<compile_context>
chip_gen: v6e
topology: v6e:2x2x1
jax: 0.10.0
libtpu: 0.0.40
codegen_flags: <defaults>
</compile_context>

<pallas_src>
import functools

import jax
import jax.numpy as jnp
from jax.experimental import pallas as pl
from jax.experimental.pallas import tpu as pltpu

# ----------------------- hyper-parameters ("args") --------------------------
EMBED_DIM = 32           # args.embed_dim
N_BERT_LAYERS = 2        # args.n_bert_layers
N_ATTN_HEADS = 4         # args.n_attn_heads
INTERMEDIATE = 1280      # hard-coded in the module's BertConfig
HEAD_DIM = EMBED_DIM // N_ATTN_HEADS
LABEL_SMOOTHING = 0.1    # args.label_smoothing
LN_EPS = 1e-12
N_ENTITIES = 64
N_RELATIONS = 8
ADD_INVERSE_RELS = False   # args.add_inverse_rels
ADD_SEGMENT_EMBED = False  # args.add_segment_embed

QUERY_SEQ = 3                                   # [CLS, src_ent, query_rel]
ENT_PAD = ((N_ENTITIES + 127) // 128) * 128     # lane-dense logits width


# ----------------------------- kernel helpers -------------------------------
def _ln(x, g, b):
    """LayerNorm over the last axis (eps = 1e-12), matching nn.LayerNorm."""
    mu = jnp.mean(x, axis=-1, keepdims=True)
    var = jnp.mean(jnp.square(x - mu), axis=-1, keepdims=True)
    return (x - mu) * jax.lax.rsqrt(var + LN_EPS) * g + b


# --------------------- per-branch encoder kernel (grid=(2,)) -----------------
def branch_kernel(x_ref, mask_ref, lng_ref, lnb_ref,
                  wqkv_ref, bqkv_ref, wo_ref, bo_ref, ln1g_ref, ln1b_ref,
                  wi_ref, bi_ref, wf_ref, bf_ref, ln2g_ref, ln2b_ref,
                  cls_ref, *, num_heads, head_dim, n_layers):
    """Runs ONE branch (subgraph or query, selected by the grid index via the
    BlockSpecs): embedding LayerNorm + n_layers HF BertLayers, emits CLS."""
    D = num_heads * head_dim
    _, B, S, _ = x_ref.shape

    # embedding LayerNorm for this branch (f32)
    h = _ln(x_ref[0].reshape(B * S, D), lng_ref[0], lnb_ref[0])      # [B*S, D]

    # additive attention mask tiled over heads ONCE (hoisted out of the loop)
    mask = mask_ref[0]                                               # [B, S, S]
    mask_hb = jnp.concatenate([mask] * num_heads, axis=0)            # [H*B, S, S]

    for li in range(n_layers):                                       # static unroll
        # ---- self-attention ------------------------------------------------
        # fused QKV projection: one bf16 [B*S, D] @ [D, 3D] matmul, f32 accum
        qkv = (jnp.dot(h.astype(jnp.bfloat16), wqkv_ref[li],
                       preferred_element_type=jnp.float32)
               + bqkv_ref[li])                                       # [B*S, 3D]
        qkv3 = qkv.reshape(B, S, 3 * D)

        # TODO(synk): the per-head lane slices below could be removed entirely
        # with a [B,S,3,H,dh] tiled<->untiled relayout + multi-batch
        # dot_general; kept as static slices (guaranteed to lower) and batched
        # over H*B so the matmuls/softmax still run once per layer.
        q_l, k_l, v_l = [], [], []
        for hd in range(num_heads):
            lo = hd * head_dim
            q_l.append(qkv3[:, :, lo:lo + head_dim])
            k_l.append(qkv3[:, :, D + lo:D + lo + head_dim])
            v_l.append(qkv3[:, :, 2 * D + lo:2 * D + lo + head_dim])
        q_all = jnp.concatenate(q_l, axis=0).astype(jnp.bfloat16)    # [H*B, S, dh]
        k_all = jnp.concatenate(k_l, axis=0).astype(jnp.bfloat16)
        v_all = jnp.concatenate(v_l, axis=0).astype(jnp.bfloat16)

        # scores: ONE batched matmul (1/sqrt(dh) is pre-folded into Q weights)
        s = jnp.einsum('bqd,bkd->bqk', q_all, k_all,
                       preferred_element_type=jnp.float32) + mask_hb  # [H*B,S,S]
        # ONE softmax across all heads (f32); approx reciprocal uses the EUP.
        s = s - jnp.max(s, axis=-1, keepdims=True)
        p = jnp.exp(s)
        p = p * pl.reciprocal(jnp.sum(p, axis=-1, keepdims=True), approx=True)

        # context: ONE batched matmul
        ctx = jnp.einsum('bqk,bkd->bqd', p.astype(jnp.bfloat16), v_all,
                         preferred_element_type=jnp.float32)         # [H*B,S,dh]
        # reassemble heads on lanes (HF concat order) -> ONE output projection
        ctx_cat = jnp.concatenate(
            [ctx[hd * B:(hd + 1) * B] for hd in range(num_heads)], axis=-1)
        attn = (jnp.dot(ctx_cat.reshape(B * S, D).astype(jnp.bfloat16),
                        wo_ref[li], preferred_element_type=jnp.float32)
                + bo_ref[li])                                        # [B*S, D]

        # BertSelfOutput: LayerNorm(attn + hidden)
        x = _ln(attn + h, ln1g_ref[li], ln1b_ref[li])

        # BertIntermediate + BertOutput (bf16 matmul operands, f32 elementwise)
        ff = (jnp.dot(x.astype(jnp.bfloat16), wi_ref[li],
                      preferred_element_type=jnp.float32) + bi_ref[li])
        # TODO(synk): HF BERT 'gelu' is the exact erf GELU; tanh approximation
        # used to guarantee Mosaic lowering (max abs diff ~1e-3).
        ff = jax.nn.gelu(ff, approximate=True)
        y = (jnp.dot(ff.astype(jnp.bfloat16), wf_ref[li],
                     preferred_element_type=jnp.float32) + bf_ref[li])
        h = _ln(y + x, ln2g_ref[li], ln2b_ref[li])                   # [B*S, D]

    # CLS token (row 0 of every batch element) for this branch
    cls_ref[0] = h.reshape(B, S, D)[:, 0:1, :].reshape(B, D)


def branch_forward(x_stk, m_stk, p):
    """grid=(2,) over the two independent branches; on v7x the branches are
    split across the two TensorCores, elsewhere the second branch's weight
    DMA is prefetched while the first branch computes."""
    _, B, S, D = x_stk.shape
    L = N_BERT_LAYERS
    I = INTERMEDIATE

    def lead3(g):
        return (g, 0, 0)

    def lead4(g):
        return (g, 0, 0, 0)

    kern = functools.partial(branch_kernel, num_heads=N_ATTN_HEADS,
                             head_dim=HEAD_DIM, n_layers=L)
    in_specs = [
        pl.BlockSpec((1, B, S, D), lead4),       # stacked branch inputs
        pl.BlockSpec((1, B, S, S), lead4),       # stacked additive masks
        pl.BlockSpec((1, 1, D), lead3),          # branch embedding-LN gamma
        pl.BlockSpec((1, 1, D), lead3),          # branch embedding-LN beta
        pl.BlockSpec((L, D, 3 * D), lead3),      # wqkv (bf16)
        pl.BlockSpec((L, 1, 3 * D), lead3),      # bqkv
        pl.BlockSpec((L, D, D), lead3),          # wo (bf16)
        pl.BlockSpec((L, 1, D), lead3),          # bo
        pl.BlockSpec((L, 1, D), lead3),          # ln1 gamma
        pl.BlockSpec((L, 1, D), lead3),          # ln1 beta
        pl.BlockSpec((L, D, I), lead3),          # wi (bf16)
        pl.BlockSpec((L, 1, I), lead3),          # bi
        pl.BlockSpec((L, I, D), lead3),          # wf (bf16)
        pl.BlockSpec((L, 1, D), lead3),          # bf
        pl.BlockSpec((L, 1, D), lead3),          # ln2 gamma
        pl.BlockSpec((L, 1, D), lead3),          # ln2 beta
    ]
    return pl.pallas_call(
        kern,
        grid=(2,),
        in_specs=in_specs,
        out_specs=pl.BlockSpec((1, B, D), lead3),
        out_shape=jax.ShapeDtypeStruct((2, B, D), jnp.float32),
        compiler_params=pltpu.CompilerParams(
            dimension_semantics=("parallel",)),
    )(x_stk, m_stk, p['enc_ln_g'], p['enc_ln_b'],
      p['wqkv'], p['bqkv'], p['wo'], p['bo'], p['ln1_g'], p['ln1_b'],
      p['wi'], p['bi'], p['wf'], p['bf'], p['ln2_g'], p['ln2_b'])


# ----------------------- head micro-kernel (gridless) ------------------------
def head_kernel(cls_ref, ww_ref, wb_ref, entt_ref, logits_ref):
    sub_cls = cls_ref[0]                                   # [B, D] f32
    qry_cls = cls_ref[1]                                   # [B, D] f32
    # fused head projection: concat on lanes then ONE [B, 2D] @ [2D, D] dot
    cat = jnp.concatenate([qry_cls, sub_cls], axis=-1).astype(jnp.bfloat16)
    final = (jnp.dot(cat, ww_ref[...], preferred_element_type=jnp.float32)
             + wb_ref[...])                                # [B, D]
    # entity logits: table pre-transposed + lane-padded -> dense store
    logits_ref[...] = jnp.dot(final.astype(jnp.bfloat16), entt_ref[...],
                              preferred_element_type=jnp.float32)


def head_forward(cls_pair, p):
    B = cls_pair.shape[1]
    return pl.pallas_call(
        head_kernel,
        out_shape=jax.ShapeDtypeStruct((B, ENT_PAD), jnp.float32),
    )(cls_pair, p['W_w'], p['W_b'], p['ent_emb_t'])


# ------------------------------- loss (glue) --------------------------------
def cross_entropy_label_smoothing(logits, labels, eps):
    """PyTorch CrossEntropyLoss(ignore_index=-1, reduction='mean',
    label_smoothing=eps)."""
    logp = jax.nn.log_softmax(logits, axis=-1)
    valid = labels != -1
    safe_labels = jnp.where(valid, labels, 0)
    nll = -jnp.take_along_axis(logp, safe_labels[:, None], axis=-1)[:, 0]
    smooth = -jnp.mean(logp, axis=-1)
    per = (1.0 - eps) * nll + eps * smooth
    per = jnp.where(valid, per, 0.0)
    denom = jnp.maximum(jnp.sum(valid.astype(jnp.float32)), 1.0)
    return jnp.sum(per) / denom


# ------------------------------ forward (glue) -------------------------------
@functools.partial(jax.jit, static_argnames=('n_entity_nodes',))
def graph_transformer_forward(packed, input_ids, attention_mask,
                              token_type_ids, ent_masked_lm_labels,
                              ent_ids, rel_ids, n_entity_nodes):
    B, S = input_ids.shape
    D = EMBED_DIM
    ent_tab = packed['ent_embedding']
    rel_tab = packed['rel_embedding']

    # ---- subgraph branch inputs (tiny data-dependent gathers stay in XLA) ----
    ent_embeddings = ent_tab[input_ids[:, :n_entity_nodes]]
    rel_embeddings = rel_tab[input_ids[:, n_entity_nodes:]]
    inputs_embeds = jnp.concatenate([ent_embeddings, rel_embeddings], axis=1)
    inputs_embeds = inputs_embeds + packed['type_embeds'][token_type_ids]
    # F.dropout(p=0.6) is identity in eval mode.
    sub_add_mask = (1.0 - attention_mask.astype(jnp.float32)) * -10000.0

    # ---- query branch inputs, zero-padded from 3 to S rows (keys masked) ----
    src_ent_embed = ent_tab[ent_ids]                               # [B, D]
    query_rel_embed = rel_tab[rel_ids]                             # [B, D]
    q = jnp.stack([src_ent_embed, query_rel_embed], axis=1)        # [B, 2, D]
    cls = jnp.broadcast_to(packed['cls_query'][None], (B, 1, D))
    q = jnp.concatenate([cls, q], axis=1)                          # [B, 3, D]
    q = q + packed['type_embeds_query'][None, :QUERY_SEQ]
    qry_in = jnp.concatenate(
        [q, jnp.zeros((B, S - QUERY_SEQ, D), jnp.float32)], axis=1)
    # additive mask: padded KEY positions (>= 3) are -10000 for every query row
    key_is_pad = (jnp.arange(S) >= QUERY_SEQ).astype(jnp.float32)
    qry_add_mask = jnp.broadcast_to(key_is_pad * -10000.0, (B, S, S))

    # stack the two branches for the grid=(2,) kernel
    x_stk = jnp.stack([inputs_embeds, qry_in], axis=0)             # [2,B,S,D]
    m_stk = jnp.stack([sub_add_mask, qry_add_mask], axis=0)        # [2,B,S,S]

    # TODO(synk): the custom BertEncoder's extra `n_entity_nodes` argument has
    # unknown semantics; standard HF BertEncoder behavior is implemented.
    cls_pair = branch_forward(x_stk, m_stk, packed)                # [2, B, D]
    logits_pad = head_forward(cls_pair, packed)                    # [B, ENT_PAD]
    logits = logits_pad[:, :N_ENTITIES]

    ent_predict = jnp.argmax(logits, axis=-1)
    # o_emb dropout (p=0.6) is identity in eval mode.
    loss = cross_entropy_label_smoothing(logits, ent_masked_lm_labels,
                                         LABEL_SMOOTHING)
    return {'loss': loss, 'ent_logits': logits, 'entity_pred': ent_predict}


# --------------------------- deterministic params ----------------------------
def init_params(key):
    D = EMBED_DIM
    keys = iter(jax.random.split(key, 256))

    def nk():
        return next(keys)

    def normal(shape, std=0.02):
        return jax.random.normal(nk(), shape, jnp.float32) * std

    def linear(din, dout):
        lim = (6.0 / (din + dout)) ** 0.5          # xavier-uniform style
        w = jax.random.uniform(nk(), (din, dout), jnp.float32, -lim, lim)
        b = jnp.zeros((1, dout), jnp.float32)
        return w, b

    def bert_layer_params():
        wq, bq = linear(D, D)
        wk, bk = linear(D, D)
        wv, bv = linear(D, D)
        wo, bo = linear(D, D)
        wi, bi = linear(D, INTERMEDIATE)
        wf, bf = linear(INTERMEDIATE, D)
        return dict(wq=wq, bq=bq, wk=wk, bk=bk, wv=wv, bv=bv, wo=wo, bo=bo,
                    ln1_g=jnp.ones((1, D), jnp.float32),
                    ln1_b=jnp.zeros((1, D), jnp.float32),
                    wi=wi, bi=bi, wf=wf, bf=bf,
                    ln2_g=jnp.ones((1, D), jnp.float32),
                    ln2_b=jnp.zeros((1, D), jnp.float32))

    n_rel_rows = N_RELATIONS * 2 if ADD_INVERSE_RELS else N_RELATIONS
    params = dict(
        ent_embedding=normal((N_ENTITIES, D)),
        rel_embedding=normal((n_rel_rows, D)),
        type_embeds=normal((2, D)),
        type_embeds_query=normal((3, D)),
        cls_query=normal((1, D)),
        sub_ln_g=jnp.ones((1, D), jnp.float32),
        sub_ln_b=jnp.zeros((1, D), jnp.float32),
        query_ln_g=jnp.ones((1, D), jnp.float32),
        query_ln_b=jnp.zeros((1, D), jnp.float32),
        subgraph_layers=[bert_layer_params() for _ in range(N_BERT_LAYERS)],
        query_layers=[bert_layer_params() for _ in range(N_BERT_LAYERS)],
    )
    W_w, W_b = linear(2 * D, D)
    params['W_w'] = W_w
    params['W_b'] = W_b
    return params


def pack_params(params):
    """Pack per-layer dicts into kernel-friendly stacked arrays.

    Layers are stacked branch-major [subgraph_0..L-1, query_0..L-1]; Q/K/V are
    concatenated into one [D, 3D] matrix per layer with 1/sqrt(head_dim)
    folded into the Q weights/bias; matmul weights are stored bf16 (elementwise
    params stay f32); the entity table is transposed and lane-padded to
    ENT_PAD columns for the logits matmul."""
    layers = params['subgraph_layers'] + params['query_layers']
    scale = 1.0 / float(HEAD_DIM) ** 0.5

    def stack(key, dtype=jnp.float32):
        return jnp.stack([lp[key] for lp in layers], axis=0).astype(dtype)

    ent_t = params['ent_embedding'].T                          # [D, N]
    ent_t = jnp.pad(ent_t, ((0, 0), (0, ENT_PAD - N_ENTITIES)))

    packed = {k: v for k, v in params.items()
              if k not in ('subgraph_layers', 'query_layers')}
    packed.update(
        wqkv=jnp.stack(
            [jnp.concatenate([lp['wq'] * scale, lp['wk'], lp['wv']], axis=1)
             for lp in layers], axis=0).astype(jnp.bfloat16),  # [2L, D, 3D]
        bqkv=jnp.stack(
            [jnp.concatenate([lp['bq'] * scale, lp['bk'], lp['bv']], axis=1)
             for lp in layers], axis=0),                       # [2L, 1, 3D] f32
        wo=stack('wo', jnp.bfloat16), bo=stack('bo'),
        ln1_g=stack('ln1_g'), ln1_b=stack('ln1_b'),
        wi=stack('wi', jnp.bfloat16), bi=stack('bi'),
        wf=stack('wf', jnp.bfloat16), bf=stack('bf'),
        ln2_g=stack('ln2_g'), ln2_b=stack('ln2_b'),
        enc_ln_g=jnp.stack([params['sub_ln_g'], params['query_ln_g']], axis=0),
        enc_ln_b=jnp.stack([params['sub_ln_b'], params['query_ln_b']], axis=0),
        W_w=params['W_w'].astype(jnp.bfloat16),
        W_b=params['W_b'],
        ent_emb_t=ent_t.astype(jnp.bfloat16),
    )
    return packed


# ----------------------------------- main ------------------------------------
if __name__ == "__main__":
    key = jax.random.PRNGKey(0)
    pk, dk = jax.random.split(key)
    params = init_params(pk)
    packed = pack_params(params)

    B, S = 2, 8
    n_ent_nodes = 5
    k1, k2, k3, k4, k5 = jax.random.split(dk, 5)
    ent_part = jax.random.randint(k1, (B, n_ent_nodes), 0, N_ENTITIES)
    rel_part = jax.random.randint(k2, (B, S - n_ent_nodes), 0, N_RELATIONS)
    input_ids = jnp.concatenate([ent_part, rel_part], axis=1)            # [B, S]
    token_type_ids = jnp.concatenate(
        [jnp.zeros((B, n_ent_nodes), jnp.int32),
         jnp.ones((B, S - n_ent_nodes), jnp.int32)], axis=1)             # [B, S]
    attention_mask = jnp.ones((B, S, S), jnp.float32)                    # [B,S,S]
    ent_ids = jax.random.randint(k3, (B,), 0, N_ENTITIES)
    rel_ids = jax.random.randint(k4, (B,), 0, N_RELATIONS)
    ent_masked_lm_labels = jax.random.randint(k5, (B,), 0, N_ENTITIES)
    ent_len_tensor = jnp.full((B,), n_ent_nodes, jnp.int32)

    # Mirrors the module's `int(ent_len_tensor.max())`, hoisted to one host
    # sync at setup so the jitted forward itself has no device->host sync.
    n_entity_nodes = int(ent_len_tensor.max())

    out = graph_transformer_forward(packed, input_ids, attention_mask,
                                    token_type_ids, ent_masked_lm_labels,
                                    ent_ids, rel_ids,
                                    n_entity_nodes=n_entity_nodes)
    jax.block_until_ready(out)
    assert out['ent_logits'].shape == (B, N_ENTITIES)
    assert out['entity_pred'].shape == (B,)
    assert out['loss'].shape == ()
    print("KERNEL_OK")
</pallas_src>

<mosaic_0001>
module attributes {stable_mosaic.version = 11 : i64} {
  func.func @branch_kernel(%arg0: i32, %arg1: memref<1x2x8x32xf32, #tpu.memory_space<vmem>>, %arg2: memref<1x2x8x8xf32, #tpu.memory_space<vmem>>, %arg3: memref<1x1x32xf32, #tpu.memory_space<vmem>>, %arg4: memref<1x1x32xf32, #tpu.memory_space<vmem>>, %arg5: memref<2x32x96xbf16, #tpu.memory_space<vmem>>, %arg6: memref<2x1x96xf32, #tpu.memory_space<vmem>>, %arg7: memref<2x32x32xbf16, #tpu.memory_space<vmem>>, %arg8: memref<2x1x32xf32, #tpu.memory_space<vmem>>, %arg9: memref<2x1x32xf32, #tpu.memory_space<vmem>>, %arg10: memref<2x1x32xf32, #tpu.memory_space<vmem>>, %arg11: memref<2x32x1280xbf16, #tpu.memory_space<vmem>>, %arg12: memref<2x1x1280xf32, #tpu.memory_space<vmem>>, %arg13: memref<2x1280x32xbf16, #tpu.memory_space<vmem>>, %arg14: memref<2x1x32xf32, #tpu.memory_space<vmem>>, %arg15: memref<2x1x32xf32, #tpu.memory_space<vmem>>, %arg16: memref<2x1x32xf32, #tpu.memory_space<vmem>>, %arg17: memref<1x2x32xf32, #tpu.memory_space<vmem>>) attributes {dimension_semantics = [#tpu.dimension_semantics<parallel>], iteration_bounds = array<i64: 2>, scalar_prefetch = 0 : i64, scratch_operands = 0 : i64, tpu.core_type = #tpu.core_type<tc>, window_params = [{transform_indices = @transform_0, window_bounds = array<i64: 1, 2, 8, 32>}, {transform_indices = @transform_1, window_bounds = array<i64: 1, 2, 8, 8>}, {transform_indices = @transform_2, window_bounds = array<i64: 1, 1, 32>}, {transform_indices = @transform_3, window_bounds = array<i64: 1, 1, 32>}, {transform_indices = @transform_4, window_bounds = array<i64: 2, 32, 96>}, {transform_indices = @transform_5, window_bounds = array<i64: 2, 1, 96>}, {transform_indices = @transform_6, window_bounds = array<i64: 2, 32, 32>}, {transform_indices = @transform_7, window_bounds = array<i64: 2, 1, 32>}, {transform_indices = @transform_8, window_bounds = array<i64: 2, 1, 32>}, {transform_indices = @transform_9, window_bounds = array<i64: 2, 1, 32>}, {transform_indices = @transform_10, window_bounds = array<i64: 2, 32, 1280>}, {transform_indices = @transform_11, window_bounds = array<i64: 2, 1, 1280>}, {transform_indices = @transform_12, window_bounds = array<i64: 2, 1280, 32>}, {transform_indices = @transform_13, window_bounds = array<i64: 2, 1, 32>}, {transform_indices = @transform_14, window_bounds = array<i64: 2, 1, 32>}, {transform_indices = @transform_15, window_bounds = array<i64: 2, 1, 32>}, {transform_indices = @transform_16, window_bounds = array<i64: 1, 2, 32>}]} {
    %c0 = arith.constant 0 : index
    %c0_0 = arith.constant 0 : index
    %c0_1 = arith.constant 0 : index
    %c0_2 = arith.constant 0 : index
    %0 = vector.load %arg1[%c0, %c0_0, %c0_1, %c0_2] : memref<1x2x8x32xf32, #tpu.memory_space<vmem>>, vector<1x2x8x32xf32>
    %1 = vector.shape_cast %0 : vector<1x2x8x32xf32> to vector<2x8x32xf32>
    %2 = vector.shape_cast %1 : vector<2x8x32xf32> to vector<16x32xf32>
    %c0_3 = arith.constant 0 : index
    %c0_4 = arith.constant 0 : index
    %c0_5 = arith.constant 0 : index
    %3 = vector.load %arg3[%c0_3, %c0_4, %c0_5] : memref<1x1x32xf32, #tpu.memory_space<vmem>>, vector<1x1x32xf32>
    %4 = vector.shape_cast %3 : vector<1x1x32xf32> to vector<1x32xf32>
    %c0_6 = arith.constant 0 : index
    %c0_7 = arith.constant 0 : index
    %c0_8 = arith.constant 0 : index
    %5 = vector.load %arg4[%c0_6, %c0_7, %c0_8] : memref<1x1x32xf32, #tpu.memory_space<vmem>>, vector<1x1x32xf32>
    %6 = vector.shape_cast %5 : vector<1x1x32xf32> to vector<1x32xf32>
    %cst = arith.constant dense<0.000000e+00> : vector<16xf32>
    %7 = vector.multi_reduction <add>, %2, %cst [1] : vector<16x32xf32> to vector<16xf32>
    %8 = vector.shape_cast %7 : vector<16xf32> to vector<16x1xf32>
    %cst_9 = arith.constant 3.200000e+01 : f32
    %9 = vector.broadcast %cst_9 : f32 to vector<16x1xf32>
    %10 = arith.divf %8, %9 : vector<16x1xf32>
    %11 = vector.broadcast %10 : vector<16x1xf32> to vector<16x32xf32>
    %12 = arith.subf %2, %11 : vector<16x32xf32>
    %13 = arith.mulf %12, %12 : vector<16x32xf32>
    %cst_10 = arith.constant dense<0.000000e+00> : vector<16xf32>
    %14 = vector.multi_reduction <add>, %13, %cst_10 [1] : vector<16x32xf32> to vector<16xf32>
    %15 = vector.shape_cast %14 : vector<16xf32> to vector<16x1xf32>
    %cst_11 = arith.constant 3.200000e+01 : f32
    %16 = vector.broadcast %cst_11 : f32 to vector<16x1xf32>
    %17 = arith.divf %15, %16 : vector<16x1xf32>
    %18 = vector.broadcast %10 : vector<16x1xf32> to vector<16x32xf32>
    %19 = arith.subf %2, %18 : vector<16x32xf32>
    %cst_12 = arith.constant 9.99999996E-13 : f32
    %20 = vector.broadcast %cst_12 : f32 to vector<16x1xf32>
    %21 = arith.addf %17, %20 : vector<16x1xf32>
    %22 = math.rsqrt %21 : vector<16x1xf32>
    %23 = vector.broadcast %22 : vector<16x1xf32> to vector<16x32xf32>
    %24 = arith.mulf %19, %23 : vector<16x32xf32>
    %25 = vector.broadcast %4 : vector<1x32xf32> to vector<16x32xf32>
    %26 = arith.mulf %24, %25 : vector<16x32xf32>
    %27 = vector.broadcast %6 : vector<1x32xf32> to vector<16x32xf32>
    %28 = arith.addf %26, %27 : vector<16x32xf32>
    %c0_13 = arith.constant 0 : index
    %c0_14 = arith.constant 0 : index
    %c0_15 = arith.constant 0 : index
    %c0_16 = arith.constant 0 : index
    %29 = vector.load %arg2[%c0_13, %c0_14, %c0_15, %c0_16] : memref<1x2x8x8xf32, #tpu.memory_space<vmem>>, vector<1x2x8x8xf32>
    %30 = vector.shape_cast %29 : vector<1x2x8x8xf32> to vector<2x8x8xf32>
    %31 = tpu.concatenate %30, %30, %30, %30 in 0 : vector<2x8x8xf32>, vector<2x8x8xf32>, vector<2x8x8xf32>, vector<2x8x8xf32> -> vector<8x8x8xf32>
    %32 = arith.truncf %28 : vector<16x32xf32> to vector<16x32xbf16>
    %c0_17 = arith.constant 0 : index
    %c0_18 = arith.constant 0 : index
    %c0_19 = arith.constant 0 : index
    %33 = vector.load %arg5[%c0_17, %c0_18, %c0_19] : memref<2x32x96xbf16, #tpu.memory_space<vmem>>, vector<1x32x96xbf16>
    %34 = vector.shape_cast %33 : vector<1x32x96xbf16> to vector<32x96xbf16>
    %cst_20 = arith.constant dense<0.000000e+00> : vector<16x96xf32>
    %35 = tpu.matmul %32, %34, %cst_20 {dimension_numbers = #tpu.dot_dimension_numbers<[1], [0], [0], [1], [0, 0, 1, 1], [], []>} : vector<16x32xbf16>, vector<32x96xbf16>, vector<16x96xf32> -> vector<16x96xf32>
    %c0_21 = arith.constant 0 : index
    %c0_22 = arith.constant 0 : index
    %c0_23 = arith.constant 0 : index
    %36 = vector.load %arg6[%c0_21, %c0_22, %c0_23] : memref<2x1x96xf32, #tpu.memory_space<vmem>>, vector<1x1x96xf32>
    %37 = vector.shape_cast %36 : vector<1x1x96xf32> to vector<1x96xf32>
    %38 = vector.broadcast %37 : vector<1x96xf32> to vector<16x96xf32>
    %39 = arith.addf %35, %38 : vector<16x96xf32>
    %40 = vector.shape_cast %39 : vector<16x96xf32> to vector<2x8x96xf32>
    %41 = vector.extract_strided_slice %40 {offsets = [0, 0, 0], sizes = [2, 8, 8], strides = [1, 1, 1]} : vector<2x8x96xf32> to vector<2x8x8xf32>
    %42 = vector.extract_strided_slice %40 {offsets = [0, 0, 32], sizes = [2, 8, 8], strides = [1, 1, 1]} : vector<2x8x96xf32> to vector<2x8x8xf32>
    %43 = vector.extract_strided_slice %40 {offsets = [0, 0, 64], sizes = [2, 8, 8], strides = [1, 1, 1]} : vector<2x8x96xf32> to vector<2x8x8xf32>
    %44 = vector.extract_strided_slice %40 {offsets = [0, 0, 8], sizes = [2, 8, 8], strides = [1, 1, 1]} : vector<2x8x96xf32> to vector<2x8x8xf32>
    %45 = vector.extract_strided_slice %40 {offsets = [0, 0, 40], sizes = [2, 8, 8], strides = [1, 1, 1]} : vector<2x8x96xf32> to vector<2x8x8xf32>
    %46 = vector.extract_strided_slice %40 {offsets = [0, 0, 72], sizes = [2, 8, 8], strides = [1, 1, 1]} : vector<2x8x96xf32> to vector<2x8x8xf32>
    %47 = vector.extract_strided_slice %40 {offsets = [0, 0, 16], sizes = [2, 8, 8], strides = [1, 1, 1]} : vector<2x8x96xf32> to vector<2x8x8xf32>
    %48 = vector.extract_strided_slice %40 {offsets = [0, 0, 48], sizes = [2, 8, 8], strides = [1, 1, 1]} : vector<2x8x96xf32> to vector<2x8x8xf32>
    %49 = vector.extract_strided_slice %40 {offsets = [0, 0, 80], sizes = [2, 8, 8], strides = [1, 1, 1]} : vector<2x8x96xf32> to vector<2x8x8xf32>
    %50 = vector.extract_strided_slice %40 {offsets = [0, 0, 24], sizes = [2, 8, 8], strides = [1, 1, 1]} : vector<2x8x96xf32> to vector<2x8x8xf32>
    %51 = vector.extract_strided_slice %40 {offsets = [0, 0, 56], sizes = [2, 8, 8], strides = [1, 1, 1]} : vector<2x8x96xf32> to vector<2x8x8xf32>
    %52 = vector.extract_strided_slice %40 {offsets = [0, 0, 88], sizes = [2, 8, 8], strides = [1, 1, 1]} : vector<2x8x96xf32> to vector<2x8x8xf32>
    %53 = tpu.concatenate %41, %44, %47, %50 in 0 : vector<2x8x8xf32>, vector<2x8x8xf32>, vector<2x8x8xf32>, vector<2x8x8xf32> -> vector<8x8x8xf32>
    %54 = arith.truncf %53 : vector<8x8x8xf32> to vector<8x8x8xbf16>
    %55 = tpu.concatenate %42, %45, %48, %51 in 0 : vector<2x8x8xf32>, vector<2x8x8xf32>, vector<2x8x8xf32>, vector<2x8x8xf32> -> vector<8x8x8xf32>
    %56 = arith.truncf %55 : vector<8x8x8xf32> to vector<8x8x8xbf16>
    %57 = tpu.concatenate %43, %46, %49, %52 in 0 : vector<2x8x8xf32>, vector<2x8x8xf32>, vector<2x8x8xf32>, vector<2x8x8xf32> -> vector<8x8x8xf32>
    %58 = arith.truncf %57 : vector<8x8x8xf32> to vector<8x8x8xbf16>
    "tpu.trace_start"() <{level = 10 : i32, message = "bqd,bkd->bqk"}> : () -> ()
    %cst_24 = arith.constant dense<0.000000e+00> : vector<8x8x8xf32>
    %59 = tpu.matmul %54, %56, %cst_24 {dimension_numbers = #tpu.dot_dimension_numbers<[2], [2], [1], [1], [0, 0, 0, 1, 1, 1], [0], [0]>} : vector<8x8x8xbf16>, vector<8x8x8xbf16>, vector<8x8x8xf32> -> vector<8x8x8xf32>
    "tpu.trace_stop"() : () -> ()
    %60 = arith.addf %59, %31 : vector<8x8x8xf32>
    %cst_25 = arith.constant dense<0xFF800000> : vector<8x8xf32>
    %61 = vector.multi_reduction <maximumf>, %60, %cst_25 [2] : vector<8x8x8xf32> to vector<8x8xf32>
    %62 = vector.shape_cast %61 : vector<8x8xf32> to vector<8x8x1xf32>
    %63 = vector.broadcast %62 : vector<8x8x1xf32> to vector<8x8x8xf32>
    %64 = arith.subf %60, %63 : vector<8x8x8xf32>
    %65 = math.exp %64 : vector<8x8x8xf32>
    %cst_26 = arith.constant dense<0.000000e+00> : vector<8x8xf32>
    %66 = vector.multi_reduction <add>, %65, %cst_26 [2] : vector<8x8x8xf32> to vector<8x8xf32>
    %67 = vector.shape_cast %66 : vector<8x8xf32> to vector<8x8x1xf32>
    %68 = tpu.reciprocal %67 {approx = true} : vector<8x8x1xf32> -> vector<8x8x1xf32>
    %69 = vector.broadcast %68 : vector<8x8x1xf32> to vector<8x8x8xf32>
    %70 = arith.mulf %65, %69 : vector<8x8x8xf32>
    %71 = arith.truncf %70 : vector<8x8x8xf32> to vector<8x8x8xbf16>
    "tpu.trace_start"() <{level = 10 : i32, message = "bqk,bkd->bqd"}> : () -> ()
    %cst_27 = arith.constant dense<0.000000e+00> : vector<8x8x8xf32>
    %72 = tpu.matmul %71, %58, %cst_27 {dimension_numbers = #tpu.dot_dimension_numbers<[2], [1], [1], [2], [0, 0, 0, 1, 1, 2], [0], [0]>} : vector<8x8x8xbf16>, vector<8x8x8xbf16>, vector<8x8x8xf32> -> vector<8x8x8xf32>
    "tpu.trace_stop"() : () -> ()
    %73 = vector.extract_strided_slice %72 {offsets = [0, 0, 0], sizes = [2, 8, 8], strides = [1, 1, 1]} : vector<8x8x8xf32> to vector<2x8x8xf32>
    %74 = vector.extract_strided_slice %72 {offsets = [2, 0, 0], sizes = [2, 8, 8], strides = [1, 1, 1]} : vector<8x8x8xf32> to vector<2x8x8xf32>
    %75 = vector.extract_strided_slice %72 {offsets = [4, 0, 0], sizes = [2, 8, 8], strides = [1, 1, 1]} : vector<8x8x8xf32> to vector<2x8x8xf32>
    %76 = vector.extract_strided_slice %72 {offsets = [6, 0, 0], sizes = [2, 8, 8], strides = [1, 1, 1]} : vector<8x8x8xf32> to vector<2x8x8xf32>
    %77 = tpu.concatenate %73, %74, %75, %76 in 2 : vector<2x8x8xf32>, vector<2x8x8xf32>, vector<2x8x8xf32>, vector<2x8x8xf32> -> vector<2x8x32xf32>
    %78 = vector.shape_cast %77 : vector<2x8x32xf32> to vector<16x32xf32>
    %79 = arith.truncf %78 : vector<16x32xf32> to vector<16x32xbf16>
    %c0_28 = arith.constant 0 : index
    %c0_29 = arith.constant 0 : index
    %c0_30 = arith.constant 0 : index
    %80 = vector.load %arg7[%c0_28, %c0_29, %c0_30] : memref<2x32x32xbf16, #tpu.memory_space<vmem>>, vector<1x32x32xbf16>
    %81 = vector.shape_cast %80 : vector<1x32x32xbf16> to vector<32x32xbf16>
    %cst_31 = arith.constant dense<0.000000e+00> : vector<16x32xf32>
    %82 = tpu.matmul %79, %81, %cst_31 {dimension_numbers = #tpu.dot_dimension_numbers<[1], [0], [0], [1], [0, 0, 1, 1], [], []>} : vector<16x32xbf16>, vector<32x32xbf16>, vector<16x32xf32> -> vector<16x32xf32>
    %c0_32 = arith.constant 0 : index
    %c0_33 = arith.constant 0 : index
    %c0_34 = arith.constant 0 : index
    %83 = vector.load %arg8[%c0_32, %c0_33, %c0_34] : memref<2x1x32xf32, #tpu.memory_space<vmem>>, vector<1x1x32xf32>
    %84 = vector.shape_cast %83 : vector<1x1x32xf32> to vector<1x32xf32>
    %85 = vector.broadcast %84 : vector<1x32xf32> to vector<16x32xf32>
    %86 = arith.addf %82, %85 : vector<16x32xf32>
    %87 = arith.addf %86, %28 : vector<16x32xf32>
    %c0_35 = arith.constant 0 : index
    %c0_36 = arith.constant 0 : index
    %c0_37 = arith.constant 0 : index
    %88 = vector.load %arg9[%c0_35, %c0_36, %c0_37] : memref<2x1x32xf32, #tpu.memory_space<vmem>>, vector<1x1x32xf32>
    %89 = vector.shape_cast %88 : vector<1x1x32xf32> to vector<1x32xf32>
    %c0_38 = arith.constant 0 : index
    %c0_39 = arith.constant 0 : index
    %c0_40 = arith.constant 0 : index
    %90 = vector.load %arg10[%c0_38, %c0_39, %c0_40] : memref<2x1x32xf32, #tpu.memory_space<vmem>>, vector<1x1x32xf32>
    %91 = vector.shape_cast %90 : vector<1x1x32xf32> to vector<1x32xf32>
    %cst_41 = arith.constant dense<0.000000e+00> : vector<16xf32>
    %92 = vector.multi_reduction <add>, %87, %cst_41 [1] : vector<16x32xf32> to vector<16xf32>
    %93 = vector.shape_cast %92 : vector<16xf32> to vector<16x1xf32>
    %cst_42 = arith.constant 3.200000e+01 : f32
    %94 = vector.broadcast %cst_42 : f32 to vector<16x1xf32>
    %95 = arith.divf %93, %94 : vector<16x1xf32>
    %96 = vector.broadcast %95 : vector<16x1xf32> to vector<16x32xf32>
    %97 = arith.subf %87, %96 : vector<16x32xf32>
    %98 = arith.mulf %97, %97 : vector<16x32xf32>
    %cst_43 = arith.constant dense<0.000000e+00> : vector<16xf32>
    %99 = vector.multi_reduction <add>, %98, %cst_43 [1] : vector<16x32xf32> to vector<16xf32>
    %100 = vector.shape_cast %99 : vector<16xf32> to vector<16x1xf32>
    %cst_44 = arith.constant 3.200000e+01 : f32
    %101 = vector.broadcast %cst_44 : f32 to vector<16x1xf32>
    %102 = arith.divf %100, %101 : vector<16x1xf32>
    %103 = vector.broadcast %95 : vector<16x1xf32> to vector<16x32xf32>
    %104 = arith.subf %87, %103 : vector<16x32xf32>
    %cst_45 = arith.constant 9.99999996E-13 : f32
    %105 = vector.broadcast %cst_45 : f32 to vector<16x1xf32>
    %106 = arith.addf %102, %105 : vector<16x1xf32>
    %107 = math.rsqrt %106 : vector<16x1xf32>
    %108 = vector.broadcast %107 : vector<16x1xf32> to vector<16x32xf32>
    %109 = arith.mulf %104, %108 : vector<16x32xf32>
    %110 = vector.broadcast %89 : vector<1x32xf32> to vector<16x32xf32>
    %111 = arith.mulf %109, %110 : vector<16x32xf32>
    %112 = vector.broadcast %91 : vector<1x32xf32> to vector<16x32xf32>
    %113 = arith.addf %111, %112 : vector<16x32xf32>
    %114 = arith.truncf %113 : vector<16x32xf32> to vector<16x32xbf16>
    %c0_46 = arith.constant 0 : index
    %c0_47 = arith.constant 0 : index
    %c0_48 = arith.constant 0 : index
    %115 = vector.load %arg11[%c0_46, %c0_47, %c0_48] : memref<2x32x1280xbf16, #tpu.memory_space<vmem>>, vector<1x32x1280xbf16>
    %116 = vector.shape_cast %115 : vector<1x32x1280xbf16> to vector<32x1280xbf16>
    %cst_49 = arith.constant dense<0.000000e+00> : vector<16x1280xf32>
    %117 = tpu.matmul %114, %116, %cst_49 {dimension_numbers = #tpu.dot_dimension_numbers<[1], [0], [0], [1], [0, 0, 1, 1], [], []>} : vector<16x32xbf16>, vector<32x1280xbf16>, vector<16x1280xf32> -> vector<16x1280xf32>
    %c0_50 = arith.constant 0 : index
    %c0_51 = arith.constant 0 : index
    %c0_52 = arith.constant 0 : index
    %118 = vector.load %arg12[%c0_50, %c0_51, %c0_52] : memref<2x1x1280xf32, #tpu.memory_space<vmem>>, vector<1x1x1280xf32>
    %119 = vector.shape_cast %118 : vector<1x1x1280xf32> to vector<1x1280xf32>
    %120 = vector.broadcast %119 : vector<1x1280xf32> to vector<16x1280xf32>
    %121 = arith.addf %117, %120 : vector<16x1280xf32>
    %122 = arith.mulf %121, %121 : vector<16x1280xf32>
    %123 = arith.mulf %121, %122 : vector<16x1280xf32>
    %cst_53 = arith.constant 4.471500e-02 : f32
    %124 = vector.broadcast %cst_53 : f32 to vector<16x1280xf32>
    %125 = arith.mulf %124, %123 : vector<16x1280xf32>
    %126 = arith.addf %121, %125 : vector<16x1280xf32>
    %cst_54 = arith.constant 0.797884583 : f32
    %127 = vector.broadcast %cst_54 : f32 to vector<16x1280xf32>
    %128 = arith.mulf %127, %126 : vector<16x1280xf32>
    %129 = math.tanh %128 : vector<16x1280xf32>
    %cst_55 = arith.constant 1.000000e+00 : f32
    %130 = vector.broadcast %cst_55 : f32 to vector<16x1280xf32>
    %131 = arith.addf %130, %129 : vector<16x1280xf32>
    %cst_56 = arith.constant 5.000000e-01 : f32
    %132 = vector.broadcast %cst_56 : f32 to vector<16x1280xf32>
    %133 = arith.mulf %132, %131 : vector<16x1280xf32>
    %134 = arith.mulf %121, %133 : vector<16x1280xf32>
    %135 = arith.truncf %134 : vector<16x1280xf32> to vector<16x1280xbf16>
    %c0_57 = arith.constant 0 : index
    %c0_58 = arith.constant 0 : index
    %c0_59 = arith.constant 0 : index
    %136 = vector.load %arg13[%c0_57, %c0_58, %c0_59] : memref<2x1280x32xbf16, #tpu.memory_space<vmem>>, vector<1x1280x32xbf16>
    %137 = vector.shape_cast %136 : vector<1x1280x32xbf16> to vector<1280x32xbf16>
    %cst_60 = arith.constant dense<0.000000e+00> : vector<16x32xf32>
    %138 = tpu.matmul %135, %137, %cst_60 {dimension_numbers = #tpu.dot_dimension_numbers<[1], [0], [0], [1], [0, 0, 1, 1], [], []>} : vector<16x1280xbf16>, vector<1280x32xbf16>, vector<16x32xf32> -> vector<16x32xf32>
    %c0_61 = arith.constant 0 : index
    %c0_62 = arith.constant 0 : index
    %c0_63 = arith.constant 0 : index
    %139 = vector.load %arg14[%c0_61, %c0_62, %c0_63] : memref<2x1x32xf32, #tpu.memory_space<vmem>>, vector<1x1x32xf32>
    %140 = vector.shape_cast %139 : vector<1x1x32xf32> to vector<1x32xf32>
    %141 = vector.broadcast %140 : vector<1x32xf32> to vector<16x32xf32>
    %142 = arith.addf %138, %141 : vector<16x32xf32>
    %143 = arith.addf %142, %113 : vector<16x32xf32>
    %c0_64 = arith.constant 0 : index
    %c0_65 = arith.constant 0 : index
    %c0_66 = arith.constant 0 : index
    %144 = vector.load %arg15[%c0_64, %c0_65, %c0_66] : memref<2x1x32xf32, #tpu.memory_space<vmem>>, vector<1x1x32xf32>
    %145 = vector.shape_cast %144 : vector<1x1x32xf32> to vector<1x32xf32>
    %c0_67 = arith.constant 0 : index
    %c0_68 = arith.constant 0 : index
    %c0_69 = arith.constant 0 : index
    %146 = vector.load %arg16[%c0_67, %c0_68, %c0_69] : memref<2x1x32xf32, #tpu.memory_space<vmem>>, vector<1x1x32xf32>
    %147 = vector.shape_cast %146 : vector<1x1x32xf32> to vector<1x32xf32>
    %cst_70 = arith.constant dense<0.000000e+00> : vector<16xf32>
    %148 = vector.multi_reduction <add>, %143, %cst_70 [1] : vector<16x32xf32> to vector<16xf32>
    %149 = vector.shape_cast %148 : vector<16xf32> to vector<16x1xf32>
    %cst_71 = arith.constant 3.200000e+01 : f32
    %150 = vector.broadcast %cst_71 : f32 to vector<16x1xf32>
    %151 = arith.divf %149, %150 : vector<16x1xf32>
    %152 = vector.broadcast %151 : vector<16x1xf32> to vector<16x32xf32>
    %153 = arith.subf %143, %152 : vector<16x32xf32>
    %154 = arith.mulf %153, %153 : vector<16x32xf32>
    %cst_72 = arith.constant dense<0.000000e+00> : vector<16xf32>
    %155 = vector.multi_reduction <add>, %154, %cst_72 [1] : vector<16x32xf32> to vector<16xf32>
    %156 = vector.shape_cast %155 : vector<16xf32> to vector<16x1xf32>
    %cst_73 = arith.constant 3.200000e+01 : f32
    %157 = vector.broadcast %cst_73 : f32 to vector<16x1xf32>
    %158 = arith.divf %156, %157 : vector<16x1xf32>
    %159 = vector.broadcast %151 : vector<16x1xf32> to vector<16x32xf32>
    %160 = arith.subf %143, %159 : vector<16x32xf32>
    %cst_74 = arith.constant 9.99999996E-13 : f32
    %161 = vector.broadcast %cst_74 : f32 to vector<16x1xf32>
    %162 = arith.addf %158, %161 : vector<16x1xf32>
    %163 = math.rsqrt %162 : vector<16x1xf32>
    %164 = vector.broadcast %163 : vector<16x1xf32> to vector<16x32xf32>
    %165 = arith.mulf %160, %164 : vector<16x32xf32>
    %166 = vector.broadcast %145 : vector<1x32xf32> to vector<16x32xf32>
    %167 = arith.mulf %165, %166 : vector<16x32xf32>
    %168 = vector.broadcast %147 : vector<1x32xf32> to vector<16x32xf32>
    %169 = arith.addf %167, %168 : vector<16x32xf32>
    %170 = arith.truncf %169 : vector<16x32xf32> to vector<16x32xbf16>
    %c1 = arith.constant 1 : index
    %c0_75 = arith.constant 0 : index
    %c0_76 = arith.constant 0 : index
    %171 = vector.load %arg5[%c1, %c0_75, %c0_76] : memref<2x32x96xbf16, #tpu.memory_space<vmem>>, vector<1x32x96xbf16>
    %172 = vector.shape_cast %171 : vector<1x32x96xbf16> to vector<32x96xbf16>
    %cst_77 = arith.constant dense<0.000000e+00> : vector<16x96xf32>
    %173 = tpu.matmul %170, %172, %cst_77 {dimension_numbers = #tpu.dot_dimension_numbers<[1], [0], [0], [1], [0, 0, 1, 1], [], []>} : vector<16x32xbf16>, vector<32x96xbf16>, vector<16x96xf32> -> vector<16x96xf32>
    %c1_78 = arith.constant 1 : index
    %c0_79 = arith.constant 0 : index
    %c0_80 = arith.constant 0 : index
    %174 = vector.load %arg6[%c1_78, %c0_79, %c0_80] : memref<2x1x96xf32, #tpu.memory_space<vmem>>, vector<1x1x96xf32>
    %175 = vector.shape_cast %174 : vector<1x1x96xf32> to vector<1x96xf32>
    %176 = vector.broadcast %175 : vector<1x96xf32> to vector<16x96xf32>
    %177 = arith.addf %173, %176 : vector<16x96xf32>
    %178 = vector.shape_cast %177 : vector<16x96xf32> to vector<2x8x96xf32>
    %179 = vector.extract_strided_slice %178 {offsets = [0, 0, 0], sizes = [2, 8, 8], strides = [1, 1, 1]} : vector<2x8x96xf32> to vector<2x8x8xf32>
    %180 = vector.extract_strided_slice %178 {offsets = [0, 0, 32], sizes = [2, 8, 8], strides = [1, 1, 1]} : vector<2x8x96xf32> to vector<2x8x8xf32>
    %181 = vector.extract_strided_slice %178 {offsets = [0, 0, 64], sizes = [2, 8, 8], strides = [1, 1, 1]} : vector<2x8x96xf32> to vector<2x8x8xf32>
    %182 = vector.extract_strided_slice %178 {offsets = [0, 0, 8], sizes = [2, 8, 8], strides = [1, 1, 1]} : vector<2x8x96xf32> to vector<2x8x8xf32>
    %183 = vector.extract_strided_slice %178 {offsets = [0, 0, 40], sizes = [2, 8, 8], strides = [1, 1, 1]} : vector<2x8x96xf32> to vector<2x8x8xf32>
    %184 = vector.extract_strided_slice %178 {offsets = [0, 0, 72], sizes = [2, 8, 8], strides = [1, 1, 1]} : vector<2x8x96xf32> to vector<2x8x8xf32>
    %185 = vector.extract_strided_slice %178 {offsets = [0, 0, 16], sizes = [2, 8, 8], strides = [1, 1, 1]} : vector<2x8x96xf32> to vector<2x8x8xf32>
    %186 = vector.extract_strided_slice %178 {offsets = [0, 0, 48], sizes = [2, 8, 8], strides = [1, 1, 1]} : vector<2x8x96xf32> to vector<2x8x8xf32>
    %187 = vector.extract_strided_slice %178 {offsets = [0, 0, 80], sizes = [2, 8, 8], strides = [1, 1, 1]} : vector<2x8x96xf32> to vector<2x8x8xf32>
    %188 = vector.extract_strided_slice %178 {offsets = [0, 0, 24], sizes = [2, 8, 8], strides = [1, 1, 1]} : vector<2x8x96xf32> to vector<2x8x8xf32>
    %189 = vector.extract_strided_slice %178 {offsets = [0, 0, 56], sizes = [2, 8, 8], strides = [1, 1, 1]} : vector<2x8x96xf32> to vector<2x8x8xf32>
    %190 = vector.extract_strided_slice %178 {offsets = [0, 0, 88], sizes = [2, 8, 8], strides = [1, 1, 1]} : vector<2x8x96xf32> to vector<2x8x8xf32>
    %191 = tpu.concatenate %179, %182, %185, %188 in 0 : vector<2x8x8xf32>, vector<2x8x8xf32>, vector<2x8x8xf32>, vector<2x8x8xf32> -> vector<8x8x8xf32>
    %192 = arith.truncf %191 : vector<8x8x8xf32> to vector<8x8x8xbf16>
    %193 = tpu.concatenate %180, %183, %186, %189 in 0 : vector<2x8x8xf32>, vector<2x8x8xf32>, vector<2x8x8xf32>, vector<2x8x8xf32> -> vector<8x8x8xf32>
    %194 = arith.truncf %193 : vector<8x8x8xf32> to vector<8x8x8xbf16>
    %195 = tpu.concatenate %181, %184, %187, %190 in 0 : vector<2x8x8xf32>, vector<2x8x8xf32>, vector<2x8x8xf32>, vector<2x8x8xf32> -> vector<8x8x8xf32>
    %196 = arith.truncf %195 : vector<8x8x8xf32> to vector<8x8x8xbf16>
    "tpu.trace_start"() <{level = 10 : i32, message = "bqd,bkd->bqk"}> : () -> ()
    %cst_81 = arith.constant dense<0.000000e+00> : vector<8x8x8xf32>
    %197 = tpu.matmul %192, %194, %cst_81 {dimension_numbers = #tpu.dot_dimension_numbers<[2], [2], [1], [1], [0, 0, 0, 1, 1, 1], [0], [0]>} : vector<8x8x8xbf16>, vector<8x8x8xbf16>, vector<8x8x8xf32> -> vector<8x8x8xf32>
    "tpu.trace_stop"() : () -> ()
    %198 = arith.addf %197, %31 : vector<8x8x8xf32>
    %cst_82 = arith.constant dense<0xFF800000> : vector<8x8xf32>
    %199 = vector.multi_reduction <maximumf>, %198, %cst_82 [2] : vector<8x8x8xf32> to vector<8x8xf32>
    %200 = vector.shape_cast %199 : vector<8x8xf32> to vector<8x8x1xf32>
    %201 = vector.broadcast %200 : vector<8x8x1xf32> to vector<8x8x8xf32>
    %202 = arith.subf %198, %201 : vector<8x8x8xf32>
    %203 = math.exp %202 : vector<8x8x8xf32>
    %cst_83 = arith.constant dense<0.000000e+00> : vector<8x8xf32>
    %204 = vector.multi_reduction <add>, %203, %cst_83 [2] : vector<8x8x8xf32> to vector<8x8xf32>
    %205 = vector.shape_cast %204 : vector<8x8xf32> to vector<8x8x1xf32>
    %206 = tpu.reciprocal %205 {approx = true} : vector<8x8x1xf32> -> vector<8x8x1xf32>
    %207 = vector.broadcast %206 : vector<8x8x1xf32> to vector<8x8x8xf32>
    %208 = arith.mulf %203, %207 : vector<8x8x8xf32>
    %209 = arith.truncf %208 : vector<8x8x8xf32> to vector<8x8x8xbf16>
    "tpu.trace_start"() <{level = 10 : i32, message = "bqk,bkd->bqd"}> : () -> ()
    %cst_84 = arith.constant dense<0.000000e+00> : vector<8x8x8xf32>
    %210 = tpu.matmul %209, %196, %cst_84 {dimension_numbers = #tpu.dot_dimension_numbers<[2], [1], [1], [2], [0, 0, 0, 1, 1, 2], [0], [0]>} : vector<8x8x8xbf16>, vector<8x8x8xbf16>, vector<8x8x8xf32> -> vector<8x8x8xf32>
    "tpu.trace_stop"() : () -> ()
    %211 = vector.extract_strided_slice %210 {offsets = [0, 0, 0], sizes = [2, 8, 8], strides = [1, 1, 1]} : vector<8x8x8xf32> to vector<2x8x8xf32>
    %212 = vector.extract_strided_slice %210 {offsets = [2, 0, 0], sizes = [2, 8, 8], strides = [1, 1, 1]} : vector<8x8x8xf32> to vector<2x8x8xf32>
    %213 = vector.extract_strided_slice %210 {offsets = [4, 0, 0], sizes = [2, 8, 8], strides = [1, 1, 1]} : vector<8x8x8xf32> to vector<2x8x8xf32>
    %214 = vector.extract_strided_slice %210 {offsets = [6, 0, 0], sizes = [2, 8, 8], strides = [1, 1, 1]} : vector<8x8x8xf32> to vector<2x8x8xf32>
    %215 = tpu.concatenate %211, %212, %213, %214 in 2 : vector<2x8x8xf32>, vector<2x8x8xf32>, vector<2x8x8xf32>, vector<2x8x8xf32> -> vector<2x8x32xf32>
    %216 = vector.shape_cast %215 : vector<2x8x32xf32> to vector<16x32xf32>
    %217 = arith.truncf %216 : vector<16x32xf32> to vector<16x32xbf16>
    %c1_85 = arith.constant 1 : index
    %c0_86 = arith.constant 0 : index
    %c0_87 = arith.constant 0 : index
    %218 = vector.load %arg7[%c1_85, %c0_86, %c0_87] : memref<2x32x32xbf16, #tpu.memory_space<vmem>>, vector<1x32x32xbf16>
    %219 = vector.shape_cast %218 : vector<1x32x32xbf16> to vector<32x32xbf16>
    %cst_88 = arith.constant dense<0.000000e+00> : vector<16x32xf32>
    %220 = tpu.matmul %217, %219, %cst_88 {dimension_numbers = #tpu.dot_dimension_numbers<[1], [0], [0], [1], [0, 0, 1, 1], [], []>} : vector<16x32xbf16>, vector<32x32xbf16>, vector<16x32xf32> -> vector<16x32xf32>
    %c1_89 = arith.constant 1 : index
    %c0_90 = arith.constant 0 : index
    %c0_91 = arith.constant 0 : index
    %221 = vector.load %arg8[%c1_89, %c0_90, %c0_91] : memref<2x1x32xf32, #tpu.memory_space<vmem>>, vector<1x1x32xf32>
    %222 = vector.shape_cast %221 : vector<1x1x32xf32> to vector<1x32xf32>
    %223 = vector.broadcast %222 : vector<1x32xf32> to vector<16x32xf32>
    %224 = arith.addf %220, %223 : vector<16x32xf32>
    %225 = arith.addf %224, %169 : vector<16x32xf32>
    %c1_92 = arith.constant 1 : index
    %c0_93 = arith.constant 0 : index
    %c0_94 = arith.constant 0 : index
    %226 = vector.load %arg9[%c1_92, %c0_93, %c0_94] : memref<2x1x32xf32, #tpu.memory_space<vmem>>, vector<1x1x32xf32>
    %227 = vector.shape_cast %226 : vector<1x1x32xf32> to vector<1x32xf32>
    %c1_95 = arith.constant 1 : index
    %c0_96 = arith.constant 0 : index
    %c0_97 = arith.constant 0 : index
    %228 = vector.load %arg10[%c1_95, %c0_96, %c0_97] : memref<2x1x32xf32, #tpu.memory_space<vmem>>, vector<1x1x32xf32>
    %229 = vector.shape_cast %228 : vector<1x1x32xf32> to vector<1x32xf32>
    %cst_98 = arith.constant dense<0.000000e+00> : vector<16xf32>
    %230 = vector.multi_reduction <add>, %225, %cst_98 [1] : vector<16x32xf32> to vector<16xf32>
    %231 = vector.shape_cast %230 : vector<16xf32> to vector<16x1xf32>
    %cst_99 = arith.constant 3.200000e+01 : f32
    %232 = vector.broadcast %cst_99 : f32 to vector<16x1xf32>
    %233 = arith.divf %231, %232 : vector<16x1xf32>
    %234 = vector.broadcast %233 : vector<16x1xf32> to vector<16x32xf32>
    %235 = arith.subf %225, %234 : vector<16x32xf32>
    %236 = arith.mulf %235, %235 : vector<16x32xf32>
    %cst_100 = arith.constant dense<0.000000e+00> : vector<16xf32>
    %237 = vector.multi_reduction <add>, %236, %cst_100 [1] : vector<16x32xf32> to vector<16xf32>
    %238 = vector.shape_cast %237 : vector<16xf32> to vector<16x1xf32>
    %cst_101 = arith.constant 3.200000e+01 : f32
    %239 = vector.broadcast %cst_101 : f32 to vector<16x1xf32>
    %240 = arith.divf %238, %239 : vector<16x1xf32>
    %241 = vector.broadcast %233 : vector<16x1xf32> to vector<16x32xf32>
    %242 = arith.subf %225, %241 : vector<16x32xf32>
    %cst_102 = arith.constant 9.99999996E-13 : f32
    %243 = vector.broadcast %cst_102 : f32 to vector<16x1xf32>
    %244 = arith.addf %240, %243 : vector<16x1xf32>
    %245 = math.rsqrt %244 : vector<16x1xf32>
    %246 = vector.broadcast %245 : vector<16x1xf32> to vector<16x32xf32>
    %247 = arith.mulf %242, %246 : vector<16x32xf32>
    %248 = vector.broadcast %227 : vector<1x32xf32> to vector<16x32xf32>
    %249 = arith.mulf %247, %248 : vector<16x32xf32>
    %250 = vector.broadcast %229 : vector<1x32xf32> to vector<16x32xf32>
    %251 = arith.addf %249, %250 : vector<16x32xf32>
    %252 = arith.truncf %251 : vector<16x32xf32> to vector<16x32xbf16>
    %c1_103 = arith.constant 1 : index
    %c0_104 = arith.constant 0 : index
    %c0_105 = arith.constant 0 : index
    %253 = vector.load %arg11[%c1_103, %c0_104, %c0_105] : memref<2x32x1280xbf16, #tpu.memory_space<vmem>>, vector<1x32x1280xbf16>
    %254 = vector.shape_cast %253 : vector<1x32x1280xbf16> to vector<32x1280xbf16>
    %cst_106 = arith.constant dense<0.000000e+00> : vector<16x1280xf32>
    %255 = tpu.matmul %252, %254, %cst_106 {dimension_numbers = #tpu.dot_dimension_numbers<[1], [0], [0], [1], [0, 0, 1, 1], [], []>} : vector<16x32xbf16>, vector<32x1280xbf16>, vector<16x1280xf32> -> vector<16x1280xf32>
    %c1_107 = arith.constant 1 : index
    %c0_108 = arith.constant 0 : index
    %c0_109 = arith.constant 0 : index
    %256 = vector.load %arg12[%c1_107, %c0_108, %c0_109] : memref<2x1x1280xf32, #tpu.memory_space<vmem>>, vector<1x1x1280xf32>
    %257 = vector.shape_cast %256 : vector<1x1x1280xf32> to vector<1x1280xf32>
    %258 = vector.broadcast %257 : vector<1x1280xf32> to vector<16x1280xf32>
    %259 = arith.addf %255, %258 : vector<16x1280xf32>
    %260 = arith.mulf %259, %259 : vector<16x1280xf32>
    %261 = arith.mulf %259, %260 : vector<16x1280xf32>
    %cst_110 = arith.constant 4.471500e-02 : f32
    %262 = vector.broadcast %cst_110 : f32 to vector<16x1280xf32>
    %263 = arith.mulf %262, %261 : vector<16x1280xf32>
    %264 = arith.addf %259, %263 : vector<16x1280xf32>
    %cst_111 = arith.constant 0.797884583 : f32
    %265 = vector.broadcast %cst_111 : f32 to vector<16x1280xf32>
    %266 = arith.mulf %265, %264 : vector<16x1280xf32>
    %267 = math.tanh %266 : vector<16x1280xf32>
    %cst_112 = arith.constant 1.000000e+00 : f32
    %268 = vector.broadcast %cst_112 : f32 to vector<16x1280xf32>
    %269 = arith.addf %268, %267 : vector<16x1280xf32>
    %cst_113 = arith.constant 5.000000e-01 : f32
    %270 = vector.broadcast %cst_113 : f32 to vector<16x1280xf32>
    %271 = arith.mulf %270, %269 : vector<16x1280xf32>
    %272 = arith.mulf %259, %271 : vector<16x1280xf32>
    %273 = arith.truncf %272 : vector<16x1280xf32> to vector<16x1280xbf16>
    %c1_114 = arith.constant 1 : index
    %c0_115 = arith.constant 0 : index
    %c0_116 = arith.constant 0 : index
    %274 = vector.load %arg13[%c1_114, %c0_115, %c0_116] : memref<2x1280x32xbf16, #tpu.memory_space<vmem>>, vector<1x1280x32xbf16>
    %275 = vector.shape_cast %274 : vector<1x1280x32xbf16> to vector<1280x32xbf16>
    %cst_117 = arith.constant dense<0.000000e+00> : vector<16x32xf32>
    %276 = tpu.matmul %273, %275, %cst_117 {dimension_numbers = #tpu.dot_dimension_numbers<[1], [0], [0], [1], [0, 0, 1, 1], [], []>} : vector<16x1280xbf16>, vector<1280x32xbf16>, vector<16x32xf32> -> vector<16x32xf32>
    %c1_118 = arith.constant 1 : index
    %c0_119 = arith.constant 0 : index
    %c0_120 = arith.constant 0 : index
    %277 = vector.load %arg14[%c1_118, %c0_119, %c0_120] : memref<2x1x32xf32, #tpu.memory_space<vmem>>, vector<1x1x32xf32>
    %278 = vector.shape_cast %277 : vector<1x1x32xf32> to vector<1x32xf32>
    %279 = vector.broadcast %278 : vector<1x32xf32> to vector<16x32xf32>
    %280 = arith.addf %276, %279 : vector<16x32xf32>
    %281 = arith.addf %280, %251 : vector<16x32xf32>
    %c1_121 = arith.constant 1 : index
    %c0_122 = arith.constant 0 : index
    %c0_123 = arith.constant 0 : index
    %282 = vector.load %arg15[%c1_121, %c0_122, %c0_123] : memref<2x1x32xf32, #tpu.memory_space<vmem>>, vector<1x1x32xf32>
    %283 = vector.shape_cast %282 : vector<1x1x32xf32> to vector<1x32xf32>
    %c1_124 = arith.constant 1 : index
    %c0_125 = arith.constant 0 : index
    %c0_126 = arith.constant 0 : index
    %284 = vector.load %arg16[%c1_124, %c0_125, %c0_126] : memref<2x1x32xf32, #tpu.memory_space<vmem>>, vector<1x1x32xf32>
    %285 = vector.shape_cast %284 : vector<1x1x32xf32> to vector<1x32xf32>
    %cst_127 = arith.constant dense<0.000000e+00> : vector<16xf32>
    %286 = vector.multi_reduction <add>, %281, %cst_127 [1] : vector<16x32xf32> to vector<16xf32>
    %287 = vector.shape_cast %286 : vector<16xf32> to vector<16x1xf32>
    %cst_128 = arith.constant 3.200000e+01 : f32
    %288 = vector.broadcast %cst_128 : f32 to vector<16x1xf32>
    %289 = arith.divf %287, %288 : vector<16x1xf32>
    %290 = vector.broadcast %289 : vector<16x1xf32> to vector<16x32xf32>
    %291 = arith.subf %281, %290 : vector<16x32xf32>
    %292 = arith.mulf %291, %291 : vector<16x32xf32>
    %cst_129 = arith.constant dense<0.000000e+00> : vector<16xf32>
    %293 = vector.multi_reduction <add>, %292, %cst_129 [1] : vector<16x32xf32> to vector<16xf32>
    %294 = vector.shape_cast %293 : vector<16xf32> to vector<16x1xf32>
    %cst_130 = arith.constant 3.200000e+01 : f32
    %295 = vector.broadcast %cst_130 : f32 to vector<16x1xf32>
    %296 = arith.divf %294, %295 : vector<16x1xf32>
    %297 = vector.broadcast %289 : vector<16x1xf32> to vector<16x32xf32>
    %298 = arith.subf %281, %297 : vector<16x32xf32>
    %cst_131 = arith.constant 9.99999996E-13 : f32
    %299 = vector.broadcast %cst_131 : f32 to vector<16x1xf32>
    %300 = arith.addf %296, %299 : vector<16x1xf32>
    %301 = math.rsqrt %300 : vector<16x1xf32>
    %302 = vector.broadcast %301 : vector<16x1xf32> to vector<16x32xf32>
    %303 = arith.mulf %298, %302 : vector<16x32xf32>
    %304 = vector.broadcast %283 : vector<1x32xf32> to vector<16x32xf32>
    %305 = arith.mulf %303, %304 : vector<16x32xf32>
    %306 = vector.broadcast %285 : vector<1x32xf32> to vector<16x32xf32>
    %307 = arith.addf %305, %306 : vector<16x32xf32>
    %308 = vector.shape_cast %307 : vector<16x32xf32> to vector<2x8x32xf32>
    %309 = vector.extract_strided_slice %308 {offsets = [0, 0, 0], sizes = [2, 1, 32], strides = [1, 1, 1]} : vector<2x8x32xf32> to vector<2x1x32xf32>
    %310 = vector.shape_cast %309 : vector<2x1x32xf32> to vector<2x32xf32>
    %c0_132 = arith.constant 0 : index
    %c0_133 = arith.constant 0 : index
    %c0_134 = arith.constant 0 : index
    %311 = vector.load %arg17[%c0_132, %c0_133, %c0_134] : memref<1x2x32xf32, #tpu.memory_space<vmem>>, vector<1x2x32xf32>
    %312 = vector.shape_cast %311 : vector<1x2x32xf32> to vector<2x32xf32>
    %313 = vector.shape_cast %310 : vector<2x32xf32> to vector<1x2x32xf32>
    tpu.vector_store %arg17[%c0_132, %c0_133, %c0_134], %313 {strides = array<i32>} : memref<1x2x32xf32, #tpu.memory_space<vmem>>, vector<1x2x32xf32>,
    return
  }
  func.func @transform_0(%arg0: i32) -> (i32, i32, i32, i32) {
    %c0_i32 = arith.constant 0 : i32
    %c0_i32_0 = arith.constant 0 : i32
    %c0_i32_1 = arith.constant 0 : i32
    %c0_i32_2 = arith.constant 0 : i32
    return %arg0, %c0_i32, %c0_i32_0, %c0_i32_1 : i32, i32, i32, i32
  }
  func.func @transform_1(%arg0: i32) -> (i32, i32, i32, i32) {
    %c0_i32 = arith.constant 0 : i32
    %c0_i32_0 = arith.constant 0 : i32
    %c0_i32_1 = arith.constant 0 : i32
    %c0_i32_2 = arith.constant 0 : i32
    return %arg0, %c0_i32, %c0_i32_0, %c0_i32_1 : i32, i32, i32, i32
  }
  func.func @transform_2(%arg0: i32) -> (i32, i32, i32) {
    %c0_i32 = arith.constant 0 : i32
    %c0_i32_0 = arith.constant 0 : i32
    %c0_i32_1 = arith.constant 0 : i32
    return %arg0, %c0_i32, %c0_i32_0 : i32, i32, i32
  }
  func.func @transform_3(%arg0: i32) -> (i32, i32, i32) {
    %c0_i32 = arith.constant 0 : i32
    %c0_i32_0 = arith.constant 0 : i32
    %c0_i32_1 = arith.constant 0 : i32
    return %arg0, %c0_i32, %c0_i32_0 : i32, i32, i32
  }
  func.func @transform_4(%arg0: i32) -> (i32, i32, i32) {
    %c0_i32 = arith.constant 0 : i32
    %c0_i32_0 = arith.constant 0 : i32
    %c0_i32_1 = arith.constant 0 : i32
    return %arg0, %c0_i32, %c0_i32_0 : i32, i32, i32
  }
  func.func @transform_5(%arg0: i32) -> (i32, i32, i32) {
    %c0_i32 = arith.constant 0 : i32
    %c0_i32_0 = arith.constant 0 : i32
    %c0_i32_1 = arith.constant 0 : i32
    return %arg0, %c0_i32, %c0_i32_0 : i32, i32, i32
  }
  func.func @transform_6(%arg0: i32) -> (i32, i32, i32) {
    %c0_i32 = arith.constant 0 : i32
    %c0_i32_0 = arith.constant 0 : i32
    %c0_i32_1 = arith.constant 0 : i32
    return %arg0, %c0_i32, %c0_i32_0 : i32, i32, i32
  }
  func.func @transform_7(%arg0: i32) -> (i32, i32, i32) {
    %c0_i32 = arith.constant 0 : i32
    %c0_i32_0 = arith.constant 0 : i32
    %c0_i32_1 = arith.constant 0 : i32
    return %arg0, %c0_i32, %c0_i32_0 : i32, i32, i32
  }
  func.func @transform_8(%arg0: i32) -> (i32, i32, i32) {
    %c0_i32 = arith.constant 0 : i32
    %c0_i32_0 = arith.constant 0 : i32
    %c0_i32_1 = arith.constant 0 : i32
    return %arg0, %c0_i32, %c0_i32_0 : i32, i32, i32
  }
  func.func @transform_9(%arg0: i32) -> (i32, i32, i32) {
    %c0_i32 = arith.constant 0 : i32
    %c0_i32_0 = arith.constant 0 : i32
    %c0_i32_1 = arith.constant 0 : i32
    return %arg0, %c0_i32, %c0_i32_0 : i32, i32, i32
  }
  func.func @transform_10(%arg0: i32) -> (i32, i32, i32) {
    %c0_i32 = arith.constant 0 : i32
    %c0_i32_0 = arith.constant 0 : i32
    %c0_i32_1 = arith.constant 0 : i32
    return %arg0, %c0_i32, %c0_i32_0 : i32, i32, i32
  }
  func.func @transform_11(%arg0: i32) -> (i32, i32, i32) {
    %c0_i32 = arith.constant 0 : i32
    %c0_i32_0 = arith.constant 0 : i32
    %c0_i32_1 = arith.constant 0 : i32
    return %arg0, %c0_i32, %c0_i32_0 : i32, i32, i32
  }
  func.func @transform_12(%arg0: i32) -> (i32, i32, i32) {
    %c0_i32 = arith.constant 0 : i32
    %c0_i32_0 = arith.constant 0 : i32
    %c0_i32_1 = arith.constant 0 : i32
    return %arg0, %c0_i32, %c0_i32_0 : i32, i32, i32
  }
  func.func @transform_13(%arg0: i32) -> (i32, i32, i32) {
    %c0_i32 = arith.constant 0 : i32
    %c0_i32_0 = arith.constant 0 : i32
    %c0_i32_1 = arith.constant 0 : i32
    return %arg0, %c0_i32, %c0_i32_0 : i32, i32, i32
  }
  func.func @transform_14(%arg0: i32) -> (i32, i32, i32) {
    %c0_i32 = arith.constant 0 : i32
    %c0_i32_0 = arith.constant 0 : i32
    %c0_i32_1 = arith.constant 0 : i32
    return %arg0, %c0_i32, %c0_i32_0 : i32, i32, i32
  }
  func.func @transform_15(%arg0: i32) -> (i32, i32, i32) {
    %c0_i32 = arith.constant 0 : i32
    %c0_i32_0 = arith.constant 0 : i32
    %c0_i32_1 = arith.constant 0 : i32
    return %arg0, %c0_i32, %c0_i32_0 : i32, i32, i32
  }
  func.func @transform_16(%arg0: i32) -> (i32, i32, i32) {
    %c0_i32 = arith.constant 0 : i32
    %c0_i32_0 = arith.constant 0 : i32
    %c0_i32_1 = arith.constant 0 : i32
    return %arg0, %c0_i32, %c0_i32_0 : i32, i32, i32
  }
}

module attributes {stable_mosaic.version = 11 : i64} {
  func.func @head_kernel(%arg0: memref<2x2x32xf32, #tpu.memory_space<vmem>>, %arg1: memref<64x32xbf16, #tpu.memory_space<vmem>>, %arg2: memref<1x32xf32, #tpu.memory_space<vmem>>, %arg3: memref<32x128xbf16, #tpu.memory_space<vmem>>, %arg4: memref<2x128xf32, #tpu.memory_space<vmem>>) attributes {dimension_semantics = [], scalar_prefetch = 0 : i64, scratch_operands = 0 : i64, tpu.core_type = #tpu.core_type<tc>} {
    %c0 = arith.constant 0 : index
    %c0_0 = arith.constant 0 : index
    %c0_1 = arith.constant 0 : index
    %0 = vector.load %arg0[%c0, %c0_0, %c0_1] : memref<2x2x32xf32, #tpu.memory_space<vmem>>, vector<1x2x32xf32>
    %1 = vector.shape_cast %0 : vector<1x2x32xf32> to vector<2x32xf32>
    %c1 = arith.constant 1 : index
    %c0_2 = arith.constant 0 : index
    %c0_3 = arith.constant 0 : index
    %2 = vector.load %arg0[%c1, %c0_2, %c0_3] : memref<2x2x32xf32, #tpu.memory_space<vmem>>, vector<1x2x32xf32>
    %3 = vector.shape_cast %2 : vector<1x2x32xf32> to vector<2x32xf32>
    %4 = tpu.concatenate %3, %1 in 1 : vector<2x32xf32>, vector<2x32xf32> -> vector<2x64xf32>
    %5 = arith.truncf %4 : vector<2x64xf32> to vector<2x64xbf16>
    %c0_4 = arith.constant 0 : index
    %c0_5 = arith.constant 0 : index
    %6 = vector.load %arg1[%c0_4, %c0_5] : memref<64x32xbf16, #tpu.memory_space<vmem>>, vector<64x32xbf16>
    %cst = arith.constant dense<0.000000e+00> : vector<2x32xf32>
    %7 = tpu.matmul %5, %6, %cst {dimension_numbers = #tpu.dot_dimension_numbers<[1], [0], [0], [1], [0, 0, 1, 1], [], []>} : vector<2x64xbf16>, vector<64x32xbf16>, vector<2x32xf32> -> vector<2x32xf32>
    %c0_6 = arith.constant 0 : index
    %c0_7 = arith.constant 0 : index
    %8 = vector.load %arg2[%c0_6, %c0_7] : memref<1x32xf32, #tpu.memory_space<vmem>>, vector<1x32xf32>
    %9 = vector.broadcast %8 : vector<1x32xf32> to vector<2x32xf32>
    %10 = arith.addf %7, %9 : vector<2x32xf32>
    %11 = arith.truncf %10 : vector<2x32xf32> to vector<2x32xbf16>
    %c0_8 = arith.constant 0 : index
    %c0_9 = arith.constant 0 : index
    %12 = vector.load %arg3[%c0_8, %c0_9] : memref<32x128xbf16, #tpu.memory_space<vmem>>, vector<32x128xbf16>
    %cst_10 = arith.constant dense<0.000000e+00> : vector<2x128xf32>
    %13 = tpu.matmul %11, %12, %cst_10 {dimension_numbers = #tpu.dot_dimension_numbers<[1], [0], [0], [1], [0, 0, 1, 1], [], []>} : vector<2x32xbf16>, vector<32x128xbf16>, vector<2x128xf32> -> vector<2x128xf32>
    %c0_11 = arith.constant 0 : index
    %c0_12 = arith.constant 0 : index
    %14 = vector.load %arg4[%c0_11, %c0_12] : memref<2x128xf32, #tpu.memory_space<vmem>>, vector<2x128xf32>
    tpu.vector_store %arg4[%c0_11, %c0_12], %13 {strides = array<i32>} : memref<2x128xf32, #tpu.memory_space<vmem>>, vector<2x128xf32>,
    return
  }
}

</mosaic_0001>

<llo_original>
// kernel: graph_transformer_forward.3
$region0: #{graph_transformer_forward.3}
  #allocation0 [shape = 'u32[]', space=smem, size = 0x4, offset = 0x4, fixed_abs, tag = 'smem constant byte address 0x4 - core index']
  #allocation1 [shape = 'u32[144,128]{1,0:T(1,128)}', space=vmem, size = 0x12000, scoped, tag = 'internal scratch']
  %s0 = inlined_call_operand.vmem [shape: f32[2,2,32], index: 0, kind: input, shape index: {}]
  %s1 = inlined_call_operand.vmem [shape: bf16[64,32], index: 1, kind: input, shape index: {}]
  %s2 = inlined_call_operand.vmem [shape: f32[1,32], index: 2, kind: input, shape index: {}]
  %s3 = inlined_call_operand.vmem [shape: bf16[32,128], index: 3, kind: input, shape index: {}]
  %s4 = inlined_call_operand.vmem [shape: f32[2,128], index: 4, kind: output, shape index: {}]
  %s5 = sld [smem:[#allocation0]]
  $region26: #{graph_transformer_forward.3} parent=0
    _
  %s7 = ssub.s32 1, %s5
  %s8 = scalar_select 0, %s7, %s5
  // Predicated region
  $region2: #{graph_transformer_forward.3} parent=0 // pred_check
    _
  $region3: #{graph_transformer_forward.3} parent=0 // pred_check_branch
    %10 = sbr.rel (0) target = $region5
  $region4: #{graph_transformer_forward.3} parent=0 // pred_region
    _
  $region5: #{graph_transformer_forward.3} parent=0 // pred_fallthru
    _
  // Predicated region
  $region6: #{graph_transformer_forward.3} parent=0 // pred_check
    _
  $region7: #{graph_transformer_forward.3} parent=0 // pred_check_branch
    %12 = sbr.rel (0) target = $region9
  $region8: #{graph_transformer_forward.3} parent=0 // pred_region
    _
  $region9: #{graph_transformer_forward.3} parent=0 // pred_fallthru
    _
  // Predicated region
  $region10: #{graph_transformer_forward.3} parent=0 // pred_check
    _
  $region11: #{graph_transformer_forward.3} parent=0 // pred_check_branch
    %14 = sbr.rel (0) target = $region13
  $region12: #{graph_transformer_forward.3} parent=0 // pred_region
    _
  $region13: #{graph_transformer_forward.3} parent=0 // pred_fallthru
    _
  // Predicated region
  $region14: #{graph_transformer_forward.3} parent=0 // pred_check
    _
  $region15: #{graph_transformer_forward.3} parent=0 // pred_check_branch
    %16 = sbr.rel (0) target = $region17
  $region16: #{graph_transformer_forward.3} parent=0 // pred_region
    _
  $region17: #{graph_transformer_forward.3} parent=0 // pred_fallthru
    _
  %v18 = vld [vmem:[%s0] sm:$0x3]
  %s19 = scalar_lea.vmem %s0, 2
  %v20 = vld [vmem:[%s19] sm:$0x3]
  %22 = vrot.lane.b32.xlu0 %v18, 32
  %v23 = vpop.permute.xlu0 %22
  %vm25 = vcmask 261120
  %v26 = vsel %vm25, %v20, %v23
  %v27 = vpack.c.bf16 %v26, %v26
  %v28 = vld [vmem:[%s1] sm:$0xf]
  %v29 = vld [vmem:[%s1 + $0x4] sm:$0xf]
  %v30 = vld [vmem:[%s1 + $0x8] sm:$0xf]
  %v31 = vld [vmem:[%s1 + $0xc] sm:$0xf]
  %v32 = vld [vmem:[%s1 + $0x10] sm:$0xf]
  %v33 = vld [vmem:[%s1 + $0x14] sm:$0xf]
  %v34 = vld [vmem:[%s1 + $0x18] sm:$0xf]
  %v35 = vld [vmem:[%s1 + $0x1c] sm:$0xf]
  %v36 = vld [vmem:[%s2] sm:$0x1]
  %v38 = vlaneseq
  %v39 = vshrl.u32 %v38, 7
  %v40 = vsub.s32 0, %v39
  %v41 = vrot.slane %v36, %v40
  %v51 = vunpack.c.l.b16 %v28
  %v52 = vunpack.c.l.b16 %v29
  %v53 = vunpack.c.l.b16 %v30
  %v54 = vunpack.c.l.b16 %v31
  %v55 = vunpack.c.l.b16 %v32
  %v56 = vunpack.c.l.b16 %v33
  %v57 = vunpack.c.l.b16 %v34
  %v58 = vunpack.c.l.b16 %v35
  %v59 = vpack.c.b16 %v52, %v51
  %v60 = vpack.c.b16 %v54, %v53
  %v61 = vpack.c.b16 %v56, %v55
  %v62 = vpack.c.b16 %v58, %v57
  %vm67 = vcmask 523264
  %v69 = vsel %vm67, %v27, 0
  %71 = vmatprep.subr.bf16.mxu0 0
  %72 = vmatpush1.bf16.msra.mxu0 0
  %73 = vmatprep.subr.bf16.mxu0 0
  %74 = vmatpush1.bf16.msra.mxu0 0
  %75 = vmatprep.subr.bf16.mxu0 0
  %76 = vmatpush1.bf16.msra.mxu0 0
  %77 = vmatprep.subr.bf16.mxu0 0
  %78 = vmatpush1.bf16.msra.mxu0 0
  %79 = vmatprep.subr.bf16.mxu0 0
  %80 = vmatpush1.bf16.msra.mxu0 %v62
  %81 = vmatprep.subr.bf16.mxu0 0
  %82 = vmatpush1.bf16.msra.mxu0 %v61
  %83 = vmatprep.subr.bf16.mxu0 0
  %84 = vmatpush1.bf16.msra.mxu0 %v60
  %85 = vmatprep.subr.bf16.mxu0 0
  %86 = vmatpush1.bf16.msra.mxu0 %v59
  %87 = vmatprep.subr.bf16.mxu0 0
  %88 = vmatpush2.bf16.msra.mxu0 0
  %89 = vmatprep.subr.bf16.mxu0 0
  %90 = vmatpush2.bf16.msra.mxu0 0
  %91 = vmatprep.subr.bf16.mxu0 0
  %92 = vmatpush2.bf16.msra.mxu0 0
  %93 = vmatprep.subr.bf16.mxu0 0
  %94 = vmatpush2.bf16.msra.mxu0 0
  %95 = vmatprep.subr.bf16.mxu0 0
  %96 = vmatpush2.bf16.msra.mxu0 0
  %97 = vmatprep.subr.bf16.mxu0 0
  %98 = vmatpush2.bf16.msra.mxu0 0
  %99 = vmatprep.subr.bf16.mxu0 0
  %100 = vmatpush2.bf16.msra.mxu0 0
  %101 = vmatprep.subr.bf16.mxu0 0
  %102 = vmatpush2.bf16.msra.mxu0 0
  %103 = vmatprep.mubr.bf16.mxu0 0
  %104 = vmatmul.mubr.bf16.gmra.mxu0 %v69
  %v105 = vpop.f32.mrf.mxu0
  %v106 = vadd.f32 %v41, %v105
  %v107 = vpop.f32.mrf.mxu0
  %v108 = vpop.f32.mrf.mxu0
  %v109 = vpop.f32.mrf.mxu0
  %110 = vdwg.mxu0
  %v111 = vpack.c.bf16 %v106, %v106
  %v112 = vld [vmem:[%s3] sm:$0xf]
  %v113 = vld [vmem:[%s3 + $0x4] sm:$0xf]
  %v114 = vld [vmem:[%s3 + $0x8] sm:$0xf]
  %v115 = vld [vmem:[%s3 + $0xc] sm:$0xf]
  %v120 = vunpack.c.l.b16 %v112
  %v121 = vunpack.c.l.b16 %v113
  %v122 = vunpack.c.l.b16 %v114
  %v123 = vunpack.c.l.b16 %v115
  %v124 = vpack.c.b16 %v121, %v120
  %v125 = vpack.c.b16 %v123, %v122
  %v129 = vsel %vm25, %v111, 0
  %131 = vmatprep.subr.bf16.mxu0 0
  %132 = vmatpush1.bf16.msra.mxu0 0
  %133 = vmatprep.subr.bf16.mxu0 0
  %134 = vmatpush1.bf16.msra.mxu0 0
  %135 = vmatprep.subr.bf16.mxu0 0
  %136 = vmatpush1.bf16.msra.mxu0 0
  %137 = vmatprep.subr.bf16.mxu0 0
  %138 = vmatpush1.bf16.msra.mxu0 0
  %139 = vmatprep.subr.bf16.mxu0 0
  %140 = vmatpush1.bf16.msra.mxu0 0
  %141 = vmatprep.subr.bf16.mxu0 0
  %142 = vmatpush1.bf16.msra.mxu0 0
  %143 = vmatprep.subr.bf16.mxu0 0
  %144 = vmatpush1.bf16.msra.mxu0 %v125
  %145 = vmatprep.subr.bf16.mxu0 0
  %146 = vmatpush1.bf16.msra.mxu0 %v124
  %147 = vmatprep.subr.bf16.mxu0 0
  %148 = vmatpush2.bf16.msra.mxu0 0
  %149 = vmatprep.subr.bf16.mxu0 0
  %150 = vmatpush2.bf16.msra.mxu0 0
  %151 = vmatprep.subr.bf16.mxu0 0
  %152 = vmatpush2.bf16.msra.mxu0 0
  %153 = vmatprep.subr.bf16.mxu0 0
  %154 = vmatpush2.bf16.msra.mxu0 0
  %155 = vmatprep.subr.bf16.mxu0 0
  %156 = vmatpush2.bf16.msra.mxu0 0
  %157 = vmatprep.subr.bf16.mxu0 0
  %158 = vmatpush2.bf16.msra.mxu0 0
  %159 = vmatprep.subr.bf16.mxu0 0
  %160 = vmatpush2.bf16.msra.mxu0 0
  %161 = vmatprep.subr.bf16.mxu0 0
  %162 = vmatpush2.bf16.msra.mxu0 0
  %163 = vmatprep.mubr.bf16.mxu0 0
  %164 = vmatmul.mubr.bf16.gmra.mxu0 %v129
  %v165 = vpop.f32.mrf.mxu0
  %v166 = vadd.f32 0.0, %v165
  %v167 = vpop.f32.mrf.mxu0
  %v168 = vpop.f32.mrf.mxu0
  %v169 = vpop.f32.mrf.mxu0
  %170 = vdwg.mxu0
  %171 = vst [vmem:[%s4] sm:$0x3] %v166
  // Predicated region
  $region18: #{graph_transformer_forward.3} parent=0 // pred_check
    _
  $region19: #{graph_transformer_forward.3} parent=0 // pred_check_branch
    %173 = sbr.rel (0) target = $region21
  $region20: #{graph_transformer_forward.3} parent=0 // pred_region
    _
  $region21: #{graph_transformer_forward.3} parent=0 // pred_fallthru
    _
  // Predicated region
  $region22: #{graph_transformer_forward.3} parent=0 // pred_check
    _
  $region23: #{graph_transformer_forward.3} parent=0 // pred_check_branch
    %175 = sbr.rel (0) target = $region25
  $region24: #{graph_transformer_forward.3} parent=0 // pred_region
    _
  $region25: #{graph_transformer_forward.3} parent=0 // pred_fallthru
    _

// kernel: graph_transformer_forward.2
$region0: #{graph_transformer_forward.2}
  #allocation0 [shape = 'u32[]', space=smem, size = 0x4, offset = 0x4, fixed_abs, tag = 'smem constant byte address 0x4 - core index']
  #allocation1 [shape = 'u32[144,128]{1,0:T(1,128)}', space=vmem, size = 0x12000, scoped, tag = 'internal scratch']
  %s0 = inlined_call_operand.vmem [shape: f32[2,2,8,32], index: 0, kind: input, shape index: {}]
  %s1 = inlined_call_operand.vmem [shape: f32[2,2,8,8], index: 1, kind: input, shape index: {}]
  %s2 = inlined_call_operand.vmem [shape: f32[2,1,32], index: 2, kind: input, shape index: {}]
  %s3 = inlined_call_operand.vmem [shape: f32[2,1,32], index: 3, kind: input, shape index: {}]
  %s4 = inlined_call_operand.vmem [shape: bf16[4,32,96], index: 4, kind: input, shape index: {}]
  %s5 = inlined_call_operand.vmem [shape: f32[4,1,96], index: 5, kind: input, shape index: {}]
  %s6 = inlined_call_operand.vmem [shape: bf16[4,32,32], index: 6, kind: input, shape index: {}]
  %s7 = inlined_call_operand.vmem [shape: f32[4,1,32], index: 7, kind: input, shape index: {}]
  %s8 = inlined_call_operand.vmem [shape: f32[4,1,32], index: 8, kind: input, shape index: {}]
  %s9 = inlined_call_operand.vmem [shape: f32[4,1,32], index: 9, kind: input, shape index: {}]
  %s10 = inlined_call_operand.vmem [shape: bf16[4,32,1280], index: 10, kind: input, shape index: {}]
  %s11 = inlined_call_operand.vmem [shape: f32[4,1,1280], index: 11, kind: input, shape index: {}]
  %s12 = inlined_call_operand.vmem [shape: bf16[4,1280,32], index: 12, kind: input, shape index: {}]
  %s13 = inlined_call_operand.vmem [shape: f32[4,1,32], index: 13, kind: input, shape index: {}]
  %s14 = inlined_call_operand.vmem [shape: f32[4,1,32], index: 14, kind: input, shape index: {}]
  %s15 = inlined_call_operand.vmem [shape: f32[4,1,32], index: 15, kind: input, shape index: {}]
  %s16 = inlined_call_operand.vmem [shape: f32[2,2,32], index: 16, kind: output, shape index: {}]
  %s17 = sld [smem:[#allocation0]]
  $region97: #{graph_transformer_forward.2} parent=0
    _
  %s19 = ssub.s32 1, %s17
  %s20 = scalar_select 0, %s19, %s17
  loop: start=0, step=1, limit=4
  $region2: #{graph_transformer_forward.2} parent=0 // loop_pre_header
    _
  $region3: #{graph_transformer_forward.2} parent=0 // loop_header
    %s22 = sphi 0, %s26
    %p23 = scmp.ge.s32.totalorder %s22, 4
    %s32 = sphi 0, %s34
    %s35 = sphi 0, %s32
    %s36 = sphi 0, %s35
    %s52 = sphi 0, %s36
    %s58 = sphi 0, %s60
    %s61 = sphi 0, %s58
    %s62 = sphi 0, %s61
    %s78 = sphi 0, %s62
    %s84 = sphi 0, %s86
    %s87 = sphi 0, %s84
    %s88 = sphi 0, %s87
    %s104 = sphi 0, %s88
    %s110 = sphi 0, %s112
    %s113 = sphi 0, %s110
    %s114 = sphi 0, %s113
    %s130 = sphi 0, %s114
    %s136 = sphi 0, %s138
    %s139 = sphi 0, %s136
    %s140 = sphi 0, %s139
    %s156 = sphi 0, %s140
    %s162 = sphi 0, %s164
    %s165 = sphi 0, %s162
    %s166 = sphi 0, %s165
    %s182 = sphi 0, %s166
    %s188 = sphi 0, %s190
    %s191 = sphi 0, %s188
    %s192 = sphi 0, %s191
    %s208 = sphi 0, %s192
    %s214 = sphi 0, %s216
    %s217 = sphi 0, %s214
    %s218 = sphi 0, %s217
    %s234 = sphi 0, %s218
    %s240 = sphi 0, %s242
    %s243 = sphi 0, %s240
    %s244 = sphi 0, %s243
    %s260 = sphi 0, %s244
    %s266 = sphi 0, %s268
    %s269 = sphi 0, %s266
    %s270 = sphi 0, %s269
    %s286 = sphi 0, %s270
    %s292 = sphi 0, %s294
    %s295 = sphi 0, %s292
    %s296 = sphi 0, %s295
    %s312 = sphi 0, %s296
    %s318 = sphi 0, %s320
    %s321 = sphi 0, %s318
    %s322 = sphi 0, %s321
    %s338 = sphi 0, %s322
    %s344 = sphi 0, %s346
    %s347 = sphi 0, %s344
    %s348 = sphi 0, %s347
    %s364 = sphi 0, %s348
    %s370 = sphi 0, %s372
    %s373 = sphi 0, %s370
    %s374 = sphi 0, %s373
    %s390 = sphi 0, %s374
    %s396 = sphi 0, %s398
    %s399 = sphi 0, %s396
    %s400 = sphi 0, %s399
    %s416 = sphi 0, %s400
    %s422 = sphi 0, %s424
    %s425 = sphi 0, %s422
    %s426 = sphi 0, %s425
    %s442 = sphi 0, %s426
    %s448 = sphi 0, %s450
    %s451 = sphi 0, %s448
    %s452 = sphi 0, %s451
    %s468 = sphi 0, %s452
  $region4: #{graph_transformer_forward.2} parent=0 // loop_header_branch
    %25 = sbr.rel (%p23) target = $region8
  $region5: #{graph_transformer_forward.2} parent=0 // loop_body
    %s27 = ssub.s32 %s22, 1
    %s28 = ssub.s32 %s22, 2
    %s29 = sadd.s32 %s22, 1
    %s30 = ssub.s32 %s22, %s29
    %p31 = scmp.eq.s32.totalorder %s30, 0
    %s33 = sadd.s32 %s32, 1
    %s34 = scalar_select %p31, %s32, %s33
    %p37 = pneg %p31
    %p38 = scmp.eq.s32.totalorder %s22, 1
    %p39 = por %p37, %p38
    %p40 = scmp.ne.s32.totalorder %s32, %s35
    %p41 = scmp.eq.s32.totalorder %s22, 0
    %p42 = por %p40, %p41
    %p43 = scmp.ne.s32.totalorder %s32, %s35
    %p44 = scmp.eq.s32.totalorder %s27, 1
    %p45 = por %p43, %p44
    %p46 = scmp.ne.s32.totalorder %s35, %s36
    %p47 = scmp.eq.s32.totalorder %s27, 0
    %p48 = por %p46, %p47
    %p49 = scmp.ne.s32.totalorder %s35, %s36
    %p50 = scmp.eq.s32.totalorder %s28, 1
    %p51 = por %p49, %p50
    %p53 = scmp.ne.s32.totalorder %s36, %s52
    %p54 = scmp.eq.s32.totalorder %s28, 0
    %p55 = por %p53, %p54
    %s56 = ssub.s32 %s22, %s29
    %p57 = scmp.eq.s32.totalorder %s56, 0
    %s59 = sadd.s32 %s58, 1
    %s60 = scalar_select %p57, %s58, %s59
    %p63 = pneg %p57
    %p64 = scmp.eq.s32.totalorder %s22, 1
    %p65 = por %p63, %p64
    %p66 = scmp.ne.s32.totalorder %s58, %s61
    %p67 = scmp.eq.s32.totalorder %s22, 0
    %p68 = por %p66, %p67
    %p69 = scmp.ne.s32.totalorder %s58, %s61
    %p70 = scmp.eq.s32.totalorder %s27, 1
    %p71 = por %p69, %p70
    %p72 = scmp.ne.s32.totalorder %s61, %s62
    %p73 = scmp.eq.s32.totalorder %s27, 0
    %p74 = por %p72, %p73
    %p75 = scmp.ne.s32.totalorder %s61, %s62
    %p76 = scmp.eq.s32.totalorder %s28, 1
    %p77 = por %p75, %p76
    %p79 = scmp.ne.s32.totalorder %s62, %s78
    %p80 = scmp.eq.s32.totalorder %s28, 0
    %p81 = por %p79, %p80
    %s82 = ssub.s32 %s22, %s29
    %p83 = scmp.eq.s32.totalorder %s82, 0
    %s85 = sadd.s32 %s84, 1
    %s86 = scalar_select %p83, %s84, %s85
    %p89 = pneg %p83
    %p90 = scmp.eq.s32.totalorder %s22, 1
    %p91 = por %p89, %p90
    %p92 = scmp.ne.s32.totalorder %s84, %s87
    %p93 = scmp.eq.s32.totalorder %s22, 0
    %p94 = por %p92, %p93
    %p95 = scmp.ne.s32.totalorder %s84, %s87
    %p96 = scmp.eq.s32.totalorder %s27, 1
    %p97 = por %p95, %p96
    %p98 = scmp.ne.s32.totalorder %s87, %s88
    %p99 = scmp.eq.s32.totalorder %s27, 0
    %p100 = por %p98, %p99
    %p101 = scmp.ne.s32.totalorder %s87, %s88
    %p102 = scmp.eq.s32.totalorder %s28, 1
    %p103 = por %p101, %p102
    %p105 = scmp.ne.s32.totalorder %s88, %s104
    %p106 = scmp.eq.s32.totalorder %s28, 0
    %p107 = por %p105, %p106
    %s108 = ssub.s32 %s22, %s29
    %p109 = scmp.eq.s32.totalorder %s108, 0
    %s111 = sadd.s32 %s110, 1
    %s112 = scalar_select %p109, %s110, %s111
    %p115 = pneg %p109
    %p116 = scmp.eq.s32.totalorder %s22, 1
    %p117 = por %p115, %p116
    %p118 = scmp.ne.s32.totalorder %s110, %s113
    %p119 = scmp.eq.s32.totalorder %s22, 0
    %p120 = por %p118, %p119
    %p121 = scmp.ne.s32.totalorder %s110, %s113
    %p122 = scmp.eq.s32.totalorder %s27, 1
    %p123 = por %p121, %p122
    %p124 = scmp.ne.s32.totalorder %s113, %s114
    %p125 = scmp.eq.s32.totalorder %s27, 0
    %p126 = por %p124, %p125
    %p127 = scmp.ne.s32.totalorder %s113, %s114
    %p128 = scmp.eq.s32.totalorder %s28, 1
    %p129 = por %p127, %p128
    %p131 = scmp.ne.s32.totalorder %s114, %s130
    %p132 = scmp.eq.s32.totalorder %s28, 0
    %p133 = por %p131, %p132
    %s134 = ssub.s32 %s22, %s29
    %p135 = scmp.eq.s32.totalorder %s134, 0
    %s137 = sadd.s32 %s136, 1
    %s138 = scalar_select %p135, %s136, %s137
    %p141 = pneg %p135
    %p142 = scmp.eq.s32.totalorder %s22, 1
    %p143 = por %p141, %p142
    %p144 = scmp.ne.s32.totalorder %s136, %s139
    %p145 = scmp.eq.s32.totalorder %s22, 0
    %p146 = por %p144, %p145
    %p147 = scmp.ne.s32.totalorder %s136, %s139
    %p148 = scmp.eq.s32.totalorder %s27, 1
    %p149 = por %p147, %p148
    %p150 = scmp.ne.s32.totalorder %s139, %s140
    %p151 = scmp.eq.s32.totalorder %s27, 0
    %p152 = por %p150, %p151
    %p153 = scmp.ne.s32.totalorder %s139, %s140
    %p154 = scmp.eq.s32.totalorder %s28, 1
    %p155 = por %p153, %p154
    %p157 = scmp.ne.s32.totalorder %s140, %s156
    %p158 = scmp.eq.s32.totalorder %s28, 0
    %p159 = por %p157, %p158
    %s160 = ssub.s32 %s22, %s29
    %p161 = scmp.eq.s32.totalorder %s160, 0
    %s163 = sadd.s32 %s162, 1
    %s164 = scalar_select %p161, %s162, %s163
    %p167 = pneg %p161
    %p168 = scmp.eq.s32.totalorder %s22, 1
    %p169 = por %p167, %p168
    %p170 = scmp.ne.s32.totalorder %s162, %s165
    %p171 = scmp.eq.s32.totalorder %s22, 0
    %p172 = por %p170, %p171
    %p173 = scmp.ne.s32.totalorder %s162, %s165
    %p174 = scmp.eq.s32.totalorder %s27, 1
    %p175 = por %p173, %p174
    %p176 = scmp.ne.s32.totalorder %s165, %s166
    %p177 = scmp.eq.s32.totalorder %s27, 0
    %p178 = por %p176, %p177
    %p179 = scmp.ne.s32.totalorder %s165, %s166
    %p180 = scmp.eq.s32.totalorder %s28, 1
    %p181 = por %p179, %p180
    %p183 = scmp.ne.s32.totalorder %s166, %s182
    %p184 = scmp.eq.s32.totalorder %s28, 0
    %p185 = por %p183, %p184
    %s186 = ssub.s32 %s22, %s29
    %p187 = scmp.eq.s32.totalorder %s186, 0
    %s189 = sadd.s32 %s188, 1
    %s190 = scalar_select %p187, %s188, %s189
    %p193 = pneg %p187
    %p194 = scmp.eq.s32.totalorder %s22, 1
    %p195 = por %p193, %p194
    %p196 = scmp.ne.s32.totalorder %s188, %s191
    %p197 = scmp.eq.s32.totalorder %s22, 0
    %p198 = por %p196, %p197
    %p199 = scmp.ne.s32.totalorder %s188, %s191
    %p200 = scmp.eq.s32.totalorder %s27, 1
    %p201 = por %p199, %p200
    %p202 = scmp.ne.s32.totalorder %s191, %s192
    %p203 = scmp.eq.s32.totalorder %s27, 0
    %p204 = por %p202, %p203
    %p205 = scmp.ne.s32.totalorder %s191, %s192
    %p206 = scmp.eq.s32.totalorder %s28, 1
    %p207 = por %p205, %p206
    %p209 = scmp.ne.s32.totalorder %s192, %s208
    %p210 = scmp.eq.s32.totalorder %s28, 0
    %p211 = por %p209, %p210
    %s212 = ssub.s32 %s22, %s29
    %p213 = scmp.eq.s32.totalorder %s212, 0
    %s215 = sadd.s32 %s214, 1
    %s216 = scalar_select %p213, %s214, %s215
    %p219 = pneg %p213
    %p220 = scmp.eq.s32.totalorder %s22, 1
    %p221 = por %p219, %p220
    %p222 = scmp.ne.s32.totalorder %s214, %s217
    %p223 = scmp.eq.s32.totalorder %s22, 0
    %p224 = por %p222, %p223
    %p225 = scmp.ne.s32.totalorder %s214, %s217
    %p226 = scmp.eq.s32.totalorder %s27, 1
    %p227 = por %p225, %p226
    %p228 = scmp.ne.s32.totalorder %s217, %s218
    %p229 = scmp.eq.s32.totalorder %s27, 0
    %p230 = por %p228, %p229
    %p231 = scmp.ne.s32.totalorder %s217, %s218
    %p232 = scmp.eq.s32.totalorder %s28, 1
    %p233 = por %p231, %p232
    %p235 = scmp.ne.s32.totalorder %s218, %s234
    %p236 = scmp.eq.s32.totalorder %s28, 0
    %p237 = por %p235, %p236
    %s238 = ssub.s32 %s22, %s29
    %p239 = scmp.eq.s32.totalorder %s238, 0
    %s241 = sadd.s32 %s240, 1
    %s242 = scalar_select %p239, %s240, %s241
    %p245 = pneg %p239
    %p246 = scmp.eq.s32.totalorder %s22, 1
    %p247 = por %p245, %p246
    %p248 = scmp.ne.s32.totalorder %s240, %s243
    %p249 = scmp.eq.s32.totalorder %s22, 0
    %p250 = por %p248, %p249
    %p251 = scmp.ne.s32.totalorder %s240, %s243
    %p252 = scmp.eq.s32.totalorder %s27, 1
    %p253 = por %p251, %p252
    %p254 = scmp.ne.s32.totalorder %s243, %s244
    %p255 = scmp.eq.s32.totalorder %s27, 0
    %p256 = por %p254, %p255
    %p257 = scmp.ne.s32.totalorder %s243, %s244
    %p258 = scmp.eq.s32.totalorder %s28, 1
    %p259 = por %p257, %p258
    %p261 = scmp.ne.s32.totalorder %s244, %s260
    %p262 = scmp.eq.s32.totalorder %s28, 0
    %p263 = por %p261, %p262
    %s264 = ssub.s32 %s22, %s29
    %p265 = scmp.eq.s32.totalorder %s264, 0
    %s267 = sadd.s32 %s266, 1
    %s268 = scalar_select %p265, %s266, %s267
    %p271 = pneg %p265
    %p272 = scmp.eq.s32.totalorder %s22, 1
    %p273 = por %p271, %p272
    %p274 = scmp.ne.s32.totalorder %s266, %s269
    %p275 = scmp.eq.s32.totalorder %s22, 0
    %p276 = por %p274, %p275
    %p277 = scmp.ne.s32.totalorder %s266, %s269
    %p278 = scmp.eq.s32.totalorder %s27, 1
    %p279 = por %p277, %p278
    %p280 = scmp.ne.s32.totalorder %s269, %s270
    %p281 = scmp.eq.s32.totalorder %s27, 0
    %p282 = por %p280, %p281
    %p283 = scmp.ne.s32.totalorder %s269, %s270
    %p284 = scmp.eq.s32.totalorder %s28, 1
    %p285 = por %p283, %p284
    %p287 = scmp.ne.s32.totalorder %s270, %s286
    %p288 = scmp.eq.s32.totalorder %s28, 0
    %p289 = por %p287, %p288
    %s290 = ssub.s32 %s22, %s29
    %p291 = scmp.eq.s32.totalorder %s290, 0
    %s293 = sadd.s32 %s292, 1
    %s294 = scalar_select %p291, %s292, %s293
    %p297 = pneg %p291
    %p298 = scmp.eq.s32.totalorder %s22, 1
    %p299 = por %p297, %p298
    %p300 = scmp.ne.s32.totalorder %s292, %s295
    %p301 = scmp.eq.s32.totalorder %s22, 0
    %p302 = por %p300, %p301
    %p303 = scmp.ne.s32.totalorder %s292, %s295
    %p304 = scmp.eq.s32.totalorder %s27, 1
    %p305 = por %p303, %p304
    %p306 = scmp.ne.s32.totalorder %s295, %s296
    %p307 = scmp.eq.s32.totalorder %s27, 0
    %p308 = por %p306, %p307
    %p309 = scmp.ne.s32.totalorder %s295, %s296
    %p310 = scmp.eq.s32.totalorder %s28, 1
    %p311 = por %p309, %p310
    %p313 = scmp.ne.s32.totalorder %s296, %s312
    %p314 = scmp.eq.s32.totalorder %s28, 0
    %p315 = por %p313, %p314
    %s316 = ssub.s32 %s22, %s29
    %p317 = scmp.eq.s32.totalorder %s316, 0
    %s319 = sadd.s32 %s318, 1
    %s320 = scalar_select %p317, %s318, %s319
    %p323 = pneg %p317
    %p324 = scmp.eq.s32.totalorder %s22, 1
    %p325 = por %p323, %p324
    %p326 = scmp.ne.s32.totalorder %s318, %s321
    %p327 = scmp.eq.s32.totalorder %s22, 0
    %p328 = por %p326, %p327
    %p329 = scmp.ne.s32.totalorder %s318, %s321
    %p330 = scmp.eq.s32.totalorder %s27, 1
    %p331 = por %p329, %p330
    %p332 = scmp.ne.s32.totalorder %s321, %s322
    %p333 = scmp.eq.s32.totalorder %s27, 0
    %p334 = por %p332, %p333
    %p335 = scmp.ne.s32.totalorder %s321, %s322
    %p336 = scmp.eq.s32.totalorder %s28, 1
    %p337 = por %p335, %p336
    %p339 = scmp.ne.s32.totalorder %s322, %s338
    %p340 = scmp.eq.s32.totalorder %s28, 0
    %p341 = por %p339, %p340
    %s342 = ssub.s32 %s22, %s29
    %p343 = scmp.eq.s32.totalorder %s342, 0
    %s345 = sadd.s32 %s344, 1
    %s346 = scalar_select %p343, %s344, %s345
    %p349 = pneg %p343
    %p350 = scmp.eq.s32.totalorder %s22, 1
    %p351 = por %p349, %p350
    %p352 = scmp.ne.s32.totalorder %s344, %s347
    %p353 = scmp.eq.s32.totalorder %s22, 0
    %p354 = por %p352, %p353
    %p355 = scmp.ne.s32.totalorder %s344, %s347
    %p356 = scmp.eq.s32.totalorder %s27, 1
    %p357 = por %p355, %p356
    %p358 = scmp.ne.s32.totalorder %s347, %s348
    %p359 = scmp.eq.s32.totalorder %s27, 0
    %p360 = por %p358, %p359
    %p361 = scmp.ne.s32.totalorder %s347, %s348
    %p362 = scmp.eq.s32.totalorder %s28, 1
    %p363 = por %p361, %p362
    %p365 = scmp.ne.s32.totalorder %s348, %s364
    %p366 = scmp.eq.s32.totalorder %s28, 0
    %p367 = por %p365, %p366
    %s368 = ssub.s32 %s22, %s29
    %p369 = scmp.eq.s32.totalorder %s368, 0
    %s371 = sadd.s32 %s370, 1
    %s372 = scalar_select %p369, %s370, %s371
    %p375 = pneg %p369
    %p376 = scmp.eq.s32.totalorder %s22, 1
    %p377 = por %p375, %p376
    %p378 = scmp.ne.s32.totalorder %s370, %s373
    %p379 = scmp.eq.s32.totalorder %s22, 0
    %p380 = por %p378, %p379
    %p381 = scmp.ne.s32.totalorder %s370, %s373
    %p382 = scmp.eq.s32.totalorder %s27, 1
    %p383 = por %p381, %p382
    %p384 = scmp.ne.s32.totalorder %s373, %s374
    %p385 = scmp.eq.s32.totalorder %s27, 0
    %p386 = por %p384, %p385
    %p387 = scmp.ne.s32.totalorder %s373, %s374
    %p388 = scmp.eq.s32.totalorder %s28, 1
    %p389 = por %p387, %p388
    %p391 = scmp.ne.s32.totalorder %s374, %s390
    %p392 = scmp.eq.s32.totalorder %s28, 0
    %p393 = por %p391, %p392
    %s394 = ssub.s32 %s22, %s29
    %p395 = scmp.eq.s32.totalorder %s394, 0
    %s397 = sadd.s32 %s396, 1
    %s398 = scalar_select %p395, %s396, %s397
    %p401 = pneg %p395
    %p402 = scmp.eq.s32.totalorder %s22, 1
    %p403 = por %p401, %p402
    %p404 = scmp.ne.s32.totalorder %s396, %s399
    %p405 = scmp.eq.s32.totalorder %s22, 0
    %p406 = por %p404, %p405
    %p407 = scmp.ne.s32.totalorder %s396, %s399
    %p408 = scmp.eq.s32.totalorder %s27, 1
    %p409 = por %p407, %p408
    %p410 = scmp.ne.s32.totalorder %s399, %s400
    %p411 = scmp.eq.s32.totalorder %s27, 0
    %p412 = por %p410, %p411
    %p413 = scmp.ne.s32.totalorder %s399, %s400
    %p414 = scmp.eq.s32.totalorder %s28, 1
    %p415 = por %p413, %p414
    %p417 = scmp.ne.s32.totalorder %s400, %s416
    %p418 = scmp.eq.s32.totalorder %s28, 0
    %p419 = por %p417, %p418
    %s420 = ssub.s32 %s22, %s29
    %p421 = scmp.eq.s32.totalorder %s420, 0
    %s423 = sadd.s32 %s422, 1
    %s424 = scalar_select %p421, %s422, %s423
    %p427 = pneg %p421
    %p428 = scmp.eq.s32.totalorder %s22, 1
    %p429 = por %p427, %p428
    %p430 = scmp.ne.s32.totalorder %s422, %s425
    %p431 = scmp.eq.s32.totalorder %s22, 0
    %p432 = por %p430, %p431
    %p433 = scmp.ne.s32.totalorder %s422, %s425
    %p434 = scmp.eq.s32.totalorder %s27, 1
    %p435 = por %p433, %p434
    %p436 = scmp.ne.s32.totalorder %s425, %s426
    %p437 = scmp.eq.s32.totalorder %s27, 0
    %p438 = por %p436, %p437
    %p439 = scmp.ne.s32.totalorder %s425, %s426
    %p440 = scmp.eq.s32.totalorder %s28, 1
    %p441 = por %p439, %p440
    %p443 = scmp.ne.s32.totalorder %s426, %s442
    %p444 = scmp.eq.s32.totalorder %s28, 0
    %p445 = por %p443, %p444
    %s446 = ssub.s32 %s22, %s29
    %p447 = scmp.eq.s32.totalorder %s446, 0
    %s449 = sadd.s32 %s448, 1
    %s450 = scalar_select %p447, %s448, %s449
    %p453 = pneg %p447
    %p454 = scmp.eq.s32.totalorder %s22, 1
    %p455 = por %p453, %p454
    %p456 = scmp.ne.s32.totalorder %s448, %s451
    %p457 = scmp.eq.s32.totalorder %s22, 0
    %p458 = por %p456, %p457
    %p459 = scmp.ne.s32.totalorder %s448, %s451
    %p460 = scmp.eq.s32.totalorder %s27, 1
    %p461 = por %p459, %p460
    %p462 = scmp.ne.s32.totalorder %s451, %s452
    %p463 = scmp.eq.s32.totalorder %s27, 0
    %p464 = por %p462, %p463
    %p465 = scmp.ne.s32.totalorder %s451, %s452
    %p466 = scmp.eq.s32.totalorder %s28, 1
    %p467 = por %p465, %p466
    %p469 = scmp.ne.s32.totalorder %s452, %s468
    %p470 = scmp.eq.s32.totalorder %s28, 0
    %p471 = por %p469, %p470
    %p472 = scmp.le.s32.totalorder 1, %s22
    %p473 = scmp.lt.s32.totalorder %s22, 3
    %p474 = pnand %p472, %p473
    %p475 = pneg %p474
    // Predicated region
    $region9: #{graph_transformer_forward.2} parent=5 // pred_check
      _
    $region10: #{graph_transformer_forward.2} parent=5 // pred_check_branch
      %477 = sbr.rel (%p474) target = $region12
    $region11: #{graph_transformer_forward.2} parent=5 // pred_region
      %s478 = ssub.s32 %s22, 1
    $region12: #{graph_transformer_forward.2} parent=5 // pred_fallthru
      _
    %p479 = scmp.lt.s32.totalorder %s22, 2
    // Predicated region
    $region13: #{graph_transformer_forward.2} parent=5 // pred_check
      %p480 = pneg %p479
    $region14: #{graph_transformer_forward.2} parent=5 // pred_check_branch
      %482 = sbr.rel (%p480) target = $region16
    $region15: #{graph_transformer_forward.2} parent=5 // pred_region
      // Predicated region
      $region17: #{graph_transformer_forward.2} parent=15 // pred_check
        %p483 = pneg %p42
      $region18: #{graph_transformer_forward.2} parent=15 // pred_check_branch
        %485 = sbr.rel (%p483) target = $region20
      $region19: #{graph_transformer_forward.2} parent=15 // pred_region
        %p486 = scmp.lt.s32.totalorder %s22, 1
        %s487 = scalar_select %p486, %s22, 1
        %s488 = smul.addr %s487, 2
        %s489 = smul.addr %s488, 8
        %s490 = scalar_lea.vmem %s0, %s489
      $region20: #{graph_transformer_forward.2} parent=15 // pred_fallthru
        _
      // Predicated region
      $region21: #{graph_transformer_forward.2} parent=15 // pred_check
        %p491 = pneg %p68
      $region22: #{graph_transformer_forward.2} parent=15 // pred_check_branch
        %493 = sbr.rel (%p491) target = $region24
      $region23: #{graph_transformer_forward.2} parent=15 // pred_region
        %p494 = scmp.lt.s32.totalorder %s22, 1
        %s495 = scalar_select %p494, %s22, 1
        %s496 = smul.addr %s495, 2
        %s497 = smul.addr %s496, 8
        %s498 = scalar_lea.vmem %s1, %s497
      $region24: #{graph_transformer_forward.2} parent=15 // pred_fallthru
        _
      // Predicated region
      $region25: #{graph_transformer_forward.2} parent=15 // pred_check
        %p499 = pneg %p94
      $region26: #{graph_transformer_forward.2} parent=15 // pred_check_branch
        %501 = sbr.rel (%p499) target = $region28
      $region27: #{graph_transformer_forward.2} parent=15 // pred_region
        %p502 = scmp.lt.s32.totalorder %s22, 1
        %s503 = scalar_select %p502, %s22, 1
        %s504 = scalar_lea.vmem %s2, %s503
      $region28: #{graph_transformer_forward.2} parent=15 // pred_fallthru
        _
      // Predicated region
      $region29: #{graph_transformer_forward.2} parent=15 // pred_check
        %p505 = pneg %p120
      $region30: #{graph_transformer_forward.2} parent=15 // pred_check_branch
        %507 = sbr.rel (%p505) target = $region32
      $region31: #{graph_transformer_forward.2} parent=15 // pred_region
        %p508 = scmp.lt.s32.totalorder %s22, 1
        %s509 = scalar_select %p508, %s22, 1
        %s510 = scalar_lea.vmem %s3, %s509
      $region32: #{graph_transformer_forward.2} parent=15 // pred_fallthru
        _
      // Predicated region
      $region33: #{graph_transformer_forward.2} parent=15 // pred_check
        %p511 = pneg %p146
      $region34: #{graph_transformer_forward.2} parent=15 // pred_check_branch
        %513 = sbr.rel (%p511) target = $region36
      $region35: #{graph_transformer_forward.2} parent=15 // pred_region
        %s514 = smul.u32 2, %s22
        %p515 = scmp.lt.s32.totalorder %s514, 3
        %s516 = scalar_select %p515, %s514, 3
        %s517 = smul.addr %s516, 4
        %s518 = smul.addr %s517, 4
        %s519 = scalar_lea.vmem %s4, %s518
        %s520 = smul.u32 2, %s22
      $region36: #{graph_transformer_forward.2} parent=15 // pred_fallthru
        _
      // Predicated region
      $region37: #{graph_transformer_forward.2} parent=15 // pred_check
        %p521 = pneg %p172
      $region38: #{graph_transformer_forward.2} parent=15 // pred_check_branch
        %523 = sbr.rel (%p521) target = $region40
      $region39: #{graph_transformer_forward.2} parent=15 // pred_region
        %s524 = smul.u32 2, %s22
        %p525 = scmp.lt.s32.totalorder %s524, 3
        %s526 = scalar_select %p525, %s524, 3
        %s527 = scalar_lea.vmem %s5, %s526
        %s528 = smul.u32 2, %s22
      $region40: #{graph_transformer_forward.2} parent=15 // pred_fallthru
        _
      // Predicated region
      $region41: #{graph_transformer_forward.2} parent=15 // pred_check
        %p529 = pneg %p198
      $region42: #{graph_transformer_forward.2} parent=15 // pred_check_branch
        %531 = sbr.rel (%p529) target = $region44
      $region43: #{graph_transformer_forward.2} parent=15 // pred_region
        %s532 = smul.u32 2, %s22
        %p533 = scmp.lt.s32.totalorder %s532, 3
        %s534 = scalar_select %p533, %s532, 3
        %s535 = smul.addr %s534, 4
        %s536 = smul.addr %s535, 4
        %s537 = scalar_lea.vmem %s6, %s536
        %s538 = smul.u32 2, %s22
      $region44: #{graph_transformer_forward.2} parent=15 // pred_fallthru
        _
      // Predicated region
      $region45: #{graph_transformer_forward.2} parent=15 // pred_check
        %p539 = pneg %p224
      $region46: #{graph_transformer_forward.2} parent=15 // pred_check_branch
        %541 = sbr.rel (%p539) target = $region48
      $region47: #{graph_transformer_forward.2} parent=15 // pred_region
        %s542 = smul.u32 2, %s22
        %p543 = scmp.lt.s32.totalorder %s542, 3
        %s544 = scalar_select %p543, %s542, 3
        %s545 = scalar_lea.vmem %s7, %s544
        %s546 = smul.u32 2, %s22
      $region48: #{graph_transformer_forward.2} parent=15 // pred_fallthru
        _
      // Predicated region
      $region49: #{graph_transformer_forward.2} parent=15 // pred_check
        %p547 = pneg %p250
      $region50: #{graph_transformer_forward.2} parent=15 // pred_check_branch
        %549 = sbr.rel (%p547) target = $region52
      $region51: #{graph_transformer_forward.2} parent=15 // pred_region
        %s550 = smul.u32 2, %s22
        %p551 = scmp.lt.s32.totalorder %s550, 3
        %s552 = scalar_select %p551, %s550, 3
        %s553 = scalar_lea.vmem %s8, %s552
        %s554 = smul.u32 2, %s22
      $region52: #{graph_transformer_forward.2} parent=15 // pred_fallthru
        _
      // Predicated region
      $region53: #{graph_transformer_forward.2} parent=15 // pred_check
        %p555 = pneg %p276
      $region54: #{graph_transformer_forward.2} parent=15 // pred_check_branch
        %557 = sbr.rel (%p555) target = $region56
      $region55: #{graph_transformer_forward.2} parent=15 // pred_region
        %s558 = smul.u32 2, %s22
        %p559 = scmp.lt.s32.totalorder %s558, 3
        %s560 = scalar_select %p559, %s558, 3
        %s561 = scalar_lea.vmem %s9, %s560
        %s562 = smul.u32 2, %s22
      $region56: #{graph_transformer_forward.2} parent=15 // pred_fallthru
        _
      // Predicated region
      $region57: #{graph_transformer_forward.2} parent=15 // pred_check
        %p563 = pneg %p302
      $region58: #{graph_transformer_forward.2} parent=15 // pred_check_branch
        %565 = sbr.rel (%p563) target = $region60
      $region59: #{graph_transformer_forward.2} parent=15 // pred_region
        %s566 = smul.u32 2, %s22
        %p567 = scmp.lt.s32.totalorder %s566, 3
        %s568 = scalar_select %p567, %s566, 3
        %s569 = smul.addr %s568, 40
        %s570 = smul.addr %s569, 4
        %s571 = scalar_lea.vmem %s10, %s570
        %s572 = smul.u32 2, %s22
      $region60: #{graph_transformer_forward.2} parent=15 // pred_fallthru
        _
      // Predicated region
      $region61: #{graph_transformer_forward.2} parent=15 // pred_check
        %p573 = pneg %p328
      $region62: #{graph_transformer_forward.2} parent=15 // pred_check_branch
        %575 = sbr.rel (%p573) target = $region64
      $region63: #{graph_transformer_forward.2} parent=15 // pred_region
        %s576 = smul.u32 2, %s22
        %p577 = scmp.lt.s32.totalorder %s576, 3
        %s578 = scalar_select %p577, %s576, 3
        %s579 = smul.addr %s578, 10
        %s580 = scalar_lea.vmem %s11, %s579
        %s581 = smul.u32 2, %s22
      $region64: #{graph_transformer_forward.2} parent=15 // pred_fallthru
        _
      // Predicated region
      $region65: #{graph_transformer_forward.2} parent=15 // pred_check
        %p582 = pneg %p354
      $region66: #{graph_transformer_forward.2} parent=15 // pred_check_branch
        %584 = sbr.rel (%p582) target = $region68
      $region67: #{graph_transformer_forward.2} parent=15 // pred_region
        %s585 = smul.u32 2, %s22
        %p586 = scmp.lt.s32.totalorder %s585, 3
        %s587 = scalar_select %p586, %s585, 3
        %s588 = smul.addr %s587, 160
        %s589 = smul.addr %s588, 4
        %s590 = scalar_lea.vmem %s12, %s589
        %s591 = smul.u32 2, %s22
      $region68: #{graph_transformer_forward.2} parent=15 // pred_fallthru
        _
      // Predicated region
      $region69: #{graph_transformer_forward.2} parent=15 // pred_check
        %p592 = pneg %p380
      $region70: #{graph_transformer_forward.2} parent=15 // pred_check_branch
        %594 = sbr.rel (%p592) target = $region72
      $region71: #{graph_transformer_forward.2} parent=15 // pred_region
        %s595 = smul.u32 2, %s22
        %p596 = scmp.lt.s32.totalorder %s595, 3
        %s597 = scalar_select %p596, %s595, 3
        %s598 = scalar_lea.vmem %s13, %s597
        %s599 = smul.u32 2, %s22
      $region72: #{graph_transformer_forward.2} parent=15 // pred_fallthru
        _
      // Predicated region
      $region73: #{graph_transformer_forward.2} parent=15 // pred_check
        %p600 = pneg %p406
      $region74: #{graph_transformer_forward.2} parent=15 // pred_check_branch
        %602 = sbr.rel (%p600) target = $region76
      $region75: #{graph_transformer_forward.2} parent=15 // pred_region
        %s603 = smul.u32 2, %s22
        %p604 = scmp.lt.s32.totalorder %s603, 3
        %s605 = scalar_select %p604, %s603, 3
        %s606 = scalar_lea.vmem %s14, %s605
        %s607 = smul.u32 2, %s22
      $region76: #{graph_transformer_forward.2} parent=15 // pred_fallthru
        _
      // Predicated region
      $region77: #{graph_transformer_forward.2} parent=15 // pred_check
        %p608 = pneg %p432
      $region78: #{graph_transformer_forward.2} parent=15 // pred_check_branch
        %610 = sbr.rel (%p608) target = $region80
      $region79: #{graph_transformer_forward.2} parent=15 // pred_region
        %s611 = smul.u32 2, %s22
        %p612 = scmp.lt.s32.totalorder %s611, 3
        %s613 = scalar_select %p612, %s611, 3
        %s614 = scalar_lea.vmem %s15, %s613
        %s615 = smul.u32 2, %s22
      $region80: #{graph_transformer_forward.2} parent=15 // pred_fallthru
        _
    $region16: #{graph_transformer_forward.2} parent=5 // pred_fallthru
      _
    %p616 = scmp.le.s32.totalorder 1, %s22
    %p617 = scmp.lt.s32.totalorder %s22, 3
    %p618 = pnand %p616, %p617
    %p619 = pneg %p618
    // Predicated region
    $region81: #{graph_transformer_forward.2} parent=5 // pred_check
      _
    $region82: #{graph_transformer_forward.2} parent=5 // pred_check_branch
      %621 = sbr.rel (%p618) target = $region84
    $region83: #{graph_transformer_forward.2} parent=5 // pred_region
      %s622 = ssub.s32 %s22, 1
      %p623 = scmp.lt.s32.totalorder %s27, 1
      %s624 = scalar_select %p623, %s27, 1
      %s625 = smul.addr %s624, 2
      %s626 = smul.addr %s625, 8
      %s627 = scalar_lea.vmem %s0, %s626
      %p628 = pneg %p48
      %p629 = pneg %p45
      %p630 = scmp.lt.s32.totalorder %s27, 1
      %s631 = scalar_select %p630, %s27, 1
      %s632 = smul.addr %s631, 2
      %s633 = smul.addr %s632, 8
      %s634 = scalar_lea.vmem %s1, %s633
      %p635 = pneg %p74
      %p636 = pneg %p71
      %p637 = scmp.lt.s32.totalorder %s27, 1
      %s638 = scalar_select %p637, %s27, 1
      %s639 = scalar_lea.vmem %s2, %s638
      %p640 = pneg %p100
      %p641 = pneg %p97
      %p642 = scmp.lt.s32.totalorder %s27, 1
      %s643 = scalar_select %p642, %s27, 1
      %s644 = scalar_lea.vmem %s3, %s643
      %p645 = pneg %p126
      %p646 = pneg %p123
      %s647 = smul.u32 2, %s27
      %p648 = scmp.lt.s32.totalorder %s647, 3
      %s649 = scalar_select %p648, %s647, 3
      %s650 = smul.addr %s649, 4
      %s651 = smul.addr %s650, 4
      %s652 = scalar_lea.vmem %s4, %s651
      %p653 = pneg %p152
      %p654 = pneg %p149
      %s655 = smul.u32 2, %s27
      %p656 = scmp.lt.s32.totalorder %s655, 3
      %s657 = scalar_select %p656, %s655, 3
      %s658 = scalar_lea.vmem %s5, %s657
      %p659 = pneg %p178
      %p660 = pneg %p175
      %s661 = smul.u32 2, %s27
      %p662 = scmp.lt.s32.totalorder %s661, 3
      %s663 = scalar_select %p662, %s661, 3
      %s664 = smul.addr %s663, 4
      %s665 = smul.addr %s664, 4
      %s666 = scalar_lea.vmem %s6, %s665
      %p667 = pneg %p204
      %p668 = pneg %p201
      %s669 = smul.u32 2, %s27
      %p670 = scmp.lt.s32.totalorder %s669, 3
      %s671 = scalar_select %p670, %s669, 3
      %s672 = scalar_lea.vmem %s7, %s671
      %p673 = pneg %p230
      %p674 = pneg %p227
      %s675 = smul.u32 2, %s27
      %p676 = scmp.lt.s32.totalorder %s675, 3
      %s677 = scalar_select %p676, %s675, 3
      %s678 = scalar_lea.vmem %s8, %s677
      %p679 = pneg %p256
      %p680 = pneg %p253
      %s681 = smul.u32 2, %s27
      %p682 = scmp.lt.s32.totalorder %s681, 3
      %s683 = scalar_select %p682, %s681, 3
      %s684 = scalar_lea.vmem %s9, %s683
      %p685 = pneg %p282
      %p686 = pneg %p279
      %s687 = smul.u32 2, %s27
      %p688 = scmp.lt.s32.totalorder %s687, 3
      %s689 = scalar_select %p688, %s687, 3
      %s690 = smul.addr %s689, 40
      %s691 = smul.addr %s690, 4
      %s692 = scalar_lea.vmem %s10, %s691
      %p693 = pneg %p308
      %p694 = pneg %p305
      %s695 = smul.u32 2, %s27
      %p696 = scmp.lt.s32.totalorder %s695, 3
      %s697 = scalar_select %p696, %s695, 3
      %s698 = smul.addr %s697, 10
      %s699 = scalar_lea.vmem %s11, %s698
      %p700 = pneg %p334
      %p701 = pneg %p331
      %s702 = smul.u32 2, %s27
      %p703 = scmp.lt.s32.totalorder %s702, 3
      %s704 = scalar_select %p703, %s702, 3
      %s705 = smul.addr %s704, 160
      %s706 = smul.addr %s705, 4
      %s707 = scalar_lea.vmem %s12, %s706
      %p708 = pneg %p360
      %p709 = pneg %p357
      %s710 = smul.u32 2, %s27
      %p711 = scmp.lt.s32.totalorder %s710, 3
      %s712 = scalar_select %p711, %s710, 3
      %s713 = scalar_lea.vmem %s13, %s712
      %p714 = pneg %p386
      %p715 = pneg %p383
      %s716 = smul.u32 2, %s27
      %p717 = scmp.lt.s32.totalorder %s716, 3
      %s718 = scalar_select %p717, %s716, 3
      %s719 = scalar_lea.vmem %s14, %s718
      %p720 = pneg %p412
      %p721 = pneg %p409
      %s722 = smul.u32 2, %s27
      %p723 = scmp.lt.s32.totalorder %s722, 3
      %s724 = scalar_select %p723, %s722, 3
      %s725 = scalar_lea.vmem %s15, %s724
      %p726 = pneg %p438
      %p727 = pneg %p435
      %p728 = pneg %p464
      %p729 = pneg %p461
      %p730 = scmp.lt.s32.totalorder %s27, 1
      %s731 = scalar_select %p730, %s27, 1
      %s732 = smul.addr %s731, 2
      %s733 = scalar_lea.vmem %s16, %s732
      %p734 = scmp.lt.s32.totalorder %s27, 1
      %s735 = scalar_select %p734, %s27, 1
      %s736 = smul.addr %s735, 2
      %s737 = smul.addr %s736, 8
      %s738 = scalar_lea.vmem %s0, %s737
      %p739 = scmp.lt.s32.totalorder %s27, 1
      %s740 = scalar_select %p739, %s27, 1
      %s741 = smul.addr %s740, 2
      %s742 = smul.addr %s741, 8
      %s743 = scalar_lea.vmem %s1, %s742
      %p744 = scmp.lt.s32.totalorder %s27, 1
      %s745 = scalar_select %p744, %s27, 1
      %s746 = scalar_lea.vmem %s2, %s745
      %p747 = scmp.lt.s32.totalorder %s27, 1
      %s748 = scalar_select %p747, %s27, 1
      %s749 = scalar_lea.vmem %s3, %s748
      %s750 = smul.u32 2, %s27
      %p751 = scmp.lt.s32.totalorder %s750, 3
      %s752 = scalar_select %p751, %s750, 3
      %s753 = smul.addr %s752, 4
      %s754 = smul.addr %s753, 4
      %s755 = scalar_lea.vmem %s4, %s754
      %s756 = smul.u32 2, %s27
      %s757 = smul.u32 2, %s27
      %p758 = scmp.lt.s32.totalorder %s757, 3
      %s759 = scalar_select %p758, %s757, 3
      %s760 = scalar_lea.vmem %s5, %s759
      %s761 = smul.u32 2, %s27
      %s762 = smul.u32 2, %s27
      %p763 = scmp.lt.s32.totalorder %s762, 3
      %s764 = scalar_select %p763, %s762, 3
      %s765 = smul.addr %s764, 4
      %s766 = smul.addr %s765, 4
      %s767 = scalar_lea.vmem %s6, %s766
      %s768 = smul.u32 2, %s27
      %s769 = smul.u32 2, %s27
      %p770 = scmp.lt.s32.totalorder %s769, 3
      %s771 = scalar_select %p770, %s769, 3
      %s772 = scalar_lea.vmem %s7, %s771
      %s773 = smul.u32 2, %s27
      %s774 = smul.u32 2, %s27
      %p775 = scmp.lt.s32.totalorder %s774, 3
      %s776 = scalar_select %p775, %s774, 3
      %s777 = scalar_lea.vmem %s8, %s776
      %s778 = smul.u32 2, %s27
      %s779 = smul.u32 2, %s27
      %p780 = scmp.lt.s32.totalorder %s779, 3
      %s781 = scalar_select %p780, %s779, 3
      %s782 = scalar_lea.vmem %s9, %s781
      %s783 = smul.u32 2, %s27
      %s784 = smul.u32 2, %s27
      %p785 = scmp.lt.s32.totalorder %s784, 3
      %s786 = scalar_select %p785, %s784, 3
      %s787 = smul.addr %s786, 40
      %s788 = smul.addr %s787, 4
      %s789 = scalar_lea.vmem %s10, %s788
      %s790 = smul.u32 2, %s27
      %s791 = smul.u32 2, %s27
      %p792 = scmp.lt.s32.totalorder %s791, 3
      %s793 = scalar_select %p792, %s791, 3
      %s794 = smul.addr %s793, 10
      %s795 = scalar_lea.vmem %s11, %s794
      %s796 = smul.u32 2, %s27
      %s797 = smul.u32 2, %s27
      %p798 = scmp.lt.s32.totalorder %s797, 3
      %s799 = scalar_select %p798, %s797, 3
      %s800 = smul.addr %s799, 160
      %s801 = smul.addr %s800, 4
      %s802 = scalar_lea.vmem %s12, %s801
      %s803 = smul.u32 2, %s27
      %s804 = smul.u32 2, %s27
      %p805 = scmp.lt.s32.totalorder %s804, 3
      %s806 = scalar_select %p805, %s804, 3
      %s807 = scalar_lea.vmem %s13, %s806
      %s808 = smul.u32 2, %s27
      %s809 = smul.u32 2, %s27
      %p810 = scmp.lt.s32.totalorder %s809, 3
      %s811 = scalar_select %p810, %s809, 3
      %s812 = scalar_lea.vmem %s14, %s811
      %s813 = smul.u32 2, %s27
      %s814 = smul.u32 2, %s27
      %p815 = scmp.lt.s32.totalorder %s814, 3
      %s816 = scalar_select %p815, %s814, 3
      %s817 = scalar_lea.vmem %s15, %s816
      %s818 = smul.u32 2, %s27
      %p819 = scmp.lt.s32.totalorder %s27, 1
      %s820 = scalar_select %p819, %s27, 1
      %s821 = smul.addr %s820, 2
      %s822 = scalar_lea.vmem %s16, %s821
      %v824 = vld [vmem:[%s738] sm:$0xff]
      %v825 = vld [vmem:[%s738 + $0x8] sm:$0xff]
      %v826 = vld [vmem:[%s746] sm:$0x1]
      %v827 = vld [vmem:[%s749] sm:$0x1]
      %vm828 = vcmask 261120
      %v829 = vsel %vm828, %v824, 0.0
      %830 = vadd.xlane.f32.xlu0 %v829
      %v831 = vpop.xlane.xlu0 %830
      %v832 = vsel %vm828, %v825, 0.0
      %833 = vadd.xlane.f32.xlu0 %v832
      %v834 = vpop.xlane.xlu0 %833
      %v835 = vrcp.pop 32.0
      %v836 = vmul.f32 %v831, %v835
      %v837 = vmul.f32 %v834, %v835
      %v838 = vsub.f32 %v824, %v836
      %v839 = vsub.f32 %v825, %v837
      %v840 = vmul.f32 %v838, %v838
      %v841 = vmul.f32 %v839, %v839
      %v842 = vsel %vm828, %v840, 0.0
      %843 = vadd.xlane.f32.xlu0 %v842
      %v844 = vpop.xlane.xlu0 %843
      %v845 = vsel %vm828, %v841, 0.0
      %846 = vadd.xlane.f32.xlu0 %v845
      %v847 = vpop.xlane.xlu0 %846
      %v848 = vmul.f32 %v844, %v835
      %v849 = vmul.f32 %v847, %v835
      %v850 = vadd.f32 %v848, 1e-12
      %v851 = vadd.f32 %v849, 1e-12
      %v852 = vrsqrt.pop %v850
      %v853 = vrsqrt.pop %v851
      %v854 = vmul.f32 %v838, %v852
      %v855 = vmul.f32 %v839, %v853
      %v857 = vlaneseq
      %v858 = vshrl.u32 %v857, 7
      %v859 = vsub.s32 0, %v858
      %v860 = vrot.slane %v826, %v859
      %v862 = vmul.f32 %v854, %v860
      %v863 = vmul.f32 %v855, %v860
      %v865 = vlaneseq
      %v866 = vshrl.u32 %v865, 7
      %v867 = vsub.s32 0, %v866
      %v868 = vrot.slane %v827, %v867
      %v870 = vadd.f32 %v862, %v868
      %v871 = vadd.f32 %v863, %v868
      %v872 = vld [vmem:[%s743] sm:$0xff]
      %v873 = vld [vmem:[%s743 + $0x8] sm:$0xff]
      %v874 = vpack.c.bf16 %v871, %v870
      %v875 = vld [vmem:[%s755] sm:$0xf]
      %v876 = vld [vmem:[%s755 + $0x4] sm:$0xf]
      %v877 = vld [vmem:[%s755 + $0x8] sm:$0xf]
      %v878 = vld [vmem:[%s755 + $0xc] sm:$0xf]
      %v879 = vld [vmem:[%s760] sm:$0x1]
      %v881 = vlaneseq
      %v882 = vshrl.u32 %v881, 7
      %v883 = vsub.s32 0, %v882
      %v884 = vrot.slane %v879, %v883
      %v890 = vunpack.c.l.b16 %v875
      %v891 = vunpack.c.l.b16 %v876
      %v892 = vunpack.c.l.b16 %v877
      %v893 = vunpack.c.l.b16 %v878
      %v894 = vpack.c.b16 %v891, %v890
      %v895 = vpack.c.b16 %v893, %v892
      %v899 = vsel %vm828, %v874, 0
      %901 = vmatprep.subr.bf16.mxu0 0
      %902 = vmatpush1.bf16.msra.mxu0 0
      %903 = vmatprep.subr.bf16.mxu0 0
      %904 = vmatpush1.bf16.msra.mxu0 0
      %905 = vmatprep.subr.bf16.mxu0 0
      %906 = vmatpush1.bf16.msra.mxu0 0
      %907 = vmatprep.subr.bf16.mxu0 0
      %908 = vmatpush1.bf16.msra.mxu0 0
      %909 = vmatprep.subr.bf16.mxu0 0
      %910 = vmatpush1.bf16.msra.mxu0 0
      %911 = vmatprep.subr.bf16.mxu0 0
      %912 = vmatpush1.bf16.msra.mxu0 0
      %913 = vmatprep.subr.bf16.mxu0 0
      %914 = vmatpush1.bf16.msra.mxu0 %v895
      %915 = vmatprep.subr.bf16.mxu0 0
      %916 = vmatpush1.bf16.msra.mxu0 %v894
      %917 = vmatprep.subr.bf16.mxu0 0
      %918 = vmatpush2.bf16.msra.mxu0 0
      %919 = vmatprep.subr.bf16.mxu0 0
      %920 = vmatpush2.bf16.msra.mxu0 0
      %921 = vmatprep.subr.bf16.mxu0 0
      %922 = vmatpush2.bf16.msra.mxu0 0
      %923 = vmatprep.subr.bf16.mxu0 0
      %924 = vmatpush2.bf16.msra.mxu0 0
      %925 = vmatprep.subr.bf16.mxu0 0
      %926 = vmatpush2.bf16.msra.mxu0 0
      %927 = vmatprep.subr.bf16.mxu0 0
      %928 = vmatpush2.bf16.msra.mxu0 0
      %929 = vmatprep.subr.bf16.mxu0 0
      %930 = vmatpush2.bf16.msra.mxu0 0
      %931 = vmatprep.subr.bf16.mxu0 0
      %932 = vmatpush2.bf16.msra.mxu0 0
      %933 = vmatprep.mubr.bf16.mxu0 0
      %934 = vmatmul.mubr.bf16.gmra.mxu0 %v899
      %v935 = vpop.f32.mrf.mxu0
      %v936 = vadd.f32 %v884, %v935
      %v937 = vpop.f32.mrf.mxu0
      %v938 = vpop.f32.mrf.mxu0
      %v939 = vadd.f32 %v884, %v938
      %v940 = vpop.f32.mrf.mxu0
      %941 = vdwg.mxu0
      %944 = vrot.lane.b32.xlu0 %v936, 120
      %v945 = vpop.permute.xlu0 %944
      %946 = vrot.lane.b32.xlu0 %v939, 120
      %v947 = vpop.permute.xlu0 %946
      %950 = vrot.lane.b32.xlu0 %v936, 112
      %v951 = vpop.permute.xlu0 %950
      %952 = vrot.lane.b32.xlu0 %v939, 112
      %v953 = vpop.permute.xlu0 %952
      %956 = vrot.lane.b32.xlu0 %v936, 104
      %v957 = vpop.permute.xlu0 %956
      %958 = vrot.lane.b32.xlu0 %v939, 104
      %v959 = vpop.permute.xlu0 %958
      %v962 = vpack.c.bf16 %v936, %v936
      %v963 = vpack.c.bf16 %v939, %v939
      %v964 = vpack.c.bf16 %v945, %v945
      %v965 = vpack.c.bf16 %v947, %v947
      %v966 = vpack.c.bf16 %v951, %v951
      %v967 = vpack.c.bf16 %v953, %v953
      %v968 = vpack.c.bf16 %v957, %v957
      %v969 = vpack.c.bf16 %v959, %v959
      %971 = vrot.lane.b32.xlu0 %v962, 96
      %v972 = vpop.permute.xlu0 %971
      %vm973 = vcmask 64512
      %v975 = vsel %vm973, %v962, 0
      %v978 = vsel %vm973, %v972, 0
      %980 = vmatprep.subr.bf16.mxu0 0
      %981 = vmatpush1.bf16.xpose.msra.mxu0 0
      %982 = vmatprep.subr.bf16.mxu0 0
      %983 = vmatpush1.bf16.xpose.msra.mxu0 0
      %984 = vmatprep.subr.bf16.mxu0 0
      %985 = vmatpush1.bf16.xpose.msra.mxu0 0
      %986 = vmatprep.subr.bf16.mxu0 0
      %987 = vmatpush1.bf16.xpose.msra.mxu0 0
      %988 = vmatprep.subr.bf16.mxu0 0
      %989 = vmatpush1.bf16.xpose.msra.mxu0 0
      %990 = vmatprep.subr.bf16.mxu0 0
      %991 = vmatpush1.bf16.xpose.msra.mxu0 0
      %992 = vmatprep.subr.bf16.mxu0 0
      %993 = vmatpush1.bf16.xpose.msra.mxu0 0
      %994 = vmatprep.subr.bf16.mxu0 0
      %995 = vmatpush1.bf16.xpose.msra.mxu0 %v978
      %996 = vmatprep.subr.bf16.mxu0 0
      %997 = vmatpush2.bf16.xpose.msra.mxu0 0
      %998 = vmatprep.subr.bf16.mxu0 0
      %999 = vmatpush2.bf16.xpose.msra.mxu0 0
      %1000 = vmatprep.subr.bf16.mxu0 0
      %1001 = vmatpush2.bf16.xpose.msra.mxu0 0
      %1002 = vmatprep.subr.bf16.mxu0 0
      %1003 = vmatpush2.bf16.xpose.msra.mxu0 0
      %1004 = vmatprep.subr.bf16.mxu0 0
      %1005 = vmatpush2.bf16.xpose.msra.mxu0 0
      %1006 = vmatprep.subr.bf16.mxu0 0
      %1007 = vmatpush2.bf16.xpose.msra.mxu0 0
      %1008 = vmatprep.subr.bf16.mxu0 0
      %1009 = vmatpush2.bf16.xpose.msra.mxu0 0
      %1010 = vmatprep.subr.bf16.mxu0 0
      %1011 = vmatpush2.bf16.xpose.msra.mxu0 0
      %1012 = vmatprep.mubr.bf16.mxu0 0
      %1013 = vmatmul.mubr.bf16.gmra.mxu0 %v975
      %v1014 = vpop.f32.mrf.mxu0
      %v1015 = vadd.f32 %v872, %v1014
      %v1016 = vpop.f32.mrf.mxu0
      %v1017 = vpop.f32.mrf.mxu0
      %v1018 = vpop.f32.mrf.mxu0
      %1019 = vdwg.mxu0
      %1021 = vrot.lane.b32.xlu0 %v963, 96
      %v1022 = vpop.permute.xlu0 %1021
      %v1024 = vsel %vm973, %v963, 0
      %v1027 = vsel %vm973, %v1022, 0
      %1029 = vmatprep.subr.bf16.mxu0 0
      %1030 = vmatpush1.bf16.xpose.msra.mxu0 0
      %1031 = vmatprep.subr.bf16.mxu0 0
      %1032 = vmatpush1.bf16.xpose.msra.mxu0 0
      %1033 = vmatprep.subr.bf16.mxu0 0
      %1034 = vmatpush1.bf16.xpose.msra.mxu0 0
      %1035 = vmatprep.subr.bf16.mxu0 0
      %1036 = vmatpush1.bf16.xpose.msra.mxu0 0
      %1037 = vmatprep.subr.bf16.mxu0 0
      %1038 = vmatpush1.bf16.xpose.msra.mxu0 0
      %1039 = vmatprep.subr.bf16.mxu0 0
      %1040 = vmatpush1.bf16.xpose.msra.mxu0 0
      %1041 = vmatprep.subr.bf16.mxu0 0
      %1042 = vmatpush1.bf16.xpose.msra.mxu0 0
      %1043 = vmatprep.subr.bf16.mxu0 0
      %1044 = vmatpush1.bf16.xpose.msra.mxu0 %v1027
      %1045 = vmatprep.subr.bf16.mxu0 0
      %1046 = vmatpush2.bf16.xpose.msra.mxu0 0
      %1047 = vmatprep.subr.bf16.mxu0 0
      %1048 = vmatpush2.bf16.xpose.msra.mxu0 0
      %1049 = vmatprep.subr.bf16.mxu0 0
      %1050 = vmatpush2.bf16.xpose.msra.mxu0 0
      %1051 = vmatprep.subr.bf16.mxu0 0
      %1052 = vmatpush2.bf16.xpose.msra.mxu0 0
      %1053 = vmatprep.subr.bf16.mxu0 0
      %1054 = vmatpush2.bf16.xpose.msra.mxu0 0
      %1055 = vmatprep.subr.bf16.mxu0 0
      %1056 = vmatpush2.bf16.xpose.msra.mxu0 0
      %1057 = vmatprep.subr.bf16.mxu0 0
      %1058 = vmatpush2.bf16.xpose.msra.mxu0 0
      %1059 = vmatprep.subr.bf16.mxu0 0
      %1060 = vmatpush2.bf16.xpose.msra.mxu0 0
      %1061 = vmatprep.mubr.bf16.mxu0 0
      %1062 = vmatmul.mubr.bf16.gmra.mxu0 %v1024
      %v1063 = vpop.f32.mrf.mxu0
      %v1064 = vadd.f32 %v873, %v1063
      %v1065 = vpop.f32.mrf.mxu0
      %v1066 = vpop.f32.mrf.mxu0
      %v1067 = vpop.f32.mrf.mxu0
      %1068 = vdwg.mxu0
      %1070 = vrot.lane.b32.xlu0 %v964, 96
      %v1071 = vpop.permute.xlu0 %1070
      %v1073 = vsel %vm973, %v964, 0
      %v1076 = vsel %vm973, %v1071, 0
      %1078 = vmatprep.subr.bf16.mxu0 0
      %1079 = vmatpush1.bf16.xpose.msra.mxu0 0
      %1080 = vmatprep.subr.bf16.mxu0 0
      %1081 = vmatpush1.bf16.xpose.msra.mxu0 0
      %1082 = vmatprep.subr.bf16.mxu0 0
      %1083 = vmatpush1.bf16.xpose.msra.mxu0 0
      %1084 = vmatprep.subr.bf16.mxu0 0
      %1085 = vmatpush1.bf16.xpose.msra.mxu0 0
      %1086 = vmatprep.subr.bf16.mxu0 0
      %1087 = vmatpush1.bf16.xpose.msra.mxu0 0
      %1088 = vmatprep.subr.bf16.mxu0 0
      %1089 = vmatpush1.bf16.xpose.msra.mxu0 0
      %1090 = vmatprep.subr.bf16.mxu0 0
      %1091 = vmatpush1.bf16.xpose.msra.mxu0 0
      %1092 = vmatprep.subr.bf16.mxu0 0
      %1093 = vmatpush1.bf16.xpose.msra.mxu0 %v1076
      %1094 = vmatprep.subr.bf16.mxu0 0
      %1095 = vmatpush2.bf16.xpose.msra.mxu0 0
      %1096 = vmatprep.subr.bf16.mxu0 0
      %1097 = vmatpush2.bf16.xpose.msra.mxu0 0
      %1098 = vmatprep.subr.bf16.mxu0 0
      %1099 = vmatpush2.bf16.xpose.msra.mxu0 0
      %1100 = vmatprep.subr.bf16.mxu0 0
      %1101 = vmatpush2.bf16.xpose.msra.mxu0 0
      %1102 = vmatprep.subr.bf16.mxu0 0
      %1103 = vmatpush2.bf16.xpose.msra.mxu0 0
      %1104 = vmatprep.subr.bf16.mxu0 0
      %1105 = vmatpush2.bf16.xpose.msra.mxu0 0
      %1106 = vmatprep.subr.bf16.mxu0 0
      %1107 = vmatpush2.bf16.xpose.msra.mxu0 0
      %1108 = vmatprep.subr.bf16.mxu0 0
      %1109 = vmatpush2.bf16.xpose.msra.mxu0 0
      %1110 = vmatprep.mubr.bf16.mxu0 0
      %1111 = vmatmul.mubr.bf16.gmra.mxu0 %v1073
      %v1112 = vpop.f32.mrf.mxu0
      %v1113 = vadd.f32 %v872, %v1112
      %v1114 = vpop.f32.mrf.mxu0
      %v1115 = vpop.f32.mrf.mxu0
      %v1116 = vpop.f32.mrf.mxu0
      %1117 = vdwg.mxu0
      %1119 = vrot.lane.b32.xlu0 %v965, 96
      %v1120 = vpop.permute.xlu0 %1119
      %v1122 = vsel %vm973, %v965, 0
      %v1125 = vsel %vm973, %v1120, 0
      %1127 = vmatprep.subr.bf16.mxu0 0
      %1128 = vmatpush1.bf16.xpose.msra.mxu0 0
      %1129 = vmatprep.subr.bf16.mxu0 0
      %1130 = vmatpush1.bf16.xpose.msra.mxu0 0
      %1131 = vmatprep.subr.bf16.mxu0 0
      %1132 = vmatpush1.bf16.xpose.msra.mxu0 0
      %1133 = vmatprep.subr.bf16.mxu0 0
      %1134 = vmatpush1.bf16.xpose.msra.mxu0 0
      %1135 = vmatprep.subr.bf16.mxu0 0
      %1136 = vmatpush1.bf16.xpose.msra.mxu0 0
      %1137 = vmatprep.subr.bf16.mxu0 0
      %1138 = vmatpush1.bf16.xpose.msra.mxu0 0
      %1139 = vmatprep.subr.bf16.mxu0 0
      %1140 = vmatpush1.bf16.xpose.msra.mxu0 0
      %1141 = vmatprep.subr.bf16.mxu0 0
      %1142 = vmatpush1.bf16.xpose.msra.mxu0 %v1125
      %1143 = vmatprep.subr.bf16.mxu0 0
      %1144 = vmatpush2.bf16.xpose.msra.mxu0 0
      %1145 = vmatprep.subr.bf16.mxu0 0
      %1146 = vmatpush2.bf16.xpose.msra.mxu0 0
      %1147 = vmatprep.subr.bf16.mxu0 0
      %1148 = vmatpush2.bf16.xpose.msra.mxu0 0
      %1149 = vmatprep.subr.bf16.mxu0 0
      %1150 = vmatpush2.bf16.xpose.msra.mxu0 0
      %1151 = vmatprep.subr.bf16.mxu0 0
      %1152 = vmatpush2.bf16.xpose.msra.mxu0 0
      %1153 = vmatprep.subr.bf16.mxu0 0
      %1154 = vmatpush2.bf16.xpose.msra.mxu0 0
      %1155 = vmatprep.subr.bf16.mxu0 0
      %1156 = vmatpush2.bf16.xpose.msra.mxu0 0
      %1157 = vmatprep.subr.bf16.mxu0 0
      %1158 = vmatpush2.bf16.xpose.msra.mxu0 0
      %1159 = vmatprep.mubr.bf16.mxu0 0
      %1160 = vmatmul.mubr.bf16.gmra.mxu0 %v1122
      %v1161 = vpop.f32.mrf.mxu0
      %v1162 = vadd.f32 %v873, %v1161
      %v1163 = vpop.f32.mrf.mxu0
      %v1164 = vpop.f32.mrf.mxu0
      %v1165 = vpop.f32.mrf.mxu0
      %1166 = vdwg.mxu0
      %1168 = vrot.lane.b32.xlu0 %v966, 96
      %v1169 = vpop.permute.xlu0 %1168
      %v1171 = vsel %vm973, %v966, 0
      %v1174 = vsel %vm973, %v1169, 0
      %1176 = vmatprep.subr.bf16.mxu0 0
      %1177 = vmatpush1.bf16.xpose.msra.mxu0 0
      %1178 = vmatprep.subr.bf16.mxu0 0
      %1179 = vmatpush1.bf16.xpose.msra.mxu0 0
      %1180 = vmatprep.subr.bf16.mxu0 0
      %1181 = vmatpush1.bf16.xpose.msra.mxu0 0
      %1182 = vmatprep.subr.bf16.mxu0 0
      %1183 = vmatpush1.bf16.xpose.msra.mxu0 0
      %1184 = vmatprep.subr.bf16.mxu0 0
      %1185 = vmatpush1.bf16.xpose.msra.mxu0 0
      %1186 = vmatprep.subr.bf16.mxu0 0
      %1187 = vmatpush1.bf16.xpose.msra.mxu0 0
      %1188 = vmatprep.subr.bf16.mxu0 0
      %1189 = vmatpush1.bf16.xpose.msra.mxu0 0
      %1190 = vmatprep.subr.bf16.mxu0 0
      %1191 = vmatpush1.bf16.xpose.msra.mxu0 %v1174
      %1192 = vmatprep.subr.bf16.mxu0 0
      %1193 = vmatpush2.bf16.xpose.msra.mxu0 0
      %1194 = vmatprep.subr.bf16.mxu0 0
      %1195 = vmatpush2.bf16.xpose.msra.mxu0 0
      %1196 = vmatprep.subr.bf16.mxu0 0
      %1197 = vmatpush2.bf16.xpose.msra.mxu0 0
      %1198 = vmatprep.subr.bf16.mxu0 0
      %1199 = vmatpush2.bf16.xpose.msra.mxu0 0
      %1200 = vmatprep.subr.bf16.mxu0 0
      %1201 = vmatpush2.bf16.xpose.msra.mxu0 0
      %1202 = vmatprep.subr.bf16.mxu0 0
      %1203 = vmatpush2.bf16.xpose.msra.mxu0 0
      %1204 = vmatprep.subr.bf16.mxu0 0
      %1205 = vmatpush2.bf16.xpose.msra.mxu0 0
      %1206 = vmatprep.subr.bf16.mxu0 0
      %1207 = vmatpush2.bf16.xpose.msra.mxu0 0
      %1208 = vmatprep.mubr.bf16.mxu0 0
      %1209 = vmatmul.mubr.bf16.gmra.mxu0 %v1171
      %v1210 = vpop.f32.mrf.mxu0
      %v1211 = vadd.f32 %v872, %v1210
      %v1212 = vpop.f32.mrf.mxu0
      %v1213 = vpop.f32.mrf.mxu0
      %v1214 = vpop.f32.mrf.mxu0
      %1215 = vdwg.mxu0
      %1217 = vrot.lane.b32.xlu0 %v967, 96
      %v1218 = vpop.permute.xlu0 %1217
      %v1220 = vsel %vm973, %v967, 0
      %v1223 = vsel %vm973, %v1218, 0
      %1225 = vmatprep.subr.bf16.mxu0 0
      %1226 = vmatpush1.bf16.xpose.msra.mxu0 0
      %1227 = vmatprep.subr.bf16.mxu0 0
      %1228 = vmatpush1.bf16.xpose.msra.mxu0 0
      %1229 = vmatprep.subr.bf16.mxu0 0
      %1230 = vmatpush1.bf16.xpose.msra.mxu0 0
      %1231 = vmatprep.subr.bf16.mxu0 0
      %1232 = vmatpush1.bf16.xpose.msra.mxu0 0
      %1233 = vmatprep.subr.bf16.mxu0 0
      %1234 = vmatpush1.bf16.xpose.msra.mxu0 0
      %1235 = vmatprep.subr.bf16.mxu0 0
      %1236 = vmatpush1.bf16.xpose.msra.mxu0 0
      %1237 = vmatprep.subr.bf16.mxu0 0
      %1238 = vmatpush1.bf16.xpose.msra.mxu0 0
      %1239 = vmatprep.subr.bf16.mxu0 0
      %1240 = vmatpush1.bf16.xpose.msra.mxu0 %v1223
      %1241 = vmatprep.subr.bf16.mxu0 0
      %1242 = vmatpush2.bf16.xpose.msra.mxu0 0
      %1243 = vmatprep.subr.bf16.mxu0 0
      %1244 = vmatpush2.bf16.xpose.msra.mxu0 0
      %1245 = vmatprep.subr.bf16.mxu0 0
      %1246 = vmatpush2.bf16.xpose.msra.mxu0 0
      %1247 = vmatprep.subr.bf16.mxu0 0
      %1248 = vmatpush2.bf16.xpose.msra.mxu0 0
      %1249 = vmatprep.subr.bf16.mxu0 0
      %1250 = vmatpush2.bf16.xpose.msra.mxu0 0
      %1251 = vmatprep.subr.bf16.mxu0 0
      %1252 = vmatpush2.bf16.xpose.msra.mxu0 0
      %1253 = vmatprep.subr.bf16.mxu0 0
      %1254 = vmatpush2.bf16.xpose.msra.mxu0 0
      %1255 = vmatprep.subr.bf16.mxu0 0
      %1256 = vmatpush2.bf16.xpose.msra.mxu0 0
      %1257 = vmatprep.mubr.bf16.mxu0 0
      %1258 = vmatmul.mubr.bf16.gmra.mxu0 %v1220
      %v1259 = vpop.f32.mrf.mxu0
      %v1260 = vadd.f32 %v873, %v1259
      %v1261 = vpop.f32.mrf.mxu0
      %v1262 = vpop.f32.mrf.mxu0
      %v1263 = vpop.f32.mrf.mxu0
      %1264 = vdwg.mxu0
      %1266 = vrot.lane.b32.xlu0 %v968, 96
      %v1267 = vpop.permute.xlu0 %1266
      %v1269 = vsel %vm973, %v968, 0
      %v1272 = vsel %vm973, %v1267, 0
      %1274 = vmatprep.subr.bf16.mxu0 0
      %1275 = vmatpush1.bf16.xpose.msra.mxu0 0
      %1276 = vmatprep.subr.bf16.mxu0 0
      %1277 = vmatpush1.bf16.xpose.msra.mxu0 0
      %1278 = vmatprep.subr.bf16.mxu0 0
      %1279 = vmatpush1.bf16.xpose.msra.mxu0 0
      %1280 = vmatprep.subr.bf16.mxu0 0
      %1281 = vmatpush1.bf16.xpose.msra.mxu0 0
      %1282 = vmatprep.subr.bf16.mxu0 0
      %1283 = vmatpush1.bf16.xpose.msra.mxu0 0
      %1284 = vmatprep.subr.bf16.mxu0 0
      %1285 = vmatpush1.bf16.xpose.msra.mxu0 0
      %1286 = vmatprep.subr.bf16.mxu0 0
      %1287 = vmatpush1.bf16.xpose.msra.mxu0 0
      %1288 = vmatprep.subr.bf16.mxu0 0
      %1289 = vmatpush1.bf16.xpose.msra.mxu0 %v1272
      %1290 = vmatprep.subr.bf16.mxu0 0
      %1291 = vmatpush2.bf16.xpose.msra.mxu0 0
      %1292 = vmatprep.subr.bf16.mxu0 0
      %1293 = vmatpush2.bf16.xpose.msra.mxu0 0
      %1294 = vmatprep.subr.bf16.mxu0 0
      %1295 = vmatpush2.bf16.xpose.msra.mxu0 0
      %1296 = vmatprep.subr.bf16.mxu0 0
      %1297 = vmatpush2.bf16.xpose.msra.mxu0 0
      %1298 = vmatprep.subr.bf16.mxu0 0
      %1299 = vmatpush2.bf16.xpose.msra.mxu0 0
      %1300 = vmatprep.subr.bf16.mxu0 0
      %1301 = vmatpush2.bf16.xpose.msra.mxu0 0
      %1302 = vmatprep.subr.bf16.mxu0 0
      %1303 = vmatpush2.bf16.xpose.msra.mxu0 0
      %1304 = vmatprep.subr.bf16.mxu0 0
      %1305 = vmatpush2.bf16.xpose.msra.mxu0 0
      %1306 = vmatprep.mubr.bf16.mxu0 0
      %1307 = vmatmul.mubr.bf16.gmra.mxu0 %v1269
      %v1308 = vpop.f32.mrf.mxu0
      %v1309 = vadd.f32 %v872, %v1308
      %v1310 = vpop.f32.mrf.mxu0
      %v1311 = vpop.f32.mrf.mxu0
      %v1312 = vpop.f32.mrf.mxu0
      %1313 = vdwg.mxu0
      %1315 = vrot.lane.b32.xlu0 %v969, 96
      %v1316 = vpop.permute.xlu0 %1315
      %v1318 = vsel %vm973, %v969, 0
      %v1321 = vsel %vm973, %v1316, 0
      %1323 = vmatprep.subr.bf16.mxu0 0
      %1324 = vmatpush1.bf16.xpose.msra.mxu0 0
      %1325 = vmatprep.subr.bf16.mxu0 0
      %1326 = vmatpush1.bf16.xpose.msra.mxu0 0
      %1327 = vmatprep.subr.bf16.mxu0 0
      %1328 = vmatpush1.bf16.xpose.msra.mxu0 0
      %1329 = vmatprep.subr.bf16.mxu0 0
      %1330 = vmatpush1.bf16.xpose.msra.mxu0 0
      %1331 = vmatprep.subr.bf16.mxu0 0
      %1332 = vmatpush1.bf16.xpose.msra.mxu0 0
      %1333 = vmatprep.subr.bf16.mxu0 0
      %1334 = vmatpush1.bf16.xpose.msra.mxu0 0
      %1335 = vmatprep.subr.bf16.mxu0 0
      %1336 = vmatpush1.bf16.xpose.msra.mxu0 0
      %1337 = vmatprep.subr.bf16.mxu0 0
      %1338 = vmatpush1.bf16.xpose.msra.mxu0 %v1321
      %1339 = vmatprep.subr.bf16.mxu0 0
      %1340 = vmatpush2.bf16.xpose.msra.mxu0 0
      %1341 = vmatprep.subr.bf16.mxu0 0
      %1342 = vmatpush2.bf16.xpose.msra.mxu0 0
      %1343 = vmatprep.subr.bf16.mxu0 0
      %1344 = vmatpush2.bf16.xpose.msra.mxu0 0
      %1345 = vmatprep.subr.bf16.mxu0 0
      %1346 = vmatpush2.bf16.xpose.msra.mxu0 0
      %1347 = vmatprep.subr.bf16.mxu0 0
      %1348 = vmatpush2.bf16.xpose.msra.mxu0 0
      %1349 = vmatprep.subr.bf16.mxu0 0
      %1350 = vmatpush2.bf16.xpose.msra.mxu0 0
      %1351 = vmatprep.subr.bf16.mxu0 0
      %1352 = vmatpush2.bf16.xpose.msra.mxu0 0
      %1353 = vmatprep.subr.bf16.mxu0 0
      %1354 = vmatpush2.bf16.xpose.msra.mxu0 0
      %1355 = vmatprep.mubr.bf16.mxu0 0
      %1356 = vmatmul.mubr.bf16.gmra.mxu0 %v1318
      %v1357 = vpop.f32.mrf.mxu0
      %v1358 = vadd.f32 %v873, %v1357
      %v1359 = vpop.f32.mrf.mxu0
      %v1360 = vpop.f32.mrf.mxu0
      %v1361 = vpop.f32.mrf.mxu0
      %1362 = vdwg.mxu0
      %v1363 = vsel %vm973, %v1015, -inf
      %1364 = vmax.xlane.f32.xlu0 %v1363
      %v1365 = vpop.xlane.xlu0 %1364
      %v1366 = vsel %vm973, %v1064, -inf
      %1367 = vmax.xlane.f32.xlu0 %v1366
      %v1368 = vpop.xlane.xlu0 %1367
      %v1369 = vsel %vm973, %v1113, -inf
      %1370 = vmax.xlane.f32.xlu0 %v1369
      %v1371 = vpop.xlane.xlu0 %1370
      %v1372 = vsel %vm973, %v1162, -inf
      %1373 = vmax.xlane.f32.xlu0 %v1372
      %v1374 = vpop.xlane.xlu0 %1373
      %v1375 = vsel %vm973, %v1211, -inf
      %1376 = vmax.xlane.f32.xlu0 %v1375
      %v1377 = vpop.xlane.xlu0 %1376
      %v1378 = vsel %vm973, %v1260, -inf
      %1379 = vmax.xlane.f32.xlu0 %v1378
      %v1380 = vpop.xlane.xlu0 %1379
      %v1381 = vsel %vm973, %v1309, -inf
      %1382 = vmax.xlane.f32.xlu0 %v1381
      %v1383 = vpop.xlane.xlu0 %1382
      %v1384 = vsel %vm973, %v1358, -inf
      %1385 = vmax.xlane.f32.xlu0 %v1384
      %v1386 = vpop.xlane.xlu0 %1385
      %v1387 = vsub.f32 %v1015, %v1365
      %v1388 = vsub.f32 %v1064, %v1368
      %v1389 = vsub.f32 %v1113, %v1371
      %v1390 = vsub.f32 %v1162, %v1374
      %v1391 = vsub.f32 %v1211, %v1377
      %v1392 = vsub.f32 %v1260, %v1380
      %v1393 = vsub.f32 %v1309, %v1383
      %v1394 = vsub.f32 %v1358, %v1386
      %v1395 = vmul.f32 %v1387, 1.442695
      %v1396 = vpow.pop %v1395
      %v1397 = vmul.f32 %v1388, 1.442695
      %v1398 = vpow.pop %v1397
      %v1399 = vmul.f32 %v1389, 1.442695
      %v1400 = vpow.pop %v1399
      %v1401 = vmul.f32 %v1390, 1.442695
      %v1402 = vpow.pop %v1401
      %v1403 = vmul.f32 %v1391, 1.442695
      %v1404 = vpow.pop %v1403
      %v1405 = vmul.f32 %v1392, 1.442695
      %v1406 = vpow.pop %v1405
      %v1407 = vmul.f32 %v1393, 1.442695
      %v1408 = vpow.pop %v1407
      %v1409 = vmul.f32 %v1394, 1.442695
      %v1410 = vpow.pop %v1409
      %v1411 = vsel %vm973, %v1396, 0.0
      %1412 = vadd.xlane.f32.xlu0 %v1411
      %v1413 = vpop.xlane.xlu0 %1412
      %v1414 = vsel %vm973, %v1398, 0.0
      %1415 = vadd.xlane.f32.xlu0 %v1414
      %v1416 = vpop.xlane.xlu0 %1415
      %v1417 = vsel %vm973, %v1400, 0.0
      %1418 = vadd.xlane.f32.xlu0 %v1417
      %v1419 = vpop.xlane.xlu0 %1418
      %v1420 = vsel %vm973, %v1402, 0.0
      %1421 = vadd.xlane.f32.xlu0 %v1420
      %v1422 = vpop.xlane.xlu0 %1421
      %v1423 = vsel %vm973, %v1404, 0.0
      %1424 = vadd.xlane.f32.xlu0 %v1423
      %v1425 = vpop.xlane.xlu0 %1424
      %v1426 = vsel %vm973, %v1406, 0.0
      %1427 = vadd.xlane.f32.xlu0 %v1426
      %v1428 = vpop.xlane.xlu0 %1427
      %v1429 = vsel %vm973, %v1408, 0.0
      %1430 = vadd.xlane.f32.xlu0 %v1429
      %v1431 = vpop.xlane.xlu0 %1430
      %v1432 = vsel %vm973, %v1410, 0.0
      %1433 = vadd.xlane.f32.xlu0 %v1432
      %v1434 = vpop.xlane.xlu0 %1433
      %v1435 = vrcp.pop %v1413
      %v1436 = vrcp.pop %v1416
      %v1437 = vrcp.pop %v1419
      %v1438 = vrcp.pop %v1422
      %v1439 = vrcp.pop %v1425
      %v1440 = vrcp.pop %v1428
      %v1441 = vrcp.pop %v1431
      %v1442 = vrcp.pop %v1434
      %v1443 = vmul.f32 %v1396, %v1435
      %v1444 = vmul.f32 %v1398, %v1436
      %v1445 = vmul.f32 %v1400, %v1437
      %v1446 = vmul.f32 %v1402, %v1438
      %v1447 = vmul.f32 %v1404, %v1439
      %v1448 = vmul.f32 %v1406, %v1440
      %v1449 = vmul.f32 %v1408, %v1441
      %v1450 = vmul.f32 %v1410, %v1442
      %v1451 = vpack.c.bf16 %v1443, %v1443
      %v1452 = vpack.c.bf16 %v1444, %v1444
      %v1453 = vpack.c.bf16 %v1445, %v1445
      %v1454 = vpack.c.bf16 %v1446, %v1446
      %v1455 = vpack.c.bf16 %v1447, %v1447
      %v1456 = vpack.c.bf16 %v1448, %v1448
      %v1457 = vpack.c.bf16 %v1449, %v1449
      %v1458 = vpack.c.bf16 %v1450, %v1450
      %1459 = vrot.lane.b32.xlu0 %v962, 64
      %v1460 = vpop.permute.xlu0 %1459
      %v1462 = vsel %vm973, %v1451, 0
      %vm1464 = vcmask 1043456
      %v1466 = vsel %vm1464, %v1460, 0
      %1468 = vmatprep.subr.bf16.mxu0 0
      %1469 = vmatpush1.bf16.msra.mxu0 0
      %1470 = vmatprep.subr.bf16.mxu0 0
      %1471 = vmatpush1.bf16.msra.mxu0 0
      %1472 = vmatprep.subr.bf16.mxu0 0
      %1473 = vmatpush1.bf16.msra.mxu0 0
      %1474 = vmatprep.subr.bf16.mxu0 0
      %1475 = vmatpush1.bf16.msra.mxu0 0
      %1476 = vmatprep.subr.bf16.mxu0 0
      %1477 = vmatpush1.bf16.msra.mxu0 0
      %1478 = vmatprep.subr.bf16.mxu0 0
      %1479 = vmatpush1.bf16.msra.mxu0 0
      %1480 = vmatprep.subr.bf16.mxu0 0
      %1481 = vmatpush1.bf16.msra.mxu0 0
      %1482 = vmatprep.subr.bf16.mxu0 0
      %1483 = vmatpush1.bf16.msra.mxu0 %v1466
      %1484 = vmatprep.subr.bf16.mxu0 0
      %1485 = vmatpush2.bf16.msra.mxu0 0
      %1486 = vmatprep.subr.bf16.mxu0 0
      %1487 = vmatpush2.bf16.msra.mxu0 0
      %1488 = vmatprep.subr.bf16.mxu0 0
      %1489 = vmatpush2.bf16.msra.mxu0 0
      %1490 = vmatprep.subr.bf16.mxu0 0
      %1491 = vmatpush2.bf16.msra.mxu0 0
      %1492 = vmatprep.subr.bf16.mxu0 0
      %1493 = vmatpush2.bf16.msra.mxu0 0
      %1494 = vmatprep.subr.bf16.mxu0 0
      %1495 = vmatpush2.bf16.msra.mxu0 0
      %1496 = vmatprep.subr.bf16.mxu0 0
      %1497 = vmatpush2.bf16.msra.mxu0 0
      %1498 = vmatprep.subr.bf16.mxu0 0
      %1499 = vmatpush2.bf16.msra.mxu0 0
      %1500 = vmatprep.mubr.bf16.mxu0 0
      %1501 = vmatmul.mubr.bf16.gmra.mxu0 %v1462
      %v1502 = vpop.f32.mrf.mxu0
      %v1503 = vadd.f32 0.0, %v1502
      %v1504 = vpop.f32.mrf.mxu0
      %v1505 = vpop.f32.mrf.mxu0
      %v1506 = vpop.f32.mrf.mxu0
      %1507 = vdwg.mxu0
      %1508 = vrot.lane.b32.xlu0 %v963, 64
      %v1509 = vpop.permute.xlu0 %1508
      %v1511 = vsel %vm973, %v1452, 0
      %v1514 = vsel %vm1464, %v1509, 0
      %1516 = vmatprep.subr.bf16.mxu0 0
      %1517 = vmatpush1.bf16.msra.mxu0 0
      %1518 = vmatprep.subr.bf16.mxu0 0
      %1519 = vmatpush1.bf16.msra.mxu0 0
      %1520 = vmatprep.subr.bf16.mxu0 0
      %1521 = vmatpush1.bf16.msra.mxu0 0
      %1522 = vmatprep.subr.bf16.mxu0 0
      %1523 = vmatpush1.bf16.msra.mxu0 0
      %1524 = vmatprep.subr.bf16.mxu0 0
      %1525 = vmatpush1.bf16.msra.mxu0 0
      %1526 = vmatprep.subr.bf16.mxu0 0
      %1527 = vmatpush1.bf16.msra.mxu0 0
      %1528 = vmatprep.subr.bf16.mxu0 0
      %1529 = vmatpush1.bf16.msra.mxu0 0
      %1530 = vmatprep.subr.bf16.mxu0 0
      %1531 = vmatpush1.bf16.msra.mxu0 %v1514
      %1532 = vmatprep.subr.bf16.mxu0 0
      %1533 = vmatpush2.bf16.msra.mxu0 0
      %1534 = vmatprep.subr.bf16.mxu0 0
      %1535 = vmatpush2.bf16.msra.mxu0 0
      %1536 = vmatprep.subr.bf16.mxu0 0
      %1537 = vmatpush2.bf16.msra.mxu0 0
      %1538 = vmatprep.subr.bf16.mxu0 0
      %1539 = vmatpush2.bf16.msra.mxu0 0
      %1540 = vmatprep.subr.bf16.mxu0 0
      %1541 = vmatpush2.bf16.msra.mxu0 0
      %1542 = vmatprep.subr.bf16.mxu0 0
      %1543 = vmatpush2.bf16.msra.mxu0 0
      %1544 = vmatprep.subr.bf16.mxu0 0
      %1545 = vmatpush2.bf16.msra.mxu0 0
      %1546 = vmatprep.subr.bf16.mxu0 0
      %1547 = vmatpush2.bf16.msra.mxu0 0
      %1548 = vmatprep.mubr.bf16.mxu0 0
      %1549 = vmatmul.mubr.bf16.gmra.mxu0 %v1511
      %v1550 = vpop.f32.mrf.mxu0
      %v1551 = vadd.f32 0.0, %v1550
      %v1552 = vpop.f32.mrf.mxu0
      %v1553 = vpop.f32.mrf.mxu0
      %v1554 = vpop.f32.mrf.mxu0
      %1555 = vdwg.mxu0
      %1556 = vrot.lane.b32.xlu0 %v964, 64
      %v1557 = vpop.permute.xlu0 %1556
      %v1559 = vsel %vm973, %v1453, 0
      %v1562 = vsel %vm1464, %v1557, 0
      %1564 = vmatprep.subr.bf16.mxu0 0
      %1565 = vmatpush1.bf16.msra.mxu0 0
      %1566 = vmatprep.subr.bf16.mxu0 0
      %1567 = vmatpush1.bf16.msra.mxu0 0
      %1568 = vmatprep.subr.bf16.mxu0 0
      %1569 = vmatpush1.bf16.msra.mxu0 0
      %1570 = vmatprep.subr.bf16.mxu0 0
      %1571 = vmatpush1.bf16.msra.mxu0 0
      %1572 = vmatprep.subr.bf16.mxu0 0
      %1573 = vmatpush1.bf16.msra.mxu0 0
      %1574 = vmatprep.subr.bf16.mxu0 0
      %1575 = vmatpush1.bf16.msra.mxu0 0
      %1576 = vmatprep.subr.bf16.mxu0 0
      %1577 = vmatpush1.bf16.msra.mxu0 0
      %1578 = vmatprep.subr.bf16.mxu0 0
      %1579 = vmatpush1.bf16.msra.mxu0 %v1562
      %1580 = vmatprep.subr.bf16.mxu0 0
      %1581 = vmatpush2.bf16.msra.mxu0 0
      %1582 = vmatprep.subr.bf16.mxu0 0
      %1583 = vmatpush2.bf16.msra.mxu0 0
      %1584 = vmatprep.subr.bf16.mxu0 0
      %1585 = vmatpush2.bf16.msra.mxu0 0
      %1586 = vmatprep.subr.bf16.mxu0 0
      %1587 = vmatpush2.bf16.msra.mxu0 0
      %1588 = vmatprep.subr.bf16.mxu0 0
      %1589 = vmatpush2.bf16.msra.mxu0 0
      %1590 = vmatprep.subr.bf16.mxu0 0
      %1591 = vmatpush2.bf16.msra.mxu0 0
      %1592 = vmatprep.subr.bf16.mxu0 0
      %1593 = vmatpush2.bf16.msra.mxu0 0
      %1594 = vmatprep.subr.bf16.mxu0 0
      %1595 = vmatpush2.bf16.msra.mxu0 0
      %1596 = vmatprep.mubr.bf16.mxu0 0
      %1597 = vmatmul.mubr.bf16.gmra.mxu0 %v1559
      %v1598 = vpop.f32.mrf.mxu0
      %v1599 = vadd.f32 0.0, %v1598
      %v1600 = vpop.f32.mrf.mxu0
      %v1601 = vpop.f32.mrf.mxu0
      %v1602 = vpop.f32.mrf.mxu0
      %1603 = vdwg.mxu0
      %1604 = vrot.lane.b32.xlu0 %v965, 64
      %v1605 = vpop.permute.xlu0 %1604
      %v1607 = vsel %vm973, %v1454, 0
      %v1610 = vsel %vm1464, %v1605, 0
      %1612 = vmatprep.subr.bf16.mxu0 0
      %1613 = vmatpush1.bf16.msra.mxu0 0
      %1614 = vmatprep.subr.bf16.mxu0 0
      %1615 = vmatpush1.bf16.msra.mxu0 0
      %1616 = vmatprep.subr.bf16.mxu0 0
      %1617 = vmatpush1.bf16.msra.mxu0 0
      %1618 = vmatprep.subr.bf16.mxu0 0
      %1619 = vmatpush1.bf16.msra.mxu0 0
      %1620 = vmatprep.subr.bf16.mxu0 0
      %1621 = vmatpush1.bf16.msra.mxu0 0
      %1622 = vmatprep.subr.bf16.mxu0 0
      %1623 = vmatpush1.bf16.msra.mxu0 0
      %1624 = vmatprep.subr.bf16.mxu0 0
      %1625 = vmatpush1.bf16.msra.mxu0 0
      %1626 = vmatprep.subr.bf16.mxu0 0
      %1627 = vmatpush1.bf16.msra.mxu0 %v1610
      %1628 = vmatprep.subr.bf16.mxu0 0
      %1629 = vmatpush2.bf16.msra.mxu0 0
      %1630 = vmatprep.subr.bf16.mxu0 0
      %1631 = vmatpush2.bf16.msra.mxu0 0
      %1632 = vmatprep.subr.bf16.mxu0 0
      %1633 = vmatpush2.bf16.msra.mxu0 0
      %1634 = vmatprep.subr.bf16.mxu0 0
      %1635 = vmatpush2.bf16.msra.mxu0 0
      %1636 = vmatprep.subr.bf16.mxu0 0
      %1637 = vmatpush2.bf16.msra.mxu0 0
      %1638 = vmatprep.subr.bf16.mxu0 0
      %1639 = vmatpush2.bf16.msra.mxu0 0
      %1640 = vmatprep.subr.bf16.mxu0 0
      %1641 = vmatpush2.bf16.msra.mxu0 0
      %1642 = vmatprep.subr.bf16.mxu0 0
      %1643 = vmatpush2.bf16.msra.mxu0 0
      %1644 = vmatprep.mubr.bf16.mxu0 0
      %1645 = vmatmul.mubr.bf16.gmra.mxu0 %v1607
      %v1646 = vpop.f32.mrf.mxu0
      %v1647 = vadd.f32 0.0, %v1646
      %v1648 = vpop.f32.mrf.mxu0
      %v1649 = vpop.f32.mrf.mxu0
      %v1650 = vpop.f32.mrf.mxu0
      %1651 = vdwg.mxu0
      %1652 = vrot.lane.b32.xlu0 %v966, 64
      %v1653 = vpop.permute.xlu0 %1652
      %v1655 = vsel %vm973, %v1455, 0
      %v1658 = vsel %vm1464, %v1653, 0
      %1660 = vmatprep.subr.bf16.mxu0 0
      %1661 = vmatpush1.bf16.msra.mxu0 0
      %1662 = vmatprep.subr.bf16.mxu0 0
      %1663 = vmatpush1.bf16.msra.mxu0 0
      %1664 = vmatprep.subr.bf16.mxu0 0
      %1665 = vmatpush1.bf16.msra.mxu0 0
      %1666 = vmatprep.subr.bf16.mxu0 0
      %1667 = vmatpush1.bf16.msra.mxu0 0
      %1668 = vmatprep.subr.bf16.mxu0 0
      %1669 = vmatpush1.bf16.msra.mxu0 0
      %1670 = vmatprep.subr.bf16.mxu0 0
      %1671 = vmatpush1.bf16.msra.mxu0 0
      %1672 = vmatprep.subr.bf16.mxu0 0
      %1673 = vmatpush1.bf16.msra.mxu0 0
      %1674 = vmatprep.subr.bf16.mxu0 0
      %1675 = vmatpush1.bf16.msra.mxu0 %v1658
      %1676 = vmatprep.subr.bf16.mxu0 0
      %1677 = vmatpush2.bf16.msra.mxu0 0
      %1678 = vmatprep.subr.bf16.mxu0 0
      %1679 = vmatpush2.bf16.msra.mxu0 0
      %1680 = vmatprep.subr.bf16.mxu0 0
      %1681 = vmatpush2.bf16.msra.mxu0 0
      %1682 = vmatprep.subr.bf16.mxu0 0
      %1683 = vmatpush2.bf16.msra.mxu0 0
      %1684 = vmatprep.subr.bf16.mxu0 0
      %1685 = vmatpush2.bf16.msra.mxu0 0
      %1686 = vmatprep.subr.bf16.mxu0 0
      %1687 = vmatpush2.bf16.msra.mxu0 0
      %1688 = vmatprep.subr.bf16.mxu0 0
      %1689 = vmatpush2.bf16.msra.mxu0 0
      %1690 = vmatprep.subr.bf16.mxu0 0
      %1691 = vmatpush2.bf16.msra.mxu0 0
      %1692 = vmatprep.mubr.bf16.mxu0 0
      %1693 = vmatmul.mubr.bf16.gmra.mxu0 %v1655
      %v1694 = vpop.f32.mrf.mxu0
      %v1695 = vadd.f32 0.0, %v1694
      %v1696 = vpop.f32.mrf.mxu0
      %v1697 = vpop.f32.mrf.mxu0
      %v1698 = vpop.f32.mrf.mxu0
      %1699 = vdwg.mxu0
      %1700 = vrot.lane.b32.xlu0 %v967, 64
      %v1701 = vpop.permute.xlu0 %1700
      %v1703 = vsel %vm973, %v1456, 0
      %v1706 = vsel %vm1464, %v1701, 0
      %1708 = vmatprep.subr.bf16.mxu0 0
      %1709 = vmatpush1.bf16.msra.mxu0 0
      %1710 = vmatprep.subr.bf16.mxu0 0
      %1711 = vmatpush1.bf16.msra.mxu0 0
      %1712 = vmatprep.subr.bf16.mxu0 0
      %1713 = vmatpush1.bf16.msra.mxu0 0
      %1714 = vmatprep.subr.bf16.mxu0 0
      %1715 = vmatpush1.bf16.msra.mxu0 0
      %1716 = vmatprep.subr.bf16.mxu0 0
      %1717 = vmatpush1.bf16.msra.mxu0 0
      %1718 = vmatprep.subr.bf16.mxu0 0
      %1719 = vmatpush1.bf16.msra.mxu0 0
      %1720 = vmatprep.subr.bf16.mxu0 0
      %1721 = vmatpush1.bf16.msra.mxu0 0
      %1722 = vmatprep.subr.bf16.mxu0 0
      %1723 = vmatpush1.bf16.msra.mxu0 %v1706
      %1724 = vmatprep.subr.bf16.mxu0 0
      %1725 = vmatpush2.bf16.msra.mxu0 0
      %1726 = vmatprep.subr.bf16.mxu0 0
      %1727 = vmatpush2.bf16.msra.mxu0 0
      %1728 = vmatprep.subr.bf16.mxu0 0
      %1729 = vmatpush2.bf16.msra.mxu0 0
      %1730 = vmatprep.subr.bf16.mxu0 0
      %1731 = vmatpush2.bf16.msra.mxu0 0
      %1732 = vmatprep.subr.bf16.mxu0 0
      %1733 = vmatpush2.bf16.msra.mxu0 0
      %1734 = vmatprep.subr.bf16.mxu0 0
      %1735 = vmatpush2.bf16.msra.mxu0 0
      %1736 = vmatprep.subr.bf16.mxu0 0
      %1737 = vmatpush2.bf16.msra.mxu0 0
      %1738 = vmatprep.subr.bf16.mxu0 0
      %1739 = vmatpush2.bf16.msra.mxu0 0
      %1740 = vmatprep.mubr.bf16.mxu0 0
      %1741 = vmatmul.mubr.bf16.gmra.mxu0 %v1703
      %v1742 = vpop.f32.mrf.mxu0
      %v1743 = vadd.f32 0.0, %v1742
      %v1744 = vpop.f32.mrf.mxu0
      %v1745 = vpop.f32.mrf.mxu0
      %v1746 = vpop.f32.mrf.mxu0
      %1747 = vdwg.mxu0
      %1748 = vrot.lane.b32.xlu0 %v968, 64
      %v1749 = vpop.permute.xlu0 %1748
      %v1751 = vsel %vm973, %v1457, 0
      %v1754 = vsel %vm1464, %v1749, 0
      %1756 = vmatprep.subr.bf16.mxu0 0
      %1757 = vmatpush1.bf16.msra.mxu0 0
      %1758 = vmatprep.subr.bf16.mxu0 0
      %1759 = vmatpush1.bf16.msra.mxu0 0
      %1760 = vmatprep.subr.bf16.mxu0 0
      %1761 = vmatpush1.bf16.msra.mxu0 0
      %1762 = vmatprep.subr.bf16.mxu0 0
      %1763 = vmatpush1.bf16.msra.mxu0 0
      %1764 = vmatprep.subr.bf16.mxu0 0
      %1765 = vmatpush1.bf16.msra.mxu0 0
      %1766 = vmatprep.subr.bf16.mxu0 0
      %1767 = vmatpush1.bf16.msra.mxu0 0
      %1768 = vmatprep.subr.bf16.mxu0 0
      %1769 = vmatpush1.bf16.msra.mxu0 0
      %1770 = vmatprep.subr.bf16.mxu0 0
      %1771 = vmatpush1.bf16.msra.mxu0 %v1754
      %1772 = vmatprep.subr.bf16.mxu0 0
      %1773 = vmatpush2.bf16.msra.mxu0 0
      %1774 = vmatprep.subr.bf16.mxu0 0
      %1775 = vmatpush2.bf16.msra.mxu0 0
      %1776 = vmatprep.subr.bf16.mxu0 0
      %1777 = vmatpush2.bf16.msra.mxu0 0
      %1778 = vmatprep.subr.bf16.mxu0 0
      %1779 = vmatpush2.bf16.msra.mxu0 0
      %1780 = vmatprep.subr.bf16.mxu0 0
      %1781 = vmatpush2.bf16.msra.mxu0 0
      %1782 = vmatprep.subr.bf16.mxu0 0
      %1783 = vmatpush2.bf16.msra.mxu0 0
      %1784 = vmatprep.subr.bf16.mxu0 0
      %1785 = vmatpush2.bf16.msra.mxu0 0
      %1786 = vmatprep.subr.bf16.mxu0 0
      %1787 = vmatpush2.bf16.msra.mxu0 0
      %1788 = vmatprep.mubr.bf16.mxu0 0
      %1789 = vmatmul.mubr.bf16.gmra.mxu0 %v1751
      %v1790 = vpop.f32.mrf.mxu0
      %v1791 = vadd.f32 0.0, %v1790
      %v1792 = vpop.f32.mrf.mxu0
      %v1793 = vpop.f32.mrf.mxu0
      %v1794 = vpop.f32.mrf.mxu0
      %1795 = vdwg.mxu0
      %1796 = vrot.lane.b32.xlu0 %v969, 64
      %v1797 = vpop.permute.xlu0 %1796
      %v1799 = vsel %vm973, %v1458, 0
      %v1802 = vsel %vm1464, %v1797, 0
      %1804 = vmatprep.subr.bf16.mxu0 0
      %1805 = vmatpush1.bf16.msra.mxu0 0
      %1806 = vmatprep.subr.bf16.mxu0 0
      %1807 = vmatpush1.bf16.msra.mxu0 0
      %1808 = vmatprep.subr.bf16.mxu0 0
      %1809 = vmatpush1.bf16.msra.mxu0 0
      %1810 = vmatprep.subr.bf16.mxu0 0
      %1811 = vmatpush1.bf16.msra.mxu0 0
      %1812 = vmatprep.subr.bf16.mxu0 0
      %1813 = vmatpush1.bf16.msra.mxu0 0
      %1814 = vmatprep.subr.bf16.mxu0 0
      %1815 = vmatpush1.bf16.msra.mxu0 0
      %1816 = vmatprep.subr.bf16.mxu0 0
      %1817 = vmatpush1.bf16.msra.mxu0 0
      %1818 = vmatprep.subr.bf16.mxu0 0
      %1819 = vmatpush1.bf16.msra.mxu0 %v1802
      %1820 = vmatprep.subr.bf16.mxu0 0
      %1821 = vmatpush2.bf16.msra.mxu0 0
      %1822 = vmatprep.subr.bf16.mxu0 0
      %1823 = vmatpush2.bf16.msra.mxu0 0
      %1824 = vmatprep.subr.bf16.mxu0 0
      %1825 = vmatpush2.bf16.msra.mxu0 0
      %1826 = vmatprep.subr.bf16.mxu0 0
      %1827 = vmatpush2.bf16.msra.mxu0 0
      %1828 = vmatprep.subr.bf16.mxu0 0
      %1829 = vmatpush2.bf16.msra.mxu0 0
      %1830 = vmatprep.subr.bf16.mxu0 0
      %1831 = vmatpush2.bf16.msra.mxu0 0
      %1832 = vmatprep.subr.bf16.mxu0 0
      %1833 = vmatpush2.bf16.msra.mxu0 0
      %1834 = vmatprep.subr.bf16.mxu0 0
      %1835 = vmatpush2.bf16.msra.mxu0 0
      %1836 = vmatprep.mubr.bf16.mxu0 0
      %1837 = vmatmul.mubr.bf16.gmra.mxu0 %v1799
      %v1838 = vpop.f32.mrf.mxu0
      %v1839 = vadd.f32 0.0, %v1838
      %v1840 = vpop.f32.mrf.mxu0
      %v1841 = vpop.f32.mrf.mxu0
      %v1842 = vpop.f32.mrf.mxu0
      %1843 = vdwg.mxu0
      %1846 = vrot.lane.b32.xlu0 %v1599, 8
      %v1847 = vpop.permute.xlu0 %1846
      %1848 = vrot.lane.b32.xlu0 %v1647, 8
      %v1849 = vpop.permute.xlu0 %1848
      %1854 = vrot.lane.b32.xlu0 %v1695, 16
      %v1855 = vpop.permute.xlu0 %1854
      %1856 = vrot.lane.b32.xlu0 %v1743, 16
      %v1857 = vpop.permute.xlu0 %1856
      %1862 = vrot.lane.b32.xlu0 %v1791, 24
      %v1863 = vpop.permute.xlu0 %1862
      %1864 = vrot.lane.b32.xlu0 %v1839, 24
      %v1865 = vpop.permute.xlu0 %1864
      %v1868 = vsel %vm973, %v1503, %v1847
      %v1869 = vsel %vm973, %v1551, %v1849
      %vm1870 = vcmask 130048
      %v1871 = vsel %vm1870, %v1868, %v1855
      %v1872 = vsel %vm1870, %v1869, %v1857
      %vm1873 = vcmask 195584
      %v1874 = vsel %vm1873, %v1871, %v1863
      %v1875 = vsel %vm1873, %v1872, %v1865
      %v1876 = vpack.c.bf16 %v1875, %v1874
      %v1877 = vld [vmem:[%s767] sm:$0xf]
      %v1878 = vld [vmem:[%s767 + $0x4] sm:$0xf]
      %v1879 = vld [vmem:[%s767 + $0x8] sm:$0xf]
      %v1880 = vld [vmem:[%s767 + $0xc] sm:$0xf]
      %v1881 = vld [vmem:[%s772] sm:$0x1]
      %v1883 = vlaneseq
      %v1884 = vshrl.u32 %v1883, 7
      %v1885 = vsub.s32 0, %v1884
      %v1886 = vrot.slane %v1881, %v1885
      %v1892 = vunpack.c.l.b16 %v1877
      %v1893 = vunpack.c.l.b16 %v1878
      %v1894 = vunpack.c.l.b16 %v1879
      %v1895 = vunpack.c.l.b16 %v1880
      %v1896 = vpack.c.b16 %v1893, %v1892
      %v1897 = vpack.c.b16 %v1895, %v1894
      %v1901 = vsel %vm828, %v1876, 0
      %1903 = vmatprep.subr.bf16.mxu0 0
      %1904 = vmatpush1.bf16.msra.mxu0 0
      %1905 = vmatprep.subr.bf16.mxu0 0
      %1906 = vmatpush1.bf16.msra.mxu0 0
      %1907 = vmatprep.subr.bf16.mxu0 0
      %1908 = vmatpush1.bf16.msra.mxu0 0
      %1909 = vmatprep.subr.bf16.mxu0 0
      %1910 = vmatpush1.bf16.msra.mxu0 0
      %1911 = vmatprep.subr.bf16.mxu0 0
      %1912 = vmatpush1.bf16.msra.mxu0 0
      %1913 = vmatprep.subr.bf16.mxu0 0
      %1914 = vmatpush1.bf16.msra.mxu0 0
      %1915 = vmatprep.subr.bf16.mxu0 0
      %1916 = vmatpush1.bf16.msra.mxu0 %v1897
      %1917 = vmatprep.subr.bf16.mxu0 0
      %1918 = vmatpush1.bf16.msra.mxu0 %v1896
      %1919 = vmatprep.subr.bf16.mxu0 0
      %1920 = vmatpush2.bf16.msra.mxu0 0
      %1921 = vmatprep.subr.bf16.mxu0 0
      %1922 = vmatpush2.bf16.msra.mxu0 0
      %1923 = vmatprep.subr.bf16.mxu0 0
      %1924 = vmatpush2.bf16.msra.mxu0 0
      %1925 = vmatprep.subr.bf16.mxu0 0
      %1926 = vmatpush2.bf16.msra.mxu0 0
      %1927 = vmatprep.subr.bf16.mxu0 0
      %1928 = vmatpush2.bf16.msra.mxu0 0
      %1929 = vmatprep.subr.bf16.mxu0 0
      %1930 = vmatpush2.bf16.msra.mxu0 0
      %1931 = vmatprep.subr.bf16.mxu0 0
      %1932 = vmatpush2.bf16.msra.mxu0 0
      %1933 = vmatprep.subr.bf16.mxu0 0
      %1934 = vmatpush2.bf16.msra.mxu0 0
      %1935 = vmatprep.mubr.bf16.mxu0 0
      %1936 = vmatmul.mubr.bf16.gmra.mxu0 %v1901
      %v1937 = vpop.f32.mrf.mxu0
      %v1938 = vadd.f32 %v1886, %v1937
      %v1939 = vpop.f32.mrf.mxu0
      %v1940 = vpop.f32.mrf.mxu0
      %v1941 = vadd.f32 %v1886, %v1940
      %v1942 = vpop.f32.mrf.mxu0
      %1943 = vdwg.mxu0
      %v1944 = vadd.f32 %v1938, %v870
      %v1945 = vadd.f32 %v1941, %v871
      %v1946 = vld [vmem:[%s777] sm:$0x1]
      %v1947 = vld [vmem:[%s782] sm:$0x1]
      %v1948 = vsel %vm828, %v1944, 0.0
      %1949 = vadd.xlane.f32.xlu0 %v1948
      %v1950 = vpop.xlane.xlu0 %1949
      %v1951 = vsel %vm828, %v1945, 0.0
      %1952 = vadd.xlane.f32.xlu0 %v1951
      %v1953 = vpop.xlane.xlu0 %1952
      %v1954 = vmul.f32 %v1950, %v835
      %v1955 = vmul.f32 %v1953, %v835
      %v1956 = vsub.f32 %v1944, %v1954
      %v1957 = vsub.f32 %v1945, %v1955
      %v1958 = vmul.f32 %v1956, %v1956
      %v1959 = vmul.f32 %v1957, %v1957
      %v1960 = vsel %vm828, %v1958, 0.0
      %1961 = vadd.xlane.f32.xlu0 %v1960
      %v1962 = vpop.xlane.xlu0 %1961
      %v1963 = vsel %vm828, %v1959, 0.0
      %1964 = vadd.xlane.f32.xlu0 %v1963
      %v1965 = vpop.xlane.xlu0 %1964
      %v1966 = vmul.f32 %v1962, %v835
      %v1967 = vmul.f32 %v1965, %v835
      %v1968 = vadd.f32 %v1966, 1e-12
      %v1969 = vadd.f32 %v1967, 1e-12
      %v1970 = vrsqrt.pop %v1968
      %v1971 = vrsqrt.pop %v1969
      %v1972 = vmul.f32 %v1956, %v1970
      %v1973 = vmul.f32 %v1957, %v1971
      %v1975 = vlaneseq
      %v1976 = vshrl.u32 %v1975, 7
      %v1977 = vsub.s32 0, %v1976
      %v1978 = vrot.slane %v1946, %v1977
      %v1980 = vmul.f32 %v1972, %v1978
      %v1981 = vmul.f32 %v1973, %v1978
      %v1983 = vlaneseq
      %v1984 = vshrl.u32 %v1983, 7
      %v1985 = vsub.s32 0, %v1984
      %v1986 = vrot.slane %v1947, %v1985
      %v1988 = vadd.f32 %v1980, %v1986
      %v1989 = vadd.f32 %v1981, %v1986
      %v1990 = vpack.c.bf16 %v1989, %v1988
      %v1991 = vld [vmem:[%s789] sm:$0xff]
      %v1992 = vld [vmem:[%s789 + $0x8] sm:$0xff]
      %v1993 = vld [vmem:[%s789 + $0x10] sm:$0xff]
      %v1994 = vld [vmem:[%s789 + $0x18] sm:$0xff]
      %v1995 = vld [vmem:[%s789 + $0x20] sm:$0xff]
      %v1996 = vld [vmem:[%s789 + $0x28] sm:$0xff]
      %v1997 = vld [vmem:[%s789 + $0x30] sm:$0xff]
      %v1998 = vld [vmem:[%s789 + $0x38] sm:$0xff]
      %v1999 = vld [vmem:[%s789 + $0x40] sm:$0xff]
      %v2000 = vld [vmem:[%s789 + $0x48] sm:$0xff]
      %v2001 = vld [vmem:[%s789 + $0x50] sm:$0xff]
      %v2002 = vld [vmem:[%s789 + $0x58] sm:$0xff]
      %v2003 = vld [vmem:[%s789 + $0x60] sm:$0xff]
      %v2004 = vld [vmem:[%s789 + $0x68] sm:$0xff]
      %v2005 = vld [vmem:[%s789 + $0x70] sm:$0xff]
      %v2006 = vld [vmem:[%s789 + $0x78] sm:$0xff]
      %v2007 = vld [vmem:[%s789 + $0x80] sm:$0xff]
      %v2008 = vld [vmem:[%s789 + $0x88] sm:$0xff]
      %v2009 = vld [vmem:[%s789 + $0x90] sm:$0xff]
      %v2010 = vld [vmem:[%s789 + $0x98] sm:$0xff]
      %v2011 = vld [vmem:[%s795] sm:$0xff]
      %v2012 = vld [vmem:[%s795 + $0x8] sm:$0x3]
      %v2015 = vlaneseq
      %v2016 = vshrl.u32 %v2015, 7
      %v2017 = vsub.s32 0, %v2016
      %v2018 = vrot.slane %v2011, %v2017
      %v2019 = vlaneseq
      %v2020 = vshrl.u32 %v2019, 7
      %v2021 = vsub.s32 1, %v2020
      %v2022 = vrot.slane %v2011, %v2021
      %v2023 = vlaneseq
      %v2024 = vshrl.u32 %v2023, 7
      %v2025 = vsub.s32 2, %v2024
      %v2026 = vrot.slane %v2011, %v2025
      %v2027 = vlaneseq
      %v2028 = vshrl.u32 %v2027, 7
      %v2029 = vsub.s32 3, %v2028
      %v2030 = vrot.slane %v2011, %v2029
      %v2031 = vlaneseq
      %v2032 = vshrl.u32 %v2031, 7
      %v2033 = vsub.s32 4, %v2032
      %v2034 = vrot.slane %v2011, %v2033
      %v2035 = vlaneseq
      %v2036 = vshrl.u32 %v2035, 7
      %v2037 = vsub.s32 5, %v2036
      %v2038 = vrot.slane %v2011, %v2037
      %v2039 = vlaneseq
      %v2040 = vshrl.u32 %v2039, 7
      %v2041 = vsub.s32 6, %v2040
      %v2042 = vrot.slane %v2011, %v2041
      %v2043 = vlaneseq
      %v2044 = vshrl.u32 %v2043, 7
      %v2045 = vsub.s32 7, %v2044
      %v2046 = vrot.slane %v2011, %v2045
      %v2047 = vlaneseq
      %v2048 = vshrl.u32 %v2047, 7
      %v2049 = vsub.s32 0, %v2048
      %v2050 = vrot.slane %v2012, %v2049
      %v2051 = vlaneseq
      %v2052 = vshrl.u32 %v2051, 7
      %v2053 = vsub.s32 1, %v2052
      %v2054 = vrot.slane %v2012, %v2053
      %v2085 = vunpack.c.l.b16 %v1991
      %v2086 = vunpack.c.h.b16 %v1991
      %v2087 = vunpack.c.l.b16 %v1992
      %v2088 = vunpack.c.h.b16 %v1992
      %v2089 = vunpack.c.l.b16 %v1993
      %v2090 = vunpack.c.h.b16 %v1993
      %v2091 = vunpack.c.l.b16 %v1994
      %v2092 = vunpack.c.h.b16 %v1994
      %v2093 = vunpack.c.l.b16 %v1995
      %v2094 = vunpack.c.h.b16 %v1995
      %v2095 = vunpack.c.l.b16 %v1996
      %v2096 = vunpack.c.h.b16 %v1996
      %v2097 = vunpack.c.l.b16 %v1997
      %v2098 = vunpack.c.h.b16 %v1997
      %v2099 = vunpack.c.l.b16 %v1998
      %v2100 = vunpack.c.h.b16 %v1998
      %v2101 = vunpack.c.l.b16 %v1999
      %v2102 = vunpack.c.h.b16 %v1999
      %v2103 = vunpack.c.l.b16 %v2000
      %v2104 = vunpack.c.h.b16 %v2000
      %v2105 = vunpack.c.l.b16 %v2001
      %v2106 = vunpack.c.h.b16 %v2001
      %v2107 = vunpack.c.l.b16 %v2002
      %v2108 = vunpack.c.h.b16 %v2002
      %v2109 = vunpack.c.l.b16 %v2003
      %v2110 = vunpack.c.h.b16 %v2003
      %v2111 = vunpack.c.l.b16 %v2004
      %v2112 = vunpack.c.h.b16 %v2004
      %v2113 = vunpack.c.l.b16 %v2005
      %v2114 = vunpack.c.h.b16 %v2005
      %v2115 = vunpack.c.l.b16 %v2006
      %v2116 = vunpack.c.h.b16 %v2006
      %v2117 = vunpack.c.l.b16 %v2007
      %v2118 = vunpack.c.h.b16 %v2007
      %v2119 = vunpack.c.l.b16 %v2008
      %v2120 = vunpack.c.h.b16 %v2008
      %v2121 = vunpack.c.l.b16 %v2009
      %v2122 = vunpack.c.h.b16 %v2009
      %v2123 = vunpack.c.l.b16 %v2010
      %v2124 = vunpack.c.h.b16 %v2010
      %v2125 = vpack.c.b16 %v2095, %v2085
      %v2126 = vpack.c.b16 %v2096, %v2086
      %v2127 = vpack.c.b16 %v2097, %v2087
      %v2128 = vpack.c.b16 %v2098, %v2088
      %v2129 = vpack.c.b16 %v2099, %v2089
      %v2130 = vpack.c.b16 %v2100, %v2090
      %v2131 = vpack.c.b16 %v2101, %v2091
      %v2132 = vpack.c.b16 %v2102, %v2092
      %v2133 = vpack.c.b16 %v2103, %v2093
      %v2134 = vpack.c.b16 %v2104, %v2094
      %v2135 = vpack.c.b16 %v2115, %v2105
      %v2136 = vpack.c.b16 %v2116, %v2106
      %v2137 = vpack.c.b16 %v2117, %v2107
      %v2138 = vpack.c.b16 %v2118, %v2108
      %v2139 = vpack.c.b16 %v2119, %v2109
      %v2140 = vpack.c.b16 %v2120, %v2110
      %v2141 = vpack.c.b16 %v2121, %v2111
      %v2142 = vpack.c.b16 %v2122, %v2112
      %v2143 = vpack.c.b16 %v2123, %v2113
      %v2144 = vpack.c.b16 %v2124, %v2114
      %v2166 = vsel %vm828, %v1990, 0
      %2168 = vmatprep.subr.bf16.mxu0 0
      %2169 = vmatpush1.bf16.msra.mxu0 0
      %2170 = vmatprep.subr.bf16.mxu0 0
      %2171 = vmatpush1.bf16.msra.mxu0 0
      %2172 = vmatprep.subr.bf16.mxu0 0
      %2173 = vmatpush1.bf16.msra.mxu0 0
      %2174 = vmatprep.subr.bf16.mxu0 0
      %2175 = vmatpush1.bf16.msra.mxu0 0
      %2176 = vmatprep.subr.bf16.mxu0 0
      %2177 = vmatpush1.bf16.msra.mxu0 0
      %2178 = vmatprep.subr.bf16.mxu0 0
      %2179 = vmatpush1.bf16.msra.mxu0 0
      %2180 = vmatprep.subr.bf16.mxu0 %v2136
      %2181 = vmatpush1.bf16.msra.mxu0 %v2135
      %2182 = vmatprep.subr.bf16.mxu0 %v2126
      %2183 = vmatpush1.bf16.msra.mxu0 %v2125
      %2184 = vmatprep.subr.bf16.mxu0 0
      %2185 = vmatpush2.bf16.msra.mxu0 0
      %2186 = vmatprep.subr.bf16.mxu0 0
      %2187 = vmatpush2.bf16.msra.mxu0 0
      %2188 = vmatprep.subr.bf16.mxu0 0
      %2189 = vmatpush2.bf16.msra.mxu0 0
      %2190 = vmatprep.subr.bf16.mxu0 0
      %2191 = vmatpush2.bf16.msra.mxu0 0
      %2192 = vmatprep.subr.bf16.mxu0 0
      %2193 = vmatpush2.bf16.msra.mxu0 0
      %2194 = vmatprep.subr.bf16.mxu0 0
      %2195 = vmatpush2.bf16.msra.mxu0 0
      %2196 = vmatprep.subr.bf16.mxu0 0
      %2197 = vmatpush2.bf16.msra.mxu0 0
      %2198 = vmatprep.subr.bf16.mxu0 0
      %2199 = vmatpush2.bf16.msra.mxu0 0
      %2200 = vmatprep.mubr.bf16.mxu0 0
      %2201 = vmatmul.mubr.bf16.gmra.mxu0 %v2166
      %v2202 = vpop.f32.mrf.mxu0
      %v2203 = vadd.f32 %v2018, %v2202
      %v2204 = vpop.f32.mrf.mxu0
      %v2205 = vadd.f32 %v2022, %v2204
      %v2206 = vpop.f32.mrf.mxu0
      %v2207 = vadd.f32 %v2018, %v2206
      %v2208 = vpop.f32.mrf.mxu0
      %v2209 = vadd.f32 %v2022, %v2208
      %2210 = vdwg.mxu0
      %2211 = vmatprep.subr.bf16.mxu0 0
      %2212 = vmatpush1.bf16.msra.mxu0 0
      %2213 = vmatprep.subr.bf16.mxu0 0
      %2214 = vmatpush1.bf16.msra.mxu0 0
      %2215 = vmatprep.subr.bf16.mxu0 0
      %2216 = vmatpush1.bf16.msra.mxu0 0
      %2217 = vmatprep.subr.bf16.mxu0 0
      %2218 = vmatpush1.bf16.msra.mxu0 0
      %2219 = vmatprep.subr.bf16.mxu0 0
      %2220 = vmatpush1.bf16.msra.mxu0 0
      %2221 = vmatprep.subr.bf16.mxu0 0
      %2222 = vmatpush1.bf16.msra.mxu0 0
      %2223 = vmatprep.subr.bf16.mxu0 %v2138
      %2224 = vmatpush1.bf16.msra.mxu0 %v2137
      %2225 = vmatprep.subr.bf16.mxu0 %v2128
      %2226 = vmatpush1.bf16.msra.mxu0 %v2127
      %2227 = vmatprep.subr.bf16.mxu0 0
      %2228 = vmatpush2.bf16.msra.mxu0 0
      %2229 = vmatprep.subr.bf16.mxu0 0
      %2230 = vmatpush2.bf16.msra.mxu0 0
      %2231 = vmatprep.subr.bf16.mxu0 0
      %2232 = vmatpush2.bf16.msra.mxu0 0
      %2233 = vmatprep.subr.bf16.mxu0 0
      %2234 = vmatpush2.bf16.msra.mxu0 0
      %2235 = vmatprep.subr.bf16.mxu0 0
      %2236 = vmatpush2.bf16.msra.mxu0 0
      %2237 = vmatprep.subr.bf16.mxu0 0
      %2238 = vmatpush2.bf16.msra.mxu0 0
      %2239 = vmatprep.subr.bf16.mxu0 0
      %2240 = vmatpush2.bf16.msra.mxu0 0
      %2241 = vmatprep.subr.bf16.mxu0 0
      %2242 = vmatpush2.bf16.msra.mxu0 0
      %2243 = vmatprep.mubr.bf16.mxu0 0
      %2244 = vmatmul.mubr.bf16.gmra.mxu0 %v2166
      %v2245 = vpop.f32.mrf.mxu0
      %v2246 = vadd.f32 %v2026, %v2245
      %v2247 = vpop.f32.mrf.mxu0
      %v2248 = vadd.f32 %v2030, %v2247
      %v2249 = vpop.f32.mrf.mxu0
      %v2250 = vadd.f32 %v2026, %v2249
      %v2251 = vpop.f32.mrf.mxu0
      %v2252 = vadd.f32 %v2030, %v2251
      %2253 = vdwg.mxu0
      %2254 = vmatprep.subr.bf16.mxu0 0
      %2255 = vmatpush1.bf16.msra.mxu0 0
      %2256 = vmatprep.subr.bf16.mxu0 0
      %2257 = vmatpush1.bf16.msra.mxu0 0
      %2258 = vmatprep.subr.bf16.mxu0 0
      %2259 = vmatpush1.bf16.msra.mxu0 0
      %2260 = vmatprep.subr.bf16.mxu0 0
      %2261 = vmatpush1.bf16.msra.mxu0 0
      %2262 = vmatprep.subr.bf16.mxu0 0
      %2263 = vmatpush1.bf16.msra.mxu0 0
      %2264 = vmatprep.subr.bf16.mxu0 0
      %2265 = vmatpush1.bf16.msra.mxu0 0
      %2266 = vmatprep.subr.bf16.mxu0 %v2140
      %2267 = vmatpush1.bf16.msra.mxu0 %v2139
      %2268 = vmatprep.subr.bf16.mxu0 %v2130
      %2269 = vmatpush1.bf16.msra.mxu0 %v2129
      %2270 = vmatprep.subr.bf16.mxu0 0
      %2271 = vmatpush2.bf16.msra.mxu0 0
      %2272 = vmatprep.subr.bf16.mxu0 0
      %2273 = vmatpush2.bf16.msra.mxu0 0
      %2274 = vmatprep.subr.bf16.mxu0 0
      %2275 = vmatpush2.bf16.msra.mxu0 0
      %2276 = vmatprep.subr.bf16.mxu0 0
      %2277 = vmatpush2.bf16.msra.mxu0 0
      %2278 = vmatprep.subr.bf16.mxu0 0
      %2279 = vmatpush2.bf16.msra.mxu0 0
      %2280 = vmatprep.subr.bf16.mxu0 0
      %2281 = vmatpush2.bf16.msra.mxu0 0
      %2282 = vmatprep.subr.bf16.mxu0 0
      %2283 = vmatpush2.bf16.msra.mxu0 0
      %2284 = vmatprep.subr.bf16.mxu0 0
      %2285 = vmatpush2.bf16.msra.mxu0 0
      %2286 = vmatprep.mubr.bf16.mxu0 0
      %2287 = vmatmul.mubr.bf16.gmra.mxu0 %v2166
      %v2288 = vpop.f32.mrf.mxu0
      %v2289 = vadd.f32 %v2034, %v2288
      %v2290 = vpop.f32.mrf.mxu0
      %v2291 = vadd.f32 %v2038, %v2290
      %v2292 = vpop.f32.mrf.mxu0
      %v2293 = vadd.f32 %v2034, %v2292
      %v2294 = vpop.f32.mrf.mxu0
      %v2295 = vadd.f32 %v2038, %v2294
      %2296 = vdwg.mxu0
      %2297 = vmatprep.subr.bf16.mxu0 0
      %2298 = vmatpush1.bf16.msra.mxu0 0
      %2299 = vmatprep.subr.bf16.mxu0 0
      %2300 = vmatpush1.bf16.msra.mxu0 0
      %2301 = vmatprep.subr.bf16.mxu0 0
      %2302 = vmatpush1.bf16.msra.mxu0 0
      %2303 = vmatprep.subr.bf16.mxu0 0
      %2304 = vmatpush1.bf16.msra.mxu0 0
      %2305 = vmatprep.subr.bf16.mxu0 0
      %2306 = vmatpush1.bf16.msra.mxu0 0
      %2307 = vmatprep.subr.bf16.mxu0 0
      %2308 = vmatpush1.bf16.msra.mxu0 0
      %2309 = vmatprep.subr.bf16.mxu0 %v2142
      %2310 = vmatpush1.bf16.msra.mxu0 %v2141
      %2311 = vmatprep.subr.bf16.mxu0 %v2132
      %2312 = vmatpush1.bf16.msra.mxu0 %v2131
      %2313 = vmatprep.subr.bf16.mxu0 0
      %2314 = vmatpush2.bf16.msra.mxu0 0
      %2315 = vmatprep.subr.bf16.mxu0 0
      %2316 = vmatpush2.bf16.msra.mxu0 0
      %2317 = vmatprep.subr.bf16.mxu0 0
      %2318 = vmatpush2.bf16.msra.mxu0 0
      %2319 = vmatprep.subr.bf16.mxu0 0
      %2320 = vmatpush2.bf16.msra.mxu0 0
      %2321 = vmatprep.subr.bf16.mxu0 0
      %2322 = vmatpush2.bf16.msra.mxu0 0
      %2323 = vmatprep.subr.bf16.mxu0 0
      %2324 = vmatpush2.bf16.msra.mxu0 0
      %2325 = vmatprep.subr.bf16.mxu0 0
      %2326 = vmatpush2.bf16.msra.mxu0 0
      %2327 = vmatprep.subr.bf16.mxu0 0
      %2328 = vmatpush2.bf16.msra.mxu0 0
      %2329 = vmatprep.mubr.bf16.mxu0 0
      %2330 = vmatmul.mubr.bf16.gmra.mxu0 %v2166
      %v2331 = vpop.f32.mrf.mxu0
      %v2332 = vadd.f32 %v2042, %v2331
      %v2333 = vpop.f32.mrf.mxu0
      %v2334 = vadd.f32 %v2046, %v2333
      %v2335 = vpop.f32.mrf.mxu0
      %v2336 = vadd.f32 %v2042, %v2335
      %v2337 = vpop.f32.mrf.mxu0
      %v2338 = vadd.f32 %v2046, %v2337
      %2339 = vdwg.mxu0
      %2340 = vmatprep.subr.bf16.mxu0 0
      %2341 = vmatpush1.bf16.msra.mxu0 0
      %2342 = vmatprep.subr.bf16.mxu0 0
      %2343 = vmatpush1.bf16.msra.mxu0 0
      %2344 = vmatprep.subr.bf16.mxu0 0
      %2345 = vmatpush1.bf16.msra.mxu0 0
      %2346 = vmatprep.subr.bf16.mxu0 0
      %2347 = vmatpush1.bf16.msra.mxu0 0
      %2348 = vmatprep.subr.bf16.mxu0 0
      %2349 = vmatpush1.bf16.msra.mxu0 0
      %2350 = vmatprep.subr.bf16.mxu0 0
      %2351 = vmatpush1.bf16.msra.mxu0 0
      %2352 = vmatprep.subr.bf16.mxu0 %v2144
      %2353 = vmatpush1.bf16.msra.mxu0 %v2143
      %2354 = vmatprep.subr.bf16.mxu0 %v2134
      %2355 = vmatpush1.bf16.msra.mxu0 %v2133
      %2356 = vmatprep.subr.bf16.mxu0 0
      %2357 = vmatpush2.bf16.msra.mxu0 0
      %2358 = vmatprep.subr.bf16.mxu0 0
      %2359 = vmatpush2.bf16.msra.mxu0 0
      %2360 = vmatprep.subr.bf16.mxu0 0
      %2361 = vmatpush2.bf16.msra.mxu0 0
      %2362 = vmatprep.subr.bf16.mxu0 0
      %2363 = vmatpush2.bf16.msra.mxu0 0
      %2364 = vmatprep.subr.bf16.mxu0 0
      %2365 = vmatpush2.bf16.msra.mxu0 0
      %2366 = vmatprep.subr.bf16.mxu0 0
      %2367 = vmatpush2.bf16.msra.mxu0 0
      %2368 = vmatprep.subr.bf16.mxu0 0
      %2369 = vmatpush2.bf16.msra.mxu0 0
      %2370 = vmatprep.subr.bf16.mxu0 0
      %2371 = vmatpush2.bf16.msra.mxu0 0
      %2372 = vmatprep.mubr.bf16.mxu0 0
      %2373 = vmatmul.mubr.bf16.gmra.mxu0 %v2166
      %v2374 = vpop.f32.mrf.mxu0
      %v2375 = vadd.f32 %v2050, %v2374
      %v2376 = vpop.f32.mrf.mxu0
      %v2377 = vadd.f32 %v2054, %v2376
      %v2378 = vpop.f32.mrf.mxu0
      %v2379 = vadd.f32 %v2050, %v2378
      %v2380 = vpop.f32.mrf.mxu0
      %v2381 = vadd.f32 %v2054, %v2380
      %2382 = vdwg.mxu0
      %v2383 = vmul.f32 %v2203, %v2203
      %v2384 = vmul.f32 %v2205, %v2205
      %v2385 = vmul.f32 %v2246, %v2246
      %v2386 = vmul.f32 %v2248, %v2248
      %v2387 = vmul.f32 %v2289, %v2289
      %v2388 = vmul.f32 %v2291, %v2291
      %v2389 = vmul.f32 %v2332, %v2332
      %v2390 = vmul.f32 %v2334, %v2334
      %v2391 = vmul.f32 %v2375, %v2375
      %v2392 = vmul.f32 %v2377, %v2377
      %v2393 = vmul.f32 %v2207, %v2207
      %v2394 = vmul.f32 %v2209, %v2209
      %v2395 = vmul.f32 %v2250, %v2250
      %v2396 = vmul.f32 %v2252, %v2252
      %v2397 = vmul.f32 %v2293, %v2293
      %v2398 = vmul.f32 %v2295, %v2295
      %v2399 = vmul.f32 %v2336, %v2336
      %v2400 = vmul.f32 %v2338, %v2338
      %v2401 = vmul.f32 %v2379, %v2379
      %v2402 = vmul.f32 %v2381, %v2381
      %v2403 = vmul.f32 %v2203, %v2383
      %v2404 = vmul.f32 %v2205, %v2384
      %v2405 = vmul.f32 %v2246, %v2385
      %v2406 = vmul.f32 %v2248, %v2386
      %v2407 = vmul.f32 %v2289, %v2387
      %v2408 = vmul.f32 %v2291, %v2388
      %v2409 = vmul.f32 %v2332, %v2389
      %v2410 = vmul.f32 %v2334, %v2390
      %v2411 = vmul.f32 %v2375, %v2391
      %v2412 = vmul.f32 %v2377, %v2392
      %v2413 = vmul.f32 %v2207, %v2393
      %v2414 = vmul.f32 %v2209, %v2394
      %v2415 = vmul.f32 %v2250, %v2395
      %v2416 = vmul.f32 %v2252, %v2396
      %v2417 = vmul.f32 %v2293, %v2397
      %v2418 = vmul.f32 %v2295, %v2398
      %v2419 = vmul.f32 %v2336, %v2399
      %v2420 = vmul.f32 %v2338, %v2400
      %v2421 = vmul.f32 %v2379, %v2401
      %v2422 = vmul.f32 %v2381, %v2402
      %v2423 = vmul.f32 %v2403, 0.044715
      %v2424 = vmul.f32 %v2404, 0.044715
      %v2425 = vmul.f32 %v2405, 0.044715
      %v2426 = vmul.f32 %v2406, 0.044715
      %v2427 = vmul.f32 %v2407, 0.044715
      %v2428 = vmul.f32 %v2408, 0.044715
      %v2429 = vmul.f32 %v2409, 0.044715
      %v2430 = vmul.f32 %v2410, 0.044715
      %v2431 = vmul.f32 %v2411, 0.044715
      %v2432 = vmul.f32 %v2412, 0.044715
      %v2433 = vmul.f32 %v2413, 0.044715
      %v2434 = vmul.f32 %v2414, 0.044715
      %v2435 = vmul.f32 %v2415, 0.044715
      %v2436 = vmul.f32 %v2416, 0.044715
      %v2437 = vmul.f32 %v2417, 0.044715
      %v2438 = vmul.f32 %v2418, 0.044715
      %v2439 = vmul.f32 %v2419, 0.044715
      %v2440 = vmul.f32 %v2420, 0.044715
      %v2441 = vmul.f32 %v2421, 0.044715
      %v2442 = vmul.f32 %v2422, 0.044715
      %v2443 = vadd.f32 %v2203, %v2423
      %v2444 = vadd.f32 %v2205, %v2424
      %v2445 = vadd.f32 %v2246, %v2425
      %v2446 = vadd.f32 %v2248, %v2426
      %v2447 = vadd.f32 %v2289, %v2427
      %v2448 = vadd.f32 %v2291, %v2428
      %v2449 = vadd.f32 %v2332, %v2429
      %v2450 = vadd.f32 %v2334, %v2430
      %v2451 = vadd.f32 %v2375, %v2431
      %v2452 = vadd.f32 %v2377, %v2432
      %v2453 = vadd.f32 %v2207, %v2433
      %v2454 = vadd.f32 %v2209, %v2434
      %v2455 = vadd.f32 %v2250, %v2435
      %v2456 = vadd.f32 %v2252, %v2436
      %v2457 = vadd.f32 %v2293, %v2437
      %v2458 = vadd.f32 %v2295, %v2438
      %v2459 = vadd.f32 %v2336, %v2439
      %v2460 = vadd.f32 %v2338, %v2440
      %v2461 = vadd.f32 %v2379, %v2441
      %v2462 = vadd.f32 %v2381, %v2442
      %v2463 = vmul.f32 %v2443, 0.7978846
      %v2464 = vmul.f32 %v2444, 0.7978846
      %v2465 = vmul.f32 %v2445, 0.7978846
      %v2466 = vmul.f32 %v2446, 0.7978846
      %v2467 = vmul.f32 %v2447, 0.7978846
      %v2468 = vmul.f32 %v2448, 0.7978846
      %v2469 = vmul.f32 %v2449, 0.7978846
      %v2470 = vmul.f32 %v2450, 0.7978846
      %v2471 = vmul.f32 %v2451, 0.7978846
      %v2472 = vmul.f32 %v2452, 0.7978846
      %v2473 = vmul.f32 %v2453, 0.7978846
      %v2474 = vmul.f32 %v2454, 0.7978846
      %v2475 = vmul.f32 %v2455, 0.7978846
      %v2476 = vmul.f32 %v2456, 0.7978846
      %v2477 = vmul.f32 %v2457, 0.7978846
      %v2478 = vmul.f32 %v2458, 0.7978846
      %v2479 = vmul.f32 %v2459, 0.7978846
      %v2480 = vmul.f32 %v2460, 0.7978846
      %v2481 = vmul.f32 %v2461, 0.7978846
      %v2482 = vmul.f32 %v2462, 0.7978846
      %v2483 = vtanh.pop %v2463
      %v2484 = vtanh.pop %v2464
      %v2485 = vtanh.pop %v2465
      %v2486 = vtanh.pop %v2466
      %v2487 = vtanh.pop %v2467
      %v2488 = vtanh.pop %v2468
      %v2489 = vtanh.pop %v2469
      %v2490 = vtanh.pop %v2470
      %v2491 = vtanh.pop %v2471
      %v2492 = vtanh.pop %v2472
      %v2493 = vtanh.pop %v2473
      %v2494 = vtanh.pop %v2474
      %v2495 = vtanh.pop %v2475
      %v2496 = vtanh.pop %v2476
      %v2497 = vtanh.pop %v2477
      %v2498 = vtanh.pop %v2478
      %v2499 = vtanh.pop %v2479
      %v2500 = vtanh.pop %v2480
      %v2501 = vtanh.pop %v2481
      %v2502 = vtanh.pop %v2482
      %v2503 = vadd.f32 %v2483, 1.0
      %v2504 = vadd.f32 %v2484, 1.0
      %v2505 = vadd.f32 %v2485, 1.0
      %v2506 = vadd.f32 %v2486, 1.0
      %v2507 = vadd.f32 %v2487, 1.0
      %v2508 = vadd.f32 %v2488, 1.0
      %v2509 = vadd.f32 %v2489, 1.0
      %v2510 = vadd.f32 %v2490, 1.0
      %v2511 = vadd.f32 %v2491, 1.0
      %v2512 = vadd.f32 %v2492, 1.0
      %v2513 = vadd.f32 %v2493, 1.0
      %v2514 = vadd.f32 %v2494, 1.0
      %v2515 = vadd.f32 %v2495, 1.0
      %v2516 = vadd.f32 %v2496, 1.0
      %v2517 = vadd.f32 %v2497, 1.0
      %v2518 = vadd.f32 %v2498, 1.0
      %v2519 = vadd.f32 %v2499, 1.0
      %v2520 = vadd.f32 %v2500, 1.0
      %v2521 = vadd.f32 %v2501, 1.0
      %v2522 = vadd.f32 %v2502, 1.0
      %v2523 = vmul.f32 %v2503, 0.5
      %v2524 = vmul.f32 %v2504, 0.5
      %v2525 = vmul.f32 %v2505, 0.5
      %v2526 = vmul.f32 %v2506, 0.5
      %v2527 = vmul.f32 %v2507, 0.5
      %v2528 = vmul.f32 %v2508, 0.5
      %v2529 = vmul.f32 %v2509, 0.5
      %v2530 = vmul.f32 %v2510, 0.5
      %v2531 = vmul.f32 %v2511, 0.5
      %v2532 = vmul.f32 %v2512, 0.5
      %v2533 = vmul.f32 %v2513, 0.5
      %v2534 = vmul.f32 %v2514, 0.5
      %v2535 = vmul.f32 %v2515, 0.5
      %v2536 = vmul.f32 %v2516, 0.5
      %v2537 = vmul.f32 %v2517, 0.5
      %v2538 = vmul.f32 %v2518, 0.5
      %v2539 = vmul.f32 %v2519, 0.5
      %v2540 = vmul.f32 %v2520, 0.5
      %v2541 = vmul.f32 %v2521, 0.5
      %v2542 = vmul.f32 %v2522, 0.5
      %v2543 = vmul.f32 %v2203, %v2523
      %v2544 = vmul.f32 %v2205, %v2524
      %v2545 = vmul.f32 %v2246, %v2525
      %v2546 = vmul.f32 %v2248, %v2526
      %v2547 = vmul.f32 %v2289, %v2527
      %v2548 = vmul.f32 %v2291, %v2528
      %v2549 = vmul.f32 %v2332, %v2529
      %v2550 = vmul.f32 %v2334, %v2530
      %v2551 = vmul.f32 %v2375, %v2531
      %v2552 = vmul.f32 %v2377, %v2532
      %v2553 = vmul.f32 %v2207, %v2533
      %v2554 = vmul.f32 %v2209, %v2534
      %v2555 = vmul.f32 %v2250, %v2535
      %v2556 = vmul.f32 %v2252, %v2536
      %v2557 = vmul.f32 %v2293, %v2537
      %v2558 = vmul.f32 %v2295, %v2538
      %v2559 = vmul.f32 %v2336, %v2539
      %v2560 = vmul.f32 %v2338, %v2540
      %v2561 = vmul.f32 %v2379, %v2541
      %v2562 = vmul.f32 %v2381, %v2542
      %v2563 = vpack.c.bf16 %v2553, %v2543
      %v2564 = vpack.c.bf16 %v2554, %v2544
      %v2565 = vpack.c.bf16 %v2555, %v2545
      %v2566 = vpack.c.bf16 %v2556, %v2546
      %v2567 = vpack.c.bf16 %v2557, %v2547
      %v2568 = vpack.c.bf16 %v2558, %v2548
      %v2569 = vpack.c.bf16 %v2559, %v2549
      %v2570 = vpack.c.bf16 %v2560, %v2550
      %v2571 = vpack.c.bf16 %v2561, %v2551
      %v2572 = vpack.c.bf16 %v2562, %v2552
      %v2573 = vld [vmem:[%s802] sm:$0xf]
      %v2574 = vld [vmem:[%s802 + $0x4] sm:$0xf]
      %v2575 = vld [vmem:[%s802 + $0x8] sm:$0xf]
      %v2576 = vld [vmem:[%s802 + $0xc] sm:$0xf]
      %v2577 = vld [vmem:[%s802 + $0x10] sm:$0xf]
      %v2578 = vld [vmem:[%s802 + $0x14] sm:$0xf]
      %v2579 = vld [vmem:[%s802 + $0x18] sm:$0xf]
      %v2580 = vld [vmem:[%s802 + $0x1c] sm:$0xf]
      %v2581 = vld [vmem:[%s802 + $0x20] sm:$0xf]
      %v2582 = vld [vmem:[%s802 + $0x24] sm:$0xf]
      %v2583 = vld [vmem:[%s802 + $0x28] sm:$0xf]
      %v2584 = vld [vmem:[%s802 + $0x2c] sm:$0xf]
      %v2585 = vld [vmem:[%s802 + $0x30] sm:$0xf]
      %v2586 = vld [vmem:[%s802 + $0x34] sm:$0xf]
      %v2587 = vld [vmem:[%s802 + $0x38] sm:$0xf]
      %v2588 = vld [vmem:[%s802 + $0x3c] sm:$0xf]
      %v2589 = vld [vmem:[%s802 + $0x40] sm:$0xf]
      %v2590 = vld [vmem:[%s802 + $0x44] sm:$0xf]
      %v2591 = vld [vmem:[%s802 + $0x48] sm:$0xf]
      %v2592 = vld [vmem:[%s802 + $0x4c] sm:$0xf]
      %v2593 = vld [vmem:[%s802 + $0x50] sm:$0xf]
      %v2594 = vld [vmem:[%s802 + $0x54] sm:$0xf]
      %v2595 = vld [vmem:[%s802 + $0x58] sm:$0xf]
      %v2596 = vld [vmem:[%s802 + $0x5c] sm:$0xf]
      %v2597 = vld [vmem:[%s802 + $0x60] sm:$0xf]
      %v2598 = vld [vmem:[%s802 + $0x64] sm:$0xf]
      %v2599 = vld [vmem:[%s802 + $0x68] sm:$0xf]
      %v2600 = vld [vmem:[%s802 + $0x6c] sm:$0xf]
      %v2601 = vld [vmem:[%s802 + $0x70] sm:$0xf]
      %v2602 = vld [vmem:[%s802 + $0x74] sm:$0xf]
      %v2603 = vld [vmem:[%s802 + $0x78] sm:$0xf]
      %v2604 = vld [vmem:[%s802 + $0x7c] sm:$0xf]
      %v2605 = vld [vmem:[%s802 + $0x80] sm:$0xf]
      %v2606 = vld [vmem:[%s802 + $0x84] sm:$0xf]
      %v2607 = vld [vmem:[%s802 + $0x88] sm:$0xf]
      %v2608 = vld [vmem:[%s802 + $0x8c] sm:$0xf]
      %v2609 = vld [vmem:[%s802 + $0x90] sm:$0xf]
      %v2610 = vld [vmem:[%s802 + $0x94] sm:$0xf]
      %v2611 = vld [vmem:[%s802 + $0x98] sm:$0xf]
      %v2612 = vld [vmem:[%s802 + $0x9c] sm:$0xf]
      %v2613 = vld [vmem:[%s802 + $0xa0] sm:$0xf]
      %v2614 = vld [vmem:[%s802 + $0xa4] sm:$0xf]
      %v2615 = vld [vmem:[%s802 + $0xa8] sm:$0xf]
      %v2616 = vld [vmem:[%s802 + $0xac] sm:$0xf]
      %v2617 = vld [vmem:[%s802 + $0xb0] sm:$0xf]
      %v2618 = vld [vmem:[%s802 + $0xb4] sm:$0xf]
      %v2619 = vld [vmem:[%s802 + $0xb8] sm:$0xf]
      %v2620 = vld [vmem:[%s802 + $0xbc] sm:$0xf]
      %v2621 = vld [vmem:[%s802 + $0xc0] sm:$0xf]
      %v2622 = vld [vmem:[%s802 + $0xc4] sm:$0xf]
      %v2623 = vld [vmem:[%s802 + $0xc8] sm:$0xf]
      %v2624 = vld [vmem:[%s802 + $0xcc] sm:$0xf]
      %v2625 = vld [vmem:[%s802 + $0xd0] sm:$0xf]
      %v2626 = vld [vmem:[%s802 + $0xd4] sm:$0xf]
      %v2627 = vld [vmem:[%s802 + $0xd8] sm:$0xf]
      %v2628 = vld [vmem:[%s802 + $0xdc] sm:$0xf]
      %v2629 = vld [vmem:[%s802 + $0xe0] sm:$0xf]
      %v2630 = vld [vmem:[%s802 + $0xe4] sm:$0xf]
      %v2631 = vld [vmem:[%s802 + $0xe8] sm:$0xf]
      %v2632 = vld [vmem:[%s802 + $0xec] sm:$0xf]
      %v2633 = vld [vmem:[%s802 + $0xf0] sm:$0xf]
      %v2634 = vld [vmem:[%s802 + $0xf4] sm:$0xf]
      %v2635 = vld [vmem:[%s802 + $0xf8] sm:$0xf]
      %v2636 = vld [vmem:[%s802 + $0xfc] sm:$0xf]
      %v2637 = vld [vmem:[%s802 + $0x100] sm:$0xf]
      %v2638 = vld [vmem:[%s802 + $0x104] sm:$0xf]
      %v2639 = vld [vmem:[%s802 + $0x108] sm:$0xf]
      %v2640 = vld [vmem:[%s802 + $0x10c] sm:$0xf]
      %v2641 = vld [vmem:[%s802 + $0x110] sm:$0xf]
      %v2642 = vld [vmem:[%s802 + $0x114] sm:$0xf]
      %v2643 = vld [vmem:[%s802 + $0x118] sm:$0xf]
      %v2644 = vld [vmem:[%s802 + $0x11c] sm:$0xf]
      %v2645 = vld [vmem:[%s802 + $0x120] sm:$0xf]
      %v2646 = vld [vmem:[%s802 + $0x124] sm:$0xf]
      %v2647 = vld [vmem:[%s802 + $0x128] sm:$0xf]
      %v2648 = vld [vmem:[%s802 + $0x12c] sm:$0xf]
      %v2649 = vld [vmem:[%s802 + $0x130] sm:$0xf]
      %v2650 = vld [vmem:[%s802 + $0x134] sm:$0xf]
      %v2651 = vld [vmem:[%s802 + $0x138] sm:$0xf]
      %v2652 = vld [vmem:[%s802 + $0x13c] sm:$0xf]
      %v2653 = vld [vmem:[%s802 + $0x140] sm:$0xf]
      %v2654 = vld [vmem:[%s802 + $0x144] sm:$0xf]
      %v2655 = vld [vmem:[%s802 + $0x148] sm:$0xf]
      %v2656 = vld [vmem:[%s802 + $0x14c] sm:$0xf]
      %v2657 = vld [vmem:[%s802 + $0x150] sm:$0xf]
      %v2658 = vld [vmem:[%s802 + $0x154] sm:$0xf]
      %v2659 = vld [vmem:[%s802 + $0x158] sm:$0xf]
      %v2660 = vld [vmem:[%s802 + $0x15c] sm:$0xf]
      %v2661 = vld [vmem:[%s802 + $0x160] sm:$0xf]
      %v2662 = vld [vmem:[%s802 + $0x164] sm:$0xf]
      %v2663 = vld [vmem:[%s802 + $0x168] sm:$0xf]
      %v2664 = vld [vmem:[%s802 + $0x16c] sm:$0xf]
      %v2665 = vld [vmem:[%s802 + $0x170] sm:$0xf]
      %v2666 = vld [vmem:[%s802 + $0x174] sm:$0xf]
      %v2667 = vld [vmem:[%s802 + $0x178] sm:$0xf]
      %v2668 = vld [vmem:[%s802 + $0x17c] sm:$0xf]
      %v2669 = vld [vmem:[%s802 + $0x180] sm:$0xf]
      %v2670 = vld [vmem:[%s802 + $0x184] sm:$0xf]
      %v2671 = vld [vmem:[%s802 + $0x188] sm:$0xf]
      %v2672 = vld [vmem:[%s802 + $0x18c] sm:$0xf]
      %v2673 = vld [vmem:[%s802 + $0x190] sm:$0xf]
      %v2674 = vld [vmem:[%s802 + $0x194] sm:$0xf]
      %v2675 = vld [vmem:[%s802 + $0x198] sm:$0xf]
      %v2676 = vld [vmem:[%s802 + $0x19c] sm:$0xf]
      %v2677 = vld [vmem:[%s802 + $0x1a0] sm:$0xf]
      %v2678 = vld [vmem:[%s802 + $0x1a4] sm:$0xf]
      %v2679 = vld [vmem:[%s802 + $0x1a8] sm:$0xf]
      %v2680 = vld [vmem:[%s802 + $0x1ac] sm:$0xf]
      %v2681 = vld [vmem:[%s802 + $0x1b0] sm:$0xf]
      %v2682 = vld [vmem:[%s802 + $0x1b4] sm:$0xf]
      %v2683 = vld [vmem:[%s802 + $0x1b8] sm:$0xf]
      %v2684 = vld [vmem:[%s802 + $0x1bc] sm:$0xf]
      %v2685 = vld [vmem:[%s802 + $0x1c0] sm:$0xf]
      %v2686 = vld [vmem:[%s802 + $0x1c4] sm:$0xf]
      %v2687 = vld [vmem:[%s802 + $0x1c8] sm:$0xf]
      %v2688 = vld [vmem:[%s802 + $0x1cc] sm:$0xf]
      %v2689 = vld [vmem:[%s802 + $0x1d0] sm:$0xf]
      %v2690 = vld [vmem:[%s802 + $0x1d4] sm:$0xf]
      %v2691 = vld [vmem:[%s802 + $0x1d8] sm:$0xf]
      %v2692 = vld [vmem:[%s802 + $0x1dc] sm:$0xf]
      %v2693 = vld [vmem:[%s802 + $0x1e0] sm:$0xf]
      %v2694 = vld [vmem:[%s802 + $0x1e4] sm:$0xf]
      %v2695 = vld [vmem:[%s802 + $0x1e8] sm:$0xf]
      %v2696 = vld [vmem:[%s802 + $0x1ec] sm:$0xf]
      %v2697 = vld [vmem:[%s802 + $0x1f0] sm:$0xf]
      %v2698 = vld [vmem:[%s802 + $0x1f4] sm:$0xf]
      %v2699 = vld [vmem:[%s802 + $0x1f8] sm:$0xf]
      %v2700 = vld [vmem:[%s802 + $0x1fc] sm:$0xf]
      %v2701 = vld [vmem:[%s802 + $0x200] sm:$0xf]
      %v2702 = vld [vmem:[%s802 + $0x204] sm:$0xf]
      %v2703 = vld [vmem:[%s802 + $0x208] sm:$0xf]
      %v2704 = vld [vmem:[%s802 + $0x20c] sm:$0xf]
      %v2705 = vld [vmem:[%s802 + $0x210] sm:$0xf]
      %v2706 = vld [vmem:[%s802 + $0x214] sm:$0xf]
      %v2707 = vld [vmem:[%s802 + $0x218] sm:$0xf]
      %v2708 = vld [vmem:[%s802 + $0x21c] sm:$0xf]
      %v2709 = vld [vmem:[%s802 + $0x220] sm:$0xf]
      %v2710 = vld [vmem:[%s802 + $0x224] sm:$0xf]
      %v2711 = vld [vmem:[%s802 + $0x228] sm:$0xf]
      %v2712 = vld [vmem:[%s802 + $0x22c] sm:$0xf]
      %v2713 = vld [vmem:[%s802 + $0x230] sm:$0xf]
      %v2714 = vld [vmem:[%s802 + $0x234] sm:$0xf]
      %v2715 = vld [vmem:[%s802 + $0x238] sm:$0xf]
      %v2716 = vld [vmem:[%s802 + $0x23c] sm:$0xf]
      %v2717 = vld [vmem:[%s802 + $0x240] sm:$0xf]
      %v2718 = vld [vmem:[%s802 + $0x244] sm:$0xf]
      %v2719 = vld [vmem:[%s802 + $0x248] sm:$0xf]
      %v2720 = vld [vmem:[%s802 + $0x24c] sm:$0xf]
      %v2721 = vld [vmem:[%s802 + $0x250] sm:$0xf]
      %v2722 = vld [vmem:[%s802 + $0x254] sm:$0xf]
      %v2723 = vld [vmem:[%s802 + $0x258] sm:$0xf]
      %v2724 = vld [vmem:[%s802 + $0x25c] sm:$0xf]
      %v2725 = vld [vmem:[%s802 + $0x260] sm:$0xf]
      %v2726 = vld [vmem:[%s802 + $0x264] sm:$0xf]
      %v2727 = vld [vmem:[%s802 + $0x268] sm:$0xf]
      %v2728 = vld [vmem:[%s802 + $0x26c] sm:$0xf]
      %v2729 = vld [vmem:[%s802 + $0x270] sm:$0xf]
      %v2730 = vld [vmem:[%s802 + $0x274] sm:$0xf]
      %v2731 = vld [vmem:[%s802 + $0x278] sm:$0xf]
      %v2732 = vld [vmem:[%s802 + $0x27c] sm:$0xf]
      %v2733 = vld [vmem:[%s807] sm:$0x1]
      %v2735 = vlaneseq
      %v2736 = vshrl.u32 %v2735, 7
      %v2737 = vsub.s32 0, %v2736
      %v2738 = vrot.slane %v2733, %v2737
      %v2900 = vunpack.c.l.b16 %v2573
      %v2901 = vunpack.c.l.b16 %v2574
      %v2902 = vunpack.c.l.b16 %v2575
      %v2903 = vunpack.c.l.b16 %v2576
      %v2904 = vunpack.c.l.b16 %v2577
      %v2905 = vunpack.c.l.b16 %v2578
      %v2906 = vunpack.c.l.b16 %v2579
      %v2907 = vunpack.c.l.b16 %v2580
      %v2908 = vunpack.c.l.b16 %v2581
      %v2909 = vunpack.c.l.b16 %v2582
      %v2910 = vunpack.c.l.b16 %v2583
      %v2911 = vunpack.c.l.b16 %v2584
      %v2912 = vunpack.c.l.b16 %v2585
      %v2913 = vunpack.c.l.b16 %v2586
      %v2914 = vunpack.c.l.b16 %v2587
      %v2915 = vunpack.c.l.b16 %v2588
      %v2916 = vunpack.c.l.b16 %v2589
      %v2917 = vunpack.c.l.b16 %v2590
      %v2918 = vunpack.c.l.b16 %v2591
      %v2919 = vunpack.c.l.b16 %v2592
      %v2920 = vunpack.c.l.b16 %v2593
      %v2921 = vunpack.c.l.b16 %v2594
      %v2922 = vunpack.c.l.b16 %v2595
      %v2923 = vunpack.c.l.b16 %v2596
      %v2924 = vunpack.c.l.b16 %v2597
      %v2925 = vunpack.c.l.b16 %v2598
      %v2926 = vunpack.c.l.b16 %v2599
      %v2927 = vunpack.c.l.b16 %v2600
      %v2928 = vunpack.c.l.b16 %v2601
      %v2929 = vunpack.c.l.b16 %v2602
      %v2930 = vunpack.c.l.b16 %v2603
      %v2931 = vunpack.c.l.b16 %v2604
      %v2932 = vunpack.c.l.b16 %v2605
      %v2933 = vunpack.c.l.b16 %v2606
      %v2934 = vunpack.c.l.b16 %v2607
      %v2935 = vunpack.c.l.b16 %v2608
      %v2936 = vunpack.c.l.b16 %v2609
      %v2937 = vunpack.c.l.b16 %v2610
      %v2938 = vunpack.c.l.b16 %v2611
      %v2939 = vunpack.c.l.b16 %v2612
      %v2940 = vunpack.c.l.b16 %v2613
      %v2941 = vunpack.c.l.b16 %v2614
      %v2942 = vunpack.c.l.b16 %v2615
      %v2943 = vunpack.c.l.b16 %v2616
      %v2944 = vunpack.c.l.b16 %v2617
      %v2945 = vunpack.c.l.b16 %v2618
      %v2946 = vunpack.c.l.b16 %v2619
      %v2947 = vunpack.c.l.b16 %v2620
      %v2948 = vunpack.c.l.b16 %v2621
      %v2949 = vunpack.c.l.b16 %v2622
      %v2950 = vunpack.c.l.b16 %v2623
      %v2951 = vunpack.c.l.b16 %v2624
      %v2952 = vunpack.c.l.b16 %v2625
      %v2953 = vunpack.c.l.b16 %v2626
      %v2954 = vunpack.c.l.b16 %v2627
      %v2955 = vunpack.c.l.b16 %v2628
      %v2956 = vunpack.c.l.b16 %v2629
      %v2957 = vunpack.c.l.b16 %v2630
      %v2958 = vunpack.c.l.b16 %v2631
      %v2959 = vunpack.c.l.b16 %v2632
      %v2960 = vunpack.c.l.b16 %v2633
      %v2961 = vunpack.c.l.b16 %v2634
      %v2962 = vunpack.c.l.b16 %v2635
      %v2963 = vunpack.c.l.b16 %v2636
      %v2964 = vunpack.c.l.b16 %v2637
      %v2965 = vunpack.c.l.b16 %v2638
      %v2966 = vunpack.c.l.b16 %v2639
      %v2967 = vunpack.c.l.b16 %v2640
      %v2968 = vunpack.c.l.b16 %v2641
      %v2969 = vunpack.c.l.b16 %v2642
      %v2970 = vunpack.c.l.b16 %v2643
      %v2971 = vunpack.c.l.b16 %v2644
      %v2972 = vunpack.c.l.b16 %v2645
      %v2973 = vunpack.c.l.b16 %v2646
      %v2974 = vunpack.c.l.b16 %v2647
      %v2975 = vunpack.c.l.b16 %v2648
      %v2976 = vunpack.c.l.b16 %v2649
      %v2977 = vunpack.c.l.b16 %v2650
      %v2978 = vunpack.c.l.b16 %v2651
      %v2979 = vunpack.c.l.b16 %v2652
      %v2980 = vunpack.c.l.b16 %v2653
      %v2981 = vunpack.c.l.b16 %v2654
      %v2982 = vunpack.c.l.b16 %v2655
      %v2983 = vunpack.c.l.b16 %v2656
      %v2984 = vunpack.c.l.b16 %v2657
      %v2985 = vunpack.c.l.b16 %v2658
      %v2986 = vunpack.c.l.b16 %v2659
      %v2987 = vunpack.c.l.b16 %v2660
      %v2988 = vunpack.c.l.b16 %v2661
      %v2989 = vunpack.c.l.b16 %v2662
      %v2990 = vunpack.c.l.b16 %v2663
      %v2991 = vunpack.c.l.b16 %v2664
      %v2992 = vunpack.c.l.b16 %v2665
      %v2993 = vunpack.c.l.b16 %v2666
      %v2994 = vunpack.c.l.b16 %v2667
      %v2995 = vunpack.c.l.b16 %v2668
      %v2996 = vunpack.c.l.b16 %v2669
      %v2997 = vunpack.c.l.b16 %v2670
      %v2998 = vunpack.c.l.b16 %v2671
      %v2999 = vunpack.c.l.b16 %v2672
      %v3000 = vunpack.c.l.b16 %v2673
      %v3001 = vunpack.c.l.b16 %v2674
      %v3002 = vunpack.c.l.b16 %v2675
      %v3003 = vunpack.c.l.b16 %v2676
      %v3004 = vunpack.c.l.b16 %v2677
      %v3005 = vunpack.c.l.b16 %v2678
      %v3006 = vunpack.c.l.b16 %v2679
      %v3007 = vunpack.c.l.b16 %v2680
      %v3008 = vunpack.c.l.b16 %v2681
      %v3009 = vunpack.c.l.b16 %v2682
      %v3010 = vunpack.c.l.b16 %v2683
      %v3011 = vunpack.c.l.b16 %v2684
      %v3012 = vunpack.c.l.b16 %v2685
      %v3013 = vunpack.c.l.b16 %v2686
      %v3014 = vunpack.c.l.b16 %v2687
      %v3015 = vunpack.c.l.b16 %v2688
      %v3016 = vunpack.c.l.b16 %v2689
      %v3017 = vunpack.c.l.b16 %v2690
      %v3018 = vunpack.c.l.b16 %v2691
      %v3019 = vunpack.c.l.b16 %v2692
      %v3020 = vunpack.c.l.b16 %v2693
      %v3021 = vunpack.c.l.b16 %v2694
      %v3022 = vunpack.c.l.b16 %v2695
      %v3023 = vunpack.c.l.b16 %v2696
      %v3024 = vunpack.c.l.b16 %v2697
      %v3025 = vunpack.c.l.b16 %v2698
      %v3026 = vunpack.c.l.b16 %v2699
      %v3027 = vunpack.c.l.b16 %v2700
      %v3028 = vunpack.c.l.b16 %v2701
      %v3029 = vunpack.c.l.b16 %v2702
      %v3030 = vunpack.c.l.b16 %v2703
      %v3031 = vunpack.c.l.b16 %v2704
      %v3032 = vunpack.c.l.b16 %v2705
      %v3033 = vunpack.c.l.b16 %v2706
      %v3034 = vunpack.c.l.b16 %v2707
      %v3035 = vunpack.c.l.b16 %v2708
      %v3036 = vunpack.c.l.b16 %v2709
      %v3037 = vunpack.c.l.b16 %v2710
      %v3038 = vunpack.c.l.b16 %v2711
      %v3039 = vunpack.c.l.b16 %v2712
      %v3040 = vunpack.c.l.b16 %v2713
      %v3041 = vunpack.c.l.b16 %v2714
      %v3042 = vunpack.c.l.b16 %v2715
      %v3043 = vunpack.c.l.b16 %v2716
      %v3044 = vunpack.c.l.b16 %v2717
      %v3045 = vunpack.c.l.b16 %v2718
      %v3046 = vunpack.c.l.b16 %v2719
      %v3047 = vunpack.c.l.b16 %v2720
      %v3048 = vunpack.c.l.b16 %v2721
      %v3049 = vunpack.c.l.b16 %v2722
      %v3050 = vunpack.c.l.b16 %v2723
      %v3051 = vunpack.c.l.b16 %v2724
      %v3052 = vunpack.c.l.b16 %v2725
      %v3053 = vunpack.c.l.b16 %v2726
      %v3054 = vunpack.c.l.b16 %v2727
      %v3055 = vunpack.c.l.b16 %v2728
      %v3056 = vunpack.c.l.b16 %v2729
      %v3057 = vunpack.c.l.b16 %v2730
      %v3058 = vunpack.c.l.b16 %v2731
      %v3059 = vunpack.c.l.b16 %v2732
      %v3060 = vpack.c.b16 %v2901, %v2900
      %v3061 = vpack.c.b16 %v2903, %v2902
      %v3062 = vpack.c.b16 %v2905, %v2904
      %v3063 = vpack.c.b16 %v2907, %v2906
      %v3064 = vpack.c.b16 %v2909, %v2908
      %v3065 = vpack.c.b16 %v2911, %v2910
      %v3066 = vpack.c.b16 %v2913, %v2912
      %v3067 = vpack.c.b16 %v2915, %v2914
      %v3068 = vpack.c.b16 %v2917, %v2916
      %v3069 = vpack.c.b16 %v2919, %v2918
      %v3070 = vpack.c.b16 %v2921, %v2920
      %v3071 = vpack.c.b16 %v2923, %v2922
      %v3072 = vpack.c.b16 %v2925, %v2924
      %v3073 = vpack.c.b16 %v2927, %v2926
      %v3074 = vpack.c.b16 %v2929, %v2928
      %v3075 = vpack.c.b16 %v2931, %v2930
      %v3076 = vpack.c.b16 %v2933, %v2932
      %v3077 = vpack.c.b16 %v2935, %v2934
      %v3078 = vpack.c.b16 %v2937, %v2936
      %v3079 = vpack.c.b16 %v2939, %v2938
      %v3080 = vpack.c.b16 %v2941, %v2940
      %v3081 = vpack.c.b16 %v2943, %v2942
      %v3082 = vpack.c.b16 %v2945, %v2944
      %v3083 = vpack.c.b16 %v2947, %v2946
      %v3084 = vpack.c.b16 %v2949, %v2948
      %v3085 = vpack.c.b16 %v2951, %v2950
      %v3086 = vpack.c.b16 %v2953, %v2952
      %v3087 = vpack.c.b16 %v2955, %v2954
      %v3088 = vpack.c.b16 %v2957, %v2956
      %v3089 = vpack.c.b16 %v2959, %v2958
      %v3090 = vpack.c.b16 %v2961, %v2960
      %v3091 = vpack.c.b16 %v2963, %v2962
      %v3092 = vpack.c.b16 %v2965, %v2964
      %v3093 = vpack.c.b16 %v2967, %v2966
      %v3094 = vpack.c.b16 %v2969, %v2968
      %v3095 = vpack.c.b16 %v2971, %v2970
      %v3096 = vpack.c.b16 %v2973, %v2972
      %v3097 = vpack.c.b16 %v2975, %v2974
      %v3098 = vpack.c.b16 %v2977, %v2976
      %v3099 = vpack.c.b16 %v2979, %v2978
      %v3100 = vpack.c.b16 %v2981, %v2980
      %v3101 = vpack.c.b16 %v2983, %v2982
      %v3102 = vpack.c.b16 %v2985, %v2984
      %v3103 = vpack.c.b16 %v2987, %v2986
      %v3104 = vpack.c.b16 %v2989, %v2988
      %v3105 = vpack.c.b16 %v2991, %v2990
      %v3106 = vpack.c.b16 %v2993, %v2992
      %v3107 = vpack.c.b16 %v2995, %v2994
      %v3108 = vpack.c.b16 %v2997, %v2996
      %v3109 = vpack.c.b16 %v2999, %v2998
      %v3110 = vpack.c.b16 %v3001, %v3000
      %v3111 = vpack.c.b16 %v3003, %v3002
      %v3112 = vpack.c.b16 %v3005, %v3004
      %v3113 = vpack.c.b16 %v3007, %v3006
      %v3114 = vpack.c.b16 %v3009, %v3008
      %v3115 = vpack.c.b16 %v3011, %v3010
      %v3116 = vpack.c.b16 %v3013, %v3012
      %v3117 = vpack.c.b16 %v3015, %v3014
      %v3118 = vpack.c.b16 %v3017, %v3016
      %v3119 = vpack.c.b16 %v3019, %v3018
      %v3120 = vpack.c.b16 %v3021, %v3020
      %v3121 = vpack.c.b16 %v3023, %v3022
      %v3122 = vpack.c.b16 %v3025, %v3024
      %v3123 = vpack.c.b16 %v3027, %v3026
      %v3124 = vpack.c.b16 %v3029, %v3028
      %v3125 = vpack.c.b16 %v3031, %v3030
      %v3126 = vpack.c.b16 %v3033, %v3032
      %v3127 = vpack.c.b16 %v3035, %v3034
      %v3128 = vpack.c.b16 %v3037, %v3036
      %v3129 = vpack.c.b16 %v3039, %v3038
      %v3130 = vpack.c.b16 %v3041, %v3040
      %v3131 = vpack.c.b16 %v3043, %v3042
      %v3132 = vpack.c.b16 %v3045, %v3044
      %v3133 = vpack.c.b16 %v3047, %v3046
      %v3134 = vpack.c.b16 %v3049, %v3048
      %v3135 = vpack.c.b16 %v3051, %v3050
      %v3136 = vpack.c.b16 %v3053, %v3052
      %v3137 = vpack.c.b16 %v3055, %v3054
      %v3138 = vpack.c.b16 %v3057, %v3056
      %v3139 = vpack.c.b16 %v3059, %v3058
      %3220 = vmatprep.subr.bf16.mxu0 0
      %3221 = vmatpush1.bf16.msra.mxu0 %v3067
      %3222 = vmatprep.subr.bf16.mxu0 0
      %3223 = vmatpush1.bf16.msra.mxu0 %v3066
      %3224 = vmatprep.subr.bf16.mxu0 0
      %3225 = vmatpush1.bf16.msra.mxu0 %v3065
      %3226 = vmatprep.subr.bf16.mxu0 0
      %3227 = vmatpush1.bf16.msra.mxu0 %v3064
      %3228 = vmatprep.subr.bf16.mxu0 0
      %3229 = vmatpush1.bf16.msra.mxu0 %v3063
      %3230 = vmatprep.subr.bf16.mxu0 0
      %3231 = vmatpush1.bf16.msra.mxu0 %v3062
      %3232 = vmatprep.subr.bf16.mxu0 0
      %3233 = vmatpush1.bf16.msra.mxu0 %v3061
      %3234 = vmatprep.subr.bf16.mxu0 0
      %3235 = vmatpush1.bf16.msra.mxu0 %v3060
      %3236 = vmatprep.subr.bf16.mxu0 0
      %3237 = vmatpush2.bf16.msra.mxu0 %v3075
      %3238 = vmatprep.subr.bf16.mxu0 0
      %3239 = vmatpush2.bf16.msra.mxu0 %v3074
      %3240 = vmatprep.subr.bf16.mxu0 0
      %3241 = vmatpush2.bf16.msra.mxu0 %v3073
      %3242 = vmatprep.subr.bf16.mxu0 0
      %3243 = vmatpush2.bf16.msra.mxu0 %v3072
      %3244 = vmatprep.subr.bf16.mxu0 0
      %3245 = vmatpush2.bf16.msra.mxu0 %v3071
      %3246 = vmatprep.subr.bf16.mxu0 0
      %3247 = vmatpush2.bf16.msra.mxu0 %v3070
      %3248 = vmatprep.subr.bf16.mxu0 0
      %3249 = vmatpush2.bf16.msra.mxu0 %v3069
      %3250 = vmatprep.subr.bf16.mxu0 0
      %3251 = vmatpush2.bf16.msra.mxu0 %v3068
      %3252 = vmatprep.mubr.bf16.mxu0 %v2564
      %3253 = vmatmul.mubr.bf16.gmra.mxu0 %v2563
      %v3254 = vpop.f32.mrf.mxu0
      %v3255 = vadd.f32 %v2738, %v3254
      %v3256 = vpop.f32.mrf.mxu0
      %v3257 = vpop.f32.mrf.mxu0
      %v3258 = vadd.f32 %v2738, %v3257
      %v3259 = vpop.f32.mrf.mxu0
      %3260 = vdwg.mxu0
      %3261 = vmatprep.subr.bf16.mxu0 0
      %3262 = vmatpush1.bf16.msra.mxu0 %v3083
      %3263 = vmatprep.subr.bf16.mxu0 0
      %3264 = vmatpush1.bf16.msra.mxu0 %v3082
      %3265 = vmatprep.subr.bf16.mxu0 0
      %3266 = vmatpush1.bf16.msra.mxu0 %v3081
      %3267 = vmatprep.subr.bf16.mxu0 0
      %3268 = vmatpush1.bf16.msra.mxu0 %v3080
      %3269 = vmatprep.subr.bf16.mxu0 0
      %3270 = vmatpush1.bf16.msra.mxu0 %v3079
      %3271 = vmatprep.subr.bf16.mxu0 0
      %3272 = vmatpush1.bf16.msra.mxu0 %v3078
      %3273 = vmatprep.subr.bf16.mxu0 0
      %3274 = vmatpush1.bf16.msra.mxu0 %v3077
      %3275 = vmatprep.subr.bf16.mxu0 0
      %3276 = vmatpush1.bf16.msra.mxu0 %v3076
      %3277 = vmatprep.subr.bf16.mxu0 0
      %3278 = vmatpush2.bf16.msra.mxu0 %v3091
      %3279 = vmatprep.subr.bf16.mxu0 0
      %3280 = vmatpush2.bf16.msra.mxu0 %v3090
      %3281 = vmatprep.subr.bf16.mxu0 0
      %3282 = vmatpush2.bf16.msra.mxu0 %v3089
      %3283 = vmatprep.subr.bf16.mxu0 0
      %3284 = vmatpush2.bf16.msra.mxu0 %v3088
      %3285 = vmatprep.subr.bf16.mxu0 0
      %3286 = vmatpush2.bf16.msra.mxu0 %v3087
      %3287 = vmatprep.subr.bf16.mxu0 0
      %3288 = vmatpush2.bf16.msra.mxu0 %v3086
      %3289 = vmatprep.subr.bf16.mxu0 0
      %3290 = vmatpush2.bf16.msra.mxu0 %v3085
      %3291 = vmatprep.subr.bf16.mxu0 0
      %3292 = vmatpush2.bf16.msra.mxu0 %v3084
      %3293 = vmatprep.mubr.bf16.mxu0 %v2566
      %3294 = vmatmul.mubr.bf16.gmra.mxu0 %v2565
      %v3295 = vpop.f32.mrf.mxu0
      %v3296 = vadd.f32 %v3255, %v3295
      %v3297 = vpop.f32.mrf.mxu0
      %v3298 = vpop.f32.mrf.mxu0
      %v3299 = vadd.f32 %v3258, %v3298
      %v3300 = vpop.f32.mrf.mxu0
      %3301 = vdwg.mxu0
      %3302 = vmatprep.subr.bf16.mxu0 0
      %3303 = vmatpush1.bf16.msra.mxu0 %v3099
      %3304 = vmatprep.subr.bf16.mxu0 0
      %3305 = vmatpush1.bf16.msra.mxu0 %v3098
      %3306 = vmatprep.subr.bf16.mxu0 0
      %3307 = vmatpush1.bf16.msra.mxu0 %v3097
      %3308 = vmatprep.subr.bf16.mxu0 0
      %3309 = vmatpush1.bf16.msra.mxu0 %v3096
      %3310 = vmatprep.subr.bf16.mxu0 0
      %3311 = vmatpush1.bf16.msra.mxu0 %v3095
      %3312 = vmatprep.subr.bf16.mxu0 0
      %3313 = vmatpush1.bf16.msra.mxu0 %v3094
      %3314 = vmatprep.subr.bf16.mxu0 0
      %3315 = vmatpush1.bf16.msra.mxu0 %v3093
      %3316 = vmatprep.subr.bf16.mxu0 0
      %3317 = vmatpush1.bf16.msra.mxu0 %v3092
      %3318 = vmatprep.subr.bf16.mxu0 0
      %3319 = vmatpush2.bf16.msra.mxu0 %v3107
      %3320 = vmatprep.subr.bf16.mxu0 0
      %3321 = vmatpush2.bf16.msra.mxu0 %v3106
      %3322 = vmatprep.subr.bf16.mxu0 0
      %3323 = vmatpush2.bf16.msra.mxu0 %v3105
      %3324 = vmatprep.subr.bf16.mxu0 0
      %3325 = vmatpush2.bf16.msra.mxu0 %v3104
      %3326 = vmatprep.subr.bf16.mxu0 0
      %3327 = vmatpush2.bf16.msra.mxu0 %v3103
      %3328 = vmatprep.subr.bf16.mxu0 0
      %3329 = vmatpush2.bf16.msra.mxu0 %v3102
      %3330 = vmatprep.subr.bf16.mxu0 0
      %3331 = vmatpush2.bf16.msra.mxu0 %v3101
      %3332 = vmatprep.subr.bf16.mxu0 0
      %3333 = vmatpush2.bf16.msra.mxu0 %v3100
      %3334 = vmatprep.mubr.bf16.mxu0 %v2568
      %3335 = vmatmul.mubr.bf16.gmra.mxu0 %v2567
      %v3336 = vpop.f32.mrf.mxu0
      %v3337 = vadd.f32 %v3296, %v3336
      %v3338 = vpop.f32.mrf.mxu0
      %v3339 = vpop.f32.mrf.mxu0
      %v3340 = vadd.f32 %v3299, %v3339
      %v3341 = vpop.f32.mrf.mxu0
      %3342 = vdwg.mxu0
      %3343 = vmatprep.subr.bf16.mxu0 0
      %3344 = vmatpush1.bf16.msra.mxu0 %v3115
      %3345 = vmatprep.subr.bf16.mxu0 0
      %3346 = vmatpush1.bf16.msra.mxu0 %v3114
      %3347 = vmatprep.subr.bf16.mxu0 0
      %3348 = vmatpush1.bf16.msra.mxu0 %v3113
      %3349 = vmatprep.subr.bf16.mxu0 0
      %3350 = vmatpush1.bf16.msra.mxu0 %v3112
      %3351 = vmatprep.subr.bf16.mxu0 0
      %3352 = vmatpush1.bf16.msra.mxu0 %v3111
      %3353 = vmatprep.subr.bf16.mxu0 0
      %3354 = vmatpush1.bf16.msra.mxu0 %v3110
      %3355 = vmatprep.subr.bf16.mxu0 0
      %3356 = vmatpush1.bf16.msra.mxu0 %v3109
      %3357 = vmatprep.subr.bf16.mxu0 0
      %3358 = vmatpush1.bf16.msra.mxu0 %v3108
      %3359 = vmatprep.subr.bf16.mxu0 0
      %3360 = vmatpush2.bf16.msra.mxu0 %v3123
      %3361 = vmatprep.subr.bf16.mxu0 0
      %3362 = vmatpush2.bf16.msra.mxu0 %v3122
      %3363 = vmatprep.subr.bf16.mxu0 0
      %3364 = vmatpush2.bf16.msra.mxu0 %v3121
      %3365 = vmatprep.subr.bf16.mxu0 0
      %3366 = vmatpush2.bf16.msra.mxu0 %v3120
      %3367 = vmatprep.subr.bf16.mxu0 0
      %3368 = vmatpush2.bf16.msra.mxu0 %v3119
      %3369 = vmatprep.subr.bf16.mxu0 0
      %3370 = vmatpush2.bf16.msra.mxu0 %v3118
      %3371 = vmatprep.subr.bf16.mxu0 0
      %3372 = vmatpush2.bf16.msra.mxu0 %v3117
      %3373 = vmatprep.subr.bf16.mxu0 0
      %3374 = vmatpush2.bf16.msra.mxu0 %v3116
      %3375 = vmatprep.mubr.bf16.mxu0 %v2570
      %3376 = vmatmul.mubr.bf16.gmra.mxu0 %v2569
      %v3377 = vpop.f32.mrf.mxu0
      %v3378 = vadd.f32 %v3337, %v3377
      %v3379 = vpop.f32.mrf.mxu0
      %v3380 = vpop.f32.mrf.mxu0
      %v3381 = vadd.f32 %v3340, %v3380
      %v3382 = vpop.f32.mrf.mxu0
      %3383 = vdwg.mxu0
      %3384 = vmatprep.subr.bf16.mxu0 0
      %3385 = vmatpush1.bf16.msra.mxu0 %v3131
      %3386 = vmatprep.subr.bf16.mxu0 0
      %3387 = vmatpush1.bf16.msra.mxu0 %v3130
      %3388 = vmatprep.subr.bf16.mxu0 0
      %3389 = vmatpush1.bf16.msra.mxu0 %v3129
      %3390 = vmatprep.subr.bf16.mxu0 0
      %3391 = vmatpush1.bf16.msra.mxu0 %v3128
      %3392 = vmatprep.subr.bf16.mxu0 0
      %3393 = vmatpush1.bf16.msra.mxu0 %v3127
      %3394 = vmatprep.subr.bf16.mxu0 0
      %3395 = vmatpush1.bf16.msra.mxu0 %v3126
      %3396 = vmatprep.subr.bf16.mxu0 0
      %3397 = vmatpush1.bf16.msra.mxu0 %v3125
      %3398 = vmatprep.subr.bf16.mxu0 0
      %3399 = vmatpush1.bf16.msra.mxu0 %v3124
      %3400 = vmatprep.subr.bf16.mxu0 0
      %3401 = vmatpush2.bf16.msra.mxu0 %v3139
      %3402 = vmatprep.subr.bf16.mxu0 0
      %3403 = vmatpush2.bf16.msra.mxu0 %v3138
      %3404 = vmatprep.subr.bf16.mxu0 0
      %3405 = vmatpush2.bf16.msra.mxu0 %v3137
      %3406 = vmatprep.subr.bf16.mxu0 0
      %3407 = vmatpush2.bf16.msra.mxu0 %v3136
      %3408 = vmatprep.subr.bf16.mxu0 0
      %3409 = vmatpush2.bf16.msra.mxu0 %v3135
      %3410 = vmatprep.subr.bf16.mxu0 0
      %3411 = vmatpush2.bf16.msra.mxu0 %v3134
      %3412 = vmatprep.subr.bf16.mxu0 0
      %3413 = vmatpush2.bf16.msra.mxu0 %v3133
      %3414 = vmatprep.subr.bf16.mxu0 0
      %3415 = vmatpush2.bf16.msra.mxu0 %v3132
      %3416 = vmatprep.mubr.bf16.mxu0 %v2572
      %3417 = vmatmul.mubr.bf16.gmra.mxu0 %v2571
      %v3418 = vpop.f32.mrf.mxu0
      %v3419 = vadd.f32 %v3378, %v3418
      %v3420 = vpop.f32.mrf.mxu0
      %v3421 = vpop.f32.mrf.mxu0
      %v3422 = vadd.f32 %v3381, %v3421
      %v3423 = vpop.f32.mrf.mxu0
      %3424 = vdwg.mxu0
      %v3425 = vadd.f32 %v3419, %v1988
      %v3426 = vadd.f32 %v3422, %v1989
      %v3427 = vld [vmem:[%s812] sm:$0x1]
      %v3428 = vld [vmem:[%s817] sm:$0x1]
      %v3429 = vsel %vm828, %v3425, 0.0
      %3430 = vadd.xlane.f32.xlu0 %v3429
      %v3431 = vpop.xlane.xlu0 %3430
      %v3432 = vsel %vm828, %v3426, 0.0
      %3433 = vadd.xlane.f32.xlu0 %v3432
      %v3434 = vpop.xlane.xlu0 %3433
      %v3435 = vmul.f32 %v3431, %v835
      %v3436 = vmul.f32 %v3434, %v835
      %v3437 = vsub.f32 %v3425, %v3435
      %v3438 = vsub.f32 %v3426, %v3436
      %v3439 = vmul.f32 %v3437, %v3437
      %v3440 = vmul.f32 %v3438, %v3438
      %v3441 = vsel %vm828, %v3439, 0.0
      %3442 = vadd.xlane.f32.xlu0 %v3441
      %v3443 = vpop.xlane.xlu0 %3442
      %v3444 = vsel %vm828, %v3440, 0.0
      %3445 = vadd.xlane.f32.xlu0 %v3444
      %v3446 = vpop.xlane.xlu0 %3445
      %v3447 = vmul.f32 %v3443, %v835
      %v3448 = vmul.f32 %v3446, %v835
      %v3449 = vadd.f32 %v3447, 1e-12
      %v3450 = vadd.f32 %v3448, 1e-12
      %v3451 = vrsqrt.pop %v3449
      %v3452 = vrsqrt.pop %v3450
      %v3453 = vmul.f32 %v3437, %v3451
      %v3454 = vmul.f32 %v3438, %v3452
      %v3456 = vlaneseq
      %v3457 = vshrl.u32 %v3456, 7
      %v3458 = vsub.s32 0, %v3457
      %v3459 = vrot.slane %v3427, %v3458
      %v3461 = vmul.f32 %v3453, %v3459
      %v3462 = vmul.f32 %v3454, %v3459
      %v3464 = vlaneseq
      %v3465 = vshrl.u32 %v3464, 7
      %v3466 = vsub.s32 0, %v3465
      %v3467 = vrot.slane %v3428, %v3466
      %v3469 = vadd.f32 %v3461, %v3467
      %v3470 = vadd.f32 %v3462, %v3467
      %v3471 = vpack.c.bf16 %v3470, %v3469
      %s3472 = scalar_lea.vmem %s755, 16
      %v3473 = vld [vmem:[%s3472] sm:$0xf]
      %v3474 = vld [vmem:[%s3472 + $0x4] sm:$0xf]
      %v3475 = vld [vmem:[%s3472 + $0x8] sm:$0xf]
      %v3476 = vld [vmem:[%s3472 + $0xc] sm:$0xf]
      %s3477 = scalar_lea.vmem %s760, 1
      %v3478 = vld [vmem:[%s3477] sm:$0x1]
      %v3480 = vlaneseq
      %v3481 = vshrl.u32 %v3480, 7
      %v3482 = vsub.s32 0, %v3481
      %v3483 = vrot.slane %v3478, %v3482
      %v3489 = vunpack.c.l.b16 %v3473
      %v3490 = vunpack.c.l.b16 %v3474
      %v3491 = vunpack.c.l.b16 %v3475
      %v3492 = vunpack.c.l.b16 %v3476
      %v3493 = vpack.c.b16 %v3490, %v3489
      %v3494 = vpack.c.b16 %v3492, %v3491
      %v3498 = vsel %vm828, %v3471, 0
      %3500 = vmatprep.subr.bf16.mxu0 0
      %3501 = vmatpush1.bf16.msra.mxu0 0
      %3502 = vmatprep.subr.bf16.mxu0 0
      %3503 = vmatpush1.bf16.msra.mxu0 0
      %3504 = vmatprep.subr.bf16.mxu0 0
      %3505 = vmatpush1.bf16.msra.mxu0 0
      %3506 = vmatprep.subr.bf16.mxu0 0
      %3507 = vmatpush1.bf16.msra.mxu0 0
      %3508 = vmatprep.subr.bf16.mxu0 0
      %3509 = vmatpush1.bf16.msra.mxu0 0
      %3510 = vmatprep.subr.bf16.mxu0 0
      %3511 = vmatpush1.bf16.msra.mxu0 0
      %3512 = vmatprep.subr.bf16.mxu0 0
      %3513 = vmatpush1.bf16.msra.mxu0 %v3494
      %3514 = vmatprep.subr.bf16.mxu0 0
      %3515 = vmatpush1.bf16.msra.mxu0 %v3493
      %3516 = vmatprep.subr.bf16.mxu0 0
      %3517 = vmatpush2.bf16.msra.mxu0 0
      %3518 = vmatprep.subr.bf16.mxu0 0
      %3519 = vmatpush2.bf16.msra.mxu0 0
      %3520 = vmatprep.subr.bf16.mxu0 0
      %3521 = vmatpush2.bf16.msra.mxu0 0
      %3522 = vmatprep.subr.bf16.mxu0 0
      %3523 = vmatpush2.bf16.msra.mxu0 0
      %3524 = vmatprep.subr.bf16.mxu0 0
      %3525 = vmatpush2.bf16.msra.mxu0 0
      %3526 = vmatprep.subr.bf16.mxu0 0
      %3527 = vmatpush2.bf16.msra.mxu0 0
      %3528 = vmatprep.subr.bf16.mxu0 0
      %3529 = vmatpush2.bf16.msra.mxu0 0
      %3530 = vmatprep.subr.bf16.mxu0 0
      %3531 = vmatpush2.bf16.msra.mxu0 0
      %3532 = vmatprep.mubr.bf16.mxu0 0
      %3533 = vmatmul.mubr.bf16.gmra.mxu0 %v3498
      %v3534 = vpop.f32.mrf.mxu0
      %v3535 = vadd.f32 %v3483, %v3534
      %v3536 = vpop.f32.mrf.mxu0
      %v3537 = vpop.f32.mrf.mxu0
      %v3538 = vadd.f32 %v3483, %v3537
      %v3539 = vpop.f32.mrf.mxu0
      %3540 = vdwg.mxu0
      %3543 = vrot.lane.b32.xlu0 %v3535, 120
      %v3544 = vpop.permute.xlu0 %3543
      %3545 = vrot.lane.b32.xlu0 %v3538, 120
      %v3546 = vpop.permute.xlu0 %3545
      %3549 = vrot.lane.b32.xlu0 %v3535, 112
      %v3550 = vpop.permute.xlu0 %3549
      %3551 = vrot.lane.b32.xlu0 %v3538, 112
      %v3552 = vpop.permute.xlu0 %3551
      %3555 = vrot.lane.b32.xlu0 %v3535, 104
      %v3556 = vpop.permute.xlu0 %3555
      %3557 = vrot.lane.b32.xlu0 %v3538, 104
      %v3558 = vpop.permute.xlu0 %3557
      %v3561 = vpack.c.bf16 %v3535, %v3535
      %v3562 = vpack.c.bf16 %v3538, %v3538
      %v3563 = vpack.c.bf16 %v3544, %v3544
      %v3564 = vpack.c.bf16 %v3546, %v3546
      %v3565 = vpack.c.bf16 %v3550, %v3550
      %v3566 = vpack.c.bf16 %v3552, %v3552
      %v3567 = vpack.c.bf16 %v3556, %v3556
      %v3568 = vpack.c.bf16 %v3558, %v3558
      %3570 = vrot.lane.b32.xlu0 %v3561, 96
      %v3571 = vpop.permute.xlu0 %3570
      %v3573 = vsel %vm973, %v3561, 0
      %v3576 = vsel %vm973, %v3571, 0
      %3578 = vmatprep.subr.bf16.mxu0 0
      %3579 = vmatpush1.bf16.xpose.msra.mxu0 0
      %3580 = vmatprep.subr.bf16.mxu0 0
      %3581 = vmatpush1.bf16.xpose.msra.mxu0 0
      %3582 = vmatprep.subr.bf16.mxu0 0
      %3583 = vmatpush1.bf16.xpose.msra.mxu0 0
      %3584 = vmatprep.subr.bf16.mxu0 0
      %3585 = vmatpush1.bf16.xpose.msra.mxu0 0
      %3586 = vmatprep.subr.bf16.mxu0 0
      %3587 = vmatpush1.bf16.xpose.msra.mxu0 0
      %3588 = vmatprep.subr.bf16.mxu0 0
      %3589 = vmatpush1.bf16.xpose.msra.mxu0 0
      %3590 = vmatprep.subr.bf16.mxu0 0
      %3591 = vmatpush1.bf16.xpose.msra.mxu0 0
      %3592 = vmatprep.subr.bf16.mxu0 0
      %3593 = vmatpush1.bf16.xpose.msra.mxu0 %v3576
      %3594 = vmatprep.subr.bf16.mxu0 0
      %3595 = vmatpush2.bf16.xpose.msra.mxu0 0
      %3596 = vmatprep.subr.bf16.mxu0 0
      %3597 = vmatpush2.bf16.xpose.msra.mxu0 0
      %3598 = vmatprep.subr.bf16.mxu0 0
      %3599 = vmatpush2.bf16.xpose.msra.mxu0 0
      %3600 = vmatprep.subr.bf16.mxu0 0
      %3601 = vmatpush2.bf16.xpose.msra.mxu0 0
      %3602 = vmatprep.subr.bf16.mxu0 0
      %3603 = vmatpush2.bf16.xpose.msra.mxu0 0
      %3604 = vmatprep.subr.bf16.mxu0 0
      %3605 = vmatpush2.bf16.xpose.msra.mxu0 0
      %3606 = vmatprep.subr.bf16.mxu0 0
      %3607 = vmatpush2.bf16.xpose.msra.mxu0 0
      %3608 = vmatprep.subr.bf16.mxu0 0
      %3609 = vmatpush2.bf16.xpose.msra.mxu0 0
      %3610 = vmatprep.mubr.bf16.mxu0 0
      %3611 = vmatmul.mubr.bf16.gmra.mxu0 %v3573
      %v3612 = vpop.f32.mrf.mxu0
      %v3613 = vadd.f32 %v872, %v3612
      %v3614 = vpop.f32.mrf.mxu0
      %v3615 = vpop.f32.mrf.mxu0
      %v3616 = vpop.f32.mrf.mxu0
      %3617 = vdwg.mxu0
      %3619 = vrot.lane.b32.xlu0 %v3562, 96
      %v3620 = vpop.permute.xlu0 %3619
      %v3622 = vsel %vm973, %v3562, 0
      %v3625 = vsel %vm973, %v3620, 0
      %3627 = vmatprep.subr.bf16.mxu0 0
      %3628 = vmatpush1.bf16.xpose.msra.mxu0 0
      %3629 = vmatprep.subr.bf16.mxu0 0
      %3630 = vmatpush1.bf16.xpose.msra.mxu0 0
      %3631 = vmatprep.subr.bf16.mxu0 0
      %3632 = vmatpush1.bf16.xpose.msra.mxu0 0
      %3633 = vmatprep.subr.bf16.mxu0 0
      %3634 = vmatpush1.bf16.xpose.msra.mxu0 0
      %3635 = vmatprep.subr.bf16.mxu0 0
      %3636 = vmatpush1.bf16.xpose.msra.mxu0 0
      %3637 = vmatprep.subr.bf16.mxu0 0
      %3638 = vmatpush1.bf16.xpose.msra.mxu0 0
      %3639 = vmatprep.subr.bf16.mxu0 0
      %3640 = vmatpush1.bf16.xpose.msra.mxu0 0
      %3641 = vmatprep.subr.bf16.mxu0 0
      %3642 = vmatpush1.bf16.xpose.msra.mxu0 %v3625
      %3643 = vmatprep.subr.bf16.mxu0 0
      %3644 = vmatpush2.bf16.xpose.msra.mxu0 0
      %3645 = vmatprep.subr.bf16.mxu0 0
      %3646 = vmatpush2.bf16.xpose.msra.mxu0 0
      %3647 = vmatprep.subr.bf16.mxu0 0
      %3648 = vmatpush2.bf16.xpose.msra.mxu0 0
      %3649 = vmatprep.subr.bf16.mxu0 0
      %3650 = vmatpush2.bf16.xpose.msra.mxu0 0
      %3651 = vmatprep.subr.bf16.mxu0 0
      %3652 = vmatpush2.bf16.xpose.msra.mxu0 0
      %3653 = vmatprep.subr.bf16.mxu0 0
      %3654 = vmatpush2.bf16.xpose.msra.mxu0 0
      %3655 = vmatprep.subr.bf16.mxu0 0
      %3656 = vmatpush2.bf16.xpose.msra.mxu0 0
      %3657 = vmatprep.subr.bf16.mxu0 0
      %3658 = vmatpush2.bf16.xpose.msra.mxu0 0
      %3659 = vmatprep.mubr.bf16.mxu0 0
      %3660 = vmatmul.mubr.bf16.gmra.mxu0 %v3622
      %v3661 = vpop.f32.mrf.mxu0
      %v3662 = vadd.f32 %v873, %v3661
      %v3663 = vpop.f32.mrf.mxu0
      %v3664 = vpop.f32.mrf.mxu0
      %v3665 = vpop.f32.mrf.mxu0
      %3666 = vdwg.mxu0
      %3668 = vrot.lane.b32.xlu0 %v3563, 96
      %v3669 = vpop.permute.xlu0 %3668
      %v3671 = vsel %vm973, %v3563, 0
      %v3674 = vsel %vm973, %v3669, 0
      %3676 = vmatprep.subr.bf16.mxu0 0
      %3677 = vmatpush1.bf16.xpose.msra.mxu0 0
      %3678 = vmatprep.subr.bf16.mxu0 0
      %3679 = vmatpush1.bf16.xpose.msra.mxu0 0
      %3680 = vmatprep.subr.bf16.mxu0 0
      %3681 = vmatpush1.bf16.xpose.msra.mxu0 0
      %3682 = vmatprep.subr.bf16.mxu0 0
      %3683 = vmatpush1.bf16.xpose.msra.mxu0 0
      %3684 = vmatprep.subr.bf16.mxu0 0
      %3685 = vmatpush1.bf16.xpose.msra.mxu0 0
      %3686 = vmatprep.subr.bf16.mxu0 0
      %3687 = vmatpush1.bf16.xpose.msra.mxu0 0
      %3688 = vmatprep.subr.bf16.mxu0 0
      %3689 = vmatpush1.bf16.xpose.msra.mxu0 0
      %3690 = vmatprep.subr.bf16.mxu0 0
      %3691 = vmatpush1.bf16.xpose.msra.mxu0 %v3674
      %3692 = vmatprep.subr.bf16.mxu0 0
      %3693 = vmatpush2.bf16.xpose.msra.mxu0 0
      %3694 = vmatprep.subr.bf16.mxu0 0
      %3695 = vmatpush2.bf16.xpose.msra.mxu0 0
      %3696 = vmatprep.subr.bf16.mxu0 0
      %3697 = vmatpush2.bf16.xpose.msra.mxu0 0
      %3698 = vmatprep.subr.bf16.mxu0 0
      %3699 = vmatpush2.bf16.xpose.msra.mxu0 0
      %3700 = vmatprep.subr.bf16.mxu0 0
      %3701 = vmatpush2.bf16.xpose.msra.mxu0 0
      %3702 = vmatprep.subr.bf16.mxu0 0
      %3703 = vmatpush2.bf16.xpose.msra.mxu0 0
      %3704 = vmatprep.subr.bf16.mxu0 0
      %3705 = vmatpush2.bf16.xpose.msra.mxu0 0
      %3706 = vmatprep.subr.bf16.mxu0 0
      %3707 = vmatpush2.bf16.xpose.msra.mxu0 0
      %3708 = vmatprep.mubr.bf16.mxu0 0
      %3709 = vmatmul.mubr.bf16.gmra.mxu0 %v3671
      %v3710 = vpop.f32.mrf.mxu0
      %v3711 = vadd.f32 %v872, %v3710
      %v3712 = vpop.f32.mrf.mxu0
      %v3713 = vpop.f32.mrf.mxu0
      %v3714 = vpop.f32.mrf.mxu0
      %3715 = vdwg.mxu0
      %3717 = vrot.lane.b32.xlu0 %v3564, 96
      %v3718 = vpop.permute.xlu0 %3717
      %v3720 = vsel %vm973, %v3564, 0
      %v3723 = vsel %vm973, %v3718, 0
      %3725 = vmatprep.subr.bf16.mxu0 0
      %3726 = vmatpush1.bf16.xpose.msra.mxu0 0
      %3727 = vmatprep.subr.bf16.mxu0 0
      %3728 = vmatpush1.bf16.xpose.msra.mxu0 0
      %3729 = vmatprep.subr.bf16.mxu0 0
      %3730 = vmatpush1.bf16.xpose.msra.mxu0 0
      %3731 = vmatprep.subr.bf16.mxu0 0
      %3732 = vmatpush1.bf16.xpose.msra.mxu0 0
      %3733 = vmatprep.subr.bf16.mxu0 0
      %3734 = vmatpush1.bf16.xpose.msra.mxu0 0
      %3735 = vmatprep.subr.bf16.mxu0 0
      %3736 = vmatpush1.bf16.xpose.msra.mxu0 0
      %3737 = vmatprep.subr.bf16.mxu0 0
      %3738 = vmatpush1.bf16.xpose.msra.mxu0 0
      %3739 = vmatprep.subr.bf16.mxu0 0
      %3740 = vmatpush1.bf16.xpose.msra.mxu0 %v3723
      %3741 = vmatprep.subr.bf16.mxu0 0
      %3742 = vmatpush2.bf16.xpose.msra.mxu0 0
      %3743 = vmatprep.subr.bf16.mxu0 0
      %3744 = vmatpush2.bf16.xpose.msra.mxu0 0
      %3745 = vmatprep.subr.bf16.mxu0 0
      %3746 = vmatpush2.bf16.xpose.msra.mxu0 0
      %3747 = vmatprep.subr.bf16.mxu0 0
      %3748 = vmatpush2.bf16.xpose.msra.mxu0 0
      %3749 = vmatprep.subr.bf16.mxu0 0
      %3750 = vmatpush2.bf16.xpose.msra.mxu0 0
      %3751 = vmatprep.subr.bf16.mxu0 0
      %3752 = vmatpush2.bf16.xpose.msra.mxu0 0
      %3753 = vmatprep.subr.bf16.mxu0 0
      %3754 = vmatpush2.bf16.xpose.msra.mxu0 0
      %3755 = vmatprep.subr.bf16.mxu0 0
      %3756 = vmatpush2.bf16.xpose.msra.mxu0 0
      %3757 = vmatprep.mubr.bf16.mxu0 0
      %3758 = vmatmul.mubr.bf16.gmra.mxu0 %v3720
      %v3759 = vpop.f32.mrf.mxu0
      %v3760 = vadd.f32 %v873, %v3759
      %v3761 = vpop.f32.mrf.mxu0
      %v3762 = vpop.f32.mrf.mxu0
      %v3763 = vpop.f32.mrf.mxu0
      %3764 = vdwg.mxu0
      %3766 = vrot.lane.b32.xlu0 %v3565, 96
      %v3767 = vpop.permute.xlu0 %3766
      %v3769 = vsel %vm973, %v3565, 0
      %v3772 = vsel %vm973, %v3767, 0
      %3774 = vmatprep.subr.bf16.mxu0 0
      %3775 = vmatpush1.bf16.xpose.msra.mxu0 0
      %3776 = vmatprep.subr.bf16.mxu0 0
      %3777 = vmatpush1.bf16.xpose.msra.mxu0 0
      %3778 = vmatprep.subr.bf16.mxu0 0
      %3779 = vmatpush1.bf16.xpose.msra.mxu0 0
      %3780 = vmatprep.subr.bf16.mxu0 0
      %3781 = vmatpush1.bf16.xpose.msra.mxu0 0
      %3782 = vmatprep.subr.bf16.mxu0 0
      %3783 = vmatpush1.bf16.xpose.msra.mxu0 0
      %3784 = vmatprep.subr.bf16.mxu0 0
      %3785 = vmatpush1.bf16.xpose.msra.mxu0 0
      %3786 = vmatprep.subr.bf16.mxu0 0
      %3787 = vmatpush1.bf16.xpose.msra.mxu0 0
      %3788 = vmatprep.subr.bf16.mxu0 0
      %3789 = vmatpush1.bf16.xpose.msra.mxu0 %v3772
      %3790 = vmatprep.subr.bf16.mxu0 0
      %3791 = vmatpush2.bf16.xpose.msra.mxu0 0
      %3792 = vmatprep.subr.bf16.mxu0 0
      %3793 = vmatpush2.bf16.xpose.msra.mxu0 0
      %3794 = vmatprep.subr.bf16.mxu0 0
      %3795 = vmatpush2.bf16.xpose.msra.mxu0 0
      %3796 = vmatprep.subr.bf16.mxu0 0
      %3797 = vmatpush2.bf16.xpose.msra.mxu0 0
      %3798 = vmatprep.subr.bf16.mxu0 0
      %3799 = vmatpush2.bf16.xpose.msra.mxu0 0
      %3800 = vmatprep.subr.bf16.mxu0 0
      %3801 = vmatpush2.bf16.xpose.msra.mxu0 0
      %3802 = vmatprep.subr.bf16.mxu0 0
      %3803 = vmatpush2.bf16.xpose.msra.mxu0 0
      %3804 = vmatprep.subr.bf16.mxu0 0
      %3805 = vmatpush2.bf16.xpose.msra.mxu0 0
      %3806 = vmatprep.mubr.bf16.mxu0 0
      %3807 = vmatmul.mubr.bf16.gmra.mxu0 %v3769
      %v3808 = vpop.f32.mrf.mxu0
      %v3809 = vadd.f32 %v872, %v3808
      %v3810 = vpop.f32.mrf.mxu0
      %v3811 = vpop.f32.mrf.mxu0
      %v3812 = vpop.f32.mrf.mxu0
      %3813 = vdwg.mxu0
      %3815 = vrot.lane.b32.xlu0 %v3566, 96
      %v3816 = vpop.permute.xlu0 %3815
      %v3818 = vsel %vm973, %v3566, 0
      %v3821 = vsel %vm973, %v3816, 0
      %3823 = vmatprep.subr.bf16.mxu0 0
      %3824 = vmatpush1.bf16.xpose.msra.mxu0 0
      %3825 = vmatprep.subr.bf16.mxu0 0
      %3826 = vmatpush1.bf16.xpose.msra.mxu0 0
      %3827 = vmatprep.subr.bf16.mxu0 0
      %3828 = vmatpush1.bf16.xpose.msra.mxu0 0
      %3829 = vmatprep.subr.bf16.mxu0 0
      %3830 = vmatpush1.bf16.xpose.msra.mxu0 0
      %3831 = vmatprep.subr.bf16.mxu0 0
      %3832 = vmatpush1.bf16.xpose.msra.mxu0 0
      %3833 = vmatprep.subr.bf16.mxu0 0
      %3834 = vmatpush1.bf16.xpose.msra.mxu0 0
      %3835 = vmatprep.subr.bf16.mxu0 0
      %3836 = vmatpush1.bf16.xpose.msra.mxu0 0
      %3837 = vmatprep.subr.bf16.mxu0 0
      %3838 = vmatpush1.bf16.xpose.msra.mxu0 %v3821
      %3839 = vmatprep.subr.bf16.mxu0 0
      %3840 = vmatpush2.bf16.xpose.msra.mxu0 0
      %3841 = vmatprep.subr.bf16.mxu0 0
      %3842 = vmatpush2.bf16.xpose.msra.mxu0 0
      %3843 = vmatprep.subr.bf16.mxu0 0
      %3844 = vmatpush2.bf16.xpose.msra.mxu0 0
      %3845 = vmatprep.subr.bf16.mxu0 0
      %3846 = vmatpush2.bf16.xpose.msra.mxu0 0
      %3847 = vmatprep.subr.bf16.mxu0 0
      %3848 = vmatpush2.bf16.xpose.msra.mxu0 0
      %3849 = vmatprep.subr.bf16.mxu0 0
      %3850 = vmatpush2.bf16.xpose.msra.mxu0 0
      %3851 = vmatprep.subr.bf16.mxu0 0
      %3852 = vmatpush2.bf16.xpose.msra.mxu0 0
      %3853 = vmatprep.subr.bf16.mxu0 0
      %3854 = vmatpush2.bf16.xpose.msra.mxu0 0
      %3855 = vmatprep.mubr.bf16.mxu0 0
      %3856 = vmatmul.mubr.bf16.gmra.mxu0 %v3818
      %v3857 = vpop.f32.mrf.mxu0
      %v3858 = vadd.f32 %v873, %v3857
      %v3859 = vpop.f32.mrf.mxu0
      %v3860 = vpop.f32.mrf.mxu0
      %v3861 = vpop.f32.mrf.mxu0
      %3862 = vdwg.mxu0
      %3864 = vrot.lane.b32.xlu0 %v3567, 96
      %v3865 = vpop.permute.xlu0 %3864
      %v3867 = vsel %vm973, %v3567, 0
      %v3870 = vsel %vm973, %v3865, 0
      %3872 = vmatprep.subr.bf16.mxu0 0
      %3873 = vmatpush1.bf16.xpose.msra.mxu0 0
      %3874 = vmatprep.subr.bf16.mxu0 0
      %3875 = vmatpush1.bf16.xpose.msra.mxu0 0
      %3876 = vmatprep.subr.bf16.mxu0 0
      %3877 = vmatpush1.bf16.xpose.msra.mxu0 0
      %3878 = vmatprep.subr.bf16.mxu0 0
      %3879 = vmatpush1.bf16.xpose.msra.mxu0 0
      %3880 = vmatprep.subr.bf16.mxu0 0
      %3881 = vmatpush1.bf16.xpose.msra.mxu0 0
      %3882 = vmatprep.subr.bf16.mxu0 0
      %3883 = vmatpush1.bf16.xpose.msra.mxu0 0
      %3884 = vmatprep.subr.bf16.mxu0 0
      %3885 = vmatpush1.bf16.xpose.msra.mxu0 0
      %3886 = vmatprep.subr.bf16.mxu0 0
      %3887 = vmatpush1.bf16.xpose.msra.mxu0 %v3870
      %3888 = vmatprep.subr.bf16.mxu0 0
      %3889 = vmatpush2.bf16.xpose.msra.mxu0 0
      %3890 = vmatprep.subr.bf16.mxu0 0
      %3891 = vmatpush2.bf16.xpose.msra.mxu0 0
      %3892 = vmatprep.subr.bf16.mxu0 0
      %3893 = vmatpush2.bf16.xpose.msra.mxu0 0
      %3894 = vmatprep.subr.bf16.mxu0 0
      %3895 = vmatpush2.bf16.xpose.msra.mxu0 0
      %3896 = vmatprep.subr.bf16.mxu0 0
      %3897 = vmatpush2.bf16.xpose.msra.mxu0 0
      %3898 = vmatprep.subr.bf16.mxu0 0
      %3899 = vmatpush2.bf16.xpose.msra.mxu0 0
      %3900 = vmatprep.subr.bf16.mxu0 0
      %3901 = vmatpush2.bf16.xpose.msra.mxu0 0
      %3902 = vmatprep.subr.bf16.mxu0 0
      %3903 = vmatpush2.bf16.xpose.msra.mxu0 0
      %3904 = vmatprep.mubr.bf16.mxu0 0
      %3905 = vmatmul.mubr.bf16.gmra.mxu0 %v3867
      %v3906 = vpop.f32.mrf.mxu0
      %v3907 = vadd.f32 %v872, %v3906
      %v3908 = vpop.f32.mrf.mxu0
      %v3909 = vpop.f32.mrf.mxu0
      %v3910 = vpop.f32.mrf.mxu0
      %3911 = vdwg.mxu0
      %3913 = vrot.lane.b32.xlu0 %v3568, 96
      %v3914 = vpop.permute.xlu0 %3913
      %v3916 = vsel %vm973, %v3568, 0
      %v3919 = vsel %vm973, %v3914, 0
      %3921 = vmatprep.subr.bf16.mxu0 0
      %3922 = vmatpush1.bf16.xpose.msra.mxu0 0
      %3923 = vmatprep.subr.bf16.mxu0 0
      %3924 = vmatpush1.bf16.xpose.msra.mxu0 0
      %3925 = vmatprep.subr.bf16.mxu0 0
      %3926 = vmatpush1.bf16.xpose.msra.mxu0 0
      %3927 = vmatprep.subr.bf16.mxu0 0
      %3928 = vmatpush1.bf16.xpose.msra.mxu0 0
      %3929 = vmatprep.subr.bf16.mxu0 0
      %3930 = vmatpush1.bf16.xpose.msra.mxu0 0
      %3931 = vmatprep.subr.bf16.mxu0 0
      %3932 = vmatpush1.bf16.xpose.msra.mxu0 0
      %3933 = vmatprep.subr.bf16.mxu0 0
      %3934 = vmatpush1.bf16.xpose.msra.mxu0 0
      %3935 = vmatprep.subr.bf16.mxu0 0
      %3936 = vmatpush1.bf16.xpose.msra.mxu0 %v3919
      %3937 = vmatprep.subr.bf16.mxu0 0
      %3938 = vmatpush2.bf16.xpose.msra.mxu0 0
      %3939 = vmatprep.subr.bf16.mxu0 0
      %3940 = vmatpush2.bf16.xpose.msra.mxu0 0
      %3941 = vmatprep.subr.bf16.mxu0 0
      %3942 = vmatpush2.bf16.xpose.msra.mxu0 0
      %3943 = vmatprep.subr.bf16.mxu0 0
      %3944 = vmatpush2.bf16.xpose.msra.mxu0 0
      %3945 = vmatprep.subr.bf16.mxu0 0
      %3946 = vmatpush2.bf16.xpose.msra.mxu0 0
      %3947 = vmatprep.subr.bf16.mxu0 0
      %3948 = vmatpush2.bf16.xpose.msra.mxu0 0
      %3949 = vmatprep.subr.bf16.mxu0 0
      %3950 = vmatpush2.bf16.xpose.msra.mxu0 0
      %3951 = vmatprep.subr.bf16.mxu0 0
      %3952 = vmatpush2.bf16.xpose.msra.mxu0 0
      %3953 = vmatprep.mubr.bf16.mxu0 0
      %3954 = vmatmul.mubr.bf16.gmra.mxu0 %v3916
      %v3955 = vpop.f32.mrf.mxu0
      %v3956 = vadd.f32 %v873, %v3955
      %v3957 = vpop.f32.mrf.mxu0
      %v3958 = vpop.f32.mrf.mxu0
      %v3959 = vpop.f32.mrf.mxu0
      %3960 = vdwg.mxu0
      %v3961 = vsel %vm973, %v3613, -inf
      %3962 = vmax.xlane.f32.xlu0 %v3961
      %v3963 = vpop.xlane.xlu0 %3962
      %v3964 = vsel %vm973, %v3662, -inf
      %3965 = vmax.xlane.f32.xlu0 %v3964
      %v3966 = vpop.xlane.xlu0 %3965
      %v3967 = vsel %vm973, %v3711, -inf
      %3968 = vmax.xlane.f32.xlu0 %v3967
      %v3969 = vpop.xlane.xlu0 %3968
      %v3970 = vsel %vm973, %v3760, -inf
      %3971 = vmax.xlane.f32.xlu0 %v3970
      %v3972 = vpop.xlane.xlu0 %3971
      %v3973 = vsel %vm973, %v3809, -inf
      %3974 = vmax.xlane.f32.xlu0 %v3973
      %v3975 = vpop.xlane.xlu0 %3974
      %v3976 = vsel %vm973, %v3858, -inf
      %3977 = vmax.xlane.f32.xlu0 %v3976
      %v3978 = vpop.xlane.xlu0 %3977
      %v3979 = vsel %vm973, %v3907, -inf
      %3980 = vmax.xlane.f32.xlu0 %v3979
      %v3981 = vpop.xlane.xlu0 %3980
      %v3982 = vsel %vm973, %v3956, -inf
      %3983 = vmax.xlane.f32.xlu0 %v3982
      %v3984 = vpop.xlane.xlu0 %3983
      %v3985 = vsub.f32 %v3613, %v3963
      %v3986 = vsub.f32 %v3662, %v3966
      %v3987 = vsub.f32 %v3711, %v3969
      %v3988 = vsub.f32 %v3760, %v3972
      %v3989 = vsub.f32 %v3809, %v3975
      %v3990 = vsub.f32 %v3858, %v3978
      %v3991 = vsub.f32 %v3907, %v3981
      %v3992 = vsub.f32 %v3956, %v3984
      %v3993 = vmul.f32 %v3985, 1.442695
      %v3994 = vpow.pop %v3993
      %v3995 = vmul.f32 %v3986, 1.442695
      %v3996 = vpow.pop %v3995
      %v3997 = vmul.f32 %v3987, 1.442695
      %v3998 = vpow.pop %v3997
      %v3999 = vmul.f32 %v3988, 1.442695
      %v4000 = vpow.pop %v3999
      %v4001 = vmul.f32 %v3989, 1.442695
      %v4002 = vpow.pop %v4001
      %v4003 = vmul.f32 %v3990, 1.442695
      %v4004 = vpow.pop %v4003
      %v4005 = vmul.f32 %v3991, 1.442695
      %v4006 = vpow.pop %v4005
      %v4007 = vmul.f32 %v3992, 1.442695
      %v4008 = vpow.pop %v4007
      %v4009 = vsel %vm973, %v3994, 0.0
      %4010 = vadd.xlane.f32.xlu0 %v4009
      %v4011 = vpop.xlane.xlu0 %4010
      %v4012 = vsel %vm973, %v3996, 0.0
      %4013 = vadd.xlane.f32.xlu0 %v4012
      %v4014 = vpop.xlane.xlu0 %4013
      %v4015 = vsel %vm973, %v3998, 0.0
      %4016 = vadd.xlane.f32.xlu0 %v4015
      %v4017 = vpop.xlane.xlu0 %4016
      %v4018 = vsel %vm973, %v4000, 0.0
      %4019 = vadd.xlane.f32.xlu0 %v4018
      %v4020 = vpop.xlane.xlu0 %4019
      %v4021 = vsel %vm973, %v4002, 0.0
      %4022 = vadd.xlane.f32.xlu0 %v4021
      %v4023 = vpop.xlane.xlu0 %4022
      %v4024 = vsel %vm973, %v4004, 0.0
      %4025 = vadd.xlane.f32.xlu0 %v4024
      %v4026 = vpop.xlane.xlu0 %4025
      %v4027 = vsel %vm973, %v4006, 0.0
      %4028 = vadd.xlane.f32.xlu0 %v4027
      %v4029 = vpop.xlane.xlu0 %4028
      %v4030 = vsel %vm973, %v4008, 0.0
      %4031 = vadd.xlane.f32.xlu0 %v4030
      %v4032 = vpop.xlane.xlu0 %4031
      %v4033 = vrcp.pop %v4011
      %v4034 = vrcp.pop %v4014
      %v4035 = vrcp.pop %v4017
      %v4036 = vrcp.pop %v4020
      %v4037 = vrcp.pop %v4023
      %v4038 = vrcp.pop %v4026
      %v4039 = vrcp.pop %v4029
      %v4040 = vrcp.pop %v4032
      %v4041 = vmul.f32 %v3994, %v4033
      %v4042 = vmul.f32 %v3996, %v4034
      %v4043 = vmul.f32 %v3998, %v4035
      %v4044 = vmul.f32 %v4000, %v4036
      %v4045 = vmul.f32 %v4002, %v4037
      %v4046 = vmul.f32 %v4004, %v4038
      %v4047 = vmul.f32 %v4006, %v4039
      %v4048 = vmul.f32 %v4008, %v4040
      %v4049 = vpack.c.bf16 %v4041, %v4041
      %v4050 = vpack.c.bf16 %v4042, %v4042
      %v4051 = vpack.c.bf16 %v4043, %v4043
      %v4052 = vpack.c.bf16 %v4044, %v4044
      %v4053 = vpack.c.bf16 %v4045, %v4045
      %v4054 = vpack.c.bf16 %v4046, %v4046
      %v4055 = vpack.c.bf16 %v4047, %v4047
      %v4056 = vpack.c.bf16 %v4048, %v4048
      %4057 = vrot.lane.b32.xlu0 %v3561, 64
      %v4058 = vpop.permute.xlu0 %4057
      %v4060 = vsel %vm973, %v4049, 0
      %v4063 = vsel %vm1464, %v4058, 0
      %4065 = vmatprep.subr.bf16.mxu0 0
      %4066 = vmatpush1.bf16.msra.mxu0 0
      %4067 = vmatprep.subr.bf16.mxu0 0
      %4068 = vmatpush1.bf16.msra.mxu0 0
      %4069 = vmatprep.subr.bf16.mxu0 0
      %4070 = vmatpush1.bf16.msra.mxu0 0
      %4071 = vmatprep.subr.bf16.mxu0 0
      %4072 = vmatpush1.bf16.msra.mxu0 0
      %4073 = vmatprep.subr.bf16.mxu0 0
      %4074 = vmatpush1.bf16.msra.mxu0 0
      %4075 = vmatprep.subr.bf16.mxu0 0
      %4076 = vmatpush1.bf16.msra.mxu0 0
      %4077 = vmatprep.subr.bf16.mxu0 0
      %4078 = vmatpush1.bf16.msra.mxu0 0
      %4079 = vmatprep.subr.bf16.mxu0 0
      %4080 = vmatpush1.bf16.msra.mxu0 %v4063
      %4081 = vmatprep.subr.bf16.mxu0 0
      %4082 = vmatpush2.bf16.msra.mxu0 0
      %4083 = vmatprep.subr.bf16.mxu0 0
      %4084 = vmatpush2.bf16.msra.mxu0 0
      %4085 = vmatprep.subr.bf16.mxu0 0
      %4086 = vmatpush2.bf16.msra.mxu0 0
      %4087 = vmatprep.subr.bf16.mxu0 0
      %4088 = vmatpush2.bf16.msra.mxu0 0
      %4089 = vmatprep.subr.bf16.mxu0 0
      %4090 = vmatpush2.bf16.msra.mxu0 0
      %4091 = vmatprep.subr.bf16.mxu0 0
      %4092 = vmatpush2.bf16.msra.mxu0 0
      %4093 = vmatprep.subr.bf16.mxu0 0
      %4094 = vmatpush2.bf16.msra.mxu0 0
      %4095 = vmatprep.subr.bf16.mxu0 0
      %4096 = vmatpush2.bf16.msra.mxu0 0
      %4097 = vmatprep.mubr.bf16.mxu0 0
      %4098 = vmatmul.mubr.bf16.gmra.mxu0 %v4060
      %v4099 = vpop.f32.mrf.mxu0
      %v4100 = vadd.f32 0.0, %v4099
      %v4101 = vpop.f32.mrf.mxu0
      %v4102 = vpop.f32.mrf.mxu0
      %v4103 = vpop.f32.mrf.mxu0
      %4104 = vdwg.mxu0
      %4105 = vrot.lane.b32.xlu0 %v3562, 64
      %v4106 = vpop.permute.xlu0 %4105
      %v4108 = vsel %vm973, %v4050, 0
      %v4111 = vsel %vm1464, %v4106, 0
      %4113 = vmatprep.subr.bf16.mxu0 0
      %4114 = vmatpush1.bf16.msra.mxu0 0
      %4115 = vmatprep.subr.bf16.mxu0 0
      %4116 = vmatpush1.bf16.msra.mxu0 0
      %4117 = vmatprep.subr.bf16.mxu0 0
      %4118 = vmatpush1.bf16.msra.mxu0 0
      %4119 = vmatprep.subr.bf16.mxu0 0
      %4120 = vmatpush1.bf16.msra.mxu0 0
      %4121 = vmatprep.subr.bf16.mxu0 0
      %4122 = vmatpush1.bf16.msra.mxu0 0
      %4123 = vmatprep.subr.bf16.mxu0 0
      %4124 = vmatpush1.bf16.msra.mxu0 0
      %4125 = vmatprep.subr.bf16.mxu0 0
      %4126 = vmatpush1.bf16.msra.mxu0 0
      %4127 = vmatprep.subr.bf16.mxu0 0
      %4128 = vmatpush1.bf16.msra.mxu0 %v4111
      %4129 = vmatprep.subr.bf16.mxu0 0
      %4130 = vmatpush2.bf16.msra.mxu0 0
      %4131 = vmatprep.subr.bf16.mxu0 0
      %4132 = vmatpush2.bf16.msra.mxu0 0
      %4133 = vmatprep.subr.bf16.mxu0 0
      %4134 = vmatpush2.bf16.msra.mxu0 0
      %4135 = vmatprep.subr.bf16.mxu0 0
      %4136 = vmatpush2.bf16.msra.mxu0 0
      %4137 = vmatprep.subr.bf16.mxu0 0
      %4138 = vmatpush2.bf16.msra.mxu0 0
      %4139 = vmatprep.subr.bf16.mxu0 0
      %4140 = vmatpush2.bf16.msra.mxu0 0
      %4141 = vmatprep.subr.bf16.mxu0 0
      %4142 = vmatpush2.bf16.msra.mxu0 0
      %4143 = vmatprep.subr.bf16.mxu0 0
      %4144 = vmatpush2.bf16.msra.mxu0 0
      %4145 = vmatprep.mubr.bf16.mxu0 0
      %4146 = vmatmul.mubr.bf16.gmra.mxu0 %v4108
      %v4147 = vpop.f32.mrf.mxu0
      %v4148 = vadd.f32 0.0, %v4147
      %v4149 = vpop.f32.mrf.mxu0
      %v4150 = vpop.f32.mrf.mxu0
      %v4151 = vpop.f32.mrf.mxu0
      %4152 = vdwg.mxu0
      %4153 = vrot.lane.b32.xlu0 %v3563, 64
      %v4154 = vpop.permute.xlu0 %4153
      %v4156 = vsel %vm973, %v4051, 0
      %v4159 = vsel %vm1464, %v4154, 0
      %4161 = vmatprep.subr.bf16.mxu0 0
      %4162 = vmatpush1.bf16.msra.mxu0 0
      %4163 = vmatprep.subr.bf16.mxu0 0
      %4164 = vmatpush1.bf16.msra.mxu0 0
      %4165 = vmatprep.subr.bf16.mxu0 0
      %4166 = vmatpush1.bf16.msra.mxu0 0
      %4167 = vmatprep.subr.bf16.mxu0 0
      %4168 = vmatpush1.bf16.msra.mxu0 0
      %4169 = vmatprep.subr.bf16.mxu0 0
      %4170 = vmatpush1.bf16.msra.mxu0 0
      %4171 = vmatprep.subr.bf16.mxu0 0
      %4172 = vmatpush1.bf16.msra.mxu0 0
      %4173 = vmatprep.subr.bf16.mxu0 0
      %4174 = vmatpush1.bf16.msra.mxu0 0
      %4175 = vmatprep.subr.bf16.mxu0 0
      %4176 = vmatpush1.bf16.msra.mxu0 %v4159
      %4177 = vmatprep.subr.bf16.mxu0 0
      %4178 = vmatpush2.bf16.msra.mxu0 0
      %4179 = vmatprep.subr.bf16.mxu0 0
      %4180 = vmatpush2.bf16.msra.mxu0 0
      %4181 = vmatprep.subr.bf16.mxu0 0
      %4182 = vmatpush2.bf16.msra.mxu0 0
      %4183 = vmatprep.subr.bf16.mxu0 0
      %4184 = vmatpush2.bf16.msra.mxu0 0
      %4185 = vmatprep.subr.bf16.mxu0 0
      %4186 = vmatpush2.bf16.msra.mxu0 0
      %4187 = vmatprep.subr.bf16.mxu0 0
      %4188 = vmatpush2.bf16.msra.mxu0 0
      %4189 = vmatprep.subr.bf16.mxu0 0
      %4190 = vmatpush2.bf16.msra.mxu0 0
      %4191 = vmatprep.subr.bf16.mxu0 0
      %4192 = vmatpush2.bf16.msra.mxu0 0
      %4193 = vmatprep.mubr.bf16.mxu0 0
      %4194 = vmatmul.mubr.bf16.gmra.mxu0 %v4156
      %v4195 = vpop.f32.mrf.mxu0
      %v4196 = vadd.f32 0.0, %v4195
      %v4197 = vpop.f32.mrf.mxu0
      %v4198 = vpop.f32.mrf.mxu0
      %v4199 = vpop.f32.mrf.mxu0
      %4200 = vdwg.mxu0
      %4201 = vrot.lane.b32.xlu0 %v3564, 64
      %v4202 = vpop.permute.xlu0 %4201
      %v4204 = vsel %vm973, %v4052, 0
      %v4207 = vsel %vm1464, %v4202, 0
      %4209 = vmatprep.subr.bf16.mxu0 0
      %4210 = vmatpush1.bf16.msra.mxu0 0
      %4211 = vmatprep.subr.bf16.mxu0 0
      %4212 = vmatpush1.bf16.msra.mxu0 0
      %4213 = vmatprep.subr.bf16.mxu0 0
      %4214 = vmatpush1.bf16.msra.mxu0 0
      %4215 = vmatprep.subr.bf16.mxu0 0
      %4216 = vmatpush1.bf16.msra.mxu0 0
      %4217 = vmatprep.subr.bf16.mxu0 0
      %4218 = vmatpush1.bf16.msra.mxu0 0
      %4219 = vmatprep.subr.bf16.mxu0 0
      %4220 = vmatpush1.bf16.msra.mxu0 0
      %4221 = vmatprep.subr.bf16.mxu0 0
      %4222 = vmatpush1.bf16.msra.mxu0 0
      %4223 = vmatprep.subr.bf16.mxu0 0
      %4224 = vmatpush1.bf16.msra.mxu0 %v4207
      %4225 = vmatprep.subr.bf16.mxu0 0
      %4226 = vmatpush2.bf16.msra.mxu0 0
      %4227 = vmatprep.subr.bf16.mxu0 0
      %4228 = vmatpush2.bf16.msra.mxu0 0
      %4229 = vmatprep.subr.bf16.mxu0 0
      %4230 = vmatpush2.bf16.msra.mxu0 0
      %4231 = vmatprep.subr.bf16.mxu0 0
      %4232 = vmatpush2.bf16.msra.mxu0 0
      %4233 = vmatprep.subr.bf16.mxu0 0
      %4234 = vmatpush2.bf16.msra.mxu0 0
      %4235 = vmatprep.subr.bf16.mxu0 0
      %4236 = vmatpush2.bf16.msra.mxu0 0
      %4237 = vmatprep.subr.bf16.mxu0 0
      %4238 = vmatpush2.bf16.msra.mxu0 0
      %4239 = vmatprep.subr.bf16.mxu0 0
      %4240 = vmatpush2.bf16.msra.mxu0 0
      %4241 = vmatprep.mubr.bf16.mxu0 0
      %4242 = vmatmul.mubr.bf16.gmra.mxu0 %v4204
      %v4243 = vpop.f32.mrf.mxu0
      %v4244 = vadd.f32 0.0, %v4243
      %v4245 = vpop.f32.mrf.mxu0
      %v4246 = vpop.f32.mrf.mxu0
      %v4247 = vpop.f32.mrf.mxu0
      %4248 = vdwg.mxu0
      %4249 = vrot.lane.b32.xlu0 %v3565, 64
      %v4250 = vpop.permute.xlu0 %4249
      %v4252 = vsel %vm973, %v4053, 0
      %v4255 = vsel %vm1464, %v4250, 0
      %4257 = vmatprep.subr.bf16.mxu0 0
      %4258 = vmatpush1.bf16.msra.mxu0 0
      %4259 = vmatprep.subr.bf16.mxu0 0
      %4260 = vmatpush1.bf16.msra.mxu0 0
      %4261 = vmatprep.subr.bf16.mxu0 0
      %4262 = vmatpush1.bf16.msra.mxu0 0
      %4263 = vmatprep.subr.bf16.mxu0 0
      %4264 = vmatpush1.bf16.msra.mxu0 0
      %4265 = vmatprep.subr.bf16.mxu0 0
      %4266 = vmatpush1.bf16.msra.mxu0 0
      %4267 = vmatprep.subr.bf16.mxu0 0
      %4268 = vmatpush1.bf16.msra.mxu0 0
      %4269 = vmatprep.subr.bf16.mxu0 0
      %4270 = vmatpush1.bf16.msra.mxu0 0
      %4271 = vmatprep.subr.bf16.mxu0 0
      %4272 = vmatpush1.bf16.msra.mxu0 %v4255
      %4273 = vmatprep.subr.bf16.mxu0 0
      %4274 = vmatpush2.bf16.msra.mxu0 0
      %4275 = vmatprep.subr.bf16.mxu0 0
      %4276 = vmatpush2.bf16.msra.mxu0 0
      %4277 = vmatprep.subr.bf16.mxu0 0
      %4278 = vmatpush2.bf16.msra.mxu0 0
      %4279 = vmatprep.subr.bf16.mxu0 0
      %4280 = vmatpush2.bf16.msra.mxu0 0
      %4281 = vmatprep.subr.bf16.mxu0 0
      %4282 = vmatpush2.bf16.msra.mxu0 0
      %4283 = vmatprep.subr.bf16.mxu0 0
      %4284 = vmatpush2.bf16.msra.mxu0 0
      %4285 = vmatprep.subr.bf16.mxu0 0
      %4286 = vmatpush2.bf16.msra.mxu0 0
      %4287 = vmatprep.subr.bf16.mxu0 0
      %4288 = vmatpush2.bf16.msra.mxu0 0
      %4289 = vmatprep.mubr.bf16.mxu0 0
      %4290 = vmatmul.mubr.bf16.gmra.mxu0 %v4252
      %v4291 = vpop.f32.mrf.mxu0
      %v4292 = vadd.f32 0.0, %v4291
      %v4293 = vpop.f32.mrf.mxu0
      %v4294 = vpop.f32.mrf.mxu0
      %v4295 = vpop.f32.mrf.mxu0
      %4296 = vdwg.mxu0
      %4297 = vrot.lane.b32.xlu0 %v3566, 64
      %v4298 = vpop.permute.xlu0 %4297
      %v4300 = vsel %vm973, %v4054, 0
      %v4303 = vsel %vm1464, %v4298, 0
      %4305 = vmatprep.subr.bf16.mxu0 0
      %4306 = vmatpush1.bf16.msra.mxu0 0
      %4307 = vmatprep.subr.bf16.mxu0 0
      %4308 = vmatpush1.bf16.msra.mxu0 0
      %4309 = vmatprep.subr.bf16.mxu0 0
      %4310 = vmatpush1.bf16.msra.mxu0 0
      %4311 = vmatprep.subr.bf16.mxu0 0
      %4312 = vmatpush1.bf16.msra.mxu0 0
      %4313 = vmatprep.subr.bf16.mxu0 0
      %4314 = vmatpush1.bf16.msra.mxu0 0
      %4315 = vmatprep.subr.bf16.mxu0 0
      %4316 = vmatpush1.bf16.msra.mxu0 0
      %4317 = vmatprep.subr.bf16.mxu0 0
      %4318 = vmatpush1.bf16.msra.mxu0 0
      %4319 = vmatprep.subr.bf16.mxu0 0
      %4320 = vmatpush1.bf16.msra.mxu0 %v4303
      %4321 = vmatprep.subr.bf16.mxu0 0
      %4322 = vmatpush2.bf16.msra.mxu0 0
      %4323 = vmatprep.subr.bf16.mxu0 0
      %4324 = vmatpush2.bf16.msra.mxu0 0
      %4325 = vmatprep.subr.bf16.mxu0 0
      %4326 = vmatpush2.bf16.msra.mxu0 0
      %4327 = vmatprep.subr.bf16.mxu0 0
      %4328 = vmatpush2.bf16.msra.mxu0 0
      %4329 = vmatprep.subr.bf16.mxu0 0
      %4330 = vmatpush2.bf16.msra.mxu0 0
      %4331 = vmatprep.subr.bf16.mxu0 0
      %4332 = vmatpush2.bf16.msra.mxu0 0
      %4333 = vmatprep.subr.bf16.mxu0 0
      %4334 = vmatpush2.bf16.msra.mxu0 0
      %4335 = vmatprep.subr.bf16.mxu0 0
      %4336 = vmatpush2.bf16.msra.mxu0 0
      %4337 = vmatprep.mubr.bf16.mxu0 0
      %4338 = vmatmul.mubr.bf16.gmra.mxu0 %v4300
      %v4339 = vpop.f32.mrf.mxu0
      %v4340 = vadd.f32 0.0, %v4339
      %v4341 = vpop.f32.mrf.mxu0
      %v4342 = vpop.f32.mrf.mxu0
      %v4343 = vpop.f32.mrf.mxu0
      %4344 = vdwg.mxu0
      %4345 = vrot.lane.b32.xlu0 %v3567, 64
      %v4346 = vpop.permute.xlu0 %4345
      %v4348 = vsel %vm973, %v4055, 0
      %v4351 = vsel %vm1464, %v4346, 0
      %4353 = vmatprep.subr.bf16.mxu0 0
      %4354 = vmatpush1.bf16.msra.mxu0 0
      %4355 = vmatprep.subr.bf16.mxu0 0
      %4356 = vmatpush1.bf16.msra.mxu0 0
      %4357 = vmatprep.subr.bf16.mxu0 0
      %4358 = vmatpush1.bf16.msra.mxu0 0
      %4359 = vmatprep.subr.bf16.mxu0 0
      %4360 = vmatpush1.bf16.msra.mxu0 0
      %4361 = vmatprep.subr.bf16.mxu0 0
      %4362 = vmatpush1.bf16.msra.mxu0 0
      %4363 = vmatprep.subr.bf16.mxu0 0
      %4364 = vmatpush1.bf16.msra.mxu0 0
      %4365 = vmatprep.subr.bf16.mxu0 0
      %4366 = vmatpush1.bf16.msra.mxu0 0
      %4367 = vmatprep.subr.bf16.mxu0 0
      %4368 = vmatpush1.bf16.msra.mxu0 %v4351
      %4369 = vmatprep.subr.bf16.mxu0 0
      %4370 = vmatpush2.bf16.msra.mxu0 0
      %4371 = vmatprep.subr.bf16.mxu0 0
      %4372 = vmatpush2.bf16.msra.mxu0 0
      %4373 = vmatprep.subr.bf16.mxu0 0
      %4374 = vmatpush2.bf16.msra.mxu0 0
      %4375 = vmatprep.subr.bf16.mxu0 0
      %4376 = vmatpush2.bf16.msra.mxu0 0
      %4377 = vmatprep.subr.bf16.mxu0 0
      %4378 = vmatpush2.bf16.msra.mxu0 0
      %4379 = vmatprep.subr.bf16.mxu0 0
      %4380 = vmatpush2.bf16.msra.mxu0 0
      %4381 = vmatprep.subr.bf16.mxu0 0
      %4382 = vmatpush2.bf16.msra.mxu0 0
      %4383 = vmatprep.subr.bf16.mxu0 0
      %4384 = vmatpush2.bf16.msra.mxu0 0
      %4385 = vmatprep.mubr.bf16.mxu0 0
      %4386 = vmatmul.mubr.bf16.gmra.mxu0 %v4348
      %v4387 = vpop.f32.mrf.mxu0
      %v4388 = vadd.f32 0.0, %v4387
      %v4389 = vpop.f32.mrf.mxu0
      %v4390 = vpop.f32.mrf.mxu0
      %v4391 = vpop.f32.mrf.mxu0
      %4392 = vdwg.mxu0
      %4393 = vrot.lane.b32.xlu0 %v3568, 64
      %v4394 = vpop.permute.xlu0 %4393
      %v4396 = vsel %vm973, %v4056, 0
      %v4399 = vsel %vm1464, %v4394, 0
      %4401 = vmatprep.subr.bf16.mxu0 0
      %4402 = vmatpush1.bf16.msra.mxu0 0
      %4403 = vmatprep.subr.bf16.mxu0 0
      %4404 = vmatpush1.bf16.msra.mxu0 0
      %4405 = vmatprep.subr.bf16.mxu0 0
      %4406 = vmatpush1.bf16.msra.mxu0 0
      %4407 = vmatprep.subr.bf16.mxu0 0
      %4408 = vmatpush1.bf16.msra.mxu0 0
      %4409 = vmatprep.subr.bf16.mxu0 0
      %4410 = vmatpush1.bf16.msra.mxu0 0
      %4411 = vmatprep.subr.bf16.mxu0 0
      %4412 = vmatpush1.bf16.msra.mxu0 0
      %4413 = vmatprep.subr.bf16.mxu0 0
      %4414 = vmatpush1.bf16.msra.mxu0 0
      %4415 = vmatprep.subr.bf16.mxu0 0
      %4416 = vmatpush1.bf16.msra.mxu0 %v4399
      %4417 = vmatprep.subr.bf16.mxu0 0
      %4418 = vmatpush2.bf16.msra.mxu0 0
      %4419 = vmatprep.subr.bf16.mxu0 0
      %4420 = vmatpush2.bf16.msra.mxu0 0
      %4421 = vmatprep.subr.bf16.mxu0 0
      %4422 = vmatpush2.bf16.msra.mxu0 0
      %4423 = vmatprep.subr.bf16.mxu0 0
      %4424 = vmatpush2.bf16.msra.mxu0 0
      %4425 = vmatprep.subr.bf16.mxu0 0
      %4426 = vmatpush2.bf16.msra.mxu0 0
      %4427 = vmatprep.subr.bf16.mxu0 0
      %4428 = vmatpush2.bf16.msra.mxu0 0
      %4429 = vmatprep.subr.bf16.mxu0 0
      %4430 = vmatpush2.bf16.msra.mxu0 0
      %4431 = vmatprep.subr.bf16.mxu0 0
      %4432 = vmatpush2.bf16.msra.mxu0 0
      %4433 = vmatprep.mubr.bf16.mxu0 0
      %4434 = vmatmul.mubr.bf16.gmra.mxu0 %v4396
      %v4435 = vpop.f32.mrf.mxu0
      %v4436 = vadd.f32 0.0, %v4435
      %v4437 = vpop.f32.mrf.mxu0
      %v4438 = vpop.f32.mrf.mxu0
      %v4439 = vpop.f32.mrf.mxu0
      %4440 = vdwg.mxu0
      %4443 = vrot.lane.b32.xlu0 %v4196, 8
      %v4444 = vpop.permute.xlu0 %4443
      %4445 = vrot.lane.b32.xlu0 %v4244, 8
      %v4446 = vpop.permute.xlu0 %4445
      %4451 = vrot.lane.b32.xlu0 %v4292, 16
      %v4452 = vpop.permute.xlu0 %4451
      %4453 = vrot.lane.b32.xlu0 %v4340, 16
      %v4454 = vpop.permute.xlu0 %4453
      %4459 = vrot.lane.b32.xlu0 %v4388, 24
      %v4460 = vpop.permute.xlu0 %4459
      %4461 = vrot.lane.b32.xlu0 %v4436, 24
      %v4462 = vpop.permute.xlu0 %4461
      %v4465 = vsel %vm973, %v4100, %v4444
      %v4466 = vsel %vm973, %v4148, %v4446
      %v4467 = vsel %vm1870, %v4465, %v4452
      %v4468 = vsel %vm1870, %v4466, %v4454
      %v4469 = vsel %vm1873, %v4467, %v4460
      %v4470 = vsel %vm1873, %v4468, %v4462
      %v4471 = vpack.c.bf16 %v4470, %v4469
      %s4472 = scalar_lea.vmem %s767, 16
      %v4473 = vld [vmem:[%s4472] sm:$0xf]
      %v4474 = vld [vmem:[%s4472 + $0x4] sm:$0xf]
      %v4475 = vld [vmem:[%s4472 + $0x8] sm:$0xf]
      %v4476 = vld [vmem:[%s4472 + $0xc] sm:$0xf]
      %s4477 = scalar_lea.vmem %s772, 1
      %v4478 = vld [vmem:[%s4477] sm:$0x1]
      %v4480 = vlaneseq
      %v4481 = vshrl.u32 %v4480, 7
      %v4482 = vsub.s32 0, %v4481
      %v4483 = vrot.slane %v4478, %v4482
      %v4489 = vunpack.c.l.b16 %v4473
      %v4490 = vunpack.c.l.b16 %v4474
      %v4491 = vunpack.c.l.b16 %v4475
      %v4492 = vunpack.c.l.b16 %v4476
      %v4493 = vpack.c.b16 %v4490, %v4489
      %v4494 = vpack.c.b16 %v4492, %v4491
      %v4498 = vsel %vm828, %v4471, 0
      %4500 = vmatprep.subr.bf16.mxu0 0
      %4501 = vmatpush1.bf16.msra.mxu0 0
      %4502 = vmatprep.subr.bf16.mxu0 0
      %4503 = vmatpush1.bf16.msra.mxu0 0
      %4504 = vmatprep.subr.bf16.mxu0 0
      %4505 = vmatpush1.bf16.msra.mxu0 0
      %4506 = vmatprep.subr.bf16.mxu0 0
      %4507 = vmatpush1.bf16.msra.mxu0 0
      %4508 = vmatprep.subr.bf16.mxu0 0
      %4509 = vmatpush1.bf16.msra.mxu0 0
      %4510 = vmatprep.subr.bf16.mxu0 0
      %4511 = vmatpush1.bf16.msra.mxu0 0
      %4512 = vmatprep.subr.bf16.mxu0 0
      %4513 = vmatpush1.bf16.msra.mxu0 %v4494
      %4514 = vmatprep.subr.bf16.mxu0 0
      %4515 = vmatpush1.bf16.msra.mxu0 %v4493
      %4516 = vmatprep.subr.bf16.mxu0 0
      %4517 = vmatpush2.bf16.msra.mxu0 0
      %4518 = vmatprep.subr.bf16.mxu0 0
      %4519 = vmatpush2.bf16.msra.mxu0 0
      %4520 = vmatprep.subr.bf16.mxu0 0
      %4521 = vmatpush2.bf16.msra.mxu0 0
      %4522 = vmatprep.subr.bf16.mxu0 0
      %4523 = vmatpush2.bf16.msra.mxu0 0
      %4524 = vmatprep.subr.bf16.mxu0 0
      %4525 = vmatpush2.bf16.msra.mxu0 0
      %4526 = vmatprep.subr.bf16.mxu0 0
      %4527 = vmatpush2.bf16.msra.mxu0 0
      %4528 = vmatprep.subr.bf16.mxu0 0
      %4529 = vmatpush2.bf16.msra.mxu0 0
      %4530 = vmatprep.subr.bf16.mxu0 0
      %4531 = vmatpush2.bf16.msra.mxu0 0
      %4532 = vmatprep.mubr.bf16.mxu0 0
      %4533 = vmatmul.mubr.bf16.gmra.mxu0 %v4498
      %v4534 = vpop.f32.mrf.mxu0
      %v4535 = vadd.f32 %v4483, %v4534
      %v4536 = vpop.f32.mrf.mxu0
      %v4537 = vpop.f32.mrf.mxu0
      %v4538 = vadd.f32 %v4483, %v4537
      %v4539 = vpop.f32.mrf.mxu0
      %4540 = vdwg.mxu0
      %v4541 = vadd.f32 %v4535, %v3469
      %v4542 = vadd.f32 %v4538, %v3470
      %s4543 = scalar_lea.vmem %s777, 1
      %v4544 = vld [vmem:[%s4543] sm:$0x1]
      %s4545 = scalar_lea.vmem %s782, 1
      %v4546 = vld [vmem:[%s4545] sm:$0x1]
      %v4547 = vsel %vm828, %v4541, 0.0
      %4548 = vadd.xlane.f32.xlu0 %v4547
      %v4549 = vpop.xlane.xlu0 %4548
      %v4550 = vsel %vm828, %v4542, 0.0
      %4551 = vadd.xlane.f32.xlu0 %v4550
      %v4552 = vpop.xlane.xlu0 %4551
      %v4553 = vmul.f32 %v4549, %v835
      %v4554 = vmul.f32 %v4552, %v835
      %v4555 = vsub.f32 %v4541, %v4553
      %v4556 = vsub.f32 %v4542, %v4554
      %v4557 = vmul.f32 %v4555, %v4555
      %v4558 = vmul.f32 %v4556, %v4556
      %v4559 = vsel %vm828, %v4557, 0.0
      %4560 = vadd.xlane.f32.xlu0 %v4559
      %v4561 = vpop.xlane.xlu0 %4560
      %v4562 = vsel %vm828, %v4558, 0.0
      %4563 = vadd.xlane.f32.xlu0 %v4562
      %v4564 = vpop.xlane.xlu0 %4563
      %v4565 = vmul.f32 %v4561, %v835
      %v4566 = vmul.f32 %v4564, %v835
      %v4567 = vadd.f32 %v4565, 1e-12
      %v4568 = vadd.f32 %v4566, 1e-12
      %v4569 = vrsqrt.pop %v4567
      %v4570 = vrsqrt.pop %v4568
      %v4571 = vmul.f32 %v4555, %v4569
      %v4572 = vmul.f32 %v4556, %v4570
      %v4574 = vlaneseq
      %v4575 = vshrl.u32 %v4574, 7
      %v4576 = vsub.s32 0, %v4575
      %v4577 = vrot.slane %v4544, %v4576
      %v4579 = vmul.f32 %v4571, %v4577
      %v4580 = vmul.f32 %v4572, %v4577
      %v4582 = vlaneseq
      %v4583 = vshrl.u32 %v4582, 7
      %v4584 = vsub.s32 0, %v4583
      %v4585 = vrot.slane %v4546, %v4584
      %v4587 = vadd.f32 %v4579, %v4585
      %v4588 = vadd.f32 %v4580, %v4585
      %v4589 = vpack.c.bf16 %v4588, %v4587
      %s4590 = scalar_lea.vmem %s789, 160
      %v4591 = vld [vmem:[%s4590] sm:$0xff]
      %v4592 = vld [vmem:[%s4590 + $0x8] sm:$0xff]
      %v4593 = vld [vmem:[%s4590 + $0x10] sm:$0xff]
      %v4594 = vld [vmem:[%s4590 + $0x18] sm:$0xff]
      %v4595 = vld [vmem:[%s4590 + $0x20] sm:$0xff]
      %v4596 = vld [vmem:[%s4590 + $0x28] sm:$0xff]
      %v4597 = vld [vmem:[%s4590 + $0x30] sm:$0xff]
      %v4598 = vld [vmem:[%s4590 + $0x38] sm:$0xff]
      %v4599 = vld [vmem:[%s4590 + $0x40] sm:$0xff]
      %v4600 = vld [vmem:[%s4590 + $0x48] sm:$0xff]
      %v4601 = vld [vmem:[%s4590 + $0x50] sm:$0xff]
      %v4602 = vld [vmem:[%s4590 + $0x58] sm:$0xff]
      %v4603 = vld [vmem:[%s4590 + $0x60] sm:$0xff]
      %v4604 = vld [vmem:[%s4590 + $0x68] sm:$0xff]
      %v4605 = vld [vmem:[%s4590 + $0x70] sm:$0xff]
      %v4606 = vld [vmem:[%s4590 + $0x78] sm:$0xff]
      %v4607 = vld [vmem:[%s4590 + $0x80] sm:$0xff]
      %v4608 = vld [vmem:[%s4590 + $0x88] sm:$0xff]
      %v4609 = vld [vmem:[%s4590 + $0x90] sm:$0xff]
      %v4610 = vld [vmem:[%s4590 + $0x98] sm:$0xff]
      %s4611 = scalar_lea.vmem %s795, 10
      %v4612 = vld [vmem:[%s4611] sm:$0xff]
      %v4613 = vld [vmem:[%s4611 + $0x8] sm:$0x3]
      %v4616 = vlaneseq
      %v4617 = vshrl.u32 %v4616, 7
      %v4618 = vsub.s32 0, %v4617
      %v4619 = vrot.slane %v4612, %v4618
      %v4620 = vlaneseq
      %v4621 = vshrl.u32 %v4620, 7
      %v4622 = vsub.s32 1, %v4621
      %v4623 = vrot.slane %v4612, %v4622
      %v4624 = vlaneseq
      %v4625 = vshrl.u32 %v4624, 7
      %v4626 = vsub.s32 2, %v4625
      %v4627 = vrot.slane %v4612, %v4626
      %v4628 = vlaneseq
      %v4629 = vshrl.u32 %v4628, 7
      %v4630 = vsub.s32 3, %v4629
      %v4631 = vrot.slane %v4612, %v4630
      %v4632 = vlaneseq
      %v4633 = vshrl.u32 %v4632, 7
      %v4634 = vsub.s32 4, %v4633
      %v4635 = vrot.slane %v4612, %v4634
      %v4636 = vlaneseq
      %v4637 = vshrl.u32 %v4636, 7
      %v4638 = vsub.s32 5, %v4637
      %v4639 = vrot.slane %v4612, %v4638
      %v4640 = vlaneseq
      %v4641 = vshrl.u32 %v4640, 7
      %v4642 = vsub.s32 6, %v4641
      %v4643 = vrot.slane %v4612, %v4642
      %v4644 = vlaneseq
      %v4645 = vshrl.u32 %v4644, 7
      %v4646 = vsub.s32 7, %v4645
      %v4647 = vrot.slane %v4612, %v4646
      %v4648 = vlaneseq
      %v4649 = vshrl.u32 %v4648, 7
      %v4650 = vsub.s32 0, %v4649
      %v4651 = vrot.slane %v4613, %v4650
      %v4652 = vlaneseq
      %v4653 = vshrl.u32 %v4652, 7
      %v4654 = vsub.s32 1, %v4653
      %v4655 = vrot.slane %v4613, %v4654
      %v4686 = vunpack.c.l.b16 %v4591
      %v4687 = vunpack.c.h.b16 %v4591
      %v4688 = vunpack.c.l.b16 %v4592
      %v4689 = vunpack.c.h.b16 %v4592
      %v4690 = vunpack.c.l.b16 %v4593
      %v4691 = vunpack.c.h.b16 %v4593
      %v4692 = vunpack.c.l.b16 %v4594
      %v4693 = vunpack.c.h.b16 %v4594
      %v4694 = vunpack.c.l.b16 %v4595
      %v4695 = vunpack.c.h.b16 %v4595
      %v4696 = vunpack.c.l.b16 %v4596
      %v4697 = vunpack.c.h.b16 %v4596
      %v4698 = vunpack.c.l.b16 %v4597
      %v4699 = vunpack.c.h.b16 %v4597
      %v4700 = vunpack.c.l.b16 %v4598
      %v4701 = vunpack.c.h.b16 %v4598
      %v4702 = vunpack.c.l.b16 %v4599
      %v4703 = vunpack.c.h.b16 %v4599
      %v4704 = vunpack.c.l.b16 %v4600
      %v4705 = vunpack.c.h.b16 %v4600
      %v4706 = vunpack.c.l.b16 %v4601
      %v4707 = vunpack.c.h.b16 %v4601
      %v4708 = vunpack.c.l.b16 %v4602
      %v4709 = vunpack.c.h.b16 %v4602
      %v4710 = vunpack.c.l.b16 %v4603
      %v4711 = vunpack.c.h.b16 %v4603
      %v4712 = vunpack.c.l.b16 %v4604
      %v4713 = vunpack.c.h.b16 %v4604
      %v4714 = vunpack.c.l.b16 %v4605
      %v4715 = vunpack.c.h.b16 %v4605
      %v4716 = vunpack.c.l.b16 %v4606
      %v4717 = vunpack.c.h.b16 %v4606
      %v4718 = vunpack.c.l.b16 %v4607
      %v4719 = vunpack.c.h.b16 %v4607
      %v4720 = vunpack.c.l.b16 %v4608
      %v4721 = vunpack.c.h.b16 %v4608
      %v4722 = vunpack.c.l.b16 %v4609
      %v4723 = vunpack.c.h.b16 %v4609
      %v4724 = vunpack.c.l.b16 %v4610
      %v4725 = vunpack.c.h.b16 %v4610
      %v4726 = vpack.c.b16 %v4696, %v4686
      %v4727 = vpack.c.b16 %v4697, %v4687
      %v4728 = vpack.c.b16 %v4698, %v4688
      %v4729 = vpack.c.b16 %v4699, %v4689
      %v4730 = vpack.c.b16 %v4700, %v4690
      %v4731 = vpack.c.b16 %v4701, %v4691
      %v4732 = vpack.c.b16 %v4702, %v4692
      %v4733 = vpack.c.b16 %v4703, %v4693
      %v4734 = vpack.c.b16 %v4704, %v4694
      %v4735 = vpack.c.b16 %v4705, %v4695
      %v4736 = vpack.c.b16 %v4716, %v4706
      %v4737 = vpack.c.b16 %v4717, %v4707
      %v4738 = vpack.c.b16 %v4718, %v4708
      %v4739 = vpack.c.b16 %v4719, %v4709
      %v4740 = vpack.c.b16 %v4720, %v4710
      %v4741 = vpack.c.b16 %v4721, %v4711
      %v4742 = vpack.c.b16 %v4722, %v4712
      %v4743 = vpack.c.b16 %v4723, %v4713
      %v4744 = vpack.c.b16 %v4724, %v4714
      %v4745 = vpack.c.b16 %v4725, %v4715
      %v4767 = vsel %vm828, %v4589, 0
      %4769 = vmatprep.subr.bf16.mxu0 0
      %4770 = vmatpush1.bf16.msra.mxu0 0
      %4771 = vmatprep.subr.bf16.mxu0 0
      %4772 = vmatpush1.bf16.msra.mxu0 0
      %4773 = vmatprep.subr.bf16.mxu0 0
      %4774 = vmatpush1.bf16.msra.mxu0 0
      %4775 = vmatprep.subr.bf16.mxu0 0
      %4776 = vmatpush1.bf16.msra.mxu0 0
      %4777 = vmatprep.subr.bf16.mxu0 0
      %4778 = vmatpush1.bf16.msra.mxu0 0
      %4779 = vmatprep.subr.bf16.mxu0 0
      %4780 = vmatpush1.bf16.msra.mxu0 0
      %4781 = vmatprep.subr.bf16.mxu0 %v4737
      %4782 = vmatpush1.bf16.msra.mxu0 %v4736
      %4783 = vmatprep.subr.bf16.mxu0 %v4727
      %4784 = vmatpush1.bf16.msra.mxu0 %v4726
      %4785 = vmatprep.subr.bf16.mxu0 0
      %4786 = vmatpush2.bf16.msra.mxu0 0
      %4787 = vmatprep.subr.bf16.mxu0 0
      %4788 = vmatpush2.bf16.msra.mxu0 0
      %4789 = vmatprep.subr.bf16.mxu0 0
      %4790 = vmatpush2.bf16.msra.mxu0 0
      %4791 = vmatprep.subr.bf16.mxu0 0
      %4792 = vmatpush2.bf16.msra.mxu0 0
      %4793 = vmatprep.subr.bf16.mxu0 0
      %4794 = vmatpush2.bf16.msra.mxu0 0
      %4795 = vmatprep.subr.bf16.mxu0 0
      %4796 = vmatpush2.bf16.msra.mxu0 0
      %4797 = vmatprep.subr.bf16.mxu0 0
      %4798 = vmatpush2.bf16.msra.mxu0 0
      %4799 = vmatprep.subr.bf16.mxu0 0
      %4800 = vmatpush2.bf16.msra.mxu0 0
      %4801 = vmatprep.mubr.bf16.mxu0 0
      %4802 = vmatmul.mubr.bf16.gmra.mxu0 %v4767
      %v4803 = vpop.f32.mrf.mxu0
      %v4804 = vadd.f32 %v4619, %v4803
      %v4805 = vpop.f32.mrf.mxu0
      %v4806 = vadd.f32 %v4623, %v4805
      %v4807 = vpop.f32.mrf.mxu0
      %v4808 = vadd.f32 %v4619, %v4807
      %v4809 = vpop.f32.mrf.mxu0
      %v4810 = vadd.f32 %v4623, %v4809
      %4811 = vdwg.mxu0
      %4812 = vmatprep.subr.bf16.mxu0 0
      %4813 = vmatpush1.bf16.msra.mxu0 0
      %4814 = vmatprep.subr.bf16.mxu0 0
      %4815 = vmatpush1.bf16.msra.mxu0 0
      %4816 = vmatprep.subr.bf16.mxu0 0
      %4817 = vmatpush1.bf16.msra.mxu0 0
      %4818 = vmatprep.subr.bf16.mxu0 0
      %4819 = vmatpush1.bf16.msra.mxu0 0
      %4820 = vmatprep.subr.bf16.mxu0 0
      %4821 = vmatpush1.bf16.msra.mxu0 0
      %4822 = vmatprep.subr.bf16.mxu0 0
      %4823 = vmatpush1.bf16.msra.mxu0 0
      %4824 = vmatprep.subr.bf16.mxu0 %v4739
      %4825 = vmatpush1.bf16.msra.mxu0 %v4738
      %4826 = vmatprep.subr.bf16.mxu0 %v4729
      %4827 = vmatpush1.bf16.msra.mxu0 %v4728
      %4828 = vmatprep.subr.bf16.mxu0 0
      %4829 = vmatpush2.bf16.msra.mxu0 0
      %4830 = vmatprep.subr.bf16.mxu0 0
      %4831 = vmatpush2.bf16.msra.mxu0 0
      %4832 = vmatprep.subr.bf16.mxu0 0
      %4833 = vmatpush2.bf16.msra.mxu0 0
      %4834 = vmatprep.subr.bf16.mxu0 0
      %4835 = vmatpush2.bf16.msra.mxu0 0
      %4836 = vmatprep.subr.bf16.mxu0 0
      %4837 = vmatpush2.bf16.msra.mxu0 0
      %4838 = vmatprep.subr.bf16.mxu0 0
      %4839 = vmatpush2.bf16.msra.mxu0 0
      %4840 = vmatprep.subr.bf16.mxu0 0
      %4841 = vmatpush2.bf16.msra.mxu0 0
      %4842 = vmatprep.subr.bf16.mxu0 0
      %4843 = vmatpush2.bf16.msra.mxu0 0
      %4844 = vmatprep.mubr.bf16.mxu0 0
      %4845 = vmatmul.mubr.bf16.gmra.mxu0 %v4767
      %v4846 = vpop.f32.mrf.mxu0
      %v4847 = vadd.f32 %v4627, %v4846
      %v4848 = vpop.f32.mrf.mxu0
      %v4849 = vadd.f32 %v4631, %v4848
      %v4850 = vpop.f32.mrf.mxu0
      %v4851 = vadd.f32 %v4627, %v4850
      %v4852 = vpop.f32.mrf.mxu0
      %v4853 = vadd.f32 %v4631, %v4852
      %4854 = vdwg.mxu0
      %4855 = vmatprep.subr.bf16.mxu0 0
      %4856 = vmatpush1.bf16.msra.mxu0 0
      %4857 = vmatprep.subr.bf16.mxu0 0
      %4858 = vmatpush1.bf16.msra.mxu0 0
      %4859 = vmatprep.subr.bf16.mxu0 0
      %4860 = vmatpush1.bf16.msra.mxu0 0
      %4861 = vmatprep.subr.bf16.mxu0 0
      %4862 = vmatpush1.bf16.msra.mxu0 0
      %4863 = vmatprep.subr.bf16.mxu0 0
      %4864 = vmatpush1.bf16.msra.mxu0 0
      %4865 = vmatprep.subr.bf16.mxu0 0
      %4866 = vmatpush1.bf16.msra.mxu0 0
      %4867 = vmatprep.subr.bf16.mxu0 %v4741
      %4868 = vmatpush1.bf16.msra.mxu0 %v4740
      %4869 = vmatprep.subr.bf16.mxu0 %v4731
      %4870 = vmatpush1.bf16.msra.mxu0 %v4730
      %4871 = vmatprep.subr.bf16.mxu0 0
      %4872 = vmatpush2.bf16.msra.mxu0 0
      %4873 = vmatprep.subr.bf16.mxu0 0
      %4874 = vmatpush2.bf16.msra.mxu0 0
      %4875 = vmatprep.subr.bf16.mxu0 0
      %4876 = vmatpush2.bf16.msra.mxu0 0
      %4877 = vmatprep.subr.bf16.mxu0 0
      %4878 = vmatpush2.bf16.msra.mxu0 0
      %4879 = vmatprep.subr.bf16.mxu0 0
      %4880 = vmatpush2.bf16.msra.mxu0 0
      %4881 = vmatprep.subr.bf16.mxu0 0
      %4882 = vmatpush2.bf16.msra.mxu0 0
      %4883 = vmatprep.subr.bf16.mxu0 0
      %4884 = vmatpush2.bf16.msra.mxu0 0
      %4885 = vmatprep.subr.bf16.mxu0 0
      %4886 = vmatpush2.bf16.msra.mxu0 0
      %4887 = vmatprep.mubr.bf16.mxu0 0
      %4888 = vmatmul.mubr.bf16.gmra.mxu0 %v4767
      %v4889 = vpop.f32.mrf.mxu0
      %v4890 = vadd.f32 %v4635, %v4889
      %v4891 = vpop.f32.mrf.mxu0
      %v4892 = vadd.f32 %v4639, %v4891
      %v4893 = vpop.f32.mrf.mxu0
      %v4894 = vadd.f32 %v4635, %v4893
      %v4895 = vpop.f32.mrf.mxu0
      %v4896 = vadd.f32 %v4639, %v4895
      %4897 = vdwg.mxu0
      %4898 = vmatprep.subr.bf16.mxu0 0
      %4899 = vmatpush1.bf16.msra.mxu0 0
      %4900 = vmatprep.subr.bf16.mxu0 0
      %4901 = vmatpush1.bf16.msra.mxu0 0
      %4902 = vmatprep.subr.bf16.mxu0 0
      %4903 = vmatpush1.bf16.msra.mxu0 0
      %4904 = vmatprep.subr.bf16.mxu0 0
      %4905 = vmatpush1.bf16.msra.mxu0 0
      %4906 = vmatprep.subr.bf16.mxu0 0
      %4907 = vmatpush1.bf16.msra.mxu0 0
      %4908 = vmatprep.subr.bf16.mxu0 0
      %4909 = vmatpush1.bf16.msra.mxu0 0
      %4910 = vmatprep.subr.bf16.mxu0 %v4743
      %4911 = vmatpush1.bf16.msra.mxu0 %v4742
      %4912 = vmatprep.subr.bf16.mxu0 %v4733
      %4913 = vmatpush1.bf16.msra.mxu0 %v4732
      %4914 = vmatprep.subr.bf16.mxu0 0
      %4915 = vmatpush2.bf16.msra.mxu0 0
      %4916 = vmatprep.subr.bf16.mxu0 0
      %4917 = vmatpush2.bf16.msra.mxu0 0
      %4918 = vmatprep.subr.bf16.mxu0 0
      %4919 = vmatpush2.bf16.msra.mxu0 0
      %4920 = vmatprep.subr.bf16.mxu0 0
      %4921 = vmatpush2.bf16.msra.mxu0 0
      %4922 = vmatprep.subr.bf16.mxu0 0
      %4923 = vmatpush2.bf16.msra.mxu0 0
      %4924 = vmatprep.subr.bf16.mxu0 0
      %4925 = vmatpush2.bf16.msra.mxu0 0
      %4926 = vmatprep.subr.bf16.mxu0 0
      %4927 = vmatpush2.bf16.msra.mxu0 0
      %4928 = vmatprep.subr.bf16.mxu0 0
      %4929 = vmatpush2.bf16.msra.mxu0 0
      %4930 = vmatprep.mubr.bf16.mxu0 0
      %4931 = vmatmul.mubr.bf16.gmra.mxu0 %v4767
      %v4932 = vpop.f32.mrf.mxu0
      %v4933 = vadd.f32 %v4643, %v4932
      %v4934 = vpop.f32.mrf.mxu0
      %v4935 = vadd.f32 %v4647, %v4934
      %v4936 = vpop.f32.mrf.mxu0
      %v4937 = vadd.f32 %v4643, %v4936
      %v4938 = vpop.f32.mrf.mxu0
      %v4939 = vadd.f32 %v4647, %v4938
      %4940 = vdwg.mxu0
      %4941 = vmatprep.subr.bf16.mxu0 0
      %4942 = vmatpush1.bf16.msra.mxu0 0
      %4943 = vmatprep.subr.bf16.mxu0 0
      %4944 = vmatpush1.bf16.msra.mxu0 0
      %4945 = vmatprep.subr.bf16.mxu0 0
      %4946 = vmatpush1.bf16.msra.mxu0 0
      %4947 = vmatprep.subr.bf16.mxu0 0
      %4948 = vmatpush1.bf16.msra.mxu0 0
      %4949 = vmatprep.subr.bf16.mxu0 0
      %4950 = vmatpush1.bf16.msra.mxu0 0
      %4951 = vmatprep.subr.bf16.mxu0 0
      %4952 = vmatpush1.bf16.msra.mxu0 0
      %4953 = vmatprep.subr.bf16.mxu0 %v4745
      %4954 = vmatpush1.bf16.msra.mxu0 %v4744
      %4955 = vmatprep.subr.bf16.mxu0 %v4735
      %4956 = vmatpush1.bf16.msra.mxu0 %v4734
      %4957 = vmatprep.subr.bf16.mxu0 0
      %4958 = vmatpush2.bf16.msra.mxu0 0
      %4959 = vmatprep.subr.bf16.mxu0 0
      %4960 = vmatpush2.bf16.msra.mxu0 0
      %4961 = vmatprep.subr.bf16.mxu0 0
      %4962 = vmatpush2.bf16.msra.mxu0 0
      %4963 = vmatprep.subr.bf16.mxu0 0
      %4964 = vmatpush2.bf16.msra.mxu0 0
      %4965 = vmatprep.subr.bf16.mxu0 0
      %4966 = vmatpush2.bf16.msra.mxu0 0
      %4967 = vmatprep.subr.bf16.mxu0 0
      %4968 = vmatpush2.bf16.msra.mxu0 0
      %4969 = vmatprep.subr.bf16.mxu0 0
      %4970 = vmatpush2.bf16.msra.mxu0 0
      %4971 = vmatprep.subr.bf16.mxu0 0
      %4972 = vmatpush2.bf16.msra.mxu0 0
      %4973 = vmatprep.mubr.bf16.mxu0 0
      %4974 = vmatmul.mubr.bf16.gmra.mxu0 %v4767
      %v4975 = vpop.f32.mrf.mxu0
      %v4976 = vadd.f32 %v4651, %v4975
      %v4977 = vpop.f32.mrf.mxu0
      %v4978 = vadd.f32 %v4655, %v4977
      %v4979 = vpop.f32.mrf.mxu0
      %v4980 = vadd.f32 %v4651, %v4979
      %v4981 = vpop.f32.mrf.mxu0
      %v4982 = vadd.f32 %v4655, %v4981
      %4983 = vdwg.mxu0
      %v4984 = vmul.f32 %v4804, %v4804
      %v4985 = vmul.f32 %v4806, %v4806
      %v4986 = vmul.f32 %v4847, %v4847
      %v4987 = vmul.f32 %v4849, %v4849
      %v4988 = vmul.f32 %v4890, %v4890
      %v4989 = vmul.f32 %v4892, %v4892
      %v4990 = vmul.f32 %v4933, %v4933
      %v4991 = vmul.f32 %v4935, %v4935
      %v4992 = vmul.f32 %v4976, %v4976
      %v4993 = vmul.f32 %v4978, %v4978
      %v4994 = vmul.f32 %v4808, %v4808
      %v4995 = vmul.f32 %v4810, %v4810
      %v4996 = vmul.f32 %v4851, %v4851
      %v4997 = vmul.f32 %v4853, %v4853
      %v4998 = vmul.f32 %v4894, %v4894
      %v4999 = vmul.f32 %v4896, %v4896
      %v5000 = vmul.f32 %v4937, %v4937
      %v5001 = vmul.f32 %v4939, %v4939
      %v5002 = vmul.f32 %v4980, %v4980
      %v5003 = vmul.f32 %v4982, %v4982
      %v5004 = vmul.f32 %v4804, %v4984
      %v5005 = vmul.f32 %v4806, %v4985
      %v5006 = vmul.f32 %v4847, %v4986
      %v5007 = vmul.f32 %v4849, %v4987
      %v5008 = vmul.f32 %v4890, %v4988
      %v5009 = vmul.f32 %v4892, %v4989
      %v5010 = vmul.f32 %v4933, %v4990
      %v5011 = vmul.f32 %v4935, %v4991
      %v5012 = vmul.f32 %v4976, %v4992
      %v5013 = vmul.f32 %v4978, %v4993
      %v5014 = vmul.f32 %v4808, %v4994
      %v5015 = vmul.f32 %v4810, %v4995
      %v5016 = vmul.f32 %v4851, %v4996
      %v5017 = vmul.f32 %v4853, %v4997
      %v5018 = vmul.f32 %v4894, %v4998
      %v5019 = vmul.f32 %v4896, %v4999
      %v5020 = vmul.f32 %v4937, %v5000
      %v5021 = vmul.f32 %v4939, %v5001
      %v5022 = vmul.f32 %v4980, %v5002
      %v5023 = vmul.f32 %v4982, %v5003
      %v5024 = vmul.f32 %v5004, 0.044715
      %v5025 = vmul.f32 %v5005, 0.044715
      %v5026 = vmul.f32 %v5006, 0.044715
      %v5027 = vmul.f32 %v5007, 0.044715
      %v5028 = vmul.f32 %v5008, 0.044715
      %v5029 = vmul.f32 %v5009, 0.044715
      %v5030 = vmul.f32 %v5010, 0.044715
      %v5031 = vmul.f32 %v5011, 0.044715
      %v5032 = vmul.f32 %v5012, 0.044715
      %v5033 = vmul.f32 %v5013, 0.044715
      %v5034 = vmul.f32 %v5014, 0.044715
      %v5035 = vmul.f32 %v5015, 0.044715
      %v5036 = vmul.f32 %v5016, 0.044715
      %v5037 = vmul.f32 %v5017, 0.044715
      %v5038 = vmul.f32 %v5018, 0.044715
      %v5039 = vmul.f32 %v5019, 0.044715
      %v5040 = vmul.f32 %v5020, 0.044715
      %v5041 = vmul.f32 %v5021, 0.044715
      %v5042 = vmul.f32 %v5022, 0.044715
      %v5043 = vmul.f32 %v5023, 0.044715
      %v5044 = vadd.f32 %v4804, %v5024
      %v5045 = vadd.f32 %v4806, %v5025
      %v5046 = vadd.f32 %v4847, %v5026
      %v5047 = vadd.f32 %v4849, %v5027
      %v5048 = vadd.f32 %v4890, %v5028
      %v5049 = vadd.f32 %v4892, %v5029
      %v5050 = vadd.f32 %v4933, %v5030
      %v5051 = vadd.f32 %v4935, %v5031
      %v5052 = vadd.f32 %v4976, %v5032
      %v5053 = vadd.f32 %v4978, %v5033
      %v5054 = vadd.f32 %v4808, %v5034
      %v5055 = vadd.f32 %v4810, %v5035
      %v5056 = vadd.f32 %v4851, %v5036
      %v5057 = vadd.f32 %v4853, %v5037
      %v5058 = vadd.f32 %v4894, %v5038
      %v5059 = vadd.f32 %v4896, %v5039
      %v5060 = vadd.f32 %v4937, %v5040
      %v5061 = vadd.f32 %v4939, %v5041
      %v5062 = vadd.f32 %v4980, %v5042
      %v5063 = vadd.f32 %v4982, %v5043
      %v5064 = vmul.f32 %v5044, 0.7978846
      %v5065 = vmul.f32 %v5045, 0.7978846
      %v5066 = vmul.f32 %v5046, 0.7978846
      %v5067 = vmul.f32 %v5047, 0.7978846
      %v5068 = vmul.f32 %v5048, 0.7978846
      %v5069 = vmul.f32 %v5049, 0.7978846
      %v5070 = vmul.f32 %v5050, 0.7978846
      %v5071 = vmul.f32 %v5051, 0.7978846
      %v5072 = vmul.f32 %v5052, 0.7978846
      %v5073 = vmul.f32 %v5053, 0.7978846
      %v5074 = vmul.f32 %v5054, 0.7978846
      %v5075 = vmul.f32 %v5055, 0.7978846
      %v5076 = vmul.f32 %v5056, 0.7978846
      %v5077 = vmul.f32 %v5057, 0.7978846
      %v5078 = vmul.f32 %v5058, 0.7978846
      %v5079 = vmul.f32 %v5059, 0.7978846
      %v5080 = vmul.f32 %v5060, 0.7978846
      %v5081 = vmul.f32 %v5061, 0.7978846
      %v5082 = vmul.f32 %v5062, 0.7978846
      %v5083 = vmul.f32 %v5063, 0.7978846
      %v5084 = vtanh.pop %v5064
      %v5085 = vtanh.pop %v5065
      %v5086 = vtanh.pop %v5066
      %v5087 = vtanh.pop %v5067
      %v5088 = vtanh.pop %v5068
      %v5089 = vtanh.pop %v5069
      %v5090 = vtanh.pop %v5070
      %v5091 = vtanh.pop %v5071
      %v5092 = vtanh.pop %v5072
      %v5093 = vtanh.pop %v5073
      %v5094 = vtanh.pop %v5074
      %v5095 = vtanh.pop %v5075
      %v5096 = vtanh.pop %v5076
      %v5097 = vtanh.pop %v5077
      %v5098 = vtanh.pop %v5078
      %v5099 = vtanh.pop %v5079
      %v5100 = vtanh.pop %v5080
      %v5101 = vtanh.pop %v5081
      %v5102 = vtanh.pop %v5082
      %v5103 = vtanh.pop %v5083
      %v5104 = vadd.f32 %v5084, 1.0
      %v5105 = vadd.f32 %v5085, 1.0
      %v5106 = vadd.f32 %v5086, 1.0
      %v5107 = vadd.f32 %v5087, 1.0
      %v5108 = vadd.f32 %v5088, 1.0
      %v5109 = vadd.f32 %v5089, 1.0
      %v5110 = vadd.f32 %v5090, 1.0
      %v5111 = vadd.f32 %v5091, 1.0
      %v5112 = vadd.f32 %v5092, 1.0
      %v5113 = vadd.f32 %v5093, 1.0
      %v5114 = vadd.f32 %v5094, 1.0
      %v5115 = vadd.f32 %v5095, 1.0
      %v5116 = vadd.f32 %v5096, 1.0
      %v5117 = vadd.f32 %v5097, 1.0
      %v5118 = vadd.f32 %v5098, 1.0
      %v5119 = vadd.f32 %v5099, 1.0
      %v5120 = vadd.f32 %v5100, 1.0
      %v5121 = vadd.f32 %v5101, 1.0
      %v5122 = vadd.f32 %v5102, 1.0
      %v5123 = vadd.f32 %v5103, 1.0
      %v5124 = vmul.f32 %v5104, 0.5
      %v5125 = vmul.f32 %v5105, 0.5
      %v5126 = vmul.f32 %v5106, 0.5
      %v5127 = vmul.f32 %v5107, 0.5
      %v5128 = vmul.f32 %v5108, 0.5
      %v5129 = vmul.f32 %v5109, 0.5
      %v5130 = vmul.f32 %v5110, 0.5
      %v5131 = vmul.f32 %v5111, 0.5
      %v5132 = vmul.f32 %v5112, 0.5
      %v5133 = vmul.f32 %v5113, 0.5
      %v5134 = vmul.f32 %v5114, 0.5
      %v5135 = vmul.f32 %v5115, 0.5
      %v5136 = vmul.f32 %v5116, 0.5
      %v5137 = vmul.f32 %v5117, 0.5
      %v5138 = vmul.f32 %v5118, 0.5
      %v5139 = vmul.f32 %v5119, 0.5
      %v5140 = vmul.f32 %v5120, 0.5
      %v5141 = vmul.f32 %v5121, 0.5
      %v5142 = vmul.f32 %v5122, 0.5
      %v5143 = vmul.f32 %v5123, 0.5
      %v5144 = vmul.f32 %v4804, %v5124
      %v5145 = vmul.f32 %v4806, %v5125
      %v5146 = vmul.f32 %v4847, %v5126
      %v5147 = vmul.f32 %v4849, %v5127
      %v5148 = vmul.f32 %v4890, %v5128
      %v5149 = vmul.f32 %v4892, %v5129
      %v5150 = vmul.f32 %v4933, %v5130
      %v5151 = vmul.f32 %v4935, %v5131
      %v5152 = vmul.f32 %v4976, %v5132
      %v5153 = vmul.f32 %v4978, %v5133
      %v5154 = vmul.f32 %v4808, %v5134
      %v5155 = vmul.f32 %v4810, %v5135
      %v5156 = vmul.f32 %v4851, %v5136
      %v5157 = vmul.f32 %v4853, %v5137
      %v5158 = vmul.f32 %v4894, %v5138
      %v5159 = vmul.f32 %v4896, %v5139
      %v5160 = vmul.f32 %v4937, %v5140
      %v5161 = vmul.f32 %v4939, %v5141
      %v5162 = vmul.f32 %v4980, %v5142
      %v5163 = vmul.f32 %v4982, %v5143
      %v5164 = vpack.c.bf16 %v5154, %v5144
      %v5165 = vpack.c.bf16 %v5155, %v5145
      %v5166 = vpack.c.bf16 %v5156, %v5146
      %v5167 = vpack.c.bf16 %v5157, %v5147
      %v5168 = vpack.c.bf16 %v5158, %v5148
      %v5169 = vpack.c.bf16 %v5159, %v5149
      %v5170 = vpack.c.bf16 %v5160, %v5150
      %v5171 = vpack.c.bf16 %v5161, %v5151
      %v5172 = vpack.c.bf16 %v5162, %v5152
      %v5173 = vpack.c.bf16 %v5163, %v5153
      %s5174 = scalar_lea.vmem %s802, 640
      %v5175 = vld [vmem:[%s5174] sm:$0xf]
      %v5176 = vld [vmem:[%s5174 + $0x4] sm:$0xf]
      %v5177 = vld [vmem:[%s5174 + $0x8] sm:$0xf]
      %v5178 = vld [vmem:[%s5174 + $0xc] sm:$0xf]
      %v5179 = vld [vmem:[%s5174 + $0x10] sm:$0xf]
      %v5180 = vld [vmem:[%s5174 + $0x14] sm:$0xf]
      %v5181 = vld [vmem:[%s5174 + $0x18] sm:$0xf]
      %v5182 = vld [vmem:[%s5174 + $0x1c] sm:$0xf]
      %v5183 = vld [vmem:[%s5174 + $0x20] sm:$0xf]
      %v5184 = vld [vmem:[%s5174 + $0x24] sm:$0xf]
      %v5185 = vld [vmem:[%s5174 + $0x28] sm:$0xf]
      %v5186 = vld [vmem:[%s5174 + $0x2c] sm:$0xf]
      %v5187 = vld [vmem:[%s5174 + $0x30] sm:$0xf]
      %v5188 = vld [vmem:[%s5174 + $0x34] sm:$0xf]
      %v5189 = vld [vmem:[%s5174 + $0x38] sm:$0xf]
      %v5190 = vld [vmem:[%s5174 + $0x3c] sm:$0xf]
      %v5191 = vld [vmem:[%s5174 + $0x40] sm:$0xf]
      %v5192 = vld [vmem:[%s5174 + $0x44] sm:$0xf]
      %v5193 = vld [vmem:[%s5174 + $0x48] sm:$0xf]
      %v5194 = vld [vmem:[%s5174 + $0x4c] sm:$0xf]
      %v5195 = vld [vmem:[%s5174 + $0x50] sm:$0xf]
      %v5196 = vld [vmem:[%s5174 + $0x54] sm:$0xf]
      %v5197 = vld [vmem:[%s5174 + $0x58] sm:$0xf]
      %v5198 = vld [vmem:[%s5174 + $0x5c] sm:$0xf]
      %v5199 = vld [vmem:[%s5174 + $0x60] sm:$0xf]
      %v5200 = vld [vmem:[%s5174 + $0x64] sm:$0xf]
      %v5201 = vld [vmem:[%s5174 + $0x68] sm:$0xf]
      %v5202 = vld [vmem:[%s5174 + $0x6c] sm:$0xf]
      %v5203 = vld [vmem:[%s5174 + $0x70] sm:$0xf]
      %v5204 = vld [vmem:[%s5174 + $0x74] sm:$0xf]
      %v5205 = vld [vmem:[%s5174 + $0x78] sm:$0xf]
      %v5206 = vld [vmem:[%s5174 + $0x7c] sm:$0xf]
      %v5207 = vld [vmem:[%s5174 + $0x80] sm:$0xf]
      %v5208 = vld [vmem:[%s5174 + $0x84] sm:$0xf]
      %v5209 = vld [vmem:[%s5174 + $0x88] sm:$0xf]
      %v5210 = vld [vmem:[%s5174 + $0x8c] sm:$0xf]
      %v5211 = vld [vmem:[%s5174 + $0x90] sm:$0xf]
      %v5212 = vld [vmem:[%s5174 + $0x94] sm:$0xf]
      %v5213 = vld [vmem:[%s5174 + $0x98] sm:$0xf]
      %v5214 = vld [vmem:[%s5174 + $0x9c] sm:$0xf]
      %v5215 = vld [vmem:[%s5174 + $0xa0] sm:$0xf]
      %v5216 = vld [vmem:[%s5174 + $0xa4] sm:$0xf]
      %v5217 = vld [vmem:[%s5174 + $0xa8] sm:$0xf]
      %v5218 = vld [vmem:[%s5174 + $0xac] sm:$0xf]
      %v5219 = vld [vmem:[%s5174 + $0xb0] sm:$0xf]
      %v5220 = vld [vmem:[%s5174 + $0xb4] sm:$0xf]
      %v5221 = vld [vmem:[%s5174 + $0xb8] sm:$0xf]
      %v5222 = vld [vmem:[%s5174 + $0xbc] sm:$0xf]
      %v5223 = vld [vmem:[%s5174 + $0xc0] sm:$0xf]
      %v5224 = vld [vmem:[%s5174 + $0xc4] sm:$0xf]
      %v5225 = vld [vmem:[%s5174 + $0xc8] sm:$0xf]
      %v5226 = vld [vmem:[%s5174 + $0xcc] sm:$0xf]
      %v5227 = vld [vmem:[%s5174 + $0xd0] sm:$0xf]
      %v5228 = vld [vmem:[%s5174 + $0xd4] sm:$0xf]
      %v5229 = vld [vmem:[%s5174 + $0xd8] sm:$0xf]
      %v5230 = vld [vmem:[%s5174 + $0xdc] sm:$0xf]
      %v5231 = vld [vmem:[%s5174 + $0xe0] sm:$0xf]
      %v5232 = vld [vmem:[%s5174 + $0xe4] sm:$0xf]
      %v5233 = vld [vmem:[%s5174 + $0xe8] sm:$0xf]
      %v5234 = vld [vmem:[%s5174 + $0xec] sm:$0xf]
      %v5235 = vld [vmem:[%s5174 + $0xf0] sm:$0xf]
      %v5236 = vld [vmem:[%s5174 + $0xf4] sm:$0xf]
      %v5237 = vld [vmem:[%s5174 + $0xf8] sm:$0xf]
      %v5238 = vld [vmem:[%s5174 + $0xfc] sm:$0xf]
      %v5239 = vld [vmem:[%s5174 + $0x100] sm:$0xf]
      %v5240 = vld [vmem:[%s5174 + $0x104] sm:$0xf]
      %v5241 = vld [vmem:[%s5174 + $0x108] sm:$0xf]
      %v5242 = vld [vmem:[%s5174 + $0x10c] sm:$0xf]
      %v5243 = vld [vmem:[%s5174 + $0x110] sm:$0xf]
      %v5244 = vld [vmem:[%s5174 + $0x114] sm:$0xf]
      %v5245 = vld [vmem:[%s5174 + $0x118] sm:$0xf]
      %v5246 = vld [vmem:[%s5174 + $0x11c] sm:$0xf]
      %v5247 = vld [vmem:[%s5174 + $0x120] sm:$0xf]
      %v5248 = vld [vmem:[%s5174 + $0x124] sm:$0xf]
      %v5249 = vld [vmem:[%s5174 + $0x128] sm:$0xf]
      %v5250 = vld [vmem:[%s5174 + $0x12c] sm:$0xf]
      %v5251 = vld [vmem:[%s5174 + $0x130] sm:$0xf]
      %v5252 = vld [vmem:[%s5174 + $0x134] sm:$0xf]
      %v5253 = vld [vmem:[%s5174 + $0x138] sm:$0xf]
      %v5254 = vld [vmem:[%s5174 + $0x13c] sm:$0xf]
      %v5255 = vld [vmem:[%s5174 + $0x140] sm:$0xf]
      %v5256 = vld [vmem:[%s5174 + $0x144] sm:$0xf]
      %v5257 = vld [vmem:[%s5174 + $0x148] sm:$0xf]
      %v5258 = vld [vmem:[%s5174 + $0x14c] sm:$0xf]
      %v5259 = vld [vmem:[%s5174 + $0x150] sm:$0xf]
      %v5260 = vld [vmem:[%s5174 + $0x154] sm:$0xf]
      %v5261 = vld [vmem:[%s5174 + $0x158] sm:$0xf]
      %v5262 = vld [vmem:[%s5174 + $0x15c] sm:$0xf]
      %v5263 = vld [vmem:[%s5174 + $0x160] sm:$0xf]
      %v5264 = vld [vmem:[%s5174 + $0x164] sm:$0xf]
      %v5265 = vld [vmem:[%s5174 + $0x168] sm:$0xf]
      %v5266 = vld [vmem:[%s5174 + $0x16c] sm:$0xf]
      %v5267 = vld [vmem:[%s5174 + $0x170] sm:$0xf]
      %v5268 = vld [vmem:[%s5174 + $0x174] sm:$0xf]
      %v5269 = vld [vmem:[%s5174 + $0x178] sm:$0xf]
      %v5270 = vld [vmem:[%s5174 + $0x17c] sm:$0xf]
      %v5271 = vld [vmem:[%s5174 + $0x180] sm:$0xf]
      %v5272 = vld [vmem:[%s5174 + $0x184] sm:$0xf]
      %v5273 = vld [vmem:[%s5174 + $0x188] sm:$0xf]
      %v5274 = vld [vmem:[%s5174 + $0x18c] sm:$0xf]
      %v5275 = vld [vmem:[%s5174 + $0x190] sm:$0xf]
      %v5276 = vld [vmem:[%s5174 + $0x194] sm:$0xf]
      %v5277 = vld [vmem:[%s5174 + $0x198] sm:$0xf]
      %v5278 = vld [vmem:[%s5174 + $0x19c] sm:$0xf]
      %v5279 = vld [vmem:[%s5174 + $0x1a0] sm:$0xf]
      %v5280 = vld [vmem:[%s5174 + $0x1a4] sm:$0xf]
      %v5281 = vld [vmem:[%s5174 + $0x1a8] sm:$0xf]
      %v5282 = vld [vmem:[%s5174 + $0x1ac] sm:$0xf]
      %v5283 = vld [vmem:[%s5174 + $0x1b0] sm:$0xf]
      %v5284 = vld [vmem:[%s5174 + $0x1b4] sm:$0xf]
      %v5285 = vld [vmem:[%s5174 + $0x1b8] sm:$0xf]
      %v5286 = vld [vmem:[%s5174 + $0x1bc] sm:$0xf]
      %v5287 = vld [vmem:[%s5174 + $0x1c0] sm:$0xf]
      %v5288 = vld [vmem:[%s5174 + $0x1c4] sm:$0xf]
      %v5289 = vld [vmem:[%s5174 + $0x1c8] sm:$0xf]
      %v5290 = vld [vmem:[%s5174 + $0x1cc] sm:$0xf]
      %v5291 = vld [vmem:[%s5174 + $0x1d0] sm:$0xf]
      %v5292 = vld [vmem:[%s5174 + $0x1d4] sm:$0xf]
      %v5293 = vld [vmem:[%s5174 + $0x1d8] sm:$0xf]
      %v5294 = vld [vmem:[%s5174 + $0x1dc] sm:$0xf]
      %v5295 = vld [vmem:[%s5174 + $0x1e0] sm:$0xf]
      %v5296 = vld [vmem:[%s5174 + $0x1e4] sm:$0xf]
      %v5297 = vld [vmem:[%s5174 + $0x1e8] sm:$0xf]
      %v5298 = vld [vmem:[%s5174 + $0x1ec] sm:$0xf]
      %v5299 = vld [vmem:[%s5174 + $0x1f0] sm:$0xf]
      %v5300 = vld [vmem:[%s5174 + $0x1f4] sm:$0xf]
      %v5301 = vld [vmem:[%s5174 + $0x1f8] sm:$0xf]
      %v5302 = vld [vmem:[%s5174 + $0x1fc] sm:$0xf]
      %v5303 = vld [vmem:[%s5174 + $0x200] sm:$0xf]
      %v5304 = vld [vmem:[%s5174 + $0x204] sm:$0xf]
      %v5305 = vld [vmem:[%s5174 + $0x208] sm:$0xf]
      %v5306 = vld [vmem:[%s5174 + $0x20c] sm:$0xf]
      %v5307 = vld [vmem:[%s5174 + $0x210] sm:$0xf]
      %v5308 = vld [vmem:[%s5174 + $0x214] sm:$0xf]
      %v5309 = vld [vmem:[%s5174 + $0x218] sm:$0xf]
      %v5310 = vld [vmem:[%s5174 + $0x21c] sm:$0xf]
      %v5311 = vld [vmem:[%s5174 + $0x220] sm:$0xf]
      %v5312 = vld [vmem:[%s5174 + $0x224] sm:$0xf]
      %v5313 = vld [vmem:[%s5174 + $0x228] sm:$0xf]
      %v5314 = vld [vmem:[%s5174 + $0x22c] sm:$0xf]
      %v5315 = vld [vmem:[%s5174 + $0x230] sm:$0xf]
      %v5316 = vld [vmem:[%s5174 + $0x234] sm:$0xf]
      %v5317 = vld [vmem:[%s5174 + $0x238] sm:$0xf]
      %v5318 = vld [vmem:[%s5174 + $0x23c] sm:$0xf]
      %v5319 = vld [vmem:[%s5174 + $0x240] sm:$0xf]
      %v5320 = vld [vmem:[%s5174 + $0x244] sm:$0xf]
      %v5321 = vld [vmem:[%s5174 + $0x248] sm:$0xf]
      %v5322 = vld [vmem:[%s5174 + $0x24c] sm:$0xf]
      %v5323 = vld [vmem:[%s5174 + $0x250] sm:$0xf]
      %v5324 = vld [vmem:[%s5174 + $0x254] sm:$0xf]
      %v5325 = vld [vmem:[%s5174 + $0x258] sm:$0xf]
      %v5326 = vld [vmem:[%s5174 + $0x25c] sm:$0xf]
      %v5327 = vld [vmem:[%s5174 + $0x260] sm:$0xf]
      %v5328 = vld [vmem:[%s5174 + $0x264] sm:$0xf]
      %v5329 = vld [vmem:[%s5174 + $0x268] sm:$0xf]
      %v5330 = vld [vmem:[%s5174 + $0x26c] sm:$0xf]
      %v5331 = vld [vmem:[%s5174 + $0x270] sm:$0xf]
      %v5332 = vld [vmem:[%s5174 + $0x274] sm:$0xf]
      %v5333 = vld [vmem:[%s5174 + $0x278] sm:$0xf]
      %v5334 = vld [vmem:[%s5174 + $0x27c] sm:$0xf]
      %s5335 = scalar_lea.vmem %s807, 1
      %v5336 = vld [vmem:[%s5335] sm:$0x1]
      %v5338 = vlaneseq
      %v5339 = vshrl.u32 %v5338, 7
      %v5340 = vsub.s32 0, %v5339
      %v5341 = vrot.slane %v5336, %v5340
      %v5503 = vunpack.c.l.b16 %v5175
      %v5504 = vunpack.c.l.b16 %v5176
      %v5505 = vunpack.c.l.b16 %v5177
      %v5506 = vunpack.c.l.b16 %v5178
      %v5507 = vunpack.c.l.b16 %v5179
      %v5508 = vunpack.c.l.b16 %v5180
      %v5509 = vunpack.c.l.b16 %v5181
      %v5510 = vunpack.c.l.b16 %v5182
      %v5511 = vunpack.c.l.b16 %v5183
      %v5512 = vunpack.c.l.b16 %v5184
      %v5513 = vunpack.c.l.b16 %v5185
      %v5514 = vunpack.c.l.b16 %v5186
      %v5515 = vunpack.c.l.b16 %v5187
      %v5516 = vunpack.c.l.b16 %v5188
      %v5517 = vunpack.c.l.b16 %v5189
      %v5518 = vunpack.c.l.b16 %v5190
      %v5519 = vunpack.c.l.b16 %v5191
      %v5520 = vunpack.c.l.b16 %v5192
      %v5521 = vunpack.c.l.b16 %v5193
      %v5522 = vunpack.c.l.b16 %v5194
      %v5523 = vunpack.c.l.b16 %v5195
      %v5524 = vunpack.c.l.b16 %v5196
      %v5525 = vunpack.c.l.b16 %v5197
      %v5526 = vunpack.c.l.b16 %v5198
      %v5527 = vunpack.c.l.b16 %v5199
      %v5528 = vunpack.c.l.b16 %v5200
      %v5529 = vunpack.c.l.b16 %v5201
      %v5530 = vunpack.c.l.b16 %v5202
      %v5531 = vunpack.c.l.b16 %v5203
      %v5532 = vunpack.c.l.b16 %v5204
      %v5533 = vunpack.c.l.b16 %v5205
      %v5534 = vunpack.c.l.b16 %v5206
      %v5535 = vunpack.c.l.b16 %v5207
      %v5536 = vunpack.c.l.b16 %v5208
      %v5537 = vunpack.c.l.b16 %v5209
      %v5538 = vunpack.c.l.b16 %v5210
      %v5539 = vunpack.c.l.b16 %v5211
      %v5540 = vunpack.c.l.b16 %v5212
      %v5541 = vunpack.c.l.b16 %v5213
      %v5542 = vunpack.c.l.b16 %v5214
      %v5543 = vunpack.c.l.b16 %v5215
      %v5544 = vunpack.c.l.b16 %v5216
      %v5545 = vunpack.c.l.b16 %v5217
      %v5546 = vunpack.c.l.b16 %v5218
      %v5547 = vunpack.c.l.b16 %v5219
      %v5548 = vunpack.c.l.b16 %v5220
      %v5549 = vunpack.c.l.b16 %v5221
      %v5550 = vunpack.c.l.b16 %v5222
      %v5551 = vunpack.c.l.b16 %v5223
      %v5552 = vunpack.c.l.b16 %v5224
      %v5553 = vunpack.c.l.b16 %v5225
      %v5554 = vunpack.c.l.b16 %v5226
      %v5555 = vunpack.c.l.b16 %v5227
      %v5556 = vunpack.c.l.b16 %v5228
      %v5557 = vunpack.c.l.b16 %v5229
      %v5558 = vunpack.c.l.b16 %v5230
      %v5559 = vunpack.c.l.b16 %v5231
      %v5560 = vunpack.c.l.b16 %v5232
      %v5561 = vunpack.c.l.b16 %v5233
      %v5562 = vunpack.c.l.b16 %v5234
      %v5563 = vunpack.c.l.b16 %v5235
      %v5564 = vunpack.c.l.b16 %v5236
      %v5565 = vunpack.c.l.b16 %v5237
      %v5566 = vunpack.c.l.b16 %v5238
      %v5567 = vunpack.c.l.b16 %v5239
      %v5568 = vunpack.c.l.b16 %v5240
      %v5569 = vunpack.c.l.b16 %v5241
      %v5570 = vunpack.c.l.b16 %v5242
      %v5571 = vunpack.c.l.b16 %v5243
      %v5572 = vunpack.c.l.b16 %v5244
      %v5573 = vunpack.c.l.b16 %v5245
      %v5574 = vunpack.c.l.b16 %v5246
      %v5575 = vunpack.c.l.b16 %v5247
      %v5576 = vunpack.c.l.b16 %v5248
      %v5577 = vunpack.c.l.b16 %v5249
      %v5578 = vunpack.c.l.b16 %v5250
      %v5579 = vunpack.c.l.b16 %v5251
      %v5580 = vunpack.c.l.b16 %v5252
      %v5581 = vunpack.c.l.b16 %v5253
      %v5582 = vunpack.c.l.b16 %v5254
      %v5583 = vunpack.c.l.b16 %v5255
      %v5584 = vunpack.c.l.b16 %v5256
      %v5585 = vunpack.c.l.b16 %v5257
      %v5586 = vunpack.c.l.b16 %v5258
      %v5587 = vunpack.c.l.b16 %v5259
      %v5588 = vunpack.c.l.b16 %v5260
      %v5589 = vunpack.c.l.b16 %v5261
      %v5590 = vunpack.c.l.b16 %v5262
      %v5591 = vunpack.c.l.b16 %v5263
      %v5592 = vunpack.c.l.b16 %v5264
      %v5593 = vunpack.c.l.b16 %v5265
      %v5594 = vunpack.c.l.b16 %v5266
      %v5595 = vunpack.c.l.b16 %v5267
      %v5596 = vunpack.c.l.b16 %v5268
      %v5597 = vunpack.c.l.b16 %v5269
      %v5598 = vunpack.c.l.b16 %v5270
      %v5599 = vunpack.c.l.b16 %v5271
      %v5600 = vunpack.c.l.b16 %v5272
      %v5601 = vunpack.c.l.b16 %v5273
      %v5602 = vunpack.c.l.b16 %v5274
      %v5603 = vunpack.c.l.b16 %v5275
      %v5604 = vunpack.c.l.b16 %v5276
      %v5605 = vunpack.c.l.b16 %v5277
      %v5606 = vunpack.c.l.b16 %v5278
      %v5607 = vunpack.c.l.b16 %v5279
      %v5608 = vunpack.c.l.b16 %v5280
      %v5609 = vunpack.c.l.b16 %v5281
      %v5610 = vunpack.c.l.b16 %v5282
      %v5611 = vunpack.c.l.b16 %v5283
      %v5612 = vunpack.c.l.b16 %v5284
      %v5613 = vunpack.c.l.b16 %v5285
      %v5614 = vunpack.c.l.b16 %v5286
      %v5615 = vunpack.c.l.b16 %v5287
      %v5616 = vunpack.c.l.b16 %v5288
      %v5617 = vunpack.c.l.b16 %v5289
      %v5618 = vunpack.c.l.b16 %v5290
      %v5619 = vunpack.c.l.b16 %v5291
      %v5620 = vunpack.c.l.b16 %v5292
      %v5621 = vunpack.c.l.b16 %v5293
      %v5622 = vunpack.c.l.b16 %v5294
      %v5623 = vunpack.c.l.b16 %v5295
      %v5624 = vunpack.c.l.b16 %v5296
      %v5625 = vunpack.c.l.b16 %v5297
      %v5626 = vunpack.c.l.b16 %v5298
      %v5627 = vunpack.c.l.b16 %v5299
      %v5628 = vunpack.c.l.b16 %v5300
      %v5629 = vunpack.c.l.b16 %v5301
      %v5630 = vunpack.c.l.b16 %v5302
      %v5631 = vunpack.c.l.b16 %v5303
      %v5632 = vunpack.c.l.b16 %v5304
      %v5633 = vunpack.c.l.b16 %v5305
      %v5634 = vunpack.c.l.b16 %v5306
      %v5635 = vunpack.c.l.b16 %v5307
      %v5636 = vunpack.c.l.b16 %v5308
      %v5637 = vunpack.c.l.b16 %v5309
      %v5638 = vunpack.c.l.b16 %v5310
      %v5639 = vunpack.c.l.b16 %v5311
      %v5640 = vunpack.c.l.b16 %v5312
      %v5641 = vunpack.c.l.b16 %v5313
      %v5642 = vunpack.c.l.b16 %v5314
      %v5643 = vunpack.c.l.b16 %v5315
      %v5644 = vunpack.c.l.b16 %v5316
      %v5645 = vunpack.c.l.b16 %v5317
      %v5646 = vunpack.c.l.b16 %v5318
      %v5647 = vunpack.c.l.b16 %v5319
      %v5648 = vunpack.c.l.b16 %v5320
      %v5649 = vunpack.c.l.b16 %v5321
      %v5650 = vunpack.c.l.b16 %v5322
      %v5651 = vunpack.c.l.b16 %v5323
      %v5652 = vunpack.c.l.b16 %v5324
      %v5653 = vunpack.c.l.b16 %v5325
      %v5654 = vunpack.c.l.b16 %v5326
      %v5655 = vunpack.c.l.b16 %v5327
      %v5656 = vunpack.c.l.b16 %v5328
      %v5657 = vunpack.c.l.b16 %v5329
      %v5658 = vunpack.c.l.b16 %v5330
      %v5659 = vunpack.c.l.b16 %v5331
      %v5660 = vunpack.c.l.b16 %v5332
      %v5661 = vunpack.c.l.b16 %v5333
      %v5662 = vunpack.c.l.b16 %v5334
      %v5663 = vpack.c.b16 %v5504, %v5503
      %v5664 = vpack.c.b16 %v5506, %v5505
      %v5665 = vpack.c.b16 %v5508, %v5507
      %v5666 = vpack.c.b16 %v5510, %v5509
      %v5667 = vpack.c.b16 %v5512, %v5511
      %v5668 = vpack.c.b16 %v5514, %v5513
      %v5669 = vpack.c.b16 %v5516, %v5515
      %v5670 = vpack.c.b16 %v5518, %v5517
      %v5671 = vpack.c.b16 %v5520, %v5519
      %v5672 = vpack.c.b16 %v5522, %v5521
      %v5673 = vpack.c.b16 %v5524, %v5523
      %v5674 = vpack.c.b16 %v5526, %v5525
      %v5675 = vpack.c.b16 %v5528, %v5527
      %v5676 = vpack.c.b16 %v5530, %v5529
      %v5677 = vpack.c.b16 %v5532, %v5531
      %v5678 = vpack.c.b16 %v5534, %v5533
      %v5679 = vpack.c.b16 %v5536, %v5535
      %v5680 = vpack.c.b16 %v5538, %v5537
      %v5681 = vpack.c.b16 %v5540, %v5539
      %v5682 = vpack.c.b16 %v5542, %v5541
      %v5683 = vpack.c.b16 %v5544, %v5543
      %v5684 = vpack.c.b16 %v5546, %v5545
      %v5685 = vpack.c.b16 %v5548, %v5547
      %v5686 = vpack.c.b16 %v5550, %v5549
      %v5687 = vpack.c.b16 %v5552, %v5551
      %v5688 = vpack.c.b16 %v5554, %v5553
      %v5689 = vpack.c.b16 %v5556, %v5555
      %v5690 = vpack.c.b16 %v5558, %v5557
      %v5691 = vpack.c.b16 %v5560, %v5559
      %v5692 = vpack.c.b16 %v5562, %v5561
      %v5693 = vpack.c.b16 %v5564, %v5563
      %v5694 = vpack.c.b16 %v5566, %v5565
      %v5695 = vpack.c.b16 %v5568, %v5567
      %v5696 = vpack.c.b16 %v5570, %v5569
      %v5697 = vpack.c.b16 %v5572, %v5571
      %v5698 = vpack.c.b16 %v5574, %v5573
      %v5699 = vpack.c.b16 %v5576, %v5575
      %v5700 = vpack.c.b16 %v5578, %v5577
      %v5701 = vpack.c.b16 %v5580, %v5579
      %v5702 = vpack.c.b16 %v5582, %v5581
      %v5703 = vpack.c.b16 %v5584, %v5583
      %v5704 = vpack.c.b16 %v5586, %v5585
      %v5705 = vpack.c.b16 %v5588, %v5587
      %v5706 = vpack.c.b16 %v5590, %v5589
      %v5707 = vpack.c.b16 %v5592, %v5591
      %v5708 = vpack.c.b16 %v5594, %v5593
      %v5709 = vpack.c.b16 %v5596, %v5595
      %v5710 = vpack.c.b16 %v5598, %v5597
      %v5711 = vpack.c.b16 %v5600, %v5599
      %v5712 = vpack.c.b16 %v5602, %v5601
      %v5713 = vpack.c.b16 %v5604, %v5603
      %v5714 = vpack.c.b16 %v5606, %v5605
      %v5715 = vpack.c.b16 %v5608, %v5607
      %v5716 = vpack.c.b16 %v5610, %v5609
      %v5717 = vpack.c.b16 %v5612, %v5611
      %v5718 = vpack.c.b16 %v5614, %v5613
      %v5719 = vpack.c.b16 %v5616, %v5615
      %v5720 = vpack.c.b16 %v5618, %v5617
      %v5721 = vpack.c.b16 %v5620, %v5619
      %v5722 = vpack.c.b16 %v5622, %v5621
      %v5723 = vpack.c.b16 %v5624, %v5623
      %v5724 = vpack.c.b16 %v5626, %v5625
      %v5725 = vpack.c.b16 %v5628, %v5627
      %v5726 = vpack.c.b16 %v5630, %v5629
      %v5727 = vpack.c.b16 %v5632, %v5631
      %v5728 = vpack.c.b16 %v5634, %v5633
      %v5729 = vpack.c.b16 %v5636, %v5635
      %v5730 = vpack.c.b16 %v5638, %v5637
      %v5731 = vpack.c.b16 %v5640, %v5639
      %v5732 = vpack.c.b16 %v5642, %v5641
      %v5733 = vpack.c.b16 %v5644, %v5643
      %v5734 = vpack.c.b16 %v5646, %v5645
      %v5735 = vpack.c.b16 %v5648, %v5647
      %v5736 = vpack.c.b16 %v5650, %v5649
      %v5737 = vpack.c.b16 %v5652, %v5651
      %v5738 = vpack.c.b16 %v5654, %v5653
      %v5739 = vpack.c.b16 %v5656, %v5655
      %v5740 = vpack.c.b16 %v5658, %v5657
      %v5741 = vpack.c.b16 %v5660, %v5659
      %v5742 = vpack.c.b16 %v5662, %v5661
      %5823 = vmatprep.subr.bf16.mxu0 0
      %5824 = vmatpush1.bf16.msra.mxu0 %v5670
      %5825 = vmatprep.subr.bf16.mxu0 0
      %5826 = vmatpush1.bf16.msra.mxu0 %v5669
      %5827 = vmatprep.subr.bf16.mxu0 0
      %5828 = vmatpush1.bf16.msra.mxu0 %v5668
      %5829 = vmatprep.subr.bf16.mxu0 0
      %5830 = vmatpush1.bf16.msra.mxu0 %v5667
      %5831 = vmatprep.subr.bf16.mxu0 0
      %5832 = vmatpush1.bf16.msra.mxu0 %v5666
      %5833 = vmatprep.subr.bf16.mxu0 0
      %5834 = vmatpush1.bf16.msra.mxu0 %v5665
      %5835 = vmatprep.subr.bf16.mxu0 0
      %5836 = vmatpush1.bf16.msra.mxu0 %v5664
      %5837 = vmatprep.subr.bf16.mxu0 0
      %5838 = vmatpush1.bf16.msra.mxu0 %v5663
      %5839 = vmatprep.subr.bf16.mxu0 0
      %5840 = vmatpush2.bf16.msra.mxu0 %v5678
      %5841 = vmatprep.subr.bf16.mxu0 0
      %5842 = vmatpush2.bf16.msra.mxu0 %v5677
      %5843 = vmatprep.subr.bf16.mxu0 0
      %5844 = vmatpush2.bf16.msra.mxu0 %v5676
      %5845 = vmatprep.subr.bf16.mxu0 0
      %5846 = vmatpush2.bf16.msra.mxu0 %v5675
      %5847 = vmatprep.subr.bf16.mxu0 0
      %5848 = vmatpush2.bf16.msra.mxu0 %v5674
      %5849 = vmatprep.subr.bf16.mxu0 0
      %5850 = vmatpush2.bf16.msra.mxu0 %v5673
      %5851 = vmatprep.subr.bf16.mxu0 0
      %5852 = vmatpush2.bf16.msra.mxu0 %v5672
      %5853 = vmatprep.subr.bf16.mxu0 0
      %5854 = vmatpush2.bf16.msra.mxu0 %v5671
      %5855 = vmatprep.mubr.bf16.mxu0 %v5165
      %5856 = vmatmul.mubr.bf16.gmra.mxu0 %v5164
      %v5857 = vpop.f32.mrf.mxu0
      %v5858 = vadd.f32 %v5341, %v5857
      %v5859 = vpop.f32.mrf.mxu0
      %v5860 = vpop.f32.mrf.mxu0
      %v5861 = vadd.f32 %v5341, %v5860
      %v5862 = vpop.f32.mrf.mxu0
      %5863 = vdwg.mxu0
      %5864 = vmatprep.subr.bf16.mxu0 0
      %5865 = vmatpush1.bf16.msra.mxu0 %v5686
      %5866 = vmatprep.subr.bf16.mxu0 0
      %5867 = vmatpush1.bf16.msra.mxu0 %v5685
      %5868 = vmatprep.subr.bf16.mxu0 0
      %5869 = vmatpush1.bf16.msra.mxu0 %v5684
      %5870 = vmatprep.subr.bf16.mxu0 0
      %5871 = vmatpush1.bf16.msra.mxu0 %v5683
      %5872 = vmatprep.subr.bf16.mxu0 0
      %5873 = vmatpush1.bf16.msra.mxu0 %v5682
      %5874 = vmatprep.subr.bf16.mxu0 0
      %5875 = vmatpush1.bf16.msra.mxu0 %v5681
      %5876 = vmatprep.subr.bf16.mxu0 0
      %5877 = vmatpush1.bf16.msra.mxu0 %v5680
      %5878 = vmatprep.subr.bf16.mxu0 0
      %5879 = vmatpush1.bf16.msra.mxu0 %v5679
      %5880 = vmatprep.subr.bf16.mxu0 0
      %5881 = vmatpush2.bf16.msra.mxu0 %v5694
      %5882 = vmatprep.subr.bf16.mxu0 0
      %5883 = vmatpush2.bf16.msra.mxu0 %v5693
      %5884 = vmatprep.subr.bf16.mxu0 0
      %5885 = vmatpush2.bf16.msra.mxu0 %v5692
      %5886 = vmatprep.subr.bf16.mxu0 0
      %5887 = vmatpush2.bf16.msra.mxu0 %v5691
      %5888 = vmatprep.subr.bf16.mxu0 0
      %5889 = vmatpush2.bf16.msra.mxu0 %v5690
      %5890 = vmatprep.subr.bf16.mxu0 0
      %5891 = vmatpush2.bf16.msra.mxu0 %v5689
      %5892 = vmatprep.subr.bf16.mxu0 0
      %5893 = vmatpush2.bf16.msra.mxu0 %v5688
      %5894 = vmatprep.subr.bf16.mxu0 0
      %5895 = vmatpush2.bf16.msra.mxu0 %v5687
      %5896 = vmatprep.mubr.bf16.mxu0 %v5167
      %5897 = vmatmul.mubr.bf16.gmra.mxu0 %v5166
      %v5898 = vpop.f32.mrf.mxu0
      %v5899 = vadd.f32 %v5858, %v5898
      %v5900 = vpop.f32.mrf.mxu0
      %v5901 = vpop.f32.mrf.mxu0
      %v5902 = vadd.f32 %v5861, %v5901
      %v5903 = vpop.f32.mrf.mxu0
      %5904 = vdwg.mxu0
      %5905 = vmatprep.subr.bf16.mxu0 0
      %5906 = vmatpush1.bf16.msra.mxu0 %v5702
      %5907 = vmatprep.subr.bf16.mxu0 0
      %5908 = vmatpush1.bf16.msra.mxu0 %v5701
      %5909 = vmatprep.subr.bf16.mxu0 0
      %5910 = vmatpush1.bf16.msra.mxu0 %v5700
      %5911 = vmatprep.subr.bf16.mxu0 0
      %5912 = vmatpush1.bf16.msra.mxu0 %v5699
      %5913 = vmatprep.subr.bf16.mxu0 0
      %5914 = vmatpush1.bf16.msra.mxu0 %v5698
      %5915 = vmatprep.subr.bf16.mxu0 0
      %5916 = vmatpush1.bf16.msra.mxu0 %v5697
      %5917 = vmatprep.subr.bf16.mxu0 0
      %5918 = vmatpush1.bf16.msra.mxu0 %v5696
      %5919 = vmatprep.subr.bf16.mxu0 0
      %5920 = vmatpush1.bf16.msra.mxu0 %v5695
      %5921 = vmatprep.subr.bf16.mxu0 0
      %5922 = vmatpush2.bf16.msra.mxu0 %v5710
      %5923 = vmatprep.subr.bf16.mxu0 0
      %5924 = vmatpush2.bf16.msra.mxu0 %v5709
      %5925 = vmatprep.subr.bf16.mxu0 0
      %5926 = vmatpush2.bf16.msra.mxu0 %v5708
      %5927 = vmatprep.subr.bf16.mxu0 0
      %5928 = vmatpush2.bf16.msra.mxu0 %v5707
      %5929 = vmatprep.subr.bf16.mxu0 0
      %5930 = vmatpush2.bf16.msra.mxu0 %v5706
      %5931 = vmatprep.subr.bf16.mxu0 0
      %5932 = vmatpush2.bf16.msra.mxu0 %v5705
      %5933 = vmatprep.subr.bf16.mxu0 0
      %5934 = vmatpush2.bf16.msra.mxu0 %v5704
      %5935 = vmatprep.subr.bf16.mxu0 0
      %5936 = vmatpush2.bf16.msra.mxu0 %v5703
      %5937 = vmatprep.mubr.bf16.mxu0 %v5169
      %5938 = vmatmul.mubr.bf16.gmra.mxu0 %v5168
      %v5939 = vpop.f32.mrf.mxu0
      %v5940 = vadd.f32 %v5899, %v5939
      %v5941 = vpop.f32.mrf.mxu0
      %v5942 = vpop.f32.mrf.mxu0
      %v5943 = vadd.f32 %v5902, %v5942
      %v5944 = vpop.f32.mrf.mxu0
      %5945 = vdwg.mxu0
      %5946 = vmatprep.subr.bf16.mxu0 0
      %5947 = vmatpush1.bf16.msra.mxu0 %v5718
      %5948 = vmatprep.subr.bf16.mxu0 0
      %5949 = vmatpush1.bf16.msra.mxu0 %v5717
      %5950 = vmatprep.subr.bf16.mxu0 0
      %5951 = vmatpush1.bf16.msra.mxu0 %v5716
      %5952 = vmatprep.subr.bf16.mxu0 0
      %5953 = vmatpush1.bf16.msra.mxu0 %v5715
      %5954 = vmatprep.subr.bf16.mxu0 0
      %5955 = vmatpush1.bf16.msra.mxu0 %v5714
      %5956 = vmatprep.subr.bf16.mxu0 0
      %5957 = vmatpush1.bf16.msra.mxu0 %v5713
      %5958 = vmatprep.subr.bf16.mxu0 0
      %5959 = vmatpush1.bf16.msra.mxu0 %v5712
      %5960 = vmatprep.subr.bf16.mxu0 0
      %5961 = vmatpush1.bf16.msra.mxu0 %v5711
      %5962 = vmatprep.subr.bf16.mxu0 0
      %5963 = vmatpush2.bf16.msra.mxu0 %v5726
      %5964 = vmatprep.subr.bf16.mxu0 0
      %5965 = vmatpush2.bf16.msra.mxu0 %v5725
      %5966 = vmatprep.subr.bf16.mxu0 0
      %5967 = vmatpush2.bf16.msra.mxu0 %v5724
      %5968 = vmatprep.subr.bf16.mxu0 0
      %5969 = vmatpush2.bf16.msra.mxu0 %v5723
      %5970 = vmatprep.subr.bf16.mxu0 0
      %5971 = vmatpush2.bf16.msra.mxu0 %v5722
      %5972 = vmatprep.subr.bf16.mxu0 0
      %5973 = vmatpush2.bf16.msra.mxu0 %v5721
      %5974 = vmatprep.subr.bf16.mxu0 0
      %5975 = vmatpush2.bf16.msra.mxu0 %v5720
      %5976 = vmatprep.subr.bf16.mxu0 0
      %5977 = vmatpush2.bf16.msra.mxu0 %v5719
      %5978 = vmatprep.mubr.bf16.mxu0 %v5171
      %5979 = vmatmul.mubr.bf16.gmra.mxu0 %v5170
      %v5980 = vpop.f32.mrf.mxu0
      %v5981 = vadd.f32 %v5940, %v5980
      %v5982 = vpop.f32.mrf.mxu0
      %v5983 = vpop.f32.mrf.mxu0
      %v5984 = vadd.f32 %v5943, %v5983
      %v5985 = vpop.f32.mrf.mxu0
      %5986 = vdwg.mxu0
      %5987 = vmatprep.subr.bf16.mxu0 0
      %5988 = vmatpush1.bf16.msra.mxu0 %v5734
      %5989 = vmatprep.subr.bf16.mxu0 0
      %5990 = vmatpush1.bf16.msra.mxu0 %v5733
      %5991 = vmatprep.subr.bf16.mxu0 0
      %5992 = vmatpush1.bf16.msra.mxu0 %v5732
      %5993 = vmatprep.subr.bf16.mxu0 0
      %5994 = vmatpush1.bf16.msra.mxu0 %v5731
      %5995 = vmatprep.subr.bf16.mxu0 0
      %5996 = vmatpush1.bf16.msra.mxu0 %v5730
      %5997 = vmatprep.subr.bf16.mxu0 0
      %5998 = vmatpush1.bf16.msra.mxu0 %v5729
      %5999 = vmatprep.subr.bf16.mxu0 0
      %6000 = vmatpush1.bf16.msra.mxu0 %v5728
      %6001 = vmatprep.subr.bf16.mxu0 0
      %6002 = vmatpush1.bf16.msra.mxu0 %v5727
      %6003 = vmatprep.subr.bf16.mxu0 0
      %6004 = vmatpush2.bf16.msra.mxu0 %v5742
      %6005 = vmatprep.subr.bf16.mxu0 0
      %6006 = vmatpush2.bf16.msra.mxu0 %v5741
      %6007 = vmatprep.subr.bf16.mxu0 0
      %6008 = vmatpush2.bf16.msra.mxu0 %v5740
      %6009 = vmatprep.subr.bf16.mxu0 0
      %6010 = vmatpush2.bf16.msra.mxu0 %v5739
      %6011 = vmatprep.subr.bf16.mxu0 0
      %6012 = vmatpush2.bf16.msra.mxu0 %v5738
      %6013 = vmatprep.subr.bf16.mxu0 0
      %6014 = vmatpush2.bf16.msra.mxu0 %v5737
      %6015 = vmatprep.subr.bf16.mxu0 0
      %6016 = vmatpush2.bf16.msra.mxu0 %v5736
      %6017 = vmatprep.subr.bf16.mxu0 0
      %6018 = vmatpush2.bf16.msra.mxu0 %v5735
      %6019 = vmatprep.mubr.bf16.mxu0 %v5173
      %6020 = vmatmul.mubr.bf16.gmra.mxu0 %v5172
      %v6021 = vpop.f32.mrf.mxu0
      %v6022 = vadd.f32 %v5981, %v6021
      %v6023 = vpop.f32.mrf.mxu0
      %v6024 = vpop.f32.mrf.mxu0
      %v6025 = vadd.f32 %v5984, %v6024
      %v6026 = vpop.f32.mrf.mxu0
      %6027 = vdwg.mxu0
      %v6028 = vadd.f32 %v6022, %v4587
      %v6029 = vadd.f32 %v6025, %v4588
      %s6030 = scalar_lea.vmem %s812, 1
      %v6031 = vld [vmem:[%s6030] sm:$0x1]
      %s6032 = scalar_lea.vmem %s817, 1
      %v6033 = vld [vmem:[%s6032] sm:$0x1]
      %v6034 = vsel %vm828, %v6028, 0.0
      %6035 = vadd.xlane.f32.xlu0 %v6034
      %v6036 = vpop.xlane.xlu0 %6035
      %v6037 = vsel %vm828, %v6029, 0.0
      %6038 = vadd.xlane.f32.xlu0 %v6037
      %v6039 = vpop.xlane.xlu0 %6038
      %v6040 = vmul.f32 %v6036, %v835
      %v6041 = vmul.f32 %v6039, %v835
      %v6042 = vsub.f32 %v6028, %v6040
      %v6043 = vsub.f32 %v6029, %v6041
      %v6044 = vmul.f32 %v6042, %v6042
      %v6045 = vmul.f32 %v6043, %v6043
      %v6046 = vsel %vm828, %v6044, 0.0
      %6047 = vadd.xlane.f32.xlu0 %v6046
      %v6048 = vpop.xlane.xlu0 %6047
      %v6049 = vsel %vm828, %v6045, 0.0
      %6050 = vadd.xlane.f32.xlu0 %v6049
      %v6051 = vpop.xlane.xlu0 %6050
      %v6052 = vmul.f32 %v6048, %v835
      %v6053 = vmul.f32 %v6051, %v835
      %v6054 = vadd.f32 %v6052, 1e-12
      %v6055 = vadd.f32 %v6053, 1e-12
      %v6056 = vrsqrt.pop %v6054
      %v6057 = vrsqrt.pop %v6055
      %v6058 = vmul.f32 %v6042, %v6056
      %v6059 = vmul.f32 %v6043, %v6057
      %v6061 = vlaneseq
      %v6062 = vshrl.u32 %v6061, 7
      %v6063 = vsub.s32 0, %v6062
      %v6064 = vrot.slane %v6031, %v6063
      %v6066 = vmul.f32 %v6058, %v6064
      %v6067 = vmul.f32 %v6059, %v6064
      %v6069 = vlaneseq
      %v6070 = vshrl.u32 %v6069, 7
      %v6071 = vsub.s32 0, %v6070
      %v6072 = vrot.slane %v6033, %v6071
      %v6074 = vadd.f32 %v6066, %v6072
      %v6075 = vadd.f32 %v6067, %v6072
      %v6078 = vrot.slane %v6075, 7
      %vm6079 = vcmask 1041409
      %v6080 = vsel %vm6079, %v6078, %v6074
      %vm6082 = vcmask 254976
      %6083 = vst.msk [vmem:[%s822] sm:$0x3] %vm6082, %v6080
      %p6084 = scmp.lt.s32.totalorder %s27, 1
      %s6085 = scalar_select %p6084, %s27, 1
      %s6086 = smul.addr %s6085, 2
      %s6087 = scalar_lea.vmem %s16, %s6086
      // Predicated region
      $region85: #{graph_transformer_forward.2} parent=83 // pred_check
        %p6088 = pneg %p461
      $region86: #{graph_transformer_forward.2} parent=83 // pred_check_branch
        %6090 = sbr.rel (%p6088) target = $region88
      $region87: #{graph_transformer_forward.2} parent=83 // pred_region
        _
      $region88: #{graph_transformer_forward.2} parent=83 // pred_fallthru
        _
    $region84: #{graph_transformer_forward.2} parent=5 // pred_fallthru
      _
    %p6091 = scmp.le.s32.totalorder 2, %s22
    // Predicated region
    $region89: #{graph_transformer_forward.2} parent=5 // pred_check
      %p6092 = pneg %p6091
    $region90: #{graph_transformer_forward.2} parent=5 // pred_check_branch
      %6094 = sbr.rel (%p6092) target = $region92
    $region91: #{graph_transformer_forward.2} parent=5 // pred_region
      %s6095 = ssub.s32 %s22, 2
      // Predicated region
      $region93: #{graph_transformer_forward.2} parent=91 // pred_check
        %p6096 = pneg %p467
      $region94: #{graph_transformer_forward.2} parent=91 // pred_check_branch
        %6098 = sbr.rel (%p6096) target = $region96
      $region95: #{graph_transformer_forward.2} parent=91 // pred_region
        %p6099 = scmp.lt.s32.totalorder %s28, 1
        %s6100 = scalar_select %p6099, %s28, 1
        %s6101 = smul.addr %s6100, 2
        %s6102 = scalar_lea.vmem %s16, %s6101
      $region96: #{graph_transformer_forward.2} parent=91 // pred_fallthru
        _
    $region92: #{graph_transformer_forward.2} parent=5 // pred_fallthru
      _
  $region6: #{graph_transformer_forward.2} parent=0 // loop_footer
    %s26 = sadd.s32 1, %s22
  $region7: #{graph_transformer_forward.2} parent=0 // loop_footer_branch
    %21 = sbr.rel target = $region3
  $region8: #{graph_transformer_forward.2} parent=0 // loop_exit
    _

</llo_original>
